<compile_context>
chip_gen: v7x
topology: tpu7x:2x2x1
jax: 0.10.0
libtpu: 0.0.40
codegen_flags: <defaults>
</compile_context>

<pallas_src>
import functools

import jax
import jax.numpy as jnp
from jax import lax
from jax.experimental import pallas as pl
from jax.experimental.pallas import tpu as pltpu

LN_EPS = 1e-5
_VMEM = pl.BlockSpec(memory_space=pltpu.MemorySpace.VMEM)


# --------------------------------------------------------------------------
# Kernels
# --------------------------------------------------------------------------
def add_pos_kernel(x_ref, pos_ref, out_ref):
    # x: (B, T, D), pos: (T, D) broadcast over the batch dimension.
    out_ref[...] = x_ref[...] + pos_ref[...][None, :, :]


def mha_ln_kernel(x_ref, kv_ref,
                  wq_ref, bq_ref, wk_ref, bk_ref, wv_ref, bv_ref,
                  wo_ref, bo_ref, g_ref, beta_ref, out_ref,
                  *, batch, q_len, kv_len, n_heads):
    """Fused multi-head attention block: proj -> attention -> out-proj ->
    residual -> LayerNorm.  x/kv are flattened token rows (rows, D)."""
    N, D = x_ref.shape                      # N = batch * q_len
    Dh = wq_ref.shape[2]
    scale = 1.0 / float(Dh) ** 0.5

    x = x_ref[...]                          # (N, D)
    kv = kv_ref[...]                        # (M, D), M = batch * kv_len

    attn = jnp.zeros((N, D), jnp.float32)
    # Statically unrolled head loop: per-head weights come pre-split from the
    # wrapper so there is no unaligned lane slicing / concat inside the kernel;
    # each head output is folded straight into the out-projection accumulator.
    for h in range(n_heads):
        q = (jnp.dot(x, wq_ref[h], preferred_element_type=jnp.float32)
             + bq_ref[h]).reshape(batch, q_len, Dh)
        k = (jnp.dot(kv, wk_ref[h], preferred_element_type=jnp.float32)
             + bk_ref[h]).reshape(batch, kv_len, Dh)
        v = (jnp.dot(kv, wv_ref[h], preferred_element_type=jnp.float32)
             + bv_ref[h]).reshape(batch, kv_len, Dh)

        s = jnp.einsum('bqe,bke->bqk', q, k,
                       preferred_element_type=jnp.float32) * scale
        s = s - jnp.max(s, axis=-1, keepdims=True)
        e = jnp.exp(s)
        p = e * pl.reciprocal(jnp.sum(e, axis=-1, keepdims=True), approx=False)
        ctx = jnp.einsum('bqk,bke->bqe', p, v,
                         preferred_element_type=jnp.float32).reshape(N, Dh)
        attn = attn + jnp.dot(ctx, wo_ref[h],
                              preferred_element_type=jnp.float32)

    y = x + attn + bo_ref[...]
    mean = jnp.mean(y, axis=-1, keepdims=True)
    yc = y - mean
    var = jnp.mean(yc * yc, axis=-1, keepdims=True)
    out_ref[...] = (yc * lax.rsqrt(var + LN_EPS)) * g_ref[...] + beta_ref[...]


def ffn_ln_kernel(x_ref, w1_ref, b1_ref, w2_ref, b2_ref, g_ref, beta_ref,
                  out_ref):
    """Fused feed-forward block: Linear -> ReLU -> Linear -> residual -> LN."""
    x = x_ref[...]
    h = jnp.dot(x, w1_ref[...], preferred_element_type=jnp.float32) + b1_ref[...]
    h = jnp.maximum(h, 0.0)
    ff = jnp.dot(h, w2_ref[...], preferred_element_type=jnp.float32) + b2_ref[...]
    y = x + ff
    mean = jnp.mean(y, axis=-1, keepdims=True)
    yc = y - mean
    var = jnp.mean(yc * yc, axis=-1, keepdims=True)
    out_ref[...] = (yc * lax.rsqrt(var + LN_EPS)) * g_ref[...] + beta_ref[...]


def heads_kernel(x_ref, ws_ref, bs_ref, wa_ref, ba_ref, sem_ref, aco_ref):
    """Both output heads fused into one kernel (shared activation read)."""
    x = x_ref[...]
    sem_ref[...] = (jnp.dot(x, ws_ref[...], preferred_element_type=jnp.float32)
                    + bs_ref[...])
    aco_ref[...] = (jnp.dot(x, wa_ref[...], preferred_element_type=jnp.float32)
                    + ba_ref[...])


# --------------------------------------------------------------------------
# pallas_call wrappers
# --------------------------------------------------------------------------
def _row_tile(n):
    if n <= 256:
        return n
    for cand in (256, 128, 64, 32, 16, 8):
        if n % cand == 0:
            return cand
    return n


def _add_pos(x, pos):
    B, T, D = x.shape
    return pl.pallas_call(
        add_pos_kernel,
        out_shape=jax.ShapeDtypeStruct((B, T, D), jnp.float32),
        in_specs=[_VMEM, _VMEM],
        out_specs=_VMEM,
    )(x, pos)


def _mha_block(x2, kv2, w, batch, q_len, kv_len, n_heads):
    N, D = x2.shape
    kernel = functools.partial(mha_ln_kernel, batch=batch, q_len=q_len,
                               kv_len=kv_len, n_heads=n_heads)
    return pl.pallas_call(
        kernel,
        out_shape=jax.ShapeDtypeStruct((N, D), jnp.float32),
        in_specs=[_VMEM] * 12,
        out_specs=_VMEM,
    )(x2, kv2, w['wq'], w['bq'], w['wk'], w['bk'], w['wv'], w['bv'],
      w['wo'], w['bo'], w['g'], w['beta'])


def _ffn_block(x2, w):
    N, D = x2.shape
    F = w['w1'].shape[1]
    tm = _row_tile(N)
    row = lambda i: (i, 0)
    full = lambda i: (0, 0)
    return pl.pallas_call(
        ffn_ln_kernel,
        out_shape=jax.ShapeDtypeStruct((N, D), jnp.float32),
        grid=(N // tm,),
        in_specs=[pl.BlockSpec((tm, D), row),
                  pl.BlockSpec((D, F), full),
                  pl.BlockSpec((1, F), full),
                  pl.BlockSpec((F, D), full),
                  pl.BlockSpec((1, D), full),
                  pl.BlockSpec((1, D), full),
                  pl.BlockSpec((1, D), full)],
        out_specs=pl.BlockSpec((tm, D), row),
        compiler_params=pltpu.CompilerParams(
            dimension_semantics=("parallel",)),
    )(x2, w['w1'], w['b1'], w['w2'], w['b2'], w['g'], w['beta'])


def _heads(x2, w):
    N, D = x2.shape
    mel = w['w_sem'].shape[1]
    tm = _row_tile(N)
    row = lambda i: (i, 0)
    full = lambda i: (0, 0)
    return pl.pallas_call(
        heads_kernel,
        out_shape=(jax.ShapeDtypeStruct((N, mel), jnp.float32),
                   jax.ShapeDtypeStruct((N, mel), jnp.float32)),
        grid=(N // tm,),
        in_specs=[pl.BlockSpec((tm, D), row),
                  pl.BlockSpec((D, mel), full),
                  pl.BlockSpec((1, mel), full),
                  pl.BlockSpec((D, mel), full),
                  pl.BlockSpec((1, mel), full)],
        out_specs=(pl.BlockSpec((tm, mel), row),
                   pl.BlockSpec((tm, mel), row)),
        compiler_params=pltpu.CompilerParams(
            dimension_semantics=("parallel",)),
    )(x2, w['w_sem'], w['b_sem'], w['w_aco'], w['b_aco'])


# --------------------------------------------------------------------------
# Per-head weight splitting (layout plumbing done in the wrapper)
# --------------------------------------------------------------------------
def _split_cols(w, n_heads):
    # (D, D) -> (n_heads, D, Dh): contiguous output-feature groups per head.
    d_in, d_out = w.shape
    dh = d_out // n_heads
    return jnp.transpose(w.reshape(d_in, n_heads, dh), (1, 0, 2))


def _split_bias(b, n_heads):
    # (1, D) -> (n_heads, 1, Dh)
    dh = b.shape[-1] // n_heads
    return jnp.transpose(b.reshape(1, n_heads, dh), (1, 0, 2))


def _split_rows(w, n_heads):
    # (D, D) -> (n_heads, Dh, D): input rows correspond to concatenated heads.
    d_in, d_out = w.shape
    dh = d_in // n_heads
    return w.reshape(n_heads, dh, d_out)


# --------------------------------------------------------------------------
# Forward pass (matches MultiStreamDecoder.forward, eval semantics)
# --------------------------------------------------------------------------
def multistream_decoder_forward(tgt, memory, params, *, n_heads):
    """tgt: (T, B, D), memory: (S, B, D) -> (semantic, acoustic), (T, B, mel)."""
    T, B, D = tgt.shape
    S = memory.shape[0]
    pos = params['pos'][:T]                                   # (T, D)

    x3 = jnp.transpose(tgt, (1, 0, 2))                        # (B, T, D)
    x3 = _add_pos(x3, pos)                                    # Pallas
    x = x3.reshape(B * T, D)                                  # token rows
    mem = jnp.transpose(memory, (1, 0, 2)).reshape(B * S, D)

    for lp in params['layers']:
        sa = dict(wq=_split_cols(lp['sa_wq'], n_heads),
                  bq=_split_bias(lp['sa_bq'], n_heads),
                  wk=_split_cols(lp['sa_wk'], n_heads),
                  bk=_split_bias(lp['sa_bk'], n_heads),
                  wv=_split_cols(lp['sa_wv'], n_heads),
                  bv=_split_bias(lp['sa_bv'], n_heads),
                  wo=_split_rows(lp['sa_wo'], n_heads), bo=lp['sa_bo'],
                  g=lp['ln1_g'], beta=lp['ln1_b'])
        x = _mha_block(x, x, sa, B, T, T, n_heads)            # self-attention

        ca = dict(wq=_split_cols(lp['ca_wq'], n_heads),
                  bq=_split_bias(lp['ca_bq'], n_heads),
                  wk=_split_cols(lp['ca_wk'], n_heads),
                  bk=_split_bias(lp['ca_bk'], n_heads),
                  wv=_split_cols(lp['ca_wv'], n_heads),
                  bv=_split_bias(lp['ca_bv'], n_heads),
                  wo=_split_rows(lp['ca_wo'], n_heads), bo=lp['ca_bo'],
                  g=lp['ln2_g'], beta=lp['ln2_b'])
        x = _mha_block(x, mem, ca, B, T, S, n_heads)          # cross-attention

        x = _ffn_block(x, dict(w1=lp['w1'], b1=lp['b1'],
                               w2=lp['w2'], b2=lp['b2'],
                               g=lp['ln3_g'], beta=lp['ln3_b']))

    sem2, aco2 = _heads(x, dict(w_sem=params['w_sem'], b_sem=params['b_sem'],
                                w_aco=params['w_aco'], b_aco=params['b_aco']))
    mel = sem2.shape[-1]
    sem = jnp.transpose(sem2.reshape(B, T, mel), (1, 0, 2))
    aco = jnp.transpose(aco2.reshape(B, T, mel), (1, 0, 2))
    return sem, aco


# --------------------------------------------------------------------------
# Parameters
# --------------------------------------------------------------------------
def make_params(key, *, hidden, n_layers, ffn, mel, max_len):
    D, F = hidden, ffn
    ws, bs = 0.05, 0.02

    def rnd(k, shape, scale):
        return jax.random.normal(k, shape, jnp.float32) * scale

    top = jax.random.split(key, n_layers + 1)
    gk = jax.random.split(top[0], 5)
    params = dict(
        pos=rnd(gk[0], (max_len, D), 1.0),
        w_sem=rnd(gk[1], (D, mel), ws), b_sem=rnd(gk[2], (1, mel), bs),
        w_aco=rnd(gk[3], (D, mel), ws), b_aco=rnd(gk[4], (1, mel), bs),
        layers=[],
    )
    for li in range(n_layers):
        lk = jax.random.split(top[1 + li], 26)
        params['layers'].append(dict(
            sa_wq=rnd(lk[0], (D, D), ws), sa_bq=rnd(lk[1], (1, D), bs),
            sa_wk=rnd(lk[2], (D, D), ws), sa_bk=rnd(lk[3], (1, D), bs),
            sa_wv=rnd(lk[4], (D, D), ws), sa_bv=rnd(lk[5], (1, D), bs),
            sa_wo=rnd(lk[6], (D, D), ws), sa_bo=rnd(lk[7], (1, D), bs),
            ln1_g=1.0 + rnd(lk[8], (1, D), 0.1), ln1_b=rnd(lk[9], (1, D), 0.1),
            ca_wq=rnd(lk[10], (D, D), ws), ca_bq=rnd(lk[11], (1, D), bs),
            ca_wk=rnd(lk[12], (D, D), ws), ca_bk=rnd(lk[13], (1, D), bs),
            ca_wv=rnd(lk[14], (D, D), ws), ca_bv=rnd(lk[15], (1, D), bs),
            ca_wo=rnd(lk[16], (D, D), ws), ca_bo=rnd(lk[17], (1, D), bs),
            ln2_g=1.0 + rnd(lk[18], (1, D), 0.1), ln2_b=rnd(lk[19], (1, D), 0.1),
            w1=rnd(lk[20], (D, F), ws), b1=rnd(lk[21], (1, F), bs),
            w2=rnd(lk[22], (F, D), ws), b2=rnd(lk[23], (1, D), bs),
            ln3_g=1.0 + rnd(lk[24], (1, D), 0.1), ln3_b=rnd(lk[25], (1, D), 0.1),
        ))
    return params


# --------------------------------------------------------------------------
# Pure-JAX reference (matches nn.TransformerDecoder post-norm semantics)
# --------------------------------------------------------------------------
_HIGH = jax.lax.Precision.HIGHEST


def _layernorm_ref(x, g, b):
    m = jnp.mean(x, axis=-1, keepdims=True)
    xc = x - m
    v = jnp.mean(xc * xc, axis=-1, keepdims=True)
    return xc * lax.rsqrt(v + LN_EPS) * g + b


def _mha_ref(q_in, kv_in, wq, bq, wk, bk, wv, bv, wo, bo, n_heads):
    B, T, D = q_in.shape
    S = kv_in.shape[1]
    Dh = D // n_heads
    q = (jnp.einsum('btd,de->bte', q_in, wq, precision=_HIGH) + bq
         ).reshape(B, T, n_heads, Dh)
    k = (jnp.einsum('bsd,de->bse', kv_in, wk, precision=_HIGH) + bk
         ).reshape(B, S, n_heads, Dh)
    v = (jnp.einsum('bsd,de->bse', kv_in, wv, precision=_HIGH) + bv
         ).reshape(B, S, n_heads, Dh)
    s = jnp.einsum('bthd,bshd->bhts', q, k, precision=_HIGH) * (1.0 / Dh ** 0.5)
    p = jax.nn.softmax(s, axis=-1)
    ctx = jnp.einsum('bhts,bshd->bthd', p, v, precision=_HIGH).reshape(B, T, D)
    return jnp.einsum('btd,de->bte', ctx, wo, precision=_HIGH) + bo


def decoder_reference(tgt, memory, params, *, n_heads):
    T, B, D = tgt.shape
    x = tgt + params['pos'][:T][:, None, :]
    x = jnp.transpose(x, (1, 0, 2))
    mem = jnp.transpose(memory, (1, 0, 2))
    for lp in params['layers']:
        sa = _mha_ref(x, x, lp['sa_wq'], lp['sa_bq'], lp['sa_wk'], lp['sa_bk'],
                      lp['sa_wv'], lp['sa_bv'], lp['sa_wo'], lp['sa_bo'], n_heads)
        x = _layernorm_ref(x + sa, lp['ln1_g'], lp['ln1_b'])
        ca = _mha_ref(x, mem, lp['ca_wq'], lp['ca_bq'], lp['ca_wk'], lp['ca_bk'],
                      lp['ca_wv'], lp['ca_bv'], lp['ca_wo'], lp['ca_bo'], n_heads)
        x = _layernorm_ref(x + ca, lp['ln2_g'], lp['ln2_b'])
        h = jnp.maximum(
            jnp.einsum('btd,df->btf', x, lp['w1'], precision=_HIGH) + lp['b1'], 0.0)
        ff = jnp.einsum('btf,fd->btd', h, lp['w2'], precision=_HIGH) + lp['b2']
        x = _layernorm_ref(x + ff, lp['ln3_g'], lp['ln3_b'])
    sem = jnp.einsum('btd,dm->btm', x, params['w_sem'], precision=_HIGH) + params['b_sem']
    aco = jnp.einsum('btd,dm->btm', x, params['w_aco'], precision=_HIGH) + params['b_aco']
    return jnp.transpose(sem, (1, 0, 2)), jnp.transpose(aco, (1, 0, 2))


# --------------------------------------------------------------------------
if __name__ == "__main__":
    hidden_size = 256
    n_layers = 2
    n_heads = 4
    dim_feedforward = 512
    mel_dim = 80
    max_len = 32
    T, S, batch = 8, 16, 2

    key = jax.random.PRNGKey(0)
    k_params, k_tgt, k_mem = jax.random.split(key, 3)
    params = make_params(k_params, hidden=hidden_size, n_layers=n_layers,
                         ffn=dim_feedforward, mel=mel_dim, max_len=max_len)
    tgt = jax.random.normal(k_tgt, (T, batch, hidden_size), jnp.float32)
    memory = jax.random.normal(k_mem, (S, batch, hidden_size), jnp.float32)

    fwd = jax.jit(functools.partial(multistream_decoder_forward, n_heads=n_heads))
    sem, aco = jax.block_until_ready(fwd(tgt, memory, params))

    ref_sem, ref_aco = decoder_reference(tgt, memory, params, n_heads=n_heads)

    assert sem.shape == (T, batch, mel_dim), sem.shape
    assert aco.shape == (T, batch, mel_dim), aco.shape
    assert jnp.allclose(sem, ref_sem, atol=2e-3, rtol=2e-3), \
        f"semantic max abs err {jnp.max(jnp.abs(sem - ref_sem))}"
    assert jnp.allclose(aco, ref_aco, atol=2e-3, rtol=2e-3), \
        f"acoustic max abs err {jnp.max(jnp.abs(aco - ref_aco))}"
    print("KERNEL_OK")
</pallas_src>

<mosaic_0001>
module attributes {stable_mosaic.version = 11 : i64} {
  func.func @add_pos_kernel(%arg0: memref<2x8x256xf32, #tpu.memory_space<vmem>>, %arg1: memref<8x256xf32, #tpu.memory_space<vmem>>, %arg2: memref<2x8x256xf32, #tpu.memory_space<vmem>>) attributes {dimension_semantics = [], scalar_prefetch = 0 : i64, scratch_operands = 0 : i64, tpu.core_type = #tpu.core_type<tc>} {
    %c0 = arith.constant 0 : index
    %c0_0 = arith.constant 0 : index
    %c0_1 = arith.constant 0 : index
    %0 = vector.load %arg0[%c0, %c0_0, %c0_1] : memref<2x8x256xf32, #tpu.memory_space<vmem>>, vector<2x8x256xf32>
    %c0_2 = arith.constant 0 : index
    %c0_3 = arith.constant 0 : index
    %1 = vector.load %arg1[%c0_2, %c0_3] : memref<8x256xf32, #tpu.memory_space<vmem>>, vector<8x256xf32>
    %2 = vector.shape_cast %1 : vector<8x256xf32> to vector<1x8x256xf32>
    %3 = vector.broadcast %2 : vector<1x8x256xf32> to vector<2x8x256xf32>
    %4 = arith.addf %0, %3 : vector<2x8x256xf32>
    %c0_4 = arith.constant 0 : index
    %c0_5 = arith.constant 0 : index
    %c0_6 = arith.constant 0 : index
    %5 = vector.load %arg2[%c0_4, %c0_5, %c0_6] : memref<2x8x256xf32, #tpu.memory_space<vmem>>, vector<2x8x256xf32>
    tpu.vector_store %arg2[%c0_4, %c0_5, %c0_6], %4 {strides = array<i32>} : memref<2x8x256xf32, #tpu.memory_space<vmem>>, vector<2x8x256xf32>,
    return
  }
}

module attributes {stable_mosaic.version = 11 : i64} {
  func.func @ffn_ln_kernel(%arg0: i32, %arg1: memref<16x256xf32, #tpu.memory_space<vmem>>, %arg2: memref<256x512xf32, #tpu.memory_space<vmem>>, %arg3: memref<1x512xf32, #tpu.memory_space<vmem>>, %arg4: memref<512x256xf32, #tpu.memory_space<vmem>>, %arg5: memref<1x256xf32, #tpu.memory_space<vmem>>, %arg6: memref<1x256xf32, #tpu.memory_space<vmem>>, %arg7: memref<1x256xf32, #tpu.memory_space<vmem>>, %arg8: memref<16x256xf32, #tpu.memory_space<vmem>>) attributes {dimension_semantics = [#tpu.dimension_semantics<parallel>], iteration_bounds = array<i64: 1>, scalar_prefetch = 0 : i64, scratch_operands = 0 : i64, tpu.core_type = #tpu.core_type<tc>, window_params = [{transform_indices = @transform_0, window_bounds = array<i64: 16, 256>}, {pipeline_mode = #tpu.pipeline_mode<synchronous>, transform_indices = @transform_1, window_bounds = array<i64: 256, 512>}, {pipeline_mode = #tpu.pipeline_mode<synchronous>, transform_indices = @transform_2, window_bounds = array<i64: 1, 512>}, {pipeline_mode = #tpu.pipeline_mode<synchronous>, transform_indices = @transform_3, window_bounds = array<i64: 512, 256>}, {pipeline_mode = #tpu.pipeline_mode<synchronous>, transform_indices = @transform_4, window_bounds = array<i64: 1, 256>}, {pipeline_mode = #tpu.pipeline_mode<synchronous>, transform_indices = @transform_5, window_bounds = array<i64: 1, 256>}, {pipeline_mode = #tpu.pipeline_mode<synchronous>, transform_indices = @transform_6, window_bounds = array<i64: 1, 256>}, {transform_indices = @transform_7, window_bounds = array<i64: 16, 256>}]} {
    %c0 = arith.constant 0 : index
    %c0_0 = arith.constant 0 : index
    %0 = vector.load %arg1[%c0, %c0_0] : memref<16x256xf32, #tpu.memory_space<vmem>>, vector<16x256xf32>
    %c0_1 = arith.constant 0 : index
    %c0_2 = arith.constant 0 : index
    %1 = vector.load %arg2[%c0_1, %c0_2] : memref<256x512xf32, #tpu.memory_space<vmem>>, vector<256x512xf32>
    %cst = arith.constant dense<0.000000e+00> : vector<16x512xf32>
    %2 = tpu.matmul %0, %1, %cst {dimension_numbers = #tpu.dot_dimension_numbers<[1], [0], [0], [1], [0, 0, 1, 1], [], []>} : vector<16x256xf32>, vector<256x512xf32>, vector<16x512xf32> -> vector<16x512xf32>
    %c0_3 = arith.constant 0 : index
    %c0_4 = arith.constant 0 : index
    %3 = vector.load %arg3[%c0_3, %c0_4] : memref<1x512xf32, #tpu.memory_space<vmem>>, vector<1x512xf32>
    %4 = vector.broadcast %3 : vector<1x512xf32> to vector<16x512xf32>
    %5 = arith.addf %2, %4 : vector<16x512xf32>
    %cst_5 = arith.constant 0.000000e+00 : f32
    %6 = vector.broadcast %cst_5 : f32 to vector<16x512xf32>
    %7 = arith.maximumf %5, %6 : vector<16x512xf32>
    %c0_6 = arith.constant 0 : index
    %c0_7 = arith.constant 0 : index
    %8 = vector.load %arg4[%c0_6, %c0_7] : memref<512x256xf32, #tpu.memory_space<vmem>>, vector<512x256xf32>
    %cst_8 = arith.constant dense<0.000000e+00> : vector<16x256xf32>
    %9 = tpu.matmul %7, %8, %cst_8 {dimension_numbers = #tpu.dot_dimension_numbers<[1], [0], [0], [1], [0, 0, 1, 1], [], []>} : vector<16x512xf32>, vector<512x256xf32>, vector<16x256xf32> -> vector<16x256xf32>
    %c0_9 = arith.constant 0 : index
    %c0_10 = arith.constant 0 : index
    %10 = vector.load %arg5[%c0_9, %c0_10] : memref<1x256xf32, #tpu.memory_space<vmem>>, vector<1x256xf32>
    %11 = vector.broadcast %10 : vector<1x256xf32> to vector<16x256xf32>
    %12 = arith.addf %9, %11 : vector<16x256xf32>
    %13 = arith.addf %0, %12 : vector<16x256xf32>
    %cst_11 = arith.constant dense<0.000000e+00> : vector<16xf32>
    %14 = vector.multi_reduction <add>, %13, %cst_11 [1] : vector<16x256xf32> to vector<16xf32>
    %15 = vector.shape_cast %14 : vector<16xf32> to vector<16x1xf32>
    %cst_12 = arith.constant 2.560000e+02 : f32
    %16 = vector.broadcast %cst_12 : f32 to vector<16x1xf32>
    %17 = arith.divf %15, %16 : vector<16x1xf32>
    %18 = vector.broadcast %17 : vector<16x1xf32> to vector<16x256xf32>
    %19 = arith.subf %13, %18 : vector<16x256xf32>
    %20 = arith.mulf %19, %19 : vector<16x256xf32>
    %cst_13 = arith.constant dense<0.000000e+00> : vector<16xf32>
    %21 = vector.multi_reduction <add>, %20, %cst_13 [1] : vector<16x256xf32> to vector<16xf32>
    %22 = vector.shape_cast %21 : vector<16xf32> to vector<16x1xf32>
    %cst_14 = arith.constant 2.560000e+02 : f32
    %23 = vector.broadcast %cst_14 : f32 to vector<16x1xf32>
    %24 = arith.divf %22, %23 : vector<16x1xf32>
    %cst_15 = arith.constant 9.99999974E-6 : f32
    %25 = vector.broadcast %cst_15 : f32 to vector<16x1xf32>
    %26 = arith.addf %24, %25 : vector<16x1xf32>
    %27 = math.rsqrt %26 : vector<16x1xf32>
    %28 = vector.broadcast %27 : vector<16x1xf32> to vector<16x256xf32>
    %29 = arith.mulf %19, %28 : vector<16x256xf32>
    %c0_16 = arith.constant 0 : index
    %c0_17 = arith.constant 0 : index
    %30 = vector.load %arg6[%c0_16, %c0_17] : memref<1x256xf32, #tpu.memory_space<vmem>>, vector<1x256xf32>
    %31 = vector.broadcast %30 : vector<1x256xf32> to vector<16x256xf32>
    %32 = arith.mulf %29, %31 : vector<16x256xf32>
    %c0_18 = arith.constant 0 : index
    %c0_19 = arith.constant 0 : index
    %33 = vector.load %arg7[%c0_18, %c0_19] : memref<1x256xf32, #tpu.memory_space<vmem>>, vector<1x256xf32>
    %34 = vector.broadcast %33 : vector<1x256xf32> to vector<16x256xf32>
    %35 = arith.addf %32, %34 : vector<16x256xf32>
    %c0_20 = arith.constant 0 : index
    %c0_21 = arith.constant 0 : index
    %36 = vector.load %arg8[%c0_20, %c0_21] : memref<16x256xf32, #tpu.memory_space<vmem>>, vector<16x256xf32>
    tpu.vector_store %arg8[%c0_20, %c0_21], %35 {strides = array<i32>} : memref<16x256xf32, #tpu.memory_space<vmem>>, vector<16x256xf32>,
    return
  }
  func.func @transform_0(%arg0: i32) -> (i32, i32) {
    %c0_i32 = arith.constant 0 : i32
    %c0_i32_0 = arith.constant 0 : i32
    return %arg0, %c0_i32 : i32, i32
  }
  func.func @transform_1(%arg0: i32) -> (i32, i32) {
    %c0_i32 = arith.constant 0 : i32
    %c0_i32_0 = arith.constant 0 : i32
    %c0_i32_1 = arith.constant 0 : i32
    return %c0_i32, %c0_i32_0 : i32, i32
  }
  func.func @transform_2(%arg0: i32) -> (i32, i32) {
    %c0_i32 = arith.constant 0 : i32
    %c0_i32_0 = arith.constant 0 : i32
    %c0_i32_1 = arith.constant 0 : i32
    return %c0_i32, %c0_i32_0 : i32, i32
  }
  func.func @transform_3(%arg0: i32) -> (i32, i32) {
    %c0_i32 = arith.constant 0 : i32
    %c0_i32_0 = arith.constant 0 : i32
    %c0_i32_1 = arith.constant 0 : i32
    return %c0_i32, %c0_i32_0 : i32, i32
  }
  func.func @transform_4(%arg0: i32) -> (i32, i32) {
    %c0_i32 = arith.constant 0 : i32
    %c0_i32_0 = arith.constant 0 : i32
    %c0_i32_1 = arith.constant 0 : i32
    return %c0_i32, %c0_i32_0 : i32, i32
  }
  func.func @transform_5(%arg0: i32) -> (i32, i32) {
    %c0_i32 = arith.constant 0 : i32
    %c0_i32_0 = arith.constant 0 : i32
    %c0_i32_1 = arith.constant 0 : i32
    return %c0_i32, %c0_i32_0 : i32, i32
  }
  func.func @transform_6(%arg0: i32) -> (i32, i32) {
    %c0_i32 = arith.constant 0 : i32
    %c0_i32_0 = arith.constant 0 : i32
    %c0_i32_1 = arith.constant 0 : i32
    return %c0_i32, %c0_i32_0 : i32, i32
  }
  func.func @transform_7(%arg0: i32) -> (i32, i32) {
    %c0_i32 = arith.constant 0 : i32
    %c0_i32_0 = arith.constant 0 : i32
    return %arg0, %c0_i32 : i32, i32
  }
}

module attributes {stable_mosaic.version = 11 : i64} {
  func.func @mha_ln_kernel(%arg0: memref<16x256xf32, #tpu.memory_space<vmem>>, %arg1: memref<16x256xf32, #tpu.memory_space<vmem>>, %arg2: memref<4x256x64xf32, #tpu.memory_space<vmem>>, %arg3: memref<4x1x64xf32, #tpu.memory_space<vmem>>, %arg4: memref<4x256x64xf32, #tpu.memory_space<vmem>>, %arg5: memref<4x1x64xf32, #tpu.memory_space<vmem>>, %arg6: memref<4x256x64xf32, #tpu.memory_space<vmem>>, %arg7: memref<4x1x64xf32, #tpu.memory_space<vmem>>, %arg8: memref<4x64x256xf32, #tpu.memory_space<vmem>>, %arg9: memref<1x256xf32, #tpu.memory_space<vmem>>, %arg10: memref<1x256xf32, #tpu.memory_space<vmem>>, %arg11: memref<1x256xf32, #tpu.memory_space<vmem>>, %arg12: memref<16x256xf32, #tpu.memory_space<vmem>>) attributes {dimension_semantics = [], scalar_prefetch = 0 : i64, scratch_operands = 0 : i64, tpu.core_type = #tpu.core_type<tc>} {
    %c0 = arith.constant 0 : index
    %c0_0 = arith.constant 0 : index
    %0 = vector.load %arg0[%c0, %c0_0] : memref<16x256xf32, #tpu.memory_space<vmem>>, vector<16x256xf32>
    %c0_1 = arith.constant 0 : index
    %c0_2 = arith.constant 0 : index
    %1 = vector.load %arg1[%c0_1, %c0_2] : memref<16x256xf32, #tpu.memory_space<vmem>>, vector<16x256xf32>
    %cst = arith.constant 0.000000e+00 : f32
    %2 = vector.broadcast %cst : f32 to vector<16x256xf32>
    %c0_3 = arith.constant 0 : index
    %c0_4 = arith.constant 0 : index
    %c0_5 = arith.constant 0 : index
    %3 = vector.load %arg2[%c0_3, %c0_4, %c0_5] : memref<4x256x64xf32, #tpu.memory_space<vmem>>, vector<1x256x64xf32>
    %4 = vector.shape_cast %3 : vector<1x256x64xf32> to vector<256x64xf32>
    %cst_6 = arith.constant dense<0.000000e+00> : vector<16x64xf32>
    %5 = tpu.matmul %0, %4, %cst_6 {dimension_numbers = #tpu.dot_dimension_numbers<[1], [0], [0], [1], [0, 0, 1, 1], [], []>} : vector<16x256xf32>, vector<256x64xf32>, vector<16x64xf32> -> vector<16x64xf32>
    %c0_7 = arith.constant 0 : index
    %c0_8 = arith.constant 0 : index
    %c0_9 = arith.constant 0 : index
    %6 = vector.load %arg3[%c0_7, %c0_8, %c0_9] : memref<4x1x64xf32, #tpu.memory_space<vmem>>, vector<1x1x64xf32>
    %7 = vector.shape_cast %6 : vector<1x1x64xf32> to vector<1x64xf32>
    %8 = vector.broadcast %7 : vector<1x64xf32> to vector<16x64xf32>
    %9 = arith.addf %5, %8 : vector<16x64xf32>
    %10 = vector.shape_cast %9 : vector<16x64xf32> to vector<2x8x64xf32>
    %c0_10 = arith.constant 0 : index
    %c0_11 = arith.constant 0 : index
    %c0_12 = arith.constant 0 : index
    %11 = vector.load %arg4[%c0_10, %c0_11, %c0_12] : memref<4x256x64xf32, #tpu.memory_space<vmem>>, vector<1x256x64xf32>
    %12 = vector.shape_cast %11 : vector<1x256x64xf32> to vector<256x64xf32>
    %cst_13 = arith.constant dense<0.000000e+00> : vector<16x64xf32>
    %13 = tpu.matmul %1, %12, %cst_13 {dimension_numbers = #tpu.dot_dimension_numbers<[1], [0], [0], [1], [0, 0, 1, 1], [], []>} : vector<16x256xf32>, vector<256x64xf32>, vector<16x64xf32> -> vector<16x64xf32>
    %c0_14 = arith.constant 0 : index
    %c0_15 = arith.constant 0 : index
    %c0_16 = arith.constant 0 : index
    %14 = vector.load %arg5[%c0_14, %c0_15, %c0_16] : memref<4x1x64xf32, #tpu.memory_space<vmem>>, vector<1x1x64xf32>
    %15 = vector.shape_cast %14 : vector<1x1x64xf32> to vector<1x64xf32>
    %16 = vector.broadcast %15 : vector<1x64xf32> to vector<16x64xf32>
    %17 = arith.addf %13, %16 : vector<16x64xf32>
    %18 = vector.shape_cast %17 : vector<16x64xf32> to vector<2x8x64xf32>
    %c0_17 = arith.constant 0 : index
    %c0_18 = arith.constant 0 : index
    %c0_19 = arith.constant 0 : index
    %19 = vector.load %arg6[%c0_17, %c0_18, %c0_19] : memref<4x256x64xf32, #tpu.memory_space<vmem>>, vector<1x256x64xf32>
    %20 = vector.shape_cast %19 : vector<1x256x64xf32> to vector<256x64xf32>
    %cst_20 = arith.constant dense<0.000000e+00> : vector<16x64xf32>
    %21 = tpu.matmul %1, %20, %cst_20 {dimension_numbers = #tpu.dot_dimension_numbers<[1], [0], [0], [1], [0, 0, 1, 1], [], []>} : vector<16x256xf32>, vector<256x64xf32>, vector<16x64xf32> -> vector<16x64xf32>
    %c0_21 = arith.constant 0 : index
    %c0_22 = arith.constant 0 : index
    %c0_23 = arith.constant 0 : index
    %22 = vector.load %arg7[%c0_21, %c0_22, %c0_23] : memref<4x1x64xf32, #tpu.memory_space<vmem>>, vector<1x1x64xf32>
    %23 = vector.shape_cast %22 : vector<1x1x64xf32> to vector<1x64xf32>
    %24 = vector.broadcast %23 : vector<1x64xf32> to vector<16x64xf32>
    %25 = arith.addf %21, %24 : vector<16x64xf32>
    %26 = vector.shape_cast %25 : vector<16x64xf32> to vector<2x8x64xf32>
    "tpu.trace_start"() <{level = 10 : i32, message = "bqe,bke->bqk"}> : () -> ()
    %cst_24 = arith.constant dense<0.000000e+00> : vector<2x8x8xf32>
    %27 = tpu.matmul %10, %18, %cst_24 {dimension_numbers = #tpu.dot_dimension_numbers<[2], [2], [1], [1], [0, 0, 0, 1, 1, 1], [0], [0]>} : vector<2x8x64xf32>, vector<2x8x64xf32>, vector<2x8x8xf32> -> vector<2x8x8xf32>
    "tpu.trace_stop"() : () -> ()
    %cst_25 = arith.constant 1.250000e-01 : f32
    %28 = vector.broadcast %cst_25 : f32 to vector<2x8x8xf32>
    %29 = arith.mulf %27, %28 : vector<2x8x8xf32>
    %cst_26 = arith.constant dense<0xFF800000> : vector<2x8xf32>
    %30 = vector.multi_reduction <maximumf>, %29, %cst_26 [2] : vector<2x8x8xf32> to vector<2x8xf32>
    %31 = vector.shape_cast %30 : vector<2x8xf32> to vector<2x8x1xf32>
    %32 = vector.broadcast %31 : vector<2x8x1xf32> to vector<2x8x8xf32>
    %33 = arith.subf %29, %32 : vector<2x8x8xf32>
    %34 = math.exp %33 : vector<2x8x8xf32>
    %cst_27 = arith.constant dense<0.000000e+00> : vector<2x8xf32>
    %35 = vector.multi_reduction <add>, %34, %cst_27 [2] : vector<2x8x8xf32> to vector<2x8xf32>
    %36 = vector.shape_cast %35 : vector<2x8xf32> to vector<2x8x1xf32>
    %37 = tpu.reciprocal %36 : vector<2x8x1xf32> -> vector<2x8x1xf32>
    %38 = vector.broadcast %37 : vector<2x8x1xf32> to vector<2x8x8xf32>
    %39 = arith.mulf %34, %38 : vector<2x8x8xf32>
    "tpu.trace_start"() <{level = 10 : i32, message = "bqk,bke->bqe"}> : () -> ()
    %cst_28 = arith.constant dense<0.000000e+00> : vector<2x8x64xf32>
    %40 = tpu.matmul %39, %26, %cst_28 {dimension_numbers = #tpu.dot_dimension_numbers<[2], [1], [1], [2], [0, 0, 0, 1, 1, 2], [0], [0]>} : vector<2x8x8xf32>, vector<2x8x64xf32>, vector<2x8x64xf32> -> vector<2x8x64xf32>
    "tpu.trace_stop"() : () -> ()
    %41 = vector.shape_cast %40 : vector<2x8x64xf32> to vector<16x64xf32>
    %c0_29 = arith.constant 0 : index
    %c0_30 = arith.constant 0 : index
    %c0_31 = arith.constant 0 : index
    %42 = vector.load %arg8[%c0_29, %c0_30, %c0_31] : memref<4x64x256xf32, #tpu.memory_space<vmem>>, vector<1x64x256xf32>
    %43 = vector.shape_cast %42 : vector<1x64x256xf32> to vector<64x256xf32>
    %cst_32 = arith.constant dense<0.000000e+00> : vector<16x256xf32>
    %44 = tpu.matmul %41, %43, %cst_32 {dimension_numbers = #tpu.dot_dimension_numbers<[1], [0], [0], [1], [0, 0, 1, 1], [], []>} : vector<16x64xf32>, vector<64x256xf32>, vector<16x256xf32> -> vector<16x256xf32>
    %45 = arith.addf %2, %44 : vector<16x256xf32>
    %c1 = arith.constant 1 : index
    %c0_33 = arith.constant 0 : index
    %c0_34 = arith.constant 0 : index
    %46 = vector.load %arg2[%c1, %c0_33, %c0_34] : memref<4x256x64xf32, #tpu.memory_space<vmem>>, vector<1x256x64xf32>
    %47 = vector.shape_cast %46 : vector<1x256x64xf32> to vector<256x64xf32>
    %cst_35 = arith.constant dense<0.000000e+00> : vector<16x64xf32>
    %48 = tpu.matmul %0, %47, %cst_35 {dimension_numbers = #tpu.dot_dimension_numbers<[1], [0], [0], [1], [0, 0, 1, 1], [], []>} : vector<16x256xf32>, vector<256x64xf32>, vector<16x64xf32> -> vector<16x64xf32>
    %c1_36 = arith.constant 1 : index
    %c0_37 = arith.constant 0 : index
    %c0_38 = arith.constant 0 : index
    %49 = vector.load %arg3[%c1_36, %c0_37, %c0_38] : memref<4x1x64xf32, #tpu.memory_space<vmem>>, vector<1x1x64xf32>
    %50 = vector.shape_cast %49 : vector<1x1x64xf32> to vector<1x64xf32>
    %51 = vector.broadcast %50 : vector<1x64xf32> to vector<16x64xf32>
    %52 = arith.addf %48, %51 : vector<16x64xf32>
    %53 = vector.shape_cast %52 : vector<16x64xf32> to vector<2x8x64xf32>
    %c1_39 = arith.constant 1 : index
    %c0_40 = arith.constant 0 : index
    %c0_41 = arith.constant 0 : index
    %54 = vector.load %arg4[%c1_39, %c0_40, %c0_41] : memref<4x256x64xf32, #tpu.memory_space<vmem>>, vector<1x256x64xf32>
    %55 = vector.shape_cast %54 : vector<1x256x64xf32> to vector<256x64xf32>
    %cst_42 = arith.constant dense<0.000000e+00> : vector<16x64xf32>
    %56 = tpu.matmul %1, %55, %cst_42 {dimension_numbers = #tpu.dot_dimension_numbers<[1], [0], [0], [1], [0, 0, 1, 1], [], []>} : vector<16x256xf32>, vector<256x64xf32>, vector<16x64xf32> -> vector<16x64xf32>
    %c1_43 = arith.constant 1 : index
    %c0_44 = arith.constant 0 : index
    %c0_45 = arith.constant 0 : index
    %57 = vector.load %arg5[%c1_43, %c0_44, %c0_45] : memref<4x1x64xf32, #tpu.memory_space<vmem>>, vector<1x1x64xf32>
    %58 = vector.shape_cast %57 : vector<1x1x64xf32> to vector<1x64xf32>
    %59 = vector.broadcast %58 : vector<1x64xf32> to vector<16x64xf32>
    %60 = arith.addf %56, %59 : vector<16x64xf32>
    %61 = vector.shape_cast %60 : vector<16x64xf32> to vector<2x8x64xf32>
    %c1_46 = arith.constant 1 : index
    %c0_47 = arith.constant 0 : index
    %c0_48 = arith.constant 0 : index
    %62 = vector.load %arg6[%c1_46, %c0_47, %c0_48] : memref<4x256x64xf32, #tpu.memory_space<vmem>>, vector<1x256x64xf32>
    %63 = vector.shape_cast %62 : vector<1x256x64xf32> to vector<256x64xf32>
    %cst_49 = arith.constant dense<0.000000e+00> : vector<16x64xf32>
    %64 = tpu.matmul %1, %63, %cst_49 {dimension_numbers = #tpu.dot_dimension_numbers<[1], [0], [0], [1], [0, 0, 1, 1], [], []>} : vector<16x256xf32>, vector<256x64xf32>, vector<16x64xf32> -> vector<16x64xf32>
    %c1_50 = arith.constant 1 : index
    %c0_51 = arith.constant 0 : index
    %c0_52 = arith.constant 0 : index
    %65 = vector.load %arg7[%c1_50, %c0_51, %c0_52] : memref<4x1x64xf32, #tpu.memory_space<vmem>>, vector<1x1x64xf32>
    %66 = vector.shape_cast %65 : vector<1x1x64xf32> to vector<1x64xf32>
    %67 = vector.broadcast %66 : vector<1x64xf32> to vector<16x64xf32>
    %68 = arith.addf %64, %67 : vector<16x64xf32>
    %69 = vector.shape_cast %68 : vector<16x64xf32> to vector<2x8x64xf32>
    "tpu.trace_start"() <{level = 10 : i32, message = "bqe,bke->bqk"}> : () -> ()
    %cst_53 = arith.constant dense<0.000000e+00> : vector<2x8x8xf32>
    %70 = tpu.matmul %53, %61, %cst_53 {dimension_numbers = #tpu.dot_dimension_numbers<[2], [2], [1], [1], [0, 0, 0, 1, 1, 1], [0], [0]>} : vector<2x8x64xf32>, vector<2x8x64xf32>, vector<2x8x8xf32> -> vector<2x8x8xf32>
    "tpu.trace_stop"() : () -> ()
    %cst_54 = arith.constant 1.250000e-01 : f32
    %71 = vector.broadcast %cst_54 : f32 to vector<2x8x8xf32>
    %72 = arith.mulf %70, %71 : vector<2x8x8xf32>
    %cst_55 = arith.constant dense<0xFF800000> : vector<2x8xf32>
    %73 = vector.multi_reduction <maximumf>, %72, %cst_55 [2] : vector<2x8x8xf32> to vector<2x8xf32>
    %74 = vector.shape_cast %73 : vector<2x8xf32> to vector<2x8x1xf32>
    %75 = vector.broadcast %74 : vector<2x8x1xf32> to vector<2x8x8xf32>
    %76 = arith.subf %72, %75 : vector<2x8x8xf32>
    %77 = math.exp %76 : vector<2x8x8xf32>
    %cst_56 = arith.constant dense<0.000000e+00> : vector<2x8xf32>
    %78 = vector.multi_reduction <add>, %77, %cst_56 [2] : vector<2x8x8xf32> to vector<2x8xf32>
    %79 = vector.shape_cast %78 : vector<2x8xf32> to vector<2x8x1xf32>
    %80 = tpu.reciprocal %79 : vector<2x8x1xf32> -> vector<2x8x1xf32>
    %81 = vector.broadcast %80 : vector<2x8x1xf32> to vector<2x8x8xf32>
    %82 = arith.mulf %77, %81 : vector<2x8x8xf32>
    "tpu.trace_start"() <{level = 10 : i32, message = "bqk,bke->bqe"}> : () -> ()
    %cst_57 = arith.constant dense<0.000000e+00> : vector<2x8x64xf32>
    %83 = tpu.matmul %82, %69, %cst_57 {dimension_numbers = #tpu.dot_dimension_numbers<[2], [1], [1], [2], [0, 0, 0, 1, 1, 2], [0], [0]>} : vector<2x8x8xf32>, vector<2x8x64xf32>, vector<2x8x64xf32> -> vector<2x8x64xf32>
    "tpu.trace_stop"() : () -> ()
    %84 = vector.shape_cast %83 : vector<2x8x64xf32> to vector<16x64xf32>
    %c1_58 = arith.constant 1 : index
    %c0_59 = arith.constant 0 : index
    %c0_60 = arith.constant 0 : index
    %85 = vector.load %arg8[%c1_58, %c0_59, %c0_60] : memref<4x64x256xf32, #tpu.memory_space<vmem>>, vector<1x64x256xf32>
    %86 = vector.shape_cast %85 : vector<1x64x256xf32> to vector<64x256xf32>
    %cst_61 = arith.constant dense<0.000000e+00> : vector<16x256xf32>
    %87 = tpu.matmul %84, %86, %cst_61 {dimension_numbers = #tpu.dot_dimension_numbers<[1], [0], [0], [1], [0, 0, 1, 1], [], []>} : vector<16x64xf32>, vector<64x256xf32>, vector<16x256xf32> -> vector<16x256xf32>
    %88 = arith.addf %45, %87 : vector<16x256xf32>
    %c2 = arith.constant 2 : index
    %c0_62 = arith.constant 0 : index
    %c0_63 = arith.constant 0 : index
    %89 = vector.load %arg2[%c2, %c0_62, %c0_63] : memref<4x256x64xf32, #tpu.memory_space<vmem>>, vector<1x256x64xf32>
    %90 = vector.shape_cast %89 : vector<1x256x64xf32> to vector<256x64xf32>
    %cst_64 = arith.constant dense<0.000000e+00> : vector<16x64xf32>
    %91 = tpu.matmul %0, %90, %cst_64 {dimension_numbers = #tpu.dot_dimension_numbers<[1], [0], [0], [1], [0, 0, 1, 1], [], []>} : vector<16x256xf32>, vector<256x64xf32>, vector<16x64xf32> -> vector<16x64xf32>
    %c2_65 = arith.constant 2 : index
    %c0_66 = arith.constant 0 : index
    %c0_67 = arith.constant 0 : index
    %92 = vector.load %arg3[%c2_65, %c0_66, %c0_67] : memref<4x1x64xf32, #tpu.memory_space<vmem>>, vector<1x1x64xf32>
    %93 = vector.shape_cast %92 : vector<1x1x64xf32> to vector<1x64xf32>
    %94 = vector.broadcast %93 : vector<1x64xf32> to vector<16x64xf32>
    %95 = arith.addf %91, %94 : vector<16x64xf32>
    %96 = vector.shape_cast %95 : vector<16x64xf32> to vector<2x8x64xf32>
    %c2_68 = arith.constant 2 : index
    %c0_69 = arith.constant 0 : index
    %c0_70 = arith.constant 0 : index
    %97 = vector.load %arg4[%c2_68, %c0_69, %c0_70] : memref<4x256x64xf32, #tpu.memory_space<vmem>>, vector<1x256x64xf32>
    %98 = vector.shape_cast %97 : vector<1x256x64xf32> to vector<256x64xf32>
    %cst_71 = arith.constant dense<0.000000e+00> : vector<16x64xf32>
    %99 = tpu.matmul %1, %98, %cst_71 {dimension_numbers = #tpu.dot_dimension_numbers<[1], [0], [0], [1], [0, 0, 1, 1], [], []>} : vector<16x256xf32>, vector<256x64xf32>, vector<16x64xf32> -> vector<16x64xf32>
    %c2_72 = arith.constant 2 : index
    %c0_73 = arith.constant 0 : index
    %c0_74 = arith.constant 0 : index
    %100 = vector.load %arg5[%c2_72, %c0_73, %c0_74] : memref<4x1x64xf32, #tpu.memory_space<vmem>>, vector<1x1x64xf32>
    %101 = vector.shape_cast %100 : vector<1x1x64xf32> to vector<1x64xf32>
    %102 = vector.broadcast %101 : vector<1x64xf32> to vector<16x64xf32>
    %103 = arith.addf %99, %102 : vector<16x64xf32>
    %104 = vector.shape_cast %103 : vector<16x64xf32> to vector<2x8x64xf32>
    %c2_75 = arith.constant 2 : index
    %c0_76 = arith.constant 0 : index
    %c0_77 = arith.constant 0 : index
    %105 = vector.load %arg6[%c2_75, %c0_76, %c0_77] : memref<4x256x64xf32, #tpu.memory_space<vmem>>, vector<1x256x64xf32>
    %106 = vector.shape_cast %105 : vector<1x256x64xf32> to vector<256x64xf32>
    %cst_78 = arith.constant dense<0.000000e+00> : vector<16x64xf32>
    %107 = tpu.matmul %1, %106, %cst_78 {dimension_numbers = #tpu.dot_dimension_numbers<[1], [0], [0], [1], [0, 0, 1, 1], [], []>} : vector<16x256xf32>, vector<256x64xf32>, vector<16x64xf32> -> vector<16x64xf32>
    %c2_79 = arith.constant 2 : index
    %c0_80 = arith.constant 0 : index
    %c0_81 = arith.constant 0 : index
    %108 = vector.load %arg7[%c2_79, %c0_80, %c0_81] : memref<4x1x64xf32, #tpu.memory_space<vmem>>, vector<1x1x64xf32>
    %109 = vector.shape_cast %108 : vector<1x1x64xf32> to vector<1x64xf32>
    %110 = vector.broadcast %109 : vector<1x64xf32> to vector<16x64xf32>
    %111 = arith.addf %107, %110 : vector<16x64xf32>
    %112 = vector.shape_cast %111 : vector<16x64xf32> to vector<2x8x64xf32>
    "tpu.trace_start"() <{level = 10 : i32, message = "bqe,bke->bqk"}> : () -> ()
    %cst_82 = arith.constant dense<0.000000e+00> : vector<2x8x8xf32>
    %113 = tpu.matmul %96, %104, %cst_82 {dimension_numbers = #tpu.dot_dimension_numbers<[2], [2], [1], [1], [0, 0, 0, 1, 1, 1], [0], [0]>} : vector<2x8x64xf32>, vector<2x8x64xf32>, vector<2x8x8xf32> -> vector<2x8x8xf32>
    "tpu.trace_stop"() : () -> ()
    %cst_83 = arith.constant 1.250000e-01 : f32
    %114 = vector.broadcast %cst_83 : f32 to vector<2x8x8xf32>
    %115 = arith.mulf %113, %114 : vector<2x8x8xf32>
    %cst_84 = arith.constant dense<0xFF800000> : vector<2x8xf32>
    %116 = vector.multi_reduction <maximumf>, %115, %cst_84 [2] : vector<2x8x8xf32> to vector<2x8xf32>
    %117 = vector.shape_cast %116 : vector<2x8xf32> to vector<2x8x1xf32>
    %118 = vector.broadcast %117 : vector<2x8x1xf32> to vector<2x8x8xf32>
    %119 = arith.subf %115, %118 : vector<2x8x8xf32>
    %120 = math.exp %119 : vector<2x8x8xf32>
    %cst_85 = arith.constant dense<0.000000e+00> : vector<2x8xf32>
    %121 = vector.multi_reduction <add>, %120, %cst_85 [2] : vector<2x8x8xf32> to vector<2x8xf32>
    %122 = vector.shape_cast %121 : vector<2x8xf32> to vector<2x8x1xf32>
    %123 = tpu.reciprocal %122 : vector<2x8x1xf32> -> vector<2x8x1xf32>
    %124 = vector.broadcast %123 : vector<2x8x1xf32> to vector<2x8x8xf32>
    %125 = arith.mulf %120, %124 : vector<2x8x8xf32>
    "tpu.trace_start"() <{level = 10 : i32, message = "bqk,bke->bqe"}> : () -> ()
    %cst_86 = arith.constant dense<0.000000e+00> : vector<2x8x64xf32>
    %126 = tpu.matmul %125, %112, %cst_86 {dimension_numbers = #tpu.dot_dimension_numbers<[2], [1], [1], [2], [0, 0, 0, 1, 1, 2], [0], [0]>} : vector<2x8x8xf32>, vector<2x8x64xf32>, vector<2x8x64xf32> -> vector<2x8x64xf32>
    "tpu.trace_stop"() : () -> ()
    %127 = vector.shape_cast %126 : vector<2x8x64xf32> to vector<16x64xf32>
    %c2_87 = arith.constant 2 : index
    %c0_88 = arith.constant 0 : index
    %c0_89 = arith.constant 0 : index
    %128 = vector.load %arg8[%c2_87, %c0_88, %c0_89] : memref<4x64x256xf32, #tpu.memory_space<vmem>>, vector<1x64x256xf32>
    %129 = vector.shape_cast %128 : vector<1x64x256xf32> to vector<64x256xf32>
    %cst_90 = arith.constant dense<0.000000e+00> : vector<16x256xf32>
    %130 = tpu.matmul %127, %129, %cst_90 {dimension_numbers = #tpu.dot_dimension_numbers<[1], [0], [0], [1], [0, 0, 1, 1], [], []>} : vector<16x64xf32>, vector<64x256xf32>, vector<16x256xf32> -> vector<16x256xf32>
    %131 = arith.addf %88, %130 : vector<16x256xf32>
    %c3 = arith.constant 3 : index
    %c0_91 = arith.constant 0 : index
    %c0_92 = arith.constant 0 : index
    %132 = vector.load %arg2[%c3, %c0_91, %c0_92] : memref<4x256x64xf32, #tpu.memory_space<vmem>>, vector<1x256x64xf32>
    %133 = vector.shape_cast %132 : vector<1x256x64xf32> to vector<256x64xf32>
    %cst_93 = arith.constant dense<0.000000e+00> : vector<16x64xf32>
    %134 = tpu.matmul %0, %133, %cst_93 {dimension_numbers = #tpu.dot_dimension_numbers<[1], [0], [0], [1], [0, 0, 1, 1], [], []>} : vector<16x256xf32>, vector<256x64xf32>, vector<16x64xf32> -> vector<16x64xf32>
    %c3_94 = arith.constant 3 : index
    %c0_95 = arith.constant 0 : index
    %c0_96 = arith.constant 0 : index
    %135 = vector.load %arg3[%c3_94, %c0_95, %c0_96] : memref<4x1x64xf32, #tpu.memory_space<vmem>>, vector<1x1x64xf32>
    %136 = vector.shape_cast %135 : vector<1x1x64xf32> to vector<1x64xf32>
    %137 = vector.broadcast %136 : vector<1x64xf32> to vector<16x64xf32>
    %138 = arith.addf %134, %137 : vector<16x64xf32>
    %139 = vector.shape_cast %138 : vector<16x64xf32> to vector<2x8x64xf32>
    %c3_97 = arith.constant 3 : index
    %c0_98 = arith.constant 0 : index
    %c0_99 = arith.constant 0 : index
    %140 = vector.load %arg4[%c3_97, %c0_98, %c0_99] : memref<4x256x64xf32, #tpu.memory_space<vmem>>, vector<1x256x64xf32>
    %141 = vector.shape_cast %140 : vector<1x256x64xf32> to vector<256x64xf32>
    %cst_100 = arith.constant dense<0.000000e+00> : vector<16x64xf32>
    %142 = tpu.matmul %1, %141, %cst_100 {dimension_numbers = #tpu.dot_dimension_numbers<[1], [0], [0], [1], [0, 0, 1, 1], [], []>} : vector<16x256xf32>, vector<256x64xf32>, vector<16x64xf32> -> vector<16x64xf32>
    %c3_101 = arith.constant 3 : index
    %c0_102 = arith.constant 0 : index
    %c0_103 = arith.constant 0 : index
    %143 = vector.load %arg5[%c3_101, %c0_102, %c0_103] : memref<4x1x64xf32, #tpu.memory_space<vmem>>, vector<1x1x64xf32>
    %144 = vector.shape_cast %143 : vector<1x1x64xf32> to vector<1x64xf32>
    %145 = vector.broadcast %144 : vector<1x64xf32> to vector<16x64xf32>
    %146 = arith.addf %142, %145 : vector<16x64xf32>
    %147 = vector.shape_cast %146 : vector<16x64xf32> to vector<2x8x64xf32>
    %c3_104 = arith.constant 3 : index
    %c0_105 = arith.constant 0 : index
    %c0_106 = arith.constant 0 : index
    %148 = vector.load %arg6[%c3_104, %c0_105, %c0_106] : memref<4x256x64xf32, #tpu.memory_space<vmem>>, vector<1x256x64xf32>
    %149 = vector.shape_cast %148 : vector<1x256x64xf32> to vector<256x64xf32>
    %cst_107 = arith.constant dense<0.000000e+00> : vector<16x64xf32>
    %150 = tpu.matmul %1, %149, %cst_107 {dimension_numbers = #tpu.dot_dimension_numbers<[1], [0], [0], [1], [0, 0, 1, 1], [], []>} : vector<16x256xf32>, vector<256x64xf32>, vector<16x64xf32> -> vector<16x64xf32>
    %c3_108 = arith.constant 3 : index
    %c0_109 = arith.constant 0 : index
    %c0_110 = arith.constant 0 : index
    %151 = vector.load %arg7[%c3_108, %c0_109, %c0_110] : memref<4x1x64xf32, #tpu.memory_space<vmem>>, vector<1x1x64xf32>
    %152 = vector.shape_cast %151 : vector<1x1x64xf32> to vector<1x64xf32>
    %153 = vector.broadcast %152 : vector<1x64xf32> to vector<16x64xf32>
    %154 = arith.addf %150, %153 : vector<16x64xf32>
    %155 = vector.shape_cast %154 : vector<16x64xf32> to vector<2x8x64xf32>
    "tpu.trace_start"() <{level = 10 : i32, message = "bqe,bke->bqk"}> : () -> ()
    %cst_111 = arith.constant dense<0.000000e+00> : vector<2x8x8xf32>
    %156 = tpu.matmul %139, %147, %cst_111 {dimension_numbers = #tpu.dot_dimension_numbers<[2], [2], [1], [1], [0, 0, 0, 1, 1, 1], [0], [0]>} : vector<2x8x64xf32>, vector<2x8x64xf32>, vector<2x8x8xf32> -> vector<2x8x8xf32>
    "tpu.trace_stop"() : () -> ()
    %cst_112 = arith.constant 1.250000e-01 : f32
    %157 = vector.broadcast %cst_112 : f32 to vector<2x8x8xf32>
    %158 = arith.mulf %156, %157 : vector<2x8x8xf32>
    %cst_113 = arith.constant dense<0xFF800000> : vector<2x8xf32>
    %159 = vector.multi_reduction <maximumf>, %158, %cst_113 [2] : vector<2x8x8xf32> to vector<2x8xf32>
    %160 = vector.shape_cast %159 : vector<2x8xf32> to vector<2x8x1xf32>
    %161 = vector.broadcast %160 : vector<2x8x1xf32> to vector<2x8x8xf32>
    %162 = arith.subf %158, %161 : vector<2x8x8xf32>
    %163 = math.exp %162 : vector<2x8x8xf32>
    %cst_114 = arith.constant dense<0.000000e+00> : vector<2x8xf32>
    %164 = vector.multi_reduction <add>, %163, %cst_114 [2] : vector<2x8x8xf32> to vector<2x8xf32>
    %165 = vector.shape_cast %164 : vector<2x8xf32> to vector<2x8x1xf32>
    %166 = tpu.reciprocal %165 : vector<2x8x1xf32> -> vector<2x8x1xf32>
    %167 = vector.broadcast %166 : vector<2x8x1xf32> to vector<2x8x8xf32>
    %168 = arith.mulf %163, %167 : vector<2x8x8xf32>
    "tpu.trace_start"() <{level = 10 : i32, message = "bqk,bke->bqe"}> : () -> ()
    %cst_115 = arith.constant dense<0.000000e+00> : vector<2x8x64xf32>
    %169 = tpu.matmul %168, %155, %cst_115 {dimension_numbers = #tpu.dot_dimension_numbers<[2], [1], [1], [2], [0, 0, 0, 1, 1, 2], [0], [0]>} : vector<2x8x8xf32>, vector<2x8x64xf32>, vector<2x8x64xf32> -> vector<2x8x64xf32>
    "tpu.trace_stop"() : () -> ()
    %170 = vector.shape_cast %169 : vector<2x8x64xf32> to vector<16x64xf32>
    %c3_116 = arith.constant 3 : index
    %c0_117 = arith.constant 0 : index
    %c0_118 = arith.constant 0 : index
    %171 = vector.load %arg8[%c3_116, %c0_117, %c0_118] : memref<4x64x256xf32, #tpu.memory_space<vmem>>, vector<1x64x256xf32>
    %172 = vector.shape_cast %171 : vector<1x64x256xf32> to vector<64x256xf32>
    %cst_119 = arith.constant dense<0.000000e+00> : vector<16x256xf32>
    %173 = tpu.matmul %170, %172, %cst_119 {dimension_numbers = #tpu.dot_dimension_numbers<[1], [0], [0], [1], [0, 0, 1, 1], [], []>} : vector<16x64xf32>, vector<64x256xf32>, vector<16x256xf32> -> vector<16x256xf32>
    %174 = arith.addf %131, %173 : vector<16x256xf32>
    %175 = arith.addf %0, %174 : vector<16x256xf32>
    %c0_120 = arith.constant 0 : index
    %c0_121 = arith.constant 0 : index
    %176 = vector.load %arg9[%c0_120, %c0_121] : memref<1x256xf32, #tpu.memory_space<vmem>>, vector<1x256xf32>
    %177 = vector.broadcast %176 : vector<1x256xf32> to vector<16x256xf32>
    %178 = arith.addf %175, %177 : vector<16x256xf32>
    %cst_122 = arith.constant dense<0.000000e+00> : vector<16xf32>
    %179 = vector.multi_reduction <add>, %178, %cst_122 [1] : vector<16x256xf32> to vector<16xf32>
    %180 = vector.shape_cast %179 : vector<16xf32> to vector<16x1xf32>
    %cst_123 = arith.constant 2.560000e+02 : f32
    %181 = vector.broadcast %cst_123 : f32 to vector<16x1xf32>
    %182 = arith.divf %180, %181 : vector<16x1xf32>
    %183 = vector.broadcast %182 : vector<16x1xf32> to vector<16x256xf32>
    %184 = arith.subf %178, %183 : vector<16x256xf32>
    %185 = arith.mulf %184, %184 : vector<16x256xf32>
    %cst_124 = arith.constant dense<0.000000e+00> : vector<16xf32>
    %186 = vector.multi_reduction <add>, %185, %cst_124 [1] : vector<16x256xf32> to vector<16xf32>
    %187 = vector.shape_cast %186 : vector<16xf32> to vector<16x1xf32>
    %cst_125 = arith.constant 2.560000e+02 : f32
    %188 = vector.broadcast %cst_125 : f32 to vector<16x1xf32>
    %189 = arith.divf %187, %188 : vector<16x1xf32>
    %cst_126 = arith.constant 9.99999974E-6 : f32
    %190 = vector.broadcast %cst_126 : f32 to vector<16x1xf32>
    %191 = arith.addf %189, %190 : vector<16x1xf32>
    %192 = math.rsqrt %191 : vector<16x1xf32>
    %193 = vector.broadcast %192 : vector<16x1xf32> to vector<16x256xf32>
    %194 = arith.mulf %184, %193 : vector<16x256xf32>
    %c0_127 = arith.constant 0 : index
    %c0_128 = arith.constant 0 : index
    %195 = vector.load %arg10[%c0_127, %c0_128] : memref<1x256xf32, #tpu.memory_space<vmem>>, vector<1x256xf32>
    %196 = vector.broadcast %195 : vector<1x256xf32> to vector<16x256xf32>
    %197 = arith.mulf %194, %196 : vector<16x256xf32>
    %c0_129 = arith.constant 0 : index
    %c0_130 = arith.constant 0 : index
    %198 = vector.load %arg11[%c0_129, %c0_130] : memref<1x256xf32, #tpu.memory_space<vmem>>, vector<1x256xf32>
    %199 = vector.broadcast %198 : vector<1x256xf32> to vector<16x256xf32>
    %200 = arith.addf %197, %199 : vector<16x256xf32>
    %c0_131 = arith.constant 0 : index
    %c0_132 = arith.constant 0 : index
    %201 = vector.load %arg12[%c0_131, %c0_132] : memref<16x256xf32, #tpu.memory_space<vmem>>, vector<16x256xf32>
    tpu.vector_store %arg12[%c0_131, %c0_132], %200 {strides = array<i32>} : memref<16x256xf32, #tpu.memory_space<vmem>>, vector<16x256xf32>,
    return
  }
}

module attributes {stable_mosaic.version = 11 : i64} {
  func.func @mha_ln_kernel(%arg0: memref<16x256xf32, #tpu.memory_space<vmem>>, %arg1: memref<32x256xf32, #tpu.memory_space<vmem>>, %arg2: memref<4x256x64xf32, #tpu.memory_space<vmem>>, %arg3: memref<4x1x64xf32, #tpu.memory_space<vmem>>, %arg4: memref<4x256x64xf32, #tpu.memory_space<vmem>>, %arg5: memref<4x1x64xf32, #tpu.memory_space<vmem>>, %arg6: memref<4x256x64xf32, #tpu.memory_space<vmem>>, %arg7: memref<4x1x64xf32, #tpu.memory_space<vmem>>, %arg8: memref<4x64x256xf32, #tpu.memory_space<vmem>>, %arg9: memref<1x256xf32, #tpu.memory_space<vmem>>, %arg10: memref<1x256xf32, #tpu.memory_space<vmem>>, %arg11: memref<1x256xf32, #tpu.memory_space<vmem>>, %arg12: memref<16x256xf32, #tpu.memory_space<vmem>>) attributes {dimension_semantics = [], scalar_prefetch = 0 : i64, scratch_operands = 0 : i64, tpu.core_type = #tpu.core_type<tc>} {
    %c0 = arith.constant 0 : index
    %c0_0 = arith.constant 0 : index
    %0 = vector.load %arg0[%c0, %c0_0] : memref<16x256xf32, #tpu.memory_space<vmem>>, vector<16x256xf32>
    %c0_1 = arith.constant 0 : index
    %c0_2 = arith.constant 0 : index
    %1 = vector.load %arg1[%c0_1, %c0_2] : memref<32x256xf32, #tpu.memory_space<vmem>>, vector<32x256xf32>
    %cst = arith.constant 0.000000e+00 : f32
    %2 = vector.broadcast %cst : f32 to vector<16x256xf32>
    %c0_3 = arith.constant 0 : index
    %c0_4 = arith.constant 0 : index
    %c0_5 = arith.constant 0 : index
    %3 = vector.load %arg2[%c0_3, %c0_4, %c0_5] : memref<4x256x64xf32, #tpu.memory_space<vmem>>, vector<1x256x64xf32>
    %4 = vector.shape_cast %3 : vector<1x256x64xf32> to vector<256x64xf32>
    %cst_6 = arith.constant dense<0.000000e+00> : vector<16x64xf32>
    %5 = tpu.matmul %0, %4, %cst_6 {dimension_numbers = #tpu.dot_dimension_numbers<[1], [0], [0], [1], [0, 0, 1, 1], [], []>} : vector<16x256xf32>, vector<256x64xf32>, vector<16x64xf32> -> vector<16x64xf32>
    %c0_7 = arith.constant 0 : index
    %c0_8 = arith.constant 0 : index
    %c0_9 = arith.constant 0 : index
    %6 = vector.load %arg3[%c0_7, %c0_8, %c0_9] : memref<4x1x64xf32, #tpu.memory_space<vmem>>, vector<1x1x64xf32>
    %7 = vector.shape_cast %6 : vector<1x1x64xf32> to vector<1x64xf32>
    %8 = vector.broadcast %7 : vector<1x64xf32> to vector<16x64xf32>
    %9 = arith.addf %5, %8 : vector<16x64xf32>
    %10 = vector.shape_cast %9 : vector<16x64xf32> to vector<2x8x64xf32>
    %c0_10 = arith.constant 0 : index
    %c0_11 = arith.constant 0 : index
    %c0_12 = arith.constant 0 : index
    %11 = vector.load %arg4[%c0_10, %c0_11, %c0_12] : memref<4x256x64xf32, #tpu.memory_space<vmem>>, vector<1x256x64xf32>
    %12 = vector.shape_cast %11 : vector<1x256x64xf32> to vector<256x64xf32>
    %cst_13 = arith.constant dense<0.000000e+00> : vector<32x64xf32>
    %13 = tpu.matmul %1, %12, %cst_13 {dimension_numbers = #tpu.dot_dimension_numbers<[1], [0], [0], [1], [0, 0, 1, 1], [], []>} : vector<32x256xf32>, vector<256x64xf32>, vector<32x64xf32> -> vector<32x64xf32>
    %c0_14 = arith.constant 0 : index
    %c0_15 = arith.constant 0 : index
    %c0_16 = arith.constant 0 : index
    %14 = vector.load %arg5[%c0_14, %c0_15, %c0_16] : memref<4x1x64xf32, #tpu.memory_space<vmem>>, vector<1x1x64xf32>
    %15 = vector.shape_cast %14 : vector<1x1x64xf32> to vector<1x64xf32>
    %16 = vector.broadcast %15 : vector<1x64xf32> to vector<32x64xf32>
    %17 = arith.addf %13, %16 : vector<32x64xf32>
    %18 = vector.shape_cast %17 : vector<32x64xf32> to vector<2x16x64xf32>
    %c0_17 = arith.constant 0 : index
    %c0_18 = arith.constant 0 : index
    %c0_19 = arith.constant 0 : index
    %19 = vector.load %arg6[%c0_17, %c0_18, %c0_19] : memref<4x256x64xf32, #tpu.memory_space<vmem>>, vector<1x256x64xf32>
    %20 = vector.shape_cast %19 : vector<1x256x64xf32> to vector<256x64xf32>
    %cst_20 = arith.constant dense<0.000000e+00> : vector<32x64xf32>
    %21 = tpu.matmul %1, %20, %cst_20 {dimension_numbers = #tpu.dot_dimension_numbers<[1], [0], [0], [1], [0, 0, 1, 1], [], []>} : vector<32x256xf32>, vector<256x64xf32>, vector<32x64xf32> -> vector<32x64xf32>
    %c0_21 = arith.constant 0 : index
    %c0_22 = arith.constant 0 : index
    %c0_23 = arith.constant 0 : index
    %22 = vector.load %arg7[%c0_21, %c0_22, %c0_23] : memref<4x1x64xf32, #tpu.memory_space<vmem>>, vector<1x1x64xf32>
    %23 = vector.shape_cast %22 : vector<1x1x64xf32> to vector<1x64xf32>
    %24 = vector.broadcast %23 : vector<1x64xf32> to vector<32x64xf32>
    %25 = arith.addf %21, %24 : vector<32x64xf32>
    %26 = vector.shape_cast %25 : vector<32x64xf32> to vector<2x16x64xf32>
    "tpu.trace_start"() <{level = 10 : i32, message = "bqe,bke->bqk"}> : () -> ()
    %cst_24 = arith.constant dense<0.000000e+00> : vector<2x8x16xf32>
    %27 = tpu.matmul %10, %18, %cst_24 {dimension_numbers = #tpu.dot_dimension_numbers<[2], [2], [1], [1], [0, 0, 0, 1, 1, 1], [0], [0]>} : vector<2x8x64xf32>, vector<2x16x64xf32>, vector<2x8x16xf32> -> vector<2x8x16xf32>
    "tpu.trace_stop"() : () -> ()
    %cst_25 = arith.constant 1.250000e-01 : f32
    %28 = vector.broadcast %cst_25 : f32 to vector<2x8x16xf32>
    %29 = arith.mulf %27, %28 : vector<2x8x16xf32>
    %cst_26 = arith.constant dense<0xFF800000> : vector<2x8xf32>
    %30 = vector.multi_reduction <maximumf>, %29, %cst_26 [2] : vector<2x8x16xf32> to vector<2x8xf32>
    %31 = vector.shape_cast %30 : vector<2x8xf32> to vector<2x8x1xf32>
    %32 = vector.broadcast %31 : vector<2x8x1xf32> to vector<2x8x16xf32>
    %33 = arith.subf %29, %32 : vector<2x8x16xf32>
    %34 = math.exp %33 : vector<2x8x16xf32>
    %cst_27 = arith.constant dense<0.000000e+00> : vector<2x8xf32>
    %35 = vector.multi_reduction <add>, %34, %cst_27 [2] : vector<2x8x16xf32> to vector<2x8xf32>
    %36 = vector.shape_cast %35 : vector<2x8xf32> to vector<2x8x1xf32>
    %37 = tpu.reciprocal %36 : vector<2x8x1xf32> -> vector<2x8x1xf32>
    %38 = vector.broadcast %37 : vector<2x8x1xf32> to vector<2x8x16xf32>
    %39 = arith.mulf %34, %38 : vector<2x8x16xf32>
    "tpu.trace_start"() <{level = 10 : i32, message = "bqk,bke->bqe"}> : () -> ()
    %cst_28 = arith.constant dense<0.000000e+00> : vector<2x8x64xf32>
    %40 = tpu.matmul %39, %26, %cst_28 {dimension_numbers = #tpu.dot_dimension_numbers<[2], [1], [1], [2], [0, 0, 0, 1, 1, 2], [0], [0]>} : vector<2x8x16xf32>, vector<2x16x64xf32>, vector<2x8x64xf32> -> vector<2x8x64xf32>
    "tpu.trace_stop"() : () -> ()
    %41 = vector.shape_cast %40 : vector<2x8x64xf32> to vector<16x64xf32>
    %c0_29 = arith.constant 0 : index
    %c0_30 = arith.constant 0 : index
    %c0_31 = arith.constant 0 : index
    %42 = vector.load %arg8[%c0_29, %c0_30, %c0_31] : memref<4x64x256xf32, #tpu.memory_space<vmem>>, vector<1x64x256xf32>
    %43 = vector.shape_cast %42 : vector<1x64x256xf32> to vector<64x256xf32>
    %cst_32 = arith.constant dense<0.000000e+00> : vector<16x256xf32>
    %44 = tpu.matmul %41, %43, %cst_32 {dimension_numbers = #tpu.dot_dimension_numbers<[1], [0], [0], [1], [0, 0, 1, 1], [], []>} : vector<16x64xf32>, vector<64x256xf32>, vector<16x256xf32> -> vector<16x256xf32>
    %45 = arith.addf %2, %44 : vector<16x256xf32>
    %c1 = arith.constant 1 : index
    %c0_33 = arith.constant 0 : index
    %c0_34 = arith.constant 0 : index
    %46 = vector.load %arg2[%c1, %c0_33, %c0_34] : memref<4x256x64xf32, #tpu.memory_space<vmem>>, vector<1x256x64xf32>
    %47 = vector.shape_cast %46 : vector<1x256x64xf32> to vector<256x64xf32>
    %cst_35 = arith.constant dense<0.000000e+00> : vector<16x64xf32>
    %48 = tpu.matmul %0, %47, %cst_35 {dimension_numbers = #tpu.dot_dimension_numbers<[1], [0], [0], [1], [0, 0, 1, 1], [], []>} : vector<16x256xf32>, vector<256x64xf32>, vector<16x64xf32> -> vector<16x64xf32>
    %c1_36 = arith.constant 1 : index
    %c0_37 = arith.constant 0 : index
    %c0_38 = arith.constant 0 : index
    %49 = vector.load %arg3[%c1_36, %c0_37, %c0_38] : memref<4x1x64xf32, #tpu.memory_space<vmem>>, vector<1x1x64xf32>
    %50 = vector.shape_cast %49 : vector<1x1x64xf32> to vector<1x64xf32>
    %51 = vector.broadcast %50 : vector<1x64xf32> to vector<16x64xf32>
    %52 = arith.addf %48, %51 : vector<16x64xf32>
    %53 = vector.shape_cast %52 : vector<16x64xf32> to vector<2x8x64xf32>
    %c1_39 = arith.constant 1 : index
    %c0_40 = arith.constant 0 : index
    %c0_41 = arith.constant 0 : index
    %54 = vector.load %arg4[%c1_39, %c0_40, %c0_41] : memref<4x256x64xf32, #tpu.memory_space<vmem>>, vector<1x256x64xf32>
    %55 = vector.shape_cast %54 : vector<1x256x64xf32> to vector<256x64xf32>
    %cst_42 = arith.constant dense<0.000000e+00> : vector<32x64xf32>
    %56 = tpu.matmul %1, %55, %cst_42 {dimension_numbers = #tpu.dot_dimension_numbers<[1], [0], [0], [1], [0, 0, 1, 1], [], []>} : vector<32x256xf32>, vector<256x64xf32>, vector<32x64xf32> -> vector<32x64xf32>
    %c1_43 = arith.constant 1 : index
    %c0_44 = arith.constant 0 : index
    %c0_45 = arith.constant 0 : index
    %57 = vector.load %arg5[%c1_43, %c0_44, %c0_45] : memref<4x1x64xf32, #tpu.memory_space<vmem>>, vector<1x1x64xf32>
    %58 = vector.shape_cast %57 : vector<1x1x64xf32> to vector<1x64xf32>
    %59 = vector.broadcast %58 : vector<1x64xf32> to vector<32x64xf32>
    %60 = arith.addf %56, %59 : vector<32x64xf32>
    %61 = vector.shape_cast %60 : vector<32x64xf32> to vector<2x16x64xf32>
    %c1_46 = arith.constant 1 : index
    %c0_47 = arith.constant 0 : index
    %c0_48 = arith.constant 0 : index
    %62 = vector.load %arg6[%c1_46, %c0_47, %c0_48] : memref<4x256x64xf32, #tpu.memory_space<vmem>>, vector<1x256x64xf32>
    %63 = vector.shape_cast %62 : vector<1x256x64xf32> to vector<256x64xf32>
    %cst_49 = arith.constant dense<0.000000e+00> : vector<32x64xf32>
    %64 = tpu.matmul %1, %63, %cst_49 {dimension_numbers = #tpu.dot_dimension_numbers<[1], [0], [0], [1], [0, 0, 1, 1], [], []>} : vector<32x256xf32>, vector<256x64xf32>, vector<32x64xf32> -> vector<32x64xf32>
    %c1_50 = arith.constant 1 : index
    %c0_51 = arith.constant 0 : index
    %c0_52 = arith.constant 0 : index
    %65 = vector.load %arg7[%c1_50, %c0_51, %c0_52] : memref<4x1x64xf32, #tpu.memory_space<vmem>>, vector<1x1x64xf32>
    %66 = vector.shape_cast %65 : vector<1x1x64xf32> to vector<1x64xf32>
    %67 = vector.broadcast %66 : vector<1x64xf32> to vector<32x64xf32>
    %68 = arith.addf %64, %67 : vector<32x64xf32>
    %69 = vector.shape_cast %68 : vector<32x64xf32> to vector<2x16x64xf32>
    "tpu.trace_start"() <{level = 10 : i32, message = "bqe,bke->bqk"}> : () -> ()
    %cst_53 = arith.constant dense<0.000000e+00> : vector<2x8x16xf32>
    %70 = tpu.matmul %53, %61, %cst_53 {dimension_numbers = #tpu.dot_dimension_numbers<[2], [2], [1], [1], [0, 0, 0, 1, 1, 1], [0], [0]>} : vector<2x8x64xf32>, vector<2x16x64xf32>, vector<2x8x16xf32> -> vector<2x8x16xf32>
    "tpu.trace_stop"() : () -> ()
    %cst_54 = arith.constant 1.250000e-01 : f32
    %71 = vector.broadcast %cst_54 : f32 to vector<2x8x16xf32>
    %72 = arith.mulf %70, %71 : vector<2x8x16xf32>
    %cst_55 = arith.constant dense<0xFF800000> : vector<2x8xf32>
    %73 = vector.multi_reduction <maximumf>, %72, %cst_55 [2] : vector<2x8x16xf32> to vector<2x8xf32>
    %74 = vector.shape_cast %73 : vector<2x8xf32> to vector<2x8x1xf32>
    %75 = vector.broadcast %74 : vector<2x8x1xf32> to vector<2x8x16xf32>
    %76 = arith.subf %72, %75 : vector<2x8x16xf32>
    %77 = math.exp %76 : vector<2x8x16xf32>
    %cst_56 = arith.constant dense<0.000000e+00> : vector<2x8xf32>
    %78 = vector.multi_reduction <add>, %77, %cst_56 [2] : vector<2x8x16xf32> to vector<2x8xf32>
    %79 = vector.shape_cast %78 : vector<2x8xf32> to vector<2x8x1xf32>
    %80 = tpu.reciprocal %79 : vector<2x8x1xf32> -> vector<2x8x1xf32>
    %81 = vector.broadcast %80 : vector<2x8x1xf32> to vector<2x8x16xf32>
    %82 = arith.mulf %77, %81 : vector<2x8x16xf32>
    "tpu.trace_start"() <{level = 10 : i32, message = "bqk,bke->bqe"}> : () -> ()
    %cst_57 = arith.constant dense<0.000000e+00> : vector<2x8x64xf32>
    %83 = tpu.matmul %82, %69, %cst_57 {dimension_numbers = #tpu.dot_dimension_numbers<[2], [1], [1], [2], [0, 0, 0, 1, 1, 2], [0], [0]>} : vector<2x8x16xf32>, vector<2x16x64xf32>, vector<2x8x64xf32> -> vector<2x8x64xf32>
    "tpu.trace_stop"() : () -> ()
    %84 = vector.shape_cast %83 : vector<2x8x64xf32> to vector<16x64xf32>
    %c1_58 = arith.constant 1 : index
    %c0_59 = arith.constant 0 : index
    %c0_60 = arith.constant 0 : index
    %85 = vector.load %arg8[%c1_58, %c0_59, %c0_60] : memref<4x64x256xf32, #tpu.memory_space<vmem>>, vector<1x64x256xf32>
    %86 = vector.shape_cast %85 : vector<1x64x256xf32> to vector<64x256xf32>
    %cst_61 = arith.constant dense<0.000000e+00> : vector<16x256xf32>
    %87 = tpu.matmul %84, %86, %cst_61 {dimension_numbers = #tpu.dot_dimension_numbers<[1], [0], [0], [1], [0, 0, 1, 1], [], []>} : vector<16x64xf32>, vector<64x256xf32>, vector<16x256xf32> -> vector<16x256xf32>
    %88 = arith.addf %45, %87 : vector<16x256xf32>
    %c2 = arith.constant 2 : index
    %c0_62 = arith.constant 0 : index
    %c0_63 = arith.constant 0 : index
    %89 = vector.load %arg2[%c2, %c0_62, %c0_63] : memref<4x256x64xf32, #tpu.memory_space<vmem>>, vector<1x256x64xf32>
    %90 = vector.shape_cast %89 : vector<1x256x64xf32> to vector<256x64xf32>
    %cst_64 = arith.constant dense<0.000000e+00> : vector<16x64xf32>
    %91 = tpu.matmul %0, %90, %cst_64 {dimension_numbers = #tpu.dot_dimension_numbers<[1], [0], [0], [1], [0, 0, 1, 1], [], []>} : vector<16x256xf32>, vector<256x64xf32>, vector<16x64xf32> -> vector<16x64xf32>
    %c2_65 = arith.constant 2 : index
    %c0_66 = arith.constant 0 : index
    %c0_67 = arith.constant 0 : index
    %92 = vector.load %arg3[%c2_65, %c0_66, %c0_67] : memref<4x1x64xf32, #tpu.memory_space<vmem>>, vector<1x1x64xf32>
    %93 = vector.shape_cast %92 : vector<1x1x64xf32> to vector<1x64xf32>
    %94 = vector.broadcast %93 : vector<1x64xf32> to vector<16x64xf32>
    %95 = arith.addf %91, %94 : vector<16x64xf32>
    %96 = vector.shape_cast %95 : vector<16x64xf32> to vector<2x8x64xf32>
    %c2_68 = arith.constant 2 : index
    %c0_69 = arith.constant 0 : index
    %c0_70 = arith.constant 0 : index
    %97 = vector.load %arg4[%c2_68, %c0_69, %c0_70] : memref<4x256x64xf32, #tpu.memory_space<vmem>>, vector<1x256x64xf32>
    %98 = vector.shape_cast %97 : vector<1x256x64xf32> to vector<256x64xf32>
    %cst_71 = arith.constant dense<0.000000e+00> : vector<32x64xf32>
    %99 = tpu.matmul %1, %98, %cst_71 {dimension_numbers = #tpu.dot_dimension_numbers<[1], [0], [0], [1], [0, 0, 1, 1], [], []>} : vector<32x256xf32>, vector<256x64xf32>, vector<32x64xf32> -> vector<32x64xf32>
    %c2_72 = arith.constant 2 : index
    %c0_73 = arith.constant 0 : index
    %c0_74 = arith.constant 0 : index
    %100 = vector.load %arg5[%c2_72, %c0_73, %c0_74] : memref<4x1x64xf32, #tpu.memory_space<vmem>>, vector<1x1x64xf32>
    %101 = vector.shape_cast %100 : vector<1x1x64xf32> to vector<1x64xf32>
    %102 = vector.broadcast %101 : vector<1x64xf32> to vector<32x64xf32>
    %103 = arith.addf %99, %102 : vector<32x64xf32>
    %104 = vector.shape_cast %103 : vector<32x64xf32> to vector<2x16x64xf32>
    %c2_75 = arith.constant 2 : index
    %c0_76 = arith.constant 0 : index
    %c0_77 = arith.constant 0 : index
    %105 = vector.load %arg6[%c2_75, %c0_76, %c0_77] : memref<4x256x64xf32, #tpu.memory_space<vmem>>, vector<1x256x64xf32>
    %106 = vector.shape_cast %105 : vector<1x256x64xf32> to vector<256x64xf32>
    %cst_78 = arith.constant dense<0.000000e+00> : vector<32x64xf32>
    %107 = tpu.matmul %1, %106, %cst_78 {dimension_numbers = #tpu.dot_dimension_numbers<[1], [0], [0], [1], [0, 0, 1, 1], [], []>} : vector<32x256xf32>, vector<256x64xf32>, vector<32x64xf32> -> vector<32x64xf32>
    %c2_79 = arith.constant 2 : index
    %c0_80 = arith.constant 0 : index
    %c0_81 = arith.constant 0 : index
    %108 = vector.load %arg7[%c2_79, %c0_80, %c0_81] : memref<4x1x64xf32, #tpu.memory_space<vmem>>, vector<1x1x64xf32>
    %109 = vector.shape_cast %108 : vector<1x1x64xf32> to vector<1x64xf32>
    %110 = vector.broadcast %109 : vector<1x64xf32> to vector<32x64xf32>
    %111 = arith.addf %107, %110 : vector<32x64xf32>
    %112 = vector.shape_cast %111 : vector<32x64xf32> to vector<2x16x64xf32>
    "tpu.trace_start"() <{level = 10 : i32, message = "bqe,bke->bqk"}> : () -> ()
    %cst_82 = arith.constant dense<0.000000e+00> : vector<2x8x16xf32>
    %113 = tpu.matmul %96, %104, %cst_82 {dimension_numbers = #tpu.dot_dimension_numbers<[2], [2], [1], [1], [0, 0, 0, 1, 1, 1], [0], [0]>} : vector<2x8x64xf32>, vector<2x16x64xf32>, vector<2x8x16xf32> -> vector<2x8x16xf32>
    "tpu.trace_stop"() : () -> ()
    %cst_83 = arith.constant 1.250000e-01 : f32
    %114 = vector.broadcast %cst_83 : f32 to vector<2x8x16xf32>
    %115 = arith.mulf %113, %114 : vector<2x8x16xf32>
    %cst_84 = arith.constant dense<0xFF800000> : vector<2x8xf32>
    %116 = vector.multi_reduction <maximumf>, %115, %cst_84 [2] : vector<2x8x16xf32> to vector<2x8xf32>
    %117 = vector.shape_cast %116 : vector<2x8xf32> to vector<2x8x1xf32>
    %118 = vector.broadcast %117 : vector<2x8x1xf32> to vector<2x8x16xf32>
    %119 = arith.subf %115, %118 : vector<2x8x16xf32>
    %120 = math.exp %119 : vector<2x8x16xf32>
    %cst_85 = arith.constant dense<0.000000e+00> : vector<2x8xf32>
    %121 = vector.multi_reduction <add>, %120, %cst_85 [2] : vector<2x8x16xf32> to vector<2x8xf32>
    %122 = vector.shape_cast %121 : vector<2x8xf32> to vector<2x8x1xf32>
    %123 = tpu.reciprocal %122 : vector<2x8x1xf32> -> vector<2x8x1xf32>
    %124 = vector.broadcast %123 : vector<2x8x1xf32> to vector<2x8x16xf32>
    %125 = arith.mulf %120, %124 : vector<2x8x16xf32>
    "tpu.trace_start"() <{level = 10 : i32, message = "bqk,bke->bqe"}> : () -> ()
    %cst_86 = arith.constant dense<0.000000e+00> : vector<2x8x64xf32>
    %126 = tpu.matmul %125, %112, %cst_86 {dimension_numbers = #tpu.dot_dimension_numbers<[2], [1], [1], [2], [0, 0, 0, 1, 1, 2], [0], [0]>} : vector<2x8x16xf32>, vector<2x16x64xf32>, vector<2x8x64xf32> -> vector<2x8x64xf32>
    "tpu.trace_stop"() : () -> ()
    %127 = vector.shape_cast %126 : vector<2x8x64xf32> to vector<16x64xf32>
    %c2_87 = arith.constant 2 : index
    %c0_88 = arith.constant 0 : index
    %c0_89 = arith.constant 0 : index
    %128 = vector.load %arg8[%c2_87, %c0_88, %c0_89] : memref<4x64x256xf32, #tpu.memory_space<vmem>>, vector<1x64x256xf32>
    %129 = vector.shape_cast %128 : vector<1x64x256xf32> to vector<64x256xf32>
    %cst_90 = arith.constant dense<0.000000e+00> : vector<16x256xf32>
    %130 = tpu.matmul %127, %129, %cst_90 {dimension_numbers = #tpu.dot_dimension_numbers<[1], [0], [0], [1], [0, 0, 1, 1], [], []>} : vector<16x64xf32>, vector<64x256xf32>, vector<16x256xf32> -> vector<16x256xf32>
    %131 = arith.addf %88, %130 : vector<16x256xf32>
    %c3 = arith.constant 3 : index
    %c0_91 = arith.constant 0 : index
    %c0_92 = arith.constant 0 : index
    %132 = vector.load %arg2[%c3, %c0_91, %c0_92] : memref<4x256x64xf32, #tpu.memory_space<vmem>>, vector<1x256x64xf32>
    %133 = vector.shape_cast %132 : vector<1x256x64xf32> to vector<256x64xf32>
    %cst_93 = arith.constant dense<0.000000e+00> : vector<16x64xf32>
    %134 = tpu.matmul %0, %133, %cst_93 {dimension_numbers = #tpu.dot_dimension_numbers<[1], [0], [0], [1], [0, 0, 1, 1], [], []>} : vector<16x256xf32>, vector<256x64xf32>, vector<16x64xf32> -> vector<16x64xf32>
    %c3_94 = arith.constant 3 : index
    %c0_95 = arith.constant 0 : index
    %c0_96 = arith.constant 0 : index
    %135 = vector.load %arg3[%c3_94, %c0_95, %c0_96] : memref<4x1x64xf32, #tpu.memory_space<vmem>>, vector<1x1x64xf32>
    %136 = vector.shape_cast %135 : vector<1x1x64xf32> to vector<1x64xf32>
    %137 = vector.broadcast %136 : vector<1x64xf32> to vector<16x64xf32>
    %138 = arith.addf %134, %137 : vector<16x64xf32>
    %139 = vector.shape_cast %138 : vector<16x64xf32> to vector<2x8x64xf32>
    %c3_97 = arith.constant 3 : index
    %c0_98 = arith.constant 0 : index
    %c0_99 = arith.constant 0 : index
    %140 = vector.load %arg4[%c3_97, %c0_98, %c0_99] : memref<4x256x64xf32, #tpu.memory_space<vmem>>, vector<1x256x64xf32>
    %141 = vector.shape_cast %140 : vector<1x256x64xf32> to vector<256x64xf32>
    %cst_100 = arith.constant dense<0.000000e+00> : vector<32x64xf32>
    %142 = tpu.matmul %1, %141, %cst_100 {dimension_numbers = #tpu.dot_dimension_numbers<[1], [0], [0], [1], [0, 0, 1, 1], [], []>} : vector<32x256xf32>, vector<256x64xf32>, vector<32x64xf32> -> vector<32x64xf32>
    %c3_101 = arith.constant 3 : index
    %c0_102 = arith.constant 0 : index
    %c0_103 = arith.constant 0 : index
    %143 = vector.load %arg5[%c3_101, %c0_102, %c0_103] : memref<4x1x64xf32, #tpu.memory_space<vmem>>, vector<1x1x64xf32>
    %144 = vector.shape_cast %143 : vector<1x1x64xf32> to vector<1x64xf32>
    %145 = vector.broadcast %144 : vector<1x64xf32> to vector<32x64xf32>
    %146 = arith.addf %142, %145 : vector<32x64xf32>
    %147 = vector.shape_cast %146 : vector<32x64xf32> to vector<2x16x64xf32>
    %c3_104 = arith.constant 3 : index
    %c0_105 = arith.constant 0 : index
    %c0_106 = arith.constant 0 : index
    %148 = vector.load %arg6[%c3_104, %c0_105, %c0_106] : memref<4x256x64xf32, #tpu.memory_space<vmem>>, vector<1x256x64xf32>
    %149 = vector.shape_cast %148 : vector<1x256x64xf32> to vector<256x64xf32>
    %cst_107 = arith.constant dense<0.000000e+00> : vector<32x64xf32>
    %150 = tpu.matmul %1, %149, %cst_107 {dimension_numbers = #tpu.dot_dimension_numbers<[1], [0], [0], [1], [0, 0, 1, 1], [], []>} : vector<32x256xf32>, vector<256x64xf32>, vector<32x64xf32> -> vector<32x64xf32>
    %c3_108 = arith.constant 3 : index
    %c0_109 = arith.constant 0 : index
    %c0_110 = arith.constant 0 : index
    %151 = vector.load %arg7[%c3_108, %c0_109, %c0_110] : memref<4x1x64xf32, #tpu.memory_space<vmem>>, vector<1x1x64xf32>
    %152 = vector.shape_cast %151 : vector<1x1x64xf32> to vector<1x64xf32>
    %153 = vector.broadcast %152 : vector<1x64xf32> to vector<32x64xf32>
    %154 = arith.addf %150, %153 : vector<32x64xf32>
    %155 = vector.shape_cast %154 : vector<32x64xf32> to vector<2x16x64xf32>
    "tpu.trace_start"() <{level = 10 : i32, message = "bqe,bke->bqk"}> : () -> ()
    %cst_111 = arith.constant dense<0.000000e+00> : vector<2x8x16xf32>
    %156 = tpu.matmul %139, %147, %cst_111 {dimension_numbers = #tpu.dot_dimension_numbers<[2], [2], [1], [1], [0, 0, 0, 1, 1, 1], [0], [0]>} : vector<2x8x64xf32>, vector<2x16x64xf32>, vector<2x8x16xf32> -> vector<2x8x16xf32>
    "tpu.trace_stop"() : () -> ()
    %cst_112 = arith.constant 1.250000e-01 : f32
    %157 = vector.broadcast %cst_112 : f32 to vector<2x8x16xf32>
    %158 = arith.mulf %156, %157 : vector<2x8x16xf32>
    %cst_113 = arith.constant dense<0xFF800000> : vector<2x8xf32>
    %159 = vector.multi_reduction <maximumf>, %158, %cst_113 [2] : vector<2x8x16xf32> to vector<2x8xf32>
    %160 = vector.shape_cast %159 : vector<2x8xf32> to vector<2x8x1xf32>
    %161 = vector.broadcast %160 : vector<2x8x1xf32> to vector<2x8x16xf32>
    %162 = arith.subf %158, %161 : vector<2x8x16xf32>
    %163 = math.exp %162 : vector<2x8x16xf32>
    %cst_114 = arith.constant dense<0.000000e+00> : vector<2x8xf32>
    %164 = vector.multi_reduction <add>, %163, %cst_114 [2] : vector<2x8x16xf32> to vector<2x8xf32>
    %165 = vector.shape_cast %164 : vector<2x8xf32> to vector<2x8x1xf32>
    %166 = tpu.reciprocal %165 : vector<2x8x1xf32> -> vector<2x8x1xf32>
    %167 = vector.broadcast %166 : vector<2x8x1xf32> to vector<2x8x16xf32>
    %168 = arith.mulf %163, %167 : vector<2x8x16xf32>
    "tpu.trace_start"() <{level = 10 : i32, message = "bqk,bke->bqe"}> : () -> ()
    %cst_115 = arith.constant dense<0.000000e+00> : vector<2x8x64xf32>
    %169 = tpu.matmul %168, %155, %cst_115 {dimension_numbers = #tpu.dot_dimension_numbers<[2], [1], [1], [2], [0, 0, 0, 1, 1, 2], [0], [0]>} : vector<2x8x16xf32>, vector<2x16x64xf32>, vector<2x8x64xf32> -> vector<2x8x64xf32>
    "tpu.trace_stop"() : () -> ()
    %170 = vector.shape_cast %169 : vector<2x8x64xf32> to vector<16x64xf32>
    %c3_116 = arith.constant 3 : index
    %c0_117 = arith.constant 0 : index
    %c0_118 = arith.constant 0 : index
    %171 = vector.load %arg8[%c3_116, %c0_117, %c0_118] : memref<4x64x256xf32, #tpu.memory_space<vmem>>, vector<1x64x256xf32>
    %172 = vector.shape_cast %171 : vector<1x64x256xf32> to vector<64x256xf32>
    %cst_119 = arith.constant dense<0.000000e+00> : vector<16x256xf32>
    %173 = tpu.matmul %170, %172, %cst_119 {dimension_numbers = #tpu.dot_dimension_numbers<[1], [0], [0], [1], [0, 0, 1, 1], [], []>} : vector<16x64xf32>, vector<64x256xf32>, vector<16x256xf32> -> vector<16x256xf32>
    %174 = arith.addf %131, %173 : vector<16x256xf32>
    %175 = arith.addf %0, %174 : vector<16x256xf32>
    %c0_120 = arith.constant 0 : index
    %c0_121 = arith.constant 0 : index
    %176 = vector.load %arg9[%c0_120, %c0_121] : memref<1x256xf32, #tpu.memory_space<vmem>>, vector<1x256xf32>
    %177 = vector.broadcast %176 : vector<1x256xf32> to vector<16x256xf32>
    %178 = arith.addf %175, %177 : vector<16x256xf32>
    %cst_122 = arith.constant dense<0.000000e+00> : vector<16xf32>
    %179 = vector.multi_reduction <add>, %178, %cst_122 [1] : vector<16x256xf32> to vector<16xf32>
    %180 = vector.shape_cast %179 : vector<16xf32> to vector<16x1xf32>
    %cst_123 = arith.constant 2.560000e+02 : f32
    %181 = vector.broadcast %cst_123 : f32 to vector<16x1xf32>
    %182 = arith.divf %180, %181 : vector<16x1xf32>
    %183 = vector.broadcast %182 : vector<16x1xf32> to vector<16x256xf32>
    %184 = arith.subf %178, %183 : vector<16x256xf32>
    %185 = arith.mulf %184, %184 : vector<16x256xf32>
    %cst_124 = arith.constant dense<0.000000e+00> : vector<16xf32>
    %186 = vector.multi_reduction <add>, %185, %cst_124 [1] : vector<16x256xf32> to vector<16xf32>
    %187 = vector.shape_cast %186 : vector<16xf32> to vector<16x1xf32>
    %cst_125 = arith.constant 2.560000e+02 : f32
    %188 = vector.broadcast %cst_125 : f32 to vector<16x1xf32>
    %189 = arith.divf %187, %188 : vector<16x1xf32>
    %cst_126 = arith.constant 9.99999974E-6 : f32
    %190 = vector.broadcast %cst_126 : f32 to vector<16x1xf32>
    %191 = arith.addf %189, %190 : vector<16x1xf32>
    %192 = math.rsqrt %191 : vector<16x1xf32>
    %193 = vector.broadcast %192 : vector<16x1xf32> to vector<16x256xf32>
    %194 = arith.mulf %184, %193 : vector<16x256xf32>
    %c0_127 = arith.constant 0 : index
    %c0_128 = arith.constant 0 : index
    %195 = vector.load %arg10[%c0_127, %c0_128] : memref<1x256xf32, #tpu.memory_space<vmem>>, vector<1x256xf32>
    %196 = vector.broadcast %195 : vector<1x256xf32> to vector<16x256xf32>
    %197 = arith.mulf %194, %196 : vector<16x256xf32>
    %c0_129 = arith.constant 0 : index
    %c0_130 = arith.constant 0 : index
    %198 = vector.load %arg11[%c0_129, %c0_130] : memref<1x256xf32, #tpu.memory_space<vmem>>, vector<1x256xf32>
    %199 = vector.broadcast %198 : vector<1x256xf32> to vector<16x256xf32>
    %200 = arith.addf %197, %199 : vector<16x256xf32>
    %c0_131 = arith.constant 0 : index
    %c0_132 = arith.constant 0 : index
    %201 = vector.load %arg12[%c0_131, %c0_132] : memref<16x256xf32, #tpu.memory_space<vmem>>, vector<16x256xf32>
    tpu.vector_store %arg12[%c0_131, %c0_132], %200 {strides = array<i32>} : memref<16x256xf32, #tpu.memory_space<vmem>>, vector<16x256xf32>,
    return
  }
}

module attributes {stable_mosaic.version = 11 : i64} {
  func.func @heads_kernel(%arg0: i32, %arg1: memref<16x256xf32, #tpu.memory_space<vmem>>, %arg2: memref<256x80xf32, #tpu.memory_space<vmem>>, %arg3: memref<1x80xf32, #tpu.memory_space<vmem>>, %arg4: memref<256x80xf32, #tpu.memory_space<vmem>>, %arg5: memref<1x80xf32, #tpu.memory_space<vmem>>, %arg6: memref<16x80xf32, #tpu.memory_space<vmem>>, %arg7: memref<16x80xf32, #tpu.memory_space<vmem>>) attributes {dimension_semantics = [#tpu.dimension_semantics<parallel>], iteration_bounds = array<i64: 1>, scalar_prefetch = 0 : i64, scratch_operands = 0 : i64, tpu.core_type = #tpu.core_type<tc>, window_params = [{transform_indices = @transform_0, window_bounds = array<i64: 16, 256>}, {pipeline_mode = #tpu.pipeline_mode<synchronous>, transform_indices = @transform_1, window_bounds = array<i64: 256, 80>}, {pipeline_mode = #tpu.pipeline_mode<synchronous>, transform_indices = @transform_2, window_bounds = array<i64: 1, 80>}, {pipeline_mode = #tpu.pipeline_mode<synchronous>, transform_indices = @transform_3, window_bounds = array<i64: 256, 80>}, {pipeline_mode = #tpu.pipeline_mode<synchronous>, transform_indices = @transform_4, window_bounds = array<i64: 1, 80>}, {transform_indices = @transform_5, window_bounds = array<i64: 16, 80>}, {transform_indices = @transform_6, window_bounds = array<i64: 16, 80>}]} {
    %c0 = arith.constant 0 : index
    %c0_0 = arith.constant 0 : index
    %0 = vector.load %arg1[%c0, %c0_0] : memref<16x256xf32, #tpu.memory_space<vmem>>, vector<16x256xf32>
    %c0_1 = arith.constant 0 : index
    %c0_2 = arith.constant 0 : index
    %1 = vector.load %arg2[%c0_1, %c0_2] : memref<256x80xf32, #tpu.memory_space<vmem>>, vector<256x80xf32>
    %cst = arith.constant dense<0.000000e+00> : vector<16x80xf32>
    %2 = tpu.matmul %0, %1, %cst {dimension_numbers = #tpu.dot_dimension_numbers<[1], [0], [0], [1], [0, 0, 1, 1], [], []>} : vector<16x256xf32>, vector<256x80xf32>, vector<16x80xf32> -> vector<16x80xf32>
    %c0_3 = arith.constant 0 : index
    %c0_4 = arith.constant 0 : index
    %3 = vector.load %arg3[%c0_3, %c0_4] : memref<1x80xf32, #tpu.memory_space<vmem>>, vector<1x80xf32>
    %4 = vector.broadcast %3 : vector<1x80xf32> to vector<16x80xf32>
    %5 = arith.addf %2, %4 : vector<16x80xf32>
    %c0_5 = arith.constant 0 : index
    %c0_6 = arith.constant 0 : index
    %6 = vector.load %arg6[%c0_5, %c0_6] : memref<16x80xf32, #tpu.memory_space<vmem>>, vector<16x80xf32>
    tpu.vector_store %arg6[%c0_5, %c0_6], %5 {strides = array<i32>} : memref<16x80xf32, #tpu.memory_space<vmem>>, vector<16x80xf32>,
    %c0_7 = arith.constant 0 : index
    %c0_8 = arith.constant 0 : index
    %7 = vector.load %arg4[%c0_7, %c0_8] : memref<256x80xf32, #tpu.memory_space<vmem>>, vector<256x80xf32>
    %cst_9 = arith.constant dense<0.000000e+00> : vector<16x80xf32>
    %8 = tpu.matmul %0, %7, %cst_9 {dimension_numbers = #tpu.dot_dimension_numbers<[1], [0], [0], [1], [0, 0, 1, 1], [], []>} : vector<16x256xf32>, vector<256x80xf32>, vector<16x80xf32> -> vector<16x80xf32>
    %c0_10 = arith.constant 0 : index
    %c0_11 = arith.constant 0 : index
    %9 = vector.load %arg5[%c0_10, %c0_11] : memref<1x80xf32, #tpu.memory_space<vmem>>, vector<1x80xf32>
    %10 = vector.broadcast %9 : vector<1x80xf32> to vector<16x80xf32>
    %11 = arith.addf %8, %10 : vector<16x80xf32>
    %c0_12 = arith.constant 0 : index
    %c0_13 = arith.constant 0 : index
    %12 = vector.load %arg7[%c0_12, %c0_13] : memref<16x80xf32, #tpu.memory_space<vmem>>, vector<16x80xf32>
    tpu.vector_store %arg7[%c0_12, %c0_13], %11 {strides = array<i32>} : memref<16x80xf32, #tpu.memory_space<vmem>>, vector<16x80xf32>,
    return
  }
  func.func @transform_0(%arg0: i32) -> (i32, i32) {
    %c0_i32 = arith.constant 0 : i32
    %c0_i32_0 = arith.constant 0 : i32
    return %arg0, %c0_i32 : i32, i32
  }
  func.func @transform_1(%arg0: i32) -> (i32, i32) {
    %c0_i32 = arith.constant 0 : i32
    %c0_i32_0 = arith.constant 0 : i32
    %c0_i32_1 = arith.constant 0 : i32
    return %c0_i32, %c0_i32_0 : i32, i32
  }
  func.func @transform_2(%arg0: i32) -> (i32, i32) {
    %c0_i32 = arith.constant 0 : i32
    %c0_i32_0 = arith.constant 0 : i32
    %c0_i32_1 = arith.constant 0 : i32
    return %c0_i32, %c0_i32_0 : i32, i32
  }
  func.func @transform_3(%arg0: i32) -> (i32, i32) {
    %c0_i32 = arith.constant 0 : i32
    %c0_i32_0 = arith.constant 0 : i32
    %c0_i32_1 = arith.constant 0 : i32
    return %c0_i32, %c0_i32_0 : i32, i32
  }
  func.func @transform_4(%arg0: i32) -> (i32, i32) {
    %c0_i32 = arith.constant 0 : i32
    %c0_i32_0 = arith.constant 0 : i32
    %c0_i32_1 = arith.constant 0 : i32
    return %c0_i32, %c0_i32_0 : i32, i32
  }
  func.func @transform_5(%arg0: i32) -> (i32, i32) {
    %c0_i32 = arith.constant 0 : i32
    %c0_i32_0 = arith.constant 0 : i32
    return %arg0, %c0_i32 : i32, i32
  }
  func.func @transform_6(%arg0: i32) -> (i32, i32) {
    %c0_i32 = arith.constant 0 : i32
    %c0_i32_0 = arith.constant 0 : i32
    return %arg0, %c0_i32 : i32, i32
  }
}

</mosaic_0001>

<llo_original>
// kernel: multistream_decoder_forward.8
$region0: #{multistream_decoder_forward.8}
  #allocation0 [shape = 'u32[]', space=smem, size = 0x4, offset = 0x4, fixed_abs, tag = 'smem constant byte address 0x4 - core index']
  #allocation1 [shape = 'u32[144,128]{1,0:T(1,128)}', space=vmem, size = 0x12000, scoped, tag = 'internal scratch']
  %s0 = inlined_call_operand.vmem [shape: f32[2,8,256], index: 0, kind: input, shape index: {}]
  %s1 = inlined_call_operand.vmem [shape: f32[8,256], index: 1, kind: input, shape index: {}]
  %s2 = inlined_call_operand.vmem [shape: f32[2,8,256], index: 2, kind: output, shape index: {}]
  %s3 = sld [smem:[#allocation0]]
  $region18: #{multistream_decoder_forward.8} parent=0
    _
  %s5 = ssub.s32 1, %s3
  %s6 = scalar_select 0, %s5, %s3
  // Predicated region
  $region2: #{multistream_decoder_forward.8} parent=0 // pred_check
    _
  $region3: #{multistream_decoder_forward.8} parent=0 // pred_check_branch
    %8 = sbr.rel (0) target = $region5
  $region4: #{multistream_decoder_forward.8} parent=0 // pred_region
    _
  $region5: #{multistream_decoder_forward.8} parent=0 // pred_fallthru
    _
  // Predicated region
  $region6: #{multistream_decoder_forward.8} parent=0 // pred_check
    _
  $region7: #{multistream_decoder_forward.8} parent=0 // pred_check_branch
    %10 = sbr.rel (0) target = $region9
  $region8: #{multistream_decoder_forward.8} parent=0 // pred_region
    _
  $region9: #{multistream_decoder_forward.8} parent=0 // pred_fallthru
    _
  %v11 = vld [vmem:[%s0] sm:$0xff]
  %v12 = vld [vmem:[%s0 + $0x8] sm:$0xff]
  %v13 = vld [vmem:[%s0 + $0x10] sm:$0xff]
  %v14 = vld [vmem:[%s0 + $0x18] sm:$0xff]
  %v15 = vld [vmem:[%s1] sm:$0xff]
  %v16 = vld [vmem:[%s1 + $0x8] sm:$0xff]
  %v17 = vadd.f32 %v11, %v15
  %v18 = vadd.f32 %v12, %v16
  %v19 = vadd.f32 %v13, %v15
  %v20 = vadd.f32 %v14, %v16
  %21 = vst [vmem:[%s2] sm:$0xff] %v17
  %22 = vst [vmem:[%s2 + $0x8] sm:$0xff] %v18
  %23 = vst [vmem:[%s2 + $0x10] sm:$0xff] %v19
  %24 = vst [vmem:[%s2 + $0x18] sm:$0xff] %v20
  // Predicated region
  $region10: #{multistream_decoder_forward.8} parent=0 // pred_check
    _
  $region11: #{multistream_decoder_forward.8} parent=0 // pred_check_branch
    %26 = sbr.rel (0) target = $region13
  $region12: #{multistream_decoder_forward.8} parent=0 // pred_region
    _
  $region13: #{multistream_decoder_forward.8} parent=0 // pred_fallthru
    _
  // Predicated region
  $region14: #{multistream_decoder_forward.8} parent=0 // pred_check
    _
  $region15: #{multistream_decoder_forward.8} parent=0 // pred_check_branch
    %28 = sbr.rel (0) target = $region17
  $region16: #{multistream_decoder_forward.8} parent=0 // pred_region
    _
  $region17: #{multistream_decoder_forward.8} parent=0 // pred_fallthru
    _

// kernel: multistream_decoder_forward.15
$region0: #{multistream_decoder_forward.15}
  #allocation0 [shape = 'u32[]', space=smem, size = 0x4, offset = 0x4, fixed_abs, tag = 'smem constant byte address 0x4 - core index']
  #allocation1 [shape = 'u32[144,128]{1,0:T(1,128)}', space=vmem, size = 0x12000, scoped, tag = 'internal scratch']
  %s0 = inlined_call_operand.vmem [shape: f32[16,256], index: 0, kind: input, shape index: {}]
  %s1 = inlined_call_operand.vmem [shape: f32[256,80], index: 1, kind: input, shape index: {}]
  %s2 = inlined_call_operand.vmem [shape: f32[1,80], index: 2, kind: input, shape index: {}]
  %s3 = inlined_call_operand.vmem [shape: f32[256,80], index: 3, kind: input, shape index: {}]
  %s4 = inlined_call_operand.vmem [shape: f32[1,80], index: 4, kind: input, shape index: {}]
  %s5 = inlined_call_operand.vmem [shape: f32[16,80], index: 5, kind: output, shape index: {0}]
  %s6 = inlined_call_operand.vmem [shape: f32[16,80], index: 6, kind: output, shape index: {1}]
  %7 = xla_tuple %s5, %s6
  %s8 = sld [smem:[#allocation0]]
  $region38: #{multistream_decoder_forward.15} parent=0
    _
  %s10 = ssub.s32 1, %s8
  %s11 = scalar_select 0, %s10, %s8
  // Predicated region
  $region2: #{multistream_decoder_forward.15} parent=0 // pred_check
    _
  $region3: #{multistream_decoder_forward.15} parent=0 // pred_check_branch
    %13 = sbr.rel (0) target = $region5
  $region4: #{multistream_decoder_forward.15} parent=0 // pred_region
    _
  $region5: #{multistream_decoder_forward.15} parent=0 // pred_fallthru
    _
  // Predicated region
  $region6: #{multistream_decoder_forward.15} parent=0 // pred_check
    _
  $region7: #{multistream_decoder_forward.15} parent=0 // pred_check_branch
    %15 = sbr.rel (0) target = $region9
  $region8: #{multistream_decoder_forward.15} parent=0 // pred_region
    _
  $region9: #{multistream_decoder_forward.15} parent=0 // pred_fallthru
    _
  // Predicated region
  $region10: #{multistream_decoder_forward.15} parent=0 // pred_check
    _
  $region11: #{multistream_decoder_forward.15} parent=0 // pred_check_branch
    %17 = sbr.rel (0) target = $region13
  $region12: #{multistream_decoder_forward.15} parent=0 // pred_region
    _
  $region13: #{multistream_decoder_forward.15} parent=0 // pred_fallthru
    _
  // Predicated region
  $region14: #{multistream_decoder_forward.15} parent=0 // pred_check
    _
  $region15: #{multistream_decoder_forward.15} parent=0 // pred_check_branch
    %19 = sbr.rel (0) target = $region17
  $region16: #{multistream_decoder_forward.15} parent=0 // pred_region
    _
  $region17: #{multistream_decoder_forward.15} parent=0 // pred_fallthru
    _
  // Predicated region
  $region18: #{multistream_decoder_forward.15} parent=0 // pred_check
    _
  $region19: #{multistream_decoder_forward.15} parent=0 // pred_check_branch
    %21 = sbr.rel (0) target = $region21
  $region20: #{multistream_decoder_forward.15} parent=0 // pred_region
    _
  $region21: #{multistream_decoder_forward.15} parent=0 // pred_fallthru
    _
  %v22 = vld [vmem:[%s0] sm:$0xff]
  %v23 = vld [vmem:[%s0 + $0x8] sm:$0xff]
  %v24 = vld [vmem:[%s0 + $0x10] sm:$0xff]
  %v25 = vld [vmem:[%s0 + $0x18] sm:$0xff]
  %v26 = vld [vmem:[%s1] sm:$0xff]
  %v27 = vld [vmem:[%s1 + $0x8] sm:$0xff]
  %v28 = vld [vmem:[%s1 + $0x10] sm:$0xff]
  %v29 = vld [vmem:[%s1 + $0x18] sm:$0xff]
  %v30 = vld [vmem:[%s1 + $0x20] sm:$0xff]
  %v31 = vld [vmem:[%s1 + $0x28] sm:$0xff]
  %v32 = vld [vmem:[%s1 + $0x30] sm:$0xff]
  %v33 = vld [vmem:[%s1 + $0x38] sm:$0xff]
  %v34 = vld [vmem:[%s1 + $0x40] sm:$0xff]
  %v35 = vld [vmem:[%s1 + $0x48] sm:$0xff]
  %v36 = vld [vmem:[%s1 + $0x50] sm:$0xff]
  %v37 = vld [vmem:[%s1 + $0x58] sm:$0xff]
  %v38 = vld [vmem:[%s1 + $0x60] sm:$0xff]
  %v39 = vld [vmem:[%s1 + $0x68] sm:$0xff]
  %v40 = vld [vmem:[%s1 + $0x70] sm:$0xff]
  %v41 = vld [vmem:[%s1 + $0x78] sm:$0xff]
  %v42 = vld [vmem:[%s1 + $0x80] sm:$0xff]
  %v43 = vld [vmem:[%s1 + $0x88] sm:$0xff]
  %v44 = vld [vmem:[%s1 + $0x90] sm:$0xff]
  %v45 = vld [vmem:[%s1 + $0x98] sm:$0xff]
  %v46 = vld [vmem:[%s1 + $0xa0] sm:$0xff]
  %v47 = vld [vmem:[%s1 + $0xa8] sm:$0xff]
  %v48 = vld [vmem:[%s1 + $0xb0] sm:$0xff]
  %v49 = vld [vmem:[%s1 + $0xb8] sm:$0xff]
  %v50 = vld [vmem:[%s1 + $0xc0] sm:$0xff]
  %v51 = vld [vmem:[%s1 + $0xc8] sm:$0xff]
  %v52 = vld [vmem:[%s1 + $0xd0] sm:$0xff]
  %v53 = vld [vmem:[%s1 + $0xd8] sm:$0xff]
  %v54 = vld [vmem:[%s1 + $0xe0] sm:$0xff]
  %v55 = vld [vmem:[%s1 + $0xe8] sm:$0xff]
  %v56 = vld [vmem:[%s1 + $0xf0] sm:$0xff]
  %v57 = vld [vmem:[%s1 + $0xf8] sm:$0xff]
  %v58 = vld [vmem:[%s2] sm:$0x1]
  %v60 = vlaneseq
  %v61 = vshrl.u32 %v60, 7
  %v62 = vsub.s32 0, %v61
  %v63 = vrot.slane %v58, %v62
  %65 = vmatprep.subr.mxu0 0.0
  %66 = vmatpush1.msra.mxu0 %v26
  %67 = vmatprep.subr.mxu0 0.0
  %68 = vmatpush1.msra.mxu0 %v27
  %69 = vmatprep.subr.mxu0 0.0
  %70 = vmatpush1.msra.mxu0 %v28
  %71 = vmatprep.subr.mxu0 0.0
  %72 = vmatpush1.msra.mxu0 %v29
  %73 = vmatprep.subr.mxu0 0.0
  %74 = vmatpush1.msra.mxu0 %v30
  %75 = vmatprep.subr.mxu0 0.0
  %76 = vmatpush1.msra.mxu0 %v31
  %77 = vmatprep.subr.mxu0 0.0
  %78 = vmatpush1.msra.mxu0 %v32
  %79 = vmatprep.subr.mxu0 0.0
  %80 = vmatpush1.msra.mxu0 %v33
  %81 = vmatprep.subr.mxu0 0.0
  %82 = vmatpush1.msra.mxu0 %v34
  %83 = vmatprep.subr.mxu0 0.0
  %84 = vmatpush1.msra.mxu0 %v35
  %85 = vmatprep.subr.mxu0 0.0
  %86 = vmatpush1.msra.mxu0 %v36
  %87 = vmatprep.subr.mxu0 0.0
  %88 = vmatpush1.msra.mxu0 %v37
  %89 = vmatprep.subr.mxu0 0.0
  %90 = vmatpush1.msra.mxu0 %v38
  %91 = vmatprep.subr.mxu0 0.0
  %92 = vmatpush1.msra.mxu0 %v39
  %93 = vmatprep.subr.mxu0 0.0
  %94 = vmatpush1.msra.mxu0 %v40
  %95 = vmatprep.subr.mxu0 0.0
  %96 = vmatpush1.msra.mxu0 %v41
  %97 = vmatprep.subr.mxu0 0.0
  %98 = vmatpush1.msra.mxu0 %v42
  %99 = vmatprep.subr.mxu0 0.0
  %100 = vmatpush1.msra.mxu0 %v43
  %101 = vmatprep.subr.mxu0 0.0
  %102 = vmatpush1.msra.mxu0 %v44
  %103 = vmatprep.subr.mxu0 0.0
  %104 = vmatpush1.msra.mxu0 %v45
  %105 = vmatprep.subr.mxu0 0.0
  %106 = vmatpush1.msra.mxu0 %v46
  %107 = vmatprep.subr.mxu0 0.0
  %108 = vmatpush1.msra.mxu0 %v47
  %109 = vmatprep.subr.mxu0 0.0
  %110 = vmatpush1.msra.mxu0 %v48
  %111 = vmatprep.subr.mxu0 0.0
  %112 = vmatpush1.msra.mxu0 %v49
  %113 = vmatprep.subr.mxu0 0.0
  %114 = vmatpush1.msra.mxu0 %v50
  %115 = vmatprep.subr.mxu0 0.0
  %116 = vmatpush1.msra.mxu0 %v51
  %117 = vmatprep.subr.mxu0 0.0
  %118 = vmatpush1.msra.mxu0 %v52
  %119 = vmatprep.subr.mxu0 0.0
  %120 = vmatpush1.msra.mxu0 %v53
  %121 = vmatprep.subr.mxu0 0.0
  %122 = vmatpush1.msra.mxu0 %v54
  %123 = vmatprep.subr.mxu0 0.0
  %124 = vmatpush1.msra.mxu0 %v55
  %125 = vmatprep.subr.mxu0 0.0
  %126 = vmatpush1.msra.mxu0 %v56
  %127 = vmatprep.subr.mxu0 0.0
  %128 = vmatpush1.msra.mxu0 %v57
  %129 = vmatprep.mubr.f32.mxu0 %v23
  %130 = vmatmul.mubr.f32.gmra.mrb[0].mxu0 %v22
  %v131 = vpop.f32.mrb[0].mxu0
  %v132 = vadd.f32 %v63, %v131
  %v133 = vpop.f32.mrb[0].mxu0
  %134 = vmatprep.mubr.f32.mxu0 %v25
  %135 = vmatmul.mubr.f32.gmra.mrb[0].mxu0 %v24
  %v136 = vpop.f32.mrb[0].mxu0
  %v137 = vadd.f32 %v63, %v136
  %v138 = vpop.f32.mrb[0].mxu0
  %139 = vdwg.mxu0
  %vm140 = vcmask 654336
  %141 = vst.msk [vmem:[%s5] sm:$0xff] %vm140, %v132
  %142 = vst.msk [vmem:[%s5 + $0x8] sm:$0xff] %vm140, %v137
  %v143 = vld [vmem:[%s3] sm:$0xff]
  %v144 = vld [vmem:[%s3 + $0x8] sm:$0xff]
  %v145 = vld [vmem:[%s3 + $0x10] sm:$0xff]
  %v146 = vld [vmem:[%s3 + $0x18] sm:$0xff]
  %v147 = vld [vmem:[%s3 + $0x20] sm:$0xff]
  %v148 = vld [vmem:[%s3 + $0x28] sm:$0xff]
  %v149 = vld [vmem:[%s3 + $0x30] sm:$0xff]
  %v150 = vld [vmem:[%s3 + $0x38] sm:$0xff]
  %v151 = vld [vmem:[%s3 + $0x40] sm:$0xff]
  %v152 = vld [vmem:[%s3 + $0x48] sm:$0xff]
  %v153 = vld [vmem:[%s3 + $0x50] sm:$0xff]
  %v154 = vld [vmem:[%s3 + $0x58] sm:$0xff]
  %v155 = vld [vmem:[%s3 + $0x60] sm:$0xff]
  %v156 = vld [vmem:[%s3 + $0x68] sm:$0xff]
  %v157 = vld [vmem:[%s3 + $0x70] sm:$0xff]
  %v158 = vld [vmem:[%s3 + $0x78] sm:$0xff]
  %v159 = vld [vmem:[%s3 + $0x80] sm:$0xff]
  %v160 = vld [vmem:[%s3 + $0x88] sm:$0xff]
  %v161 = vld [vmem:[%s3 + $0x90] sm:$0xff]
  %v162 = vld [vmem:[%s3 + $0x98] sm:$0xff]
  %v163 = vld [vmem:[%s3 + $0xa0] sm:$0xff]
  %v164 = vld [vmem:[%s3 + $0xa8] sm:$0xff]
  %v165 = vld [vmem:[%s3 + $0xb0] sm:$0xff]
  %v166 = vld [vmem:[%s3 + $0xb8] sm:$0xff]
  %v167 = vld [vmem:[%s3 + $0xc0] sm:$0xff]
  %v168 = vld [vmem:[%s3 + $0xc8] sm:$0xff]
  %v169 = vld [vmem:[%s3 + $0xd0] sm:$0xff]
  %v170 = vld [vmem:[%s3 + $0xd8] sm:$0xff]
  %v171 = vld [vmem:[%s3 + $0xe0] sm:$0xff]
  %v172 = vld [vmem:[%s3 + $0xe8] sm:$0xff]
  %v173 = vld [vmem:[%s3 + $0xf0] sm:$0xff]
  %v174 = vld [vmem:[%s3 + $0xf8] sm:$0xff]
  %v175 = vld [vmem:[%s4] sm:$0x1]
  %v177 = vlaneseq
  %v178 = vshrl.u32 %v177, 7
  %v179 = vsub.s32 0, %v178
  %v180 = vrot.slane %v175, %v179
  %182 = vmatprep.subr.mxu0 0.0
  %183 = vmatpush1.msra.mxu0 %v143
  %184 = vmatprep.subr.mxu0 0.0
  %185 = vmatpush1.msra.mxu0 %v144
  %186 = vmatprep.subr.mxu0 0.0
  %187 = vmatpush1.msra.mxu0 %v145
  %188 = vmatprep.subr.mxu0 0.0
  %189 = vmatpush1.msra.mxu0 %v146
  %190 = vmatprep.subr.mxu0 0.0
  %191 = vmatpush1.msra.mxu0 %v147
  %192 = vmatprep.subr.mxu0 0.0
  %193 = vmatpush1.msra.mxu0 %v148
  %194 = vmatprep.subr.mxu0 0.0
  %195 = vmatpush1.msra.mxu0 %v149
  %196 = vmatprep.subr.mxu0 0.0
  %197 = vmatpush1.msra.mxu0 %v150
  %198 = vmatprep.subr.mxu0 0.0
  %199 = vmatpush1.msra.mxu0 %v151
  %200 = vmatprep.subr.mxu0 0.0
  %201 = vmatpush1.msra.mxu0 %v152
  %202 = vmatprep.subr.mxu0 0.0
  %203 = vmatpush1.msra.mxu0 %v153
  %204 = vmatprep.subr.mxu0 0.0
  %205 = vmatpush1.msra.mxu0 %v154
  %206 = vmatprep.subr.mxu0 0.0
  %207 = vmatpush1.msra.mxu0 %v155
  %208 = vmatprep.subr.mxu0 0.0
  %209 = vmatpush1.msra.mxu0 %v156
  %210 = vmatprep.subr.mxu0 0.0
  %211 = vmatpush1.msra.mxu0 %v157
  %212 = vmatprep.subr.mxu0 0.0
  %213 = vmatpush1.msra.mxu0 %v158
  %214 = vmatprep.subr.mxu0 0.0
  %215 = vmatpush1.msra.mxu0 %v159
  %216 = vmatprep.subr.mxu0 0.0
  %217 = vmatpush1.msra.mxu0 %v160
  %218 = vmatprep.subr.mxu0 0.0
  %219 = vmatpush1.msra.mxu0 %v161
  %220 = vmatprep.subr.mxu0 0.0
  %221 = vmatpush1.msra.mxu0 %v162
  %222 = vmatprep.subr.mxu0 0.0
  %223 = vmatpush1.msra.mxu0 %v163
  %224 = vmatprep.subr.mxu0 0.0
  %225 = vmatpush1.msra.mxu0 %v164
  %226 = vmatprep.subr.mxu0 0.0
  %227 = vmatpush1.msra.mxu0 %v165
  %228 = vmatprep.subr.mxu0 0.0
  %229 = vmatpush1.msra.mxu0 %v166
  %230 = vmatprep.subr.mxu0 0.0
  %231 = vmatpush1.msra.mxu0 %v167
  %232 = vmatprep.subr.mxu0 0.0
  %233 = vmatpush1.msra.mxu0 %v168
  %234 = vmatprep.subr.mxu0 0.0
  %235 = vmatpush1.msra.mxu0 %v169
  %236 = vmatprep.subr.mxu0 0.0
  %237 = vmatpush1.msra.mxu0 %v170
  %238 = vmatprep.subr.mxu0 0.0
  %239 = vmatpush1.msra.mxu0 %v171
  %240 = vmatprep.subr.mxu0 0.0
  %241 = vmatpush1.msra.mxu0 %v172
  %242 = vmatprep.subr.mxu0 0.0
  %243 = vmatpush1.msra.mxu0 %v173
  %244 = vmatprep.subr.mxu0 0.0
  %245 = vmatpush1.msra.mxu0 %v174
  %246 = vmatprep.mubr.f32.mxu0 %v23
  %247 = vmatmul.mubr.f32.gmra.mrb[0].mxu0 %v22
  %v248 = vpop.f32.mrb[0].mxu0
  %v249 = vadd.f32 %v180, %v248
  %v250 = vpop.f32.mrb[0].mxu0
  %251 = vmatprep.mubr.f32.mxu0 %v25
  %252 = vmatmul.mubr.f32.gmra.mrb[0].mxu0 %v24
  %v253 = vpop.f32.mrb[0].mxu0
  %v254 = vadd.f32 %v180, %v253
  %v255 = vpop.f32.mrb[0].mxu0
  %256 = vdwg.mxu0
  %257 = vst.msk [vmem:[%s6] sm:$0xff] %vm140, %v249
  %258 = vst.msk [vmem:[%s6 + $0x8] sm:$0xff] %vm140, %v254
  // Predicated region
  $region22: #{multistream_decoder_forward.15} parent=0 // pred_check
    _
  $region23: #{multistream_decoder_forward.15} parent=0 // pred_check_branch
    %260 = sbr.rel (0) target = $region25
  $region24: #{multistream_decoder_forward.15} parent=0 // pred_region
    _
  $region25: #{multistream_decoder_forward.15} parent=0 // pred_fallthru
    _
  // Predicated region
  $region26: #{multistream_decoder_forward.15} parent=0 // pred_check
    _
  $region27: #{multistream_decoder_forward.15} parent=0 // pred_check_branch
    %262 = sbr.rel (0) target = $region29
  $region28: #{multistream_decoder_forward.15} parent=0 // pred_region
    _
  $region29: #{multistream_decoder_forward.15} parent=0 // pred_fallthru
    _
  // Predicated region
  $region30: #{multistream_decoder_forward.15} parent=0 // pred_check
    _
  $region31: #{multistream_decoder_forward.15} parent=0 // pred_check_branch
    %264 = sbr.rel (0) target = $region33
  $region32: #{multistream_decoder_forward.15} parent=0 // pred_region
    _
  $region33: #{multistream_decoder_forward.15} parent=0 // pred_fallthru
    _
  // Predicated region
  $region34: #{multistream_decoder_forward.15} parent=0 // pred_check
    _
  $region35: #{multistream_decoder_forward.15} parent=0 // pred_check_branch
    %266 = sbr.rel (0) target = $region37
  $region36: #{multistream_decoder_forward.15} parent=0 // pred_region
    _
  $region37: #{multistream_decoder_forward.15} parent=0 // pred_fallthru
    _

// kernel: multistream_decoder_forward.11
$region0: #{multistream_decoder_forward.11}
  #allocation0 [shape = 'u32[]', space=smem, size = 0x4, offset = 0x4, fixed_abs, tag = 'smem constant byte address 0x4 - core index']
  #allocation1 [shape = 'u32[144,128]{1,0:T(1,128)}', space=vmem, size = 0x12000, scoped, tag = 'internal scratch']
  %s0 = inlined_call_operand.vmem [shape: f32[16,256], index: 0, kind: input, shape index: {}]
  %s1 = inlined_call_operand.vmem [shape: f32[256,512], index: 1, kind: input, shape index: {}]
  %s2 = inlined_call_operand.vmem [shape: f32[1,512], index: 2, kind: input, shape index: {}]
  %s3 = inlined_call_operand.vmem [shape: f32[512,256], index: 3, kind: input, shape index: {}]
  %s4 = inlined_call_operand.vmem [shape: f32[1,256], index: 4, kind: input, shape index: {}]
  %s5 = inlined_call_operand.vmem [shape: f32[1,256], index: 5, kind: input, shape index: {}]
  %s6 = inlined_call_operand.vmem [shape: f32[1,256], index: 6, kind: input, shape index: {}]
  %s7 = inlined_call_operand.vmem [shape: f32[16,256], index: 7, kind: output, shape index: {}]
  %s8 = sld [smem:[#allocation0]]
  $region38: #{multistream_decoder_forward.11} parent=0
    _
  %s10 = ssub.s32 1, %s8
  %s11 = scalar_select 0, %s10, %s8
  // Predicated region
  $region2: #{multistream_decoder_forward.11} parent=0 // pred_check
    _
  $region3: #{multistream_decoder_forward.11} parent=0 // pred_check_branch
    %13 = sbr.rel (0) target = $region5
  $region4: #{multistream_decoder_forward.11} parent=0 // pred_region
    _
  $region5: #{multistream_decoder_forward.11} parent=0 // pred_fallthru
    _
  // Predicated region
  $region6: #{multistream_decoder_forward.11} parent=0 // pred_check
    _
  $region7: #{multistream_decoder_forward.11} parent=0 // pred_check_branch
    %15 = sbr.rel (0) target = $region9
  $region8: #{multistream_decoder_forward.11} parent=0 // pred_region
    _
  $region9: #{multistream_decoder_forward.11} parent=0 // pred_fallthru
    _
  // Predicated region
  $region10: #{multistream_decoder_forward.11} parent=0 // pred_check
    _
  $region11: #{multistream_decoder_forward.11} parent=0 // pred_check_branch
    %17 = sbr.rel (0) target = $region13
  $region12: #{multistream_decoder_forward.11} parent=0 // pred_region
    _
  $region13: #{multistream_decoder_forward.11} parent=0 // pred_fallthru
    _
  // Predicated region
  $region14: #{multistream_decoder_forward.11} parent=0 // pred_check
    _
  $region15: #{multistream_decoder_forward.11} parent=0 // pred_check_branch
    %19 = sbr.rel (0) target = $region17
  $region16: #{multistream_decoder_forward.11} parent=0 // pred_region
    _
  $region17: #{multistream_decoder_forward.11} parent=0 // pred_fallthru
    _
  // Predicated region
  $region18: #{multistream_decoder_forward.11} parent=0 // pred_check
    _
  $region19: #{multistream_decoder_forward.11} parent=0 // pred_check_branch
    %21 = sbr.rel (0) target = $region21
  $region20: #{multistream_decoder_forward.11} parent=0 // pred_region
    _
  $region21: #{multistream_decoder_forward.11} parent=0 // pred_fallthru
    _
  // Predicated region
  $region22: #{multistream_decoder_forward.11} parent=0 // pred_check
    _
  $region23: #{multistream_decoder_forward.11} parent=0 // pred_check_branch
    %23 = sbr.rel (0) target = $region25
  $region24: #{multistream_decoder_forward.11} parent=0 // pred_region
    _
  $region25: #{multistream_decoder_forward.11} parent=0 // pred_fallthru
    _
  // Predicated region
  $region26: #{multistream_decoder_forward.11} parent=0 // pred_check
    _
  $region27: #{multistream_decoder_forward.11} parent=0 // pred_check_branch
    %25 = sbr.rel (0) target = $region29
  $region28: #{multistream_decoder_forward.11} parent=0 // pred_region
    _
  $region29: #{multistream_decoder_forward.11} parent=0 // pred_fallthru
    _
  %v26 = vld [vmem:[%s0] sm:$0xff]
  %v27 = vld [vmem:[%s0 + $0x8] sm:$0xff]
  %v28 = vld [vmem:[%s0 + $0x10] sm:$0xff]
  %v29 = vld [vmem:[%s0 + $0x18] sm:$0xff]
  %v30 = vld [vmem:[%s1] sm:$0xff]
  %v31 = vld [vmem:[%s1 + $0x8] sm:$0xff]
  %v32 = vld [vmem:[%s1 + $0x10] sm:$0xff]
  %v33 = vld [vmem:[%s1 + $0x18] sm:$0xff]
  %v34 = vld [vmem:[%s1 + $0x20] sm:$0xff]
  %v35 = vld [vmem:[%s1 + $0x28] sm:$0xff]
  %v36 = vld [vmem:[%s1 + $0x30] sm:$0xff]
  %v37 = vld [vmem:[%s1 + $0x38] sm:$0xff]
  %v38 = vld [vmem:[%s1 + $0x40] sm:$0xff]
  %v39 = vld [vmem:[%s1 + $0x48] sm:$0xff]
  %v40 = vld [vmem:[%s1 + $0x50] sm:$0xff]
  %v41 = vld [vmem:[%s1 + $0x58] sm:$0xff]
  %v42 = vld [vmem:[%s1 + $0x60] sm:$0xff]
  %v43 = vld [vmem:[%s1 + $0x68] sm:$0xff]
  %v44 = vld [vmem:[%s1 + $0x70] sm:$0xff]
  %v45 = vld [vmem:[%s1 + $0x78] sm:$0xff]
  %v46 = vld [vmem:[%s1 + $0x80] sm:$0xff]
  %v47 = vld [vmem:[%s1 + $0x88] sm:$0xff]
  %v48 = vld [vmem:[%s1 + $0x90] sm:$0xff]
  %v49 = vld [vmem:[%s1 + $0x98] sm:$0xff]
  %v50 = vld [vmem:[%s1 + $0xa0] sm:$0xff]
  %v51 = vld [vmem:[%s1 + $0xa8] sm:$0xff]
  %v52 = vld [vmem:[%s1 + $0xb0] sm:$0xff]
  %v53 = vld [vmem:[%s1 + $0xb8] sm:$0xff]
  %v54 = vld [vmem:[%s1 + $0xc0] sm:$0xff]
  %v55 = vld [vmem:[%s1 + $0xc8] sm:$0xff]
  %v56 = vld [vmem:[%s1 + $0xd0] sm:$0xff]
  %v57 = vld [vmem:[%s1 + $0xd8] sm:$0xff]
  %v58 = vld [vmem:[%s1 + $0xe0] sm:$0xff]
  %v59 = vld [vmem:[%s1 + $0xe8] sm:$0xff]
  %v60 = vld [vmem:[%s1 + $0xf0] sm:$0xff]
  %v61 = vld [vmem:[%s1 + $0xf8] sm:$0xff]
  %v62 = vld [vmem:[%s1 + $0x100] sm:$0xff]
  %v63 = vld [vmem:[%s1 + $0x108] sm:$0xff]
  %v64 = vld [vmem:[%s1 + $0x110] sm:$0xff]
  %v65 = vld [vmem:[%s1 + $0x118] sm:$0xff]
  %v66 = vld [vmem:[%s1 + $0x120] sm:$0xff]
  %v67 = vld [vmem:[%s1 + $0x128] sm:$0xff]
  %v68 = vld [vmem:[%s1 + $0x130] sm:$0xff]
  %v69 = vld [vmem:[%s1 + $0x138] sm:$0xff]
  %v70 = vld [vmem:[%s1 + $0x140] sm:$0xff]
  %v71 = vld [vmem:[%s1 + $0x148] sm:$0xff]
  %v72 = vld [vmem:[%s1 + $0x150] sm:$0xff]
  %v73 = vld [vmem:[%s1 + $0x158] sm:$0xff]
  %v74 = vld [vmem:[%s1 + $0x160] sm:$0xff]
  %v75 = vld [vmem:[%s1 + $0x168] sm:$0xff]
  %v76 = vld [vmem:[%s1 + $0x170] sm:$0xff]
  %v77 = vld [vmem:[%s1 + $0x178] sm:$0xff]
  %v78 = vld [vmem:[%s1 + $0x180] sm:$0xff]
  %v79 = vld [vmem:[%s1 + $0x188] sm:$0xff]
  %v80 = vld [vmem:[%s1 + $0x190] sm:$0xff]
  %v81 = vld [vmem:[%s1 + $0x198] sm:$0xff]
  %v82 = vld [vmem:[%s1 + $0x1a0] sm:$0xff]
  %v83 = vld [vmem:[%s1 + $0x1a8] sm:$0xff]
  %v84 = vld [vmem:[%s1 + $0x1b0] sm:$0xff]
  %v85 = vld [vmem:[%s1 + $0x1b8] sm:$0xff]
  %v86 = vld [vmem:[%s1 + $0x1c0] sm:$0xff]
  %v87 = vld [vmem:[%s1 + $0x1c8] sm:$0xff]
  %v88 = vld [vmem:[%s1 + $0x1d0] sm:$0xff]
  %v89 = vld [vmem:[%s1 + $0x1d8] sm:$0xff]
  %v90 = vld [vmem:[%s1 + $0x1e0] sm:$0xff]
  %v91 = vld [vmem:[%s1 + $0x1e8] sm:$0xff]
  %v92 = vld [vmem:[%s1 + $0x1f0] sm:$0xff]
  %v93 = vld [vmem:[%s1 + $0x1f8] sm:$0xff]
  %v94 = vld [vmem:[%s1 + $0x200] sm:$0xff]
  %v95 = vld [vmem:[%s1 + $0x208] sm:$0xff]
  %v96 = vld [vmem:[%s1 + $0x210] sm:$0xff]
  %v97 = vld [vmem:[%s1 + $0x218] sm:$0xff]
  %v98 = vld [vmem:[%s1 + $0x220] sm:$0xff]
  %v99 = vld [vmem:[%s1 + $0x228] sm:$0xff]
  %v100 = vld [vmem:[%s1 + $0x230] sm:$0xff]
  %v101 = vld [vmem:[%s1 + $0x238] sm:$0xff]
  %v102 = vld [vmem:[%s1 + $0x240] sm:$0xff]
  %v103 = vld [vmem:[%s1 + $0x248] sm:$0xff]
  %v104 = vld [vmem:[%s1 + $0x250] sm:$0xff]
  %v105 = vld [vmem:[%s1 + $0x258] sm:$0xff]
  %v106 = vld [vmem:[%s1 + $0x260] sm:$0xff]
  %v107 = vld [vmem:[%s1 + $0x268] sm:$0xff]
  %v108 = vld [vmem:[%s1 + $0x270] sm:$0xff]
  %v109 = vld [vmem:[%s1 + $0x278] sm:$0xff]
  %v110 = vld [vmem:[%s1 + $0x280] sm:$0xff]
  %v111 = vld [vmem:[%s1 + $0x288] sm:$0xff]
  %v112 = vld [vmem:[%s1 + $0x290] sm:$0xff]
  %v113 = vld [vmem:[%s1 + $0x298] sm:$0xff]
  %v114 = vld [vmem:[%s1 + $0x2a0] sm:$0xff]
  %v115 = vld [vmem:[%s1 + $0x2a8] sm:$0xff]
  %v116 = vld [vmem:[%s1 + $0x2b0] sm:$0xff]
  %v117 = vld [vmem:[%s1 + $0x2b8] sm:$0xff]
  %v118 = vld [vmem:[%s1 + $0x2c0] sm:$0xff]
  %v119 = vld [vmem:[%s1 + $0x2c8] sm:$0xff]
  %v120 = vld [vmem:[%s1 + $0x2d0] sm:$0xff]
  %v121 = vld [vmem:[%s1 + $0x2d8] sm:$0xff]
  %v122 = vld [vmem:[%s1 + $0x2e0] sm:$0xff]
  %v123 = vld [vmem:[%s1 + $0x2e8] sm:$0xff]
  %v124 = vld [vmem:[%s1 + $0x2f0] sm:$0xff]
  %v125 = vld [vmem:[%s1 + $0x2f8] sm:$0xff]
  %v126 = vld [vmem:[%s1 + $0x300] sm:$0xff]
  %v127 = vld [vmem:[%s1 + $0x308] sm:$0xff]
  %v128 = vld [vmem:[%s1 + $0x310] sm:$0xff]
  %v129 = vld [vmem:[%s1 + $0x318] sm:$0xff]
  %v130 = vld [vmem:[%s1 + $0x320] sm:$0xff]
  %v131 = vld [vmem:[%s1 + $0x328] sm:$0xff]
  %v132 = vld [vmem:[%s1 + $0x330] sm:$0xff]
  %v133 = vld [vmem:[%s1 + $0x338] sm:$0xff]
  %v134 = vld [vmem:[%s1 + $0x340] sm:$0xff]
  %v135 = vld [vmem:[%s1 + $0x348] sm:$0xff]
  %v136 = vld [vmem:[%s1 + $0x350] sm:$0xff]
  %v137 = vld [vmem:[%s1 + $0x358] sm:$0xff]
  %v138 = vld [vmem:[%s1 + $0x360] sm:$0xff]
  %v139 = vld [vmem:[%s1 + $0x368] sm:$0xff]
  %v140 = vld [vmem:[%s1 + $0x370] sm:$0xff]
  %v141 = vld [vmem:[%s1 + $0x378] sm:$0xff]
  %v142 = vld [vmem:[%s1 + $0x380] sm:$0xff]
  %v143 = vld [vmem:[%s1 + $0x388] sm:$0xff]
  %v144 = vld [vmem:[%s1 + $0x390] sm:$0xff]
  %v145 = vld [vmem:[%s1 + $0x398] sm:$0xff]
  %v146 = vld [vmem:[%s1 + $0x3a0] sm:$0xff]
  %v147 = vld [vmem:[%s1 + $0x3a8] sm:$0xff]
  %v148 = vld [vmem:[%s1 + $0x3b0] sm:$0xff]
  %v149 = vld [vmem:[%s1 + $0x3b8] sm:$0xff]
  %v150 = vld [vmem:[%s1 + $0x3c0] sm:$0xff]
  %v151 = vld [vmem:[%s1 + $0x3c8] sm:$0xff]
  %v152 = vld [vmem:[%s1 + $0x3d0] sm:$0xff]
  %v153 = vld [vmem:[%s1 + $0x3d8] sm:$0xff]
  %v154 = vld [vmem:[%s1 + $0x3e0] sm:$0xff]
  %v155 = vld [vmem:[%s1 + $0x3e8] sm:$0xff]
  %v156 = vld [vmem:[%s1 + $0x3f0] sm:$0xff]
  %v157 = vld [vmem:[%s1 + $0x3f8] sm:$0xff]
  %v158 = vld [vmem:[%s2] sm:$0xf]
  %v160 = vlaneseq
  %v161 = vshrl.u32 %v160, 7
  %v162 = vsub.s32 0, %v161
  %v163 = vrot.slane %v158, %v162
  %v164 = vlaneseq
  %v165 = vshrl.u32 %v164, 7
  %v166 = vsub.s32 1, %v165
  %v167 = vrot.slane %v158, %v166
  %v168 = vlaneseq
  %v169 = vshrl.u32 %v168, 7
  %v170 = vsub.s32 2, %v169
  %v171 = vrot.slane %v158, %v170
  %v172 = vlaneseq
  %v173 = vshrl.u32 %v172, 7
  %v174 = vsub.s32 3, %v173
  %v175 = vrot.slane %v158, %v174
  %180 = vmatprep.subr.mxu0 %v31
  %181 = vmatpush1.msra.mxu0 %v30
  %182 = vmatprep.subr.mxu0 %v35
  %183 = vmatpush1.msra.mxu0 %v34
  %184 = vmatprep.subr.mxu0 %v39
  %185 = vmatpush1.msra.mxu0 %v38
  %186 = vmatprep.subr.mxu0 %v43
  %187 = vmatpush1.msra.mxu0 %v42
  %188 = vmatprep.subr.mxu0 %v47
  %189 = vmatpush1.msra.mxu0 %v46
  %190 = vmatprep.subr.mxu0 %v51
  %191 = vmatpush1.msra.mxu0 %v50
  %192 = vmatprep.subr.mxu0 %v55
  %193 = vmatpush1.msra.mxu0 %v54
  %194 = vmatprep.subr.mxu0 %v59
  %195 = vmatpush1.msra.mxu0 %v58
  %196 = vmatprep.subr.mxu0 %v63
  %197 = vmatpush1.msra.mxu0 %v62
  %198 = vmatprep.subr.mxu0 %v67
  %199 = vmatpush1.msra.mxu0 %v66
  %200 = vmatprep.subr.mxu0 %v71
  %201 = vmatpush1.msra.mxu0 %v70
  %202 = vmatprep.subr.mxu0 %v75
  %203 = vmatpush1.msra.mxu0 %v74
  %204 = vmatprep.subr.mxu0 %v79
  %205 = vmatpush1.msra.mxu0 %v78
  %206 = vmatprep.subr.mxu0 %v83
  %207 = vmatpush1.msra.mxu0 %v82
  %208 = vmatprep.subr.mxu0 %v87
  %209 = vmatpush1.msra.mxu0 %v86
  %210 = vmatprep.subr.mxu0 %v91
  %211 = vmatpush1.msra.mxu0 %v90
  %212 = vmatprep.subr.mxu0 %v95
  %213 = vmatpush1.msra.mxu0 %v94
  %214 = vmatprep.subr.mxu0 %v99
  %215 = vmatpush1.msra.mxu0 %v98
  %216 = vmatprep.subr.mxu0 %v103
  %217 = vmatpush1.msra.mxu0 %v102
  %218 = vmatprep.subr.mxu0 %v107
  %219 = vmatpush1.msra.mxu0 %v106
  %220 = vmatprep.subr.mxu0 %v111
  %221 = vmatpush1.msra.mxu0 %v110
  %222 = vmatprep.subr.mxu0 %v115
  %223 = vmatpush1.msra.mxu0 %v114
  %224 = vmatprep.subr.mxu0 %v119
  %225 = vmatpush1.msra.mxu0 %v118
  %226 = vmatprep.subr.mxu0 %v123
  %227 = vmatpush1.msra.mxu0 %v122
  %228 = vmatprep.subr.mxu0 %v127
  %229 = vmatpush1.msra.mxu0 %v126
  %230 = vmatprep.subr.mxu0 %v131
  %231 = vmatpush1.msra.mxu0 %v130
  %232 = vmatprep.subr.mxu0 %v135
  %233 = vmatpush1.msra.mxu0 %v134
  %234 = vmatprep.subr.mxu0 %v139
  %235 = vmatpush1.msra.mxu0 %v138
  %236 = vmatprep.subr.mxu0 %v143
  %237 = vmatpush1.msra.mxu0 %v142
  %238 = vmatprep.subr.mxu0 %v147
  %239 = vmatpush1.msra.mxu0 %v146
  %240 = vmatprep.subr.mxu0 %v151
  %241 = vmatpush1.msra.mxu0 %v150
  %242 = vmatprep.subr.mxu0 %v155
  %243 = vmatpush1.msra.mxu0 %v154
  %244 = vmatprep.mubr.f32.mxu0 %v27
  %245 = vmatmul.mubr.f32.gmra.mrb[0].mxu0 %v26
  %v246 = vpop.f32.mrb[0].mxu0
  %v247 = vadd.f32 %v163, %v246
  %v248 = vpop.f32.mrb[0].mxu0
  %v249 = vadd.f32 %v167, %v248
  %250 = vmatprep.mubr.f32.mxu0 %v29
  %251 = vmatmul.mubr.f32.gmra.mrb[0].mxu0 %v28
  %v252 = vpop.f32.mrb[0].mxu0
  %v253 = vadd.f32 %v163, %v252
  %v254 = vpop.f32.mrb[0].mxu0
  %v255 = vadd.f32 %v167, %v254
  %256 = vdwg.mxu0
  %257 = vmatprep.subr.mxu0 %v33
  %258 = vmatpush1.msra.mxu0 %v32
  %259 = vmatprep.subr.mxu0 %v37
  %260 = vmatpush1.msra.mxu0 %v36
  %261 = vmatprep.subr.mxu0 %v41
  %262 = vmatpush1.msra.mxu0 %v40
  %263 = vmatprep.subr.mxu0 %v45
  %264 = vmatpush1.msra.mxu0 %v44
  %265 = vmatprep.subr.mxu0 %v49
  %266 = vmatpush1.msra.mxu0 %v48
  %267 = vmatprep.subr.mxu0 %v53
  %268 = vmatpush1.msra.mxu0 %v52
  %269 = vmatprep.subr.mxu0 %v57
  %270 = vmatpush1.msra.mxu0 %v56
  %271 = vmatprep.subr.mxu0 %v61
  %272 = vmatpush1.msra.mxu0 %v60
  %273 = vmatprep.subr.mxu0 %v65
  %274 = vmatpush1.msra.mxu0 %v64
  %275 = vmatprep.subr.mxu0 %v69
  %276 = vmatpush1.msra.mxu0 %v68
  %277 = vmatprep.subr.mxu0 %v73
  %278 = vmatpush1.msra.mxu0 %v72
  %279 = vmatprep.subr.mxu0 %v77
  %280 = vmatpush1.msra.mxu0 %v76
  %281 = vmatprep.subr.mxu0 %v81
  %282 = vmatpush1.msra.mxu0 %v80
  %283 = vmatprep.subr.mxu0 %v85
  %284 = vmatpush1.msra.mxu0 %v84
  %285 = vmatprep.subr.mxu0 %v89
  %286 = vmatpush1.msra.mxu0 %v88
  %287 = vmatprep.subr.mxu0 %v93
  %288 = vmatpush1.msra.mxu0 %v92
  %289 = vmatprep.subr.mxu0 %v97
  %290 = vmatpush1.msra.mxu0 %v96
  %291 = vmatprep.subr.mxu0 %v101
  %292 = vmatpush1.msra.mxu0 %v100
  %293 = vmatprep.subr.mxu0 %v105
  %294 = vmatpush1.msra.mxu0 %v104
  %295 = vmatprep.subr.mxu0 %v109
  %296 = vmatpush1.msra.mxu0 %v108
  %297 = vmatprep.subr.mxu0 %v113
  %298 = vmatpush1.msra.mxu0 %v112
  %299 = vmatprep.subr.mxu0 %v117
  %300 = vmatpush1.msra.mxu0 %v116
  %301 = vmatprep.subr.mxu0 %v121
  %302 = vmatpush1.msra.mxu0 %v120
  %303 = vmatprep.subr.mxu0 %v125
  %304 = vmatpush1.msra.mxu0 %v124
  %305 = vmatprep.subr.mxu0 %v129
  %306 = vmatpush1.msra.mxu0 %v128
  %307 = vmatprep.subr.mxu0 %v133
  %308 = vmatpush1.msra.mxu0 %v132
  %309 = vmatprep.subr.mxu0 %v137
  %310 = vmatpush1.msra.mxu0 %v136
  %311 = vmatprep.subr.mxu0 %v141
  %312 = vmatpush1.msra.mxu0 %v140
  %313 = vmatprep.subr.mxu0 %v145
  %314 = vmatpush1.msra.mxu0 %v144
  %315 = vmatprep.subr.mxu0 %v149
  %316 = vmatpush1.msra.mxu0 %v148
  %317 = vmatprep.subr.mxu0 %v153
  %318 = vmatpush1.msra.mxu0 %v152
  %319 = vmatprep.subr.mxu0 %v157
  %320 = vmatpush1.msra.mxu0 %v156
  %321 = vmatprep.mubr.f32.mxu0 %v27
  %322 = vmatmul.mubr.f32.gmra.mrb[0].mxu0 %v26
  %v323 = vpop.f32.mrb[0].mxu0
  %v324 = vadd.f32 %v171, %v323
  %v325 = vpop.f32.mrb[0].mxu0
  %v326 = vadd.f32 %v175, %v325
  %327 = vmatprep.mubr.f32.mxu0 %v29
  %328 = vmatmul.mubr.f32.gmra.mrb[0].mxu0 %v28
  %v329 = vpop.f32.mrb[0].mxu0
  %v330 = vadd.f32 %v171, %v329
  %v331 = vpop.f32.mrb[0].mxu0
  %v332 = vadd.f32 %v175, %v331
  %333 = vdwg.mxu0
  %v334 = vmax.f32 %v247, 0.0
  %v335 = vmax.f32 %v249, 0.0
  %v336 = vmax.f32 %v324, 0.0
  %v337 = vmax.f32 %v326, 0.0
  %v338 = vmax.f32 %v253, 0.0
  %v339 = vmax.f32 %v255, 0.0
  %v340 = vmax.f32 %v330, 0.0
  %v341 = vmax.f32 %v332, 0.0
  %v342 = vld [vmem:[%s3] sm:$0xff]
  %v343 = vld [vmem:[%s3 + $0x8] sm:$0xff]
  %v344 = vld [vmem:[%s3 + $0x10] sm:$0xff]
  %v345 = vld [vmem:[%s3 + $0x18] sm:$0xff]
  %v346 = vld [vmem:[%s3 + $0x20] sm:$0xff]
  %v347 = vld [vmem:[%s3 + $0x28] sm:$0xff]
  %v348 = vld [vmem:[%s3 + $0x30] sm:$0xff]
  %v349 = vld [vmem:[%s3 + $0x38] sm:$0xff]
  %v350 = vld [vmem:[%s3 + $0x40] sm:$0xff]
  %v351 = vld [vmem:[%s3 + $0x48] sm:$0xff]
  %v352 = vld [vmem:[%s3 + $0x50] sm:$0xff]
  %v353 = vld [vmem:[%s3 + $0x58] sm:$0xff]
  %v354 = vld [vmem:[%s3 + $0x60] sm:$0xff]
  %v355 = vld [vmem:[%s3 + $0x68] sm:$0xff]
  %v356 = vld [vmem:[%s3 + $0x70] sm:$0xff]
  %v357 = vld [vmem:[%s3 + $0x78] sm:$0xff]
  %v358 = vld [vmem:[%s3 + $0x80] sm:$0xff]
  %v359 = vld [vmem:[%s3 + $0x88] sm:$0xff]
  %v360 = vld [vmem:[%s3 + $0x90] sm:$0xff]
  %v361 = vld [vmem:[%s3 + $0x98] sm:$0xff]
  %v362 = vld [vmem:[%s3 + $0xa0] sm:$0xff]
  %v363 = vld [vmem:[%s3 + $0xa8] sm:$0xff]
  %v364 = vld [vmem:[%s3 + $0xb0] sm:$0xff]
  %v365 = vld [vmem:[%s3 + $0xb8] sm:$0xff]
  %v366 = vld [vmem:[%s3 + $0xc0] sm:$0xff]
  %v367 = vld [vmem:[%s3 + $0xc8] sm:$0xff]
  %v368 = vld [vmem:[%s3 + $0xd0] sm:$0xff]
  %v369 = vld [vmem:[%s3 + $0xd8] sm:$0xff]
  %v370 = vld [vmem:[%s3 + $0xe0] sm:$0xff]
  %v371 = vld [vmem:[%s3 + $0xe8] sm:$0xff]
  %v372 = vld [vmem:[%s3 + $0xf0] sm:$0xff]
  %v373 = vld [vmem:[%s3 + $0xf8] sm:$0xff]
  %v374 = vld [vmem:[%s3 + $0x100] sm:$0xff]
  %v375 = vld [vmem:[%s3 + $0x108] sm:$0xff]
  %v376 = vld [vmem:[%s3 + $0x110] sm:$0xff]
  %v377 = vld [vmem:[%s3 + $0x118] sm:$0xff]
  %v378 = vld [vmem:[%s3 + $0x120] sm:$0xff]
  %v379 = vld [vmem:[%s3 + $0x128] sm:$0xff]
  %v380 = vld [vmem:[%s3 + $0x130] sm:$0xff]
  %v381 = vld [vmem:[%s3 + $0x138] sm:$0xff]
  %v382 = vld [vmem:[%s3 + $0x140] sm:$0xff]
  %v383 = vld [vmem:[%s3 + $0x148] sm:$0xff]
  %v384 = vld [vmem:[%s3 + $0x150] sm:$0xff]
  %v385 = vld [vmem:[%s3 + $0x158] sm:$0xff]
  %v386 = vld [vmem:[%s3 + $0x160] sm:$0xff]
  %v387 = vld [vmem:[%s3 + $0x168] sm:$0xff]
  %v388 = vld [vmem:[%s3 + $0x170] sm:$0xff]
  %v389 = vld [vmem:[%s3 + $0x178] sm:$0xff]
  %v390 = vld [vmem:[%s3 + $0x180] sm:$0xff]
  %v391 = vld [vmem:[%s3 + $0x188] sm:$0xff]
  %v392 = vld [vmem:[%s3 + $0x190] sm:$0xff]
  %v393 = vld [vmem:[%s3 + $0x198] sm:$0xff]
  %v394 = vld [vmem:[%s3 + $0x1a0] sm:$0xff]
  %v395 = vld [vmem:[%s3 + $0x1a8] sm:$0xff]
  %v396 = vld [vmem:[%s3 + $0x1b0] sm:$0xff]
  %v397 = vld [vmem:[%s3 + $0x1b8] sm:$0xff]
  %v398 = vld [vmem:[%s3 + $0x1c0] sm:$0xff]
  %v399 = vld [vmem:[%s3 + $0x1c8] sm:$0xff]
  %v400 = vld [vmem:[%s3 + $0x1d0] sm:$0xff]
  %v401 = vld [vmem:[%s3 + $0x1d8] sm:$0xff]
  %v402 = vld [vmem:[%s3 + $0x1e0] sm:$0xff]
  %v403 = vld [vmem:[%s3 + $0x1e8] sm:$0xff]
  %v404 = vld [vmem:[%s3 + $0x1f0] sm:$0xff]
  %v405 = vld [vmem:[%s3 + $0x1f8] sm:$0xff]
  %v406 = vld [vmem:[%s3 + $0x200] sm:$0xff]
  %v407 = vld [vmem:[%s3 + $0x208] sm:$0xff]
  %v408 = vld [vmem:[%s3 + $0x210] sm:$0xff]
  %v409 = vld [vmem:[%s3 + $0x218] sm:$0xff]
  %v410 = vld [vmem:[%s3 + $0x220] sm:$0xff]
  %v411 = vld [vmem:[%s3 + $0x228] sm:$0xff]
  %v412 = vld [vmem:[%s3 + $0x230] sm:$0xff]
  %v413 = vld [vmem:[%s3 + $0x238] sm:$0xff]
  %v414 = vld [vmem:[%s3 + $0x240] sm:$0xff]
  %v415 = vld [vmem:[%s3 + $0x248] sm:$0xff]
  %v416 = vld [vmem:[%s3 + $0x250] sm:$0xff]
  %v417 = vld [vmem:[%s3 + $0x258] sm:$0xff]
  %v418 = vld [vmem:[%s3 + $0x260] sm:$0xff]
  %v419 = vld [vmem:[%s3 + $0x268] sm:$0xff]
  %v420 = vld [vmem:[%s3 + $0x270] sm:$0xff]
  %v421 = vld [vmem:[%s3 + $0x278] sm:$0xff]
  %v422 = vld [vmem:[%s3 + $0x280] sm:$0xff]
  %v423 = vld [vmem:[%s3 + $0x288] sm:$0xff]
  %v424 = vld [vmem:[%s3 + $0x290] sm:$0xff]
  %v425 = vld [vmem:[%s3 + $0x298] sm:$0xff]
  %v426 = vld [vmem:[%s3 + $0x2a0] sm:$0xff]
  %v427 = vld [vmem:[%s3 + $0x2a8] sm:$0xff]
  %v428 = vld [vmem:[%s3 + $0x2b0] sm:$0xff]
  %v429 = vld [vmem:[%s3 + $0x2b8] sm:$0xff]
  %v430 = vld [vmem:[%s3 + $0x2c0] sm:$0xff]
  %v431 = vld [vmem:[%s3 + $0x2c8] sm:$0xff]
  %v432 = vld [vmem:[%s3 + $0x2d0] sm:$0xff]
  %v433 = vld [vmem:[%s3 + $0x2d8] sm:$0xff]
  %v434 = vld [vmem:[%s3 + $0x2e0] sm:$0xff]
  %v435 = vld [vmem:[%s3 + $0x2e8] sm:$0xff]
  %v436 = vld [vmem:[%s3 + $0x2f0] sm:$0xff]
  %v437 = vld [vmem:[%s3 + $0x2f8] sm:$0xff]
  %v438 = vld [vmem:[%s3 + $0x300] sm:$0xff]
  %v439 = vld [vmem:[%s3 + $0x308] sm:$0xff]
  %v440 = vld [vmem:[%s3 + $0x310] sm:$0xff]
  %v441 = vld [vmem:[%s3 + $0x318] sm:$0xff]
  %v442 = vld [vmem:[%s3 + $0x320] sm:$0xff]
  %v443 = vld [vmem:[%s3 + $0x328] sm:$0xff]
  %v444 = vld [vmem:[%s3 + $0x330] sm:$0xff]
  %v445 = vld [vmem:[%s3 + $0x338] sm:$0xff]
  %v446 = vld [vmem:[%s3 + $0x340] sm:$0xff]
  %v447 = vld [vmem:[%s3 + $0x348] sm:$0xff]
  %v448 = vld [vmem:[%s3 + $0x350] sm:$0xff]
  %v449 = vld [vmem:[%s3 + $0x358] sm:$0xff]
  %v450 = vld [vmem:[%s3 + $0x360] sm:$0xff]
  %v451 = vld [vmem:[%s3 + $0x368] sm:$0xff]
  %v452 = vld [vmem:[%s3 + $0x370] sm:$0xff]
  %v453 = vld [vmem:[%s3 + $0x378] sm:$0xff]
  %v454 = vld [vmem:[%s3 + $0x380] sm:$0xff]
  %v455 = vld [vmem:[%s3 + $0x388] sm:$0xff]
  %v456 = vld [vmem:[%s3 + $0x390] sm:$0xff]
  %v457 = vld [vmem:[%s3 + $0x398] sm:$0xff]
  %v458 = vld [vmem:[%s3 + $0x3a0] sm:$0xff]
  %v459 = vld [vmem:[%s3 + $0x3a8] sm:$0xff]
  %v460 = vld [vmem:[%s3 + $0x3b0] sm:$0xff]
  %v461 = vld [vmem:[%s3 + $0x3b8] sm:$0xff]
  %v462 = vld [vmem:[%s3 + $0x3c0] sm:$0xff]
  %v463 = vld [vmem:[%s3 + $0x3c8] sm:$0xff]
  %v464 = vld [vmem:[%s3 + $0x3d0] sm:$0xff]
  %v465 = vld [vmem:[%s3 + $0x3d8] sm:$0xff]
  %v466 = vld [vmem:[%s3 + $0x3e0] sm:$0xff]
  %v467 = vld [vmem:[%s3 + $0x3e8] sm:$0xff]
  %v468 = vld [vmem:[%s3 + $0x3f0] sm:$0xff]
  %v469 = vld [vmem:[%s3 + $0x3f8] sm:$0xff]
  %v470 = vld [vmem:[%s4] sm:$0x3]
  %v472 = vlaneseq
  %v473 = vshrl.u32 %v472, 7
  %v474 = vsub.s32 0, %v473
  %v475 = vrot.slane %v470, %v474
  %v476 = vlaneseq
  %v477 = vshrl.u32 %v476, 7
  %v478 = vsub.s32 1, %v477
  %v479 = vrot.slane %v470, %v478
  %482 = vmatprep.subr.mxu0 %v343
  %483 = vmatpush1.msra.mxu0 %v342
  %484 = vmatprep.subr.mxu0 %v345
  %485 = vmatpush1.msra.mxu0 %v344
  %486 = vmatprep.subr.mxu0 %v347
  %487 = vmatpush1.msra.mxu0 %v346
  %488 = vmatprep.subr.mxu0 %v349
  %489 = vmatpush1.msra.mxu0 %v348
  %490 = vmatprep.subr.mxu0 %v351
  %491 = vmatpush1.msra.mxu0 %v350
  %492 = vmatprep.subr.mxu0 %v353
  %493 = vmatpush1.msra.mxu0 %v352
  %494 = vmatprep.subr.mxu0 %v355
  %495 = vmatpush1.msra.mxu0 %v354
  %496 = vmatprep.subr.mxu0 %v357
  %497 = vmatpush1.msra.mxu0 %v356
  %498 = vmatprep.subr.mxu0 %v359
  %499 = vmatpush1.msra.mxu0 %v358
  %500 = vmatprep.subr.mxu0 %v361
  %501 = vmatpush1.msra.mxu0 %v360
  %502 = vmatprep.subr.mxu0 %v363
  %503 = vmatpush1.msra.mxu0 %v362
  %504 = vmatprep.subr.mxu0 %v365
  %505 = vmatpush1.msra.mxu0 %v364
  %506 = vmatprep.subr.mxu0 %v367
  %507 = vmatpush1.msra.mxu0 %v366
  %508 = vmatprep.subr.mxu0 %v369
  %509 = vmatpush1.msra.mxu0 %v368
  %510 = vmatprep.subr.mxu0 %v371
  %511 = vmatpush1.msra.mxu0 %v370
  %512 = vmatprep.subr.mxu0 %v373
  %513 = vmatpush1.msra.mxu0 %v372
  %514 = vmatprep.subr.mxu0 %v375
  %515 = vmatpush1.msra.mxu0 %v374
  %516 = vmatprep.subr.mxu0 %v377
  %517 = vmatpush1.msra.mxu0 %v376
  %518 = vmatprep.subr.mxu0 %v379
  %519 = vmatpush1.msra.mxu0 %v378
  %520 = vmatprep.subr.mxu0 %v381
  %521 = vmatpush1.msra.mxu0 %v380
  %522 = vmatprep.subr.mxu0 %v383
  %523 = vmatpush1.msra.mxu0 %v382
  %524 = vmatprep.subr.mxu0 %v385
  %525 = vmatpush1.msra.mxu0 %v384
  %526 = vmatprep.subr.mxu0 %v387
  %527 = vmatpush1.msra.mxu0 %v386
  %528 = vmatprep.subr.mxu0 %v389
  %529 = vmatpush1.msra.mxu0 %v388
  %530 = vmatprep.subr.mxu0 %v391
  %531 = vmatpush1.msra.mxu0 %v390
  %532 = vmatprep.subr.mxu0 %v393
  %533 = vmatpush1.msra.mxu0 %v392
  %534 = vmatprep.subr.mxu0 %v395
  %535 = vmatpush1.msra.mxu0 %v394
  %536 = vmatprep.subr.mxu0 %v397
  %537 = vmatpush1.msra.mxu0 %v396
  %538 = vmatprep.subr.mxu0 %v399
  %539 = vmatpush1.msra.mxu0 %v398
  %540 = vmatprep.subr.mxu0 %v401
  %541 = vmatpush1.msra.mxu0 %v400
  %542 = vmatprep.subr.mxu0 %v403
  %543 = vmatpush1.msra.mxu0 %v402
  %544 = vmatprep.subr.mxu0 %v405
  %545 = vmatpush1.msra.mxu0 %v404
  %546 = vmatprep.mubr.f32.mxu0 %v335
  %547 = vmatmul.mubr.f32.gmra.mrb[0].mxu0 %v334
  %v548 = vpop.f32.mrb[0].mxu0
  %v549 = vadd.f32 %v475, %v548
  %v550 = vpop.f32.mrb[0].mxu0
  %v551 = vadd.f32 %v479, %v550
  %552 = vmatprep.mubr.f32.mxu0 %v339
  %553 = vmatmul.mubr.f32.gmra.mrb[0].mxu0 %v338
  %v554 = vpop.f32.mrb[0].mxu0
  %v555 = vadd.f32 %v475, %v554
  %v556 = vpop.f32.mrb[0].mxu0
  %v557 = vadd.f32 %v479, %v556
  %558 = vdwg.mxu0
  %559 = vmatprep.subr.mxu0 %v407
  %560 = vmatpush1.msra.mxu0 %v406
  %561 = vmatprep.subr.mxu0 %v409
  %562 = vmatpush1.msra.mxu0 %v408
  %563 = vmatprep.subr.mxu0 %v411
  %564 = vmatpush1.msra.mxu0 %v410
  %565 = vmatprep.subr.mxu0 %v413
  %566 = vmatpush1.msra.mxu0 %v412
  %567 = vmatprep.subr.mxu0 %v415
  %568 = vmatpush1.msra.mxu0 %v414
  %569 = vmatprep.subr.mxu0 %v417
  %570 = vmatpush1.msra.mxu0 %v416
  %571 = vmatprep.subr.mxu0 %v419
  %572 = vmatpush1.msra.mxu0 %v418
  %573 = vmatprep.subr.mxu0 %v421
  %574 = vmatpush1.msra.mxu0 %v420
  %575 = vmatprep.subr.mxu0 %v423
  %576 = vmatpush1.msra.mxu0 %v422
  %577 = vmatprep.subr.mxu0 %v425
  %578 = vmatpush1.msra.mxu0 %v424
  %579 = vmatprep.subr.mxu0 %v427
  %580 = vmatpush1.msra.mxu0 %v426
  %581 = vmatprep.subr.mxu0 %v429
  %582 = vmatpush1.msra.mxu0 %v428
  %583 = vmatprep.subr.mxu0 %v431
  %584 = vmatpush1.msra.mxu0 %v430
  %585 = vmatprep.subr.mxu0 %v433
  %586 = vmatpush1.msra.mxu0 %v432
  %587 = vmatprep.subr.mxu0 %v435
  %588 = vmatpush1.msra.mxu0 %v434
  %589 = vmatprep.subr.mxu0 %v437
  %590 = vmatpush1.msra.mxu0 %v436
  %591 = vmatprep.subr.mxu0 %v439
  %592 = vmatpush1.msra.mxu0 %v438
  %593 = vmatprep.subr.mxu0 %v441
  %594 = vmatpush1.msra.mxu0 %v440
  %595 = vmatprep.subr.mxu0 %v443
  %596 = vmatpush1.msra.mxu0 %v442
  %597 = vmatprep.subr.mxu0 %v445
  %598 = vmatpush1.msra.mxu0 %v444
  %599 = vmatprep.subr.mxu0 %v447
  %600 = vmatpush1.msra.mxu0 %v446
  %601 = vmatprep.subr.mxu0 %v449
  %602 = vmatpush1.msra.mxu0 %v448
  %603 = vmatprep.subr.mxu0 %v451
  %604 = vmatpush1.msra.mxu0 %v450
  %605 = vmatprep.subr.mxu0 %v453
  %606 = vmatpush1.msra.mxu0 %v452
  %607 = vmatprep.subr.mxu0 %v455
  %608 = vmatpush1.msra.mxu0 %v454
  %609 = vmatprep.subr.mxu0 %v457
  %610 = vmatpush1.msra.mxu0 %v456
  %611 = vmatprep.subr.mxu0 %v459
  %612 = vmatpush1.msra.mxu0 %v458
  %613 = vmatprep.subr.mxu0 %v461
  %614 = vmatpush1.msra.mxu0 %v460
  %615 = vmatprep.subr.mxu0 %v463
  %616 = vmatpush1.msra.mxu0 %v462
  %617 = vmatprep.subr.mxu0 %v465
  %618 = vmatpush1.msra.mxu0 %v464
  %619 = vmatprep.subr.mxu0 %v467
  %620 = vmatpush1.msra.mxu0 %v466
  %621 = vmatprep.subr.mxu0 %v469
  %622 = vmatpush1.msra.mxu0 %v468
  %623 = vmatprep.mubr.f32.mxu0 %v337
  %624 = vmatmul.mubr.f32.gmra.mrb[0].mxu0 %v336
  %v625 = vpop.f32.mrb[0].mxu0
  %v626 = vadd.f32 %v549, %v625
  %v627 = vpop.f32.mrb[0].mxu0
  %v628 = vadd.f32 %v551, %v627
  %629 = vmatprep.mubr.f32.mxu0 %v341
  %630 = vmatmul.mubr.f32.gmra.mrb[0].mxu0 %v340
  %v631 = vpop.f32.mrb[0].mxu0
  %v632 = vadd.f32 %v555, %v631
  %v633 = vpop.f32.mrb[0].mxu0
  %v634 = vadd.f32 %v557, %v633
  %635 = vdwg.mxu0
  %v636 = vadd.f32 %v26, %v626
  %v637 = vadd.f32 %v27, %v628
  %v638 = vadd.f32 %v28, %v632
  %v639 = vadd.f32 %v29, %v634
  %v640 = vadd.f32 %v636, %v637
  %641 = vadd.xlane.f32.xlu0 %v640
  %v642 = vpop.xlane.xlu0 %641
  %v643 = vadd.f32 %v638, %v639
  %644 = vadd.xlane.f32.xlu0 %v643
  %v645 = vpop.xlane.xlu0 %644
  %v646 = vrcp.pop 256.0
  %v647 = vmul.f32 %v642, %v646
  %v648 = vmul.f32 %v645, %v646
  %v649 = vsub.f32 %v636, %v647
  %v650 = vsub.f32 %v637, %v647
  %v651 = vsub.f32 %v638, %v648
  %v652 = vsub.f32 %v639, %v648
  %v653 = vmul.f32 %v649, %v649
  %v654 = vmul.f32 %v650, %v650
  %v655 = vmul.f32 %v651, %v651
  %v656 = vmul.f32 %v652, %v652
  %v657 = vadd.f32 %v653, %v654
  %658 = vadd.xlane.f32.xlu0 %v657
  %v659 = vpop.xlane.xlu0 %658
  %v660 = vadd.f32 %v655, %v656
  %661 = vadd.xlane.f32.xlu0 %v660
  %v662 = vpop.xlane.xlu0 %661
  %v663 = vmul.f32 %v659, %v646
  %v664 = vmul.f32 %v662, %v646
  %v665 = vadd.f32 %v663, 1e-05
  %v666 = vadd.f32 %v664, 1e-05
  %v667 = vrsqrt.pop %v665
  %v668 = vrsqrt.pop %v666
  %v669 = vmul.f32 %v649, %v667
  %v670 = vmul.f32 %v650, %v667
  %v671 = vmul.f32 %v651, %v668
  %v672 = vmul.f32 %v652, %v668
  %v673 = vld [vmem:[%s5] sm:$0x3]
  %v675 = vlaneseq
  %v676 = vshrl.u32 %v675, 7
  %v677 = vsub.s32 0, %v676
  %v678 = vrot.slane %v673, %v677
  %v679 = vlaneseq
  %v680 = vshrl.u32 %v679, 7
  %v681 = vsub.s32 1, %v680
  %v682 = vrot.slane %v673, %v681
  %v685 = vmul.f32 %v669, %v678
  %v686 = vmul.f32 %v670, %v682
  %v687 = vmul.f32 %v671, %v678
  %v688 = vmul.f32 %v672, %v682
  %v689 = vld [vmem:[%s6] sm:$0x3]
  %v691 = vlaneseq
  %v692 = vshrl.u32 %v691, 7
  %v693 = vsub.s32 0, %v692
  %v694 = vrot.slane %v689, %v693
  %v695 = vlaneseq
  %v696 = vshrl.u32 %v695, 7
  %v697 = vsub.s32 1, %v696
  %v698 = vrot.slane %v689, %v697
  %v701 = vadd.f32 %v685, %v694
  %v702 = vadd.f32 %v686, %v698
  %v703 = vadd.f32 %v687, %v694
  %v704 = vadd.f32 %v688, %v698
  %705 = vst [vmem:[%s7] sm:$0xff] %v701
  %706 = vst [vmem:[%s7 + $0x8] sm:$0xff] %v702
  %707 = vst [vmem:[%s7 + $0x10] sm:$0xff] %v703
  %708 = vst [vmem:[%s7 + $0x18] sm:$0xff] %v704
  // Predicated region
  $region30: #{multistream_decoder_forward.11} parent=0 // pred_check
    _
  $region31: #{multistream_decoder_forward.11} parent=0 // pred_check_branch
    %710 = sbr.rel (0) target = $region33
  $region32: #{multistream_decoder_forward.11} parent=0 // pred_region
    _
  $region33: #{multistream_decoder_forward.11} parent=0 // pred_fallthru
    _
  // Predicated region
  $region34: #{multistream_decoder_forward.11} parent=0 // pred_check
    _
  $region35: #{multistream_decoder_forward.11} parent=0 // pred_check_branch
    %712 = sbr.rel (0) target = $region37
  $region36: #{multistream_decoder_forward.11} parent=0 // pred_region
    _
  $region37: #{multistream_decoder_forward.11} parent=0 // pred_fallthru
    _

// kernel: multistream_decoder_forward.9
$region0: #{multistream_decoder_forward.9}
  #allocation0 [shape = 'u32[]', space=smem, size = 0x4, offset = 0x4, fixed_abs, tag = 'smem constant byte address 0x4 - core index']
  #allocation1 [shape = 'u32[144,128]{1,0:T(1,128)}', space=vmem, size = 0x12000, scoped, tag = 'internal scratch']
  %s0 = inlined_call_operand.vmem [shape: f32[16,256], index: 0, kind: input, shape index: {}, may-alias: {0,1}]
  %s1 = inlined_call_operand.vmem [shape: f32[16,256], index: 1, kind: input, shape index: {}, may-alias: {0,1}]
  %s2 = inlined_call_operand.vmem [shape: f32[4,256,64], index: 2, kind: input, shape index: {}]
  %s3 = inlined_call_operand.vmem [shape: f32[4,1,64], index: 3, kind: input, shape index: {}]
  %s4 = inlined_call_operand.vmem [shape: f32[4,256,64], index: 4, kind: input, shape index: {}]
  %s5 = inlined_call_operand.vmem [shape: f32[4,1,64], index: 5, kind: input, shape index: {}]
  %s6 = inlined_call_operand.vmem [shape: f32[4,256,64], index: 6, kind: input, shape index: {}]
  %s7 = inlined_call_operand.vmem [shape: f32[4,1,64], index: 7, kind: input, shape index: {}]
  %s8 = inlined_call_operand.vmem [shape: f32[4,64,256], index: 8, kind: input, shape index: {}]
  %s9 = inlined_call_operand.vmem [shape: f32[1,256], index: 9, kind: input, shape index: {}]
  %s10 = inlined_call_operand.vmem [shape: f32[1,256], index: 10, kind: input, shape index: {}]
  %s11 = inlined_call_operand.vmem [shape: f32[1,256], index: 11, kind: input, shape index: {}]
  %s12 = inlined_call_operand.vmem [shape: f32[16,256], index: 12, kind: output, shape index: {}]
  %s13 = sld [smem:[#allocation0]]
  $region58: #{multistream_decoder_forward.9} parent=0
    _
  %s15 = ssub.s32 1, %s13
  %s16 = scalar_select 0, %s15, %s13
  // Predicated region
  $region2: #{multistream_decoder_forward.9} parent=0 // pred_check
    _
  $region3: #{multistream_decoder_forward.9} parent=0 // pred_check_branch
    %18 = sbr.rel (0) target = $region5
  $region4: #{multistream_decoder_forward.9} parent=0 // pred_region
    _
  $region5: #{multistream_decoder_forward.9} parent=0 // pred_fallthru
    _
  // Predicated region
  $region6: #{multistream_decoder_forward.9} parent=0 // pred_check
    _
  $region7: #{multistream_decoder_forward.9} parent=0 // pred_check_branch
    %20 = sbr.rel (0) target = $region9
  $region8: #{multistream_decoder_forward.9} parent=0 // pred_region
    _
  $region9: #{multistream_decoder_forward.9} parent=0 // pred_fallthru
    _
  // Predicated region
  $region10: #{multistream_decoder_forward.9} parent=0 // pred_check
    _
  $region11: #{multistream_decoder_forward.9} parent=0 // pred_check_branch
    %22 = sbr.rel (0) target = $region13
  $region12: #{multistream_decoder_forward.9} parent=0 // pred_region
    _
  $region13: #{multistream_decoder_forward.9} parent=0 // pred_fallthru
    _
  // Predicated region
  $region14: #{multistream_decoder_forward.9} parent=0 // pred_check
    _
  $region15: #{multistream_decoder_forward.9} parent=0 // pred_check_branch
    %24 = sbr.rel (0) target = $region17
  $region16: #{multistream_decoder_forward.9} parent=0 // pred_region
    _
  $region17: #{multistream_decoder_forward.9} parent=0 // pred_fallthru
    _
  // Predicated region
  $region18: #{multistream_decoder_forward.9} parent=0 // pred_check
    _
  $region19: #{multistream_decoder_forward.9} parent=0 // pred_check_branch
    %26 = sbr.rel (0) target = $region21
  $region20: #{multistream_decoder_forward.9} parent=0 // pred_region
    _
  $region21: #{multistream_decoder_forward.9} parent=0 // pred_fallthru
    _
  // Predicated region
  $region22: #{multistream_decoder_forward.9} parent=0 // pred_check
    _
  $region23: #{multistream_decoder_forward.9} parent=0 // pred_check_branch
    %28 = sbr.rel (0) target = $region25
  $region24: #{multistream_decoder_forward.9} parent=0 // pred_region
    _
  $region25: #{multistream_decoder_forward.9} parent=0 // pred_fallthru
    _
  // Predicated region
  $region26: #{multistream_decoder_forward.9} parent=0 // pred_check
    _
  $region27: #{multistream_decoder_forward.9} parent=0 // pred_check_branch
    %30 = sbr.rel (0) target = $region29
  $region28: #{multistream_decoder_forward.9} parent=0 // pred_region
    _
  $region29: #{multistream_decoder_forward.9} parent=0 // pred_fallthru
    _
  // Predicated region
  $region30: #{multistream_decoder_forward.9} parent=0 // pred_check
    _
  $region31: #{multistream_decoder_forward.9} parent=0 // pred_check_branch
    %32 = sbr.rel (0) target = $region33
  $region32: #{multistream_decoder_forward.9} parent=0 // pred_region
    _
  $region33: #{multistream_decoder_forward.9} parent=0 // pred_fallthru
    _
  // Predicated region
  $region34: #{multistream_decoder_forward.9} parent=0 // pred_check
    _
  $region35: #{multistream_decoder_forward.9} parent=0 // pred_check_branch
    %34 = sbr.rel (0) target = $region37
  $region36: #{multistream_decoder_forward.9} parent=0 // pred_region
    _
  $region37: #{multistream_decoder_forward.9} parent=0 // pred_fallthru
    _
  // Predicated region
  $region38: #{multistream_decoder_forward.9} parent=0 // pred_check
    _
  $region39: #{multistream_decoder_forward.9} parent=0 // pred_check_branch
    %36 = sbr.rel (0) target = $region41
  $region40: #{multistream_decoder_forward.9} parent=0 // pred_region
    _
  $region41: #{multistream_decoder_forward.9} parent=0 // pred_fallthru
    _
  // Predicated region
  $region42: #{multistream_decoder_forward.9} parent=0 // pred_check
    _
  $region43: #{multistream_decoder_forward.9} parent=0 // pred_check_branch
    %38 = sbr.rel (0) target = $region45
  $region44: #{multistream_decoder_forward.9} parent=0 // pred_region
    _
  $region45: #{multistream_decoder_forward.9} parent=0 // pred_fallthru
    _
  // Predicated region
  $region46: #{multistream_decoder_forward.9} parent=0 // pred_check
    _
  $region47: #{multistream_decoder_forward.9} parent=0 // pred_check_branch
    %40 = sbr.rel (0) target = $region49
  $region48: #{multistream_decoder_forward.9} parent=0 // pred_region
    _
  $region49: #{multistream_decoder_forward.9} parent=0 // pred_fallthru
    _
  %v41 = vld [vmem:[%s0] sm:$0xff]
  %v42 = vld [vmem:[%s0 + $0x8] sm:$0xff]
  %v43 = vld [vmem:[%s0 + $0x10] sm:$0xff]
  %v44 = vld [vmem:[%s0 + $0x18] sm:$0xff]
  %v45 = vld [vmem:[%s1] sm:$0xff]
  %v46 = vld [vmem:[%s1 + $0x8] sm:$0xff]
  %v47 = vld [vmem:[%s1 + $0x10] sm:$0xff]
  %v48 = vld [vmem:[%s1 + $0x18] sm:$0xff]
  %v49 = vld [vmem:[%s2] sm:$0xff]
  %v50 = vld [vmem:[%s2 + $0x8] sm:$0xff]
  %v51 = vld [vmem:[%s2 + $0x10] sm:$0xff]
  %v52 = vld [vmem:[%s2 + $0x18] sm:$0xff]
  %v53 = vld [vmem:[%s2 + $0x20] sm:$0xff]
  %v54 = vld [vmem:[%s2 + $0x28] sm:$0xff]
  %v55 = vld [vmem:[%s2 + $0x30] sm:$0xff]
  %v56 = vld [vmem:[%s2 + $0x38] sm:$0xff]
  %v57 = vld [vmem:[%s2 + $0x40] sm:$0xff]
  %v58 = vld [vmem:[%s2 + $0x48] sm:$0xff]
  %v59 = vld [vmem:[%s2 + $0x50] sm:$0xff]
  %v60 = vld [vmem:[%s2 + $0x58] sm:$0xff]
  %v61 = vld [vmem:[%s2 + $0x60] sm:$0xff]
  %v62 = vld [vmem:[%s2 + $0x68] sm:$0xff]
  %v63 = vld [vmem:[%s2 + $0x70] sm:$0xff]
  %v64 = vld [vmem:[%s2 + $0x78] sm:$0xff]
  %v65 = vld [vmem:[%s2 + $0x80] sm:$0xff]
  %v66 = vld [vmem:[%s2 + $0x88] sm:$0xff]
  %v67 = vld [vmem:[%s2 + $0x90] sm:$0xff]
  %v68 = vld [vmem:[%s2 + $0x98] sm:$0xff]
  %v69 = vld [vmem:[%s2 + $0xa0] sm:$0xff]
  %v70 = vld [vmem:[%s2 + $0xa8] sm:$0xff]
  %v71 = vld [vmem:[%s2 + $0xb0] sm:$0xff]
  %v72 = vld [vmem:[%s2 + $0xb8] sm:$0xff]
  %v73 = vld [vmem:[%s2 + $0xc0] sm:$0xff]
  %v74 = vld [vmem:[%s2 + $0xc8] sm:$0xff]
  %v75 = vld [vmem:[%s2 + $0xd0] sm:$0xff]
  %v76 = vld [vmem:[%s2 + $0xd8] sm:$0xff]
  %v77 = vld [vmem:[%s2 + $0xe0] sm:$0xff]
  %v78 = vld [vmem:[%s2 + $0xe8] sm:$0xff]
  %v79 = vld [vmem:[%s2 + $0xf0] sm:$0xff]
  %v80 = vld [vmem:[%s2 + $0xf8] sm:$0xff]
  %v81 = vld [vmem:[%s3] sm:$0x1]
  %v83 = vlaneseq
  %v84 = vshrl.u32 %v83, 7
  %v85 = vsub.s32 0, %v84
  %v86 = vrot.slane %v81, %v85
  %88 = vmatprep.subr.mxu0 0.0
  %89 = vmatpush1.msra.mxu0 %v49
  %90 = vmatprep.subr.mxu0 0.0
  %91 = vmatpush1.msra.mxu0 %v50
  %92 = vmatprep.subr.mxu0 0.0
  %93 = vmatpush1.msra.mxu0 %v51
  %94 = vmatprep.subr.mxu0 0.0
  %95 = vmatpush1.msra.mxu0 %v52
  %96 = vmatprep.subr.mxu0 0.0
  %97 = vmatpush1.msra.mxu0 %v53
  %98 = vmatprep.subr.mxu0 0.0
  %99 = vmatpush1.msra.mxu0 %v54
  %100 = vmatprep.subr.mxu0 0.0
  %101 = vmatpush1.msra.mxu0 %v55
  %102 = vmatprep.subr.mxu0 0.0
  %103 = vmatpush1.msra.mxu0 %v56
  %104 = vmatprep.subr.mxu0 0.0
  %105 = vmatpush1.msra.mxu0 %v57
  %106 = vmatprep.subr.mxu0 0.0
  %107 = vmatpush1.msra.mxu0 %v58
  %108 = vmatprep.subr.mxu0 0.0
  %109 = vmatpush1.msra.mxu0 %v59
  %110 = vmatprep.subr.mxu0 0.0
  %111 = vmatpush1.msra.mxu0 %v60
  %112 = vmatprep.subr.mxu0 0.0
  %113 = vmatpush1.msra.mxu0 %v61
  %114 = vmatprep.subr.mxu0 0.0
  %115 = vmatpush1.msra.mxu0 %v62
  %116 = vmatprep.subr.mxu0 0.0
  %117 = vmatpush1.msra.mxu0 %v63
  %118 = vmatprep.subr.mxu0 0.0
  %119 = vmatpush1.msra.mxu0 %v64
  %120 = vmatprep.subr.mxu0 0.0
  %121 = vmatpush1.msra.mxu0 %v65
  %122 = vmatprep.subr.mxu0 0.0
  %123 = vmatpush1.msra.mxu0 %v66
  %124 = vmatprep.subr.mxu0 0.0
  %125 = vmatpush1.msra.mxu0 %v67
  %126 = vmatprep.subr.mxu0 0.0
  %127 = vmatpush1.msra.mxu0 %v68
  %128 = vmatprep.subr.mxu0 0.0
  %129 = vmatpush1.msra.mxu0 %v69
  %130 = vmatprep.subr.mxu0 0.0
  %131 = vmatpush1.msra.mxu0 %v70
  %132 = vmatprep.subr.mxu0 0.0
  %133 = vmatpush1.msra.mxu0 %v71
  %134 = vmatprep.subr.mxu0 0.0
  %135 = vmatpush1.msra.mxu0 %v72
  %136 = vmatprep.subr.mxu0 0.0
  %137 = vmatpush1.msra.mxu0 %v73
  %138 = vmatprep.subr.mxu0 0.0
  %139 = vmatpush1.msra.mxu0 %v74
  %140 = vmatprep.subr.mxu0 0.0
  %141 = vmatpush1.msra.mxu0 %v75
  %142 = vmatprep.subr.mxu0 0.0
  %143 = vmatpush1.msra.mxu0 %v76
  %144 = vmatprep.subr.mxu0 0.0
  %145 = vmatpush1.msra.mxu0 %v77
  %146 = vmatprep.subr.mxu0 0.0
  %147 = vmatpush1.msra.mxu0 %v78
  %148 = vmatprep.subr.mxu0 0.0
  %149 = vmatpush1.msra.mxu0 %v79
  %150 = vmatprep.subr.mxu0 0.0
  %151 = vmatpush1.msra.mxu0 %v80
  %152 = vmatprep.mubr.f32.mxu0 %v42
  %153 = vmatmul.mubr.f32.gmra.mrb[0].mxu0 %v41
  %v154 = vpop.f32.mrb[0].mxu0
  %v155 = vadd.f32 %v86, %v154
  %v156 = vpop.f32.mrb[0].mxu0
  %157 = vmatprep.mubr.f32.mxu0 %v44
  %158 = vmatmul.mubr.f32.gmra.mrb[0].mxu0 %v43
  %v159 = vpop.f32.mrb[0].mxu0
  %v160 = vadd.f32 %v86, %v159
  %v161 = vpop.f32.mrb[0].mxu0
  %162 = vdwg.mxu0
  %v163 = vld [vmem:[%s4] sm:$0xff]
  %v164 = vld [vmem:[%s4 + $0x8] sm:$0xff]
  %v165 = vld [vmem:[%s4 + $0x10] sm:$0xff]
  %v166 = vld [vmem:[%s4 + $0x18] sm:$0xff]
  %v167 = vld [vmem:[%s4 + $0x20] sm:$0xff]
  %v168 = vld [vmem:[%s4 + $0x28] sm:$0xff]
  %v169 = vld [vmem:[%s4 + $0x30] sm:$0xff]
  %v170 = vld [vmem:[%s4 + $0x38] sm:$0xff]
  %v171 = vld [vmem:[%s4 + $0x40] sm:$0xff]
  %v172 = vld [vmem:[%s4 + $0x48] sm:$0xff]
  %v173 = vld [vmem:[%s4 + $0x50] sm:$0xff]
  %v174 = vld [vmem:[%s4 + $0x58] sm:$0xff]
  %v175 = vld [vmem:[%s4 + $0x60] sm:$0xff]
  %v176 = vld [vmem:[%s4 + $0x68] sm:$0xff]
  %v177 = vld [vmem:[%s4 + $0x70] sm:$0xff]
  %v178 = vld [vmem:[%s4 + $0x78] sm:$0xff]
  %v179 = vld [vmem:[%s4 + $0x80] sm:$0xff]
  %v180 = vld [vmem:[%s4 + $0x88] sm:$0xff]
  %v181 = vld [vmem:[%s4 + $0x90] sm:$0xff]
  %v182 = vld [vmem:[%s4 + $0x98] sm:$0xff]
  %v183 = vld [vmem:[%s4 + $0xa0] sm:$0xff]
  %v184 = vld [vmem:[%s4 + $0xa8] sm:$0xff]
  %v185 = vld [vmem:[%s4 + $0xb0] sm:$0xff]
  %v186 = vld [vmem:[%s4 + $0xb8] sm:$0xff]
  %v187 = vld [vmem:[%s4 + $0xc0] sm:$0xff]
  %v188 = vld [vmem:[%s4 + $0xc8] sm:$0xff]
  %v189 = vld [vmem:[%s4 + $0xd0] sm:$0xff]
  %v190 = vld [vmem:[%s4 + $0xd8] sm:$0xff]
  %v191 = vld [vmem:[%s4 + $0xe0] sm:$0xff]
  %v192 = vld [vmem:[%s4 + $0xe8] sm:$0xff]
  %v193 = vld [vmem:[%s4 + $0xf0] sm:$0xff]
  %v194 = vld [vmem:[%s4 + $0xf8] sm:$0xff]
  %v195 = vld [vmem:[%s5] sm:$0x1]
  %v197 = vlaneseq
  %v198 = vshrl.u32 %v197, 7
  %v199 = vsub.s32 0, %v198
  %v200 = vrot.slane %v195, %v199
  %202 = vmatprep.subr.mxu0 0.0
  %203 = vmatpush1.msra.mxu0 %v163
  %204 = vmatprep.subr.mxu0 0.0
  %205 = vmatpush1.msra.mxu0 %v164
  %206 = vmatprep.subr.mxu0 0.0
  %207 = vmatpush1.msra.mxu0 %v165
  %208 = vmatprep.subr.mxu0 0.0
  %209 = vmatpush1.msra.mxu0 %v166
  %210 = vmatprep.subr.mxu0 0.0
  %211 = vmatpush1.msra.mxu0 %v167
  %212 = vmatprep.subr.mxu0 0.0
  %213 = vmatpush1.msra.mxu0 %v168
  %214 = vmatprep.subr.mxu0 0.0
  %215 = vmatpush1.msra.mxu0 %v169
  %216 = vmatprep.subr.mxu0 0.0
  %217 = vmatpush1.msra.mxu0 %v170
  %218 = vmatprep.subr.mxu0 0.0
  %219 = vmatpush1.msra.mxu0 %v171
  %220 = vmatprep.subr.mxu0 0.0
  %221 = vmatpush1.msra.mxu0 %v172
  %222 = vmatprep.subr.mxu0 0.0
  %223 = vmatpush1.msra.mxu0 %v173
  %224 = vmatprep.subr.mxu0 0.0
  %225 = vmatpush1.msra.mxu0 %v174
  %226 = vmatprep.subr.mxu0 0.0
  %227 = vmatpush1.msra.mxu0 %v175
  %228 = vmatprep.subr.mxu0 0.0
  %229 = vmatpush1.msra.mxu0 %v176
  %230 = vmatprep.subr.mxu0 0.0
  %231 = vmatpush1.msra.mxu0 %v177
  %232 = vmatprep.subr.mxu0 0.0
  %233 = vmatpush1.msra.mxu0 %v178
  %234 = vmatprep.subr.mxu0 0.0
  %235 = vmatpush1.msra.mxu0 %v179
  %236 = vmatprep.subr.mxu0 0.0
  %237 = vmatpush1.msra.mxu0 %v180
  %238 = vmatprep.subr.mxu0 0.0
  %239 = vmatpush1.msra.mxu0 %v181
  %240 = vmatprep.subr.mxu0 0.0
  %241 = vmatpush1.msra.mxu0 %v182
  %242 = vmatprep.subr.mxu0 0.0
  %243 = vmatpush1.msra.mxu0 %v183
  %244 = vmatprep.subr.mxu0 0.0
  %245 = vmatpush1.msra.mxu0 %v184
  %246 = vmatprep.subr.mxu0 0.0
  %247 = vmatpush1.msra.mxu0 %v185
  %248 = vmatprep.subr.mxu0 0.0
  %249 = vmatpush1.msra.mxu0 %v186
  %250 = vmatprep.subr.mxu0 0.0
  %251 = vmatpush1.msra.mxu0 %v187
  %252 = vmatprep.subr.mxu0 0.0
  %253 = vmatpush1.msra.mxu0 %v188
  %254 = vmatprep.subr.mxu0 0.0
  %255 = vmatpush1.msra.mxu0 %v189
  %256 = vmatprep.subr.mxu0 0.0
  %257 = vmatpush1.msra.mxu0 %v190
  %258 = vmatprep.subr.mxu0 0.0
  %259 = vmatpush1.msra.mxu0 %v191
  %260 = vmatprep.subr.mxu0 0.0
  %261 = vmatpush1.msra.mxu0 %v192
  %262 = vmatprep.subr.mxu0 0.0
  %263 = vmatpush1.msra.mxu0 %v193
  %264 = vmatprep.subr.mxu0 0.0
  %265 = vmatpush1.msra.mxu0 %v194
  %266 = vmatprep.mubr.f32.mxu0 %v46
  %267 = vmatmul.mubr.f32.gmra.mrb[0].mxu0 %v45
  %v268 = vpop.f32.mrb[0].mxu0
  %v269 = vadd.f32 %v200, %v268
  %v270 = vpop.f32.mrb[0].mxu0
  %271 = vmatprep.mubr.f32.mxu0 %v48
  %272 = vmatmul.mubr.f32.gmra.mrb[0].mxu0 %v47
  %v273 = vpop.f32.mrb[0].mxu0
  %v274 = vadd.f32 %v200, %v273
  %v275 = vpop.f32.mrb[0].mxu0
  %276 = vdwg.mxu0
  %v277 = vld [vmem:[%s6] sm:$0xff]
  %v278 = vld [vmem:[%s6 + $0x8] sm:$0xff]
  %v279 = vld [vmem:[%s6 + $0x10] sm:$0xff]
  %v280 = vld [vmem:[%s6 + $0x18] sm:$0xff]
  %v281 = vld [vmem:[%s6 + $0x20] sm:$0xff]
  %v282 = vld [vmem:[%s6 + $0x28] sm:$0xff]
  %v283 = vld [vmem:[%s6 + $0x30] sm:$0xff]
  %v284 = vld [vmem:[%s6 + $0x38] sm:$0xff]
  %v285 = vld [vmem:[%s6 + $0x40] sm:$0xff]
  %v286 = vld [vmem:[%s6 + $0x48] sm:$0xff]
  %v287 = vld [vmem:[%s6 + $0x50] sm:$0xff]
  %v288 = vld [vmem:[%s6 + $0x58] sm:$0xff]
  %v289 = vld [vmem:[%s6 + $0x60] sm:$0xff]
  %v290 = vld [vmem:[%s6 + $0x68] sm:$0xff]
  %v291 = vld [vmem:[%s6 + $0x70] sm:$0xff]
  %v292 = vld [vmem:[%s6 + $0x78] sm:$0xff]
  %v293 = vld [vmem:[%s6 + $0x80] sm:$0xff]
  %v294 = vld [vmem:[%s6 + $0x88] sm:$0xff]
  %v295 = vld [vmem:[%s6 + $0x90] sm:$0xff]
  %v296 = vld [vmem:[%s6 + $0x98] sm:$0xff]
  %v297 = vld [vmem:[%s6 + $0xa0] sm:$0xff]
  %v298 = vld [vmem:[%s6 + $0xa8] sm:$0xff]
  %v299 = vld [vmem:[%s6 + $0xb0] sm:$0xff]
  %v300 = vld [vmem:[%s6 + $0xb8] sm:$0xff]
  %v301 = vld [vmem:[%s6 + $0xc0] sm:$0xff]
  %v302 = vld [vmem:[%s6 + $0xc8] sm:$0xff]
  %v303 = vld [vmem:[%s6 + $0xd0] sm:$0xff]
  %v304 = vld [vmem:[%s6 + $0xd8] sm:$0xff]
  %v305 = vld [vmem:[%s6 + $0xe0] sm:$0xff]
  %v306 = vld [vmem:[%s6 + $0xe8] sm:$0xff]
  %v307 = vld [vmem:[%s6 + $0xf0] sm:$0xff]
  %v308 = vld [vmem:[%s6 + $0xf8] sm:$0xff]
  %v309 = vld [vmem:[%s7] sm:$0x1]
  %v311 = vlaneseq
  %v312 = vshrl.u32 %v311, 7
  %v313 = vsub.s32 0, %v312
  %v314 = vrot.slane %v309, %v313
  %316 = vmatprep.subr.mxu0 0.0
  %317 = vmatpush1.msra.mxu0 %v277
  %318 = vmatprep.subr.mxu0 0.0
  %319 = vmatpush1.msra.mxu0 %v278
  %320 = vmatprep.subr.mxu0 0.0
  %321 = vmatpush1.msra.mxu0 %v279
  %322 = vmatprep.subr.mxu0 0.0
  %323 = vmatpush1.msra.mxu0 %v280
  %324 = vmatprep.subr.mxu0 0.0
  %325 = vmatpush1.msra.mxu0 %v281
  %326 = vmatprep.subr.mxu0 0.0
  %327 = vmatpush1.msra.mxu0 %v282
  %328 = vmatprep.subr.mxu0 0.0
  %329 = vmatpush1.msra.mxu0 %v283
  %330 = vmatprep.subr.mxu0 0.0
  %331 = vmatpush1.msra.mxu0 %v284
  %332 = vmatprep.subr.mxu0 0.0
  %333 = vmatpush1.msra.mxu0 %v285
  %334 = vmatprep.subr.mxu0 0.0
  %335 = vmatpush1.msra.mxu0 %v286
  %336 = vmatprep.subr.mxu0 0.0
  %337 = vmatpush1.msra.mxu0 %v287
  %338 = vmatprep.subr.mxu0 0.0
  %339 = vmatpush1.msra.mxu0 %v288
  %340 = vmatprep.subr.mxu0 0.0
  %341 = vmatpush1.msra.mxu0 %v289
  %342 = vmatprep.subr.mxu0 0.0
  %343 = vmatpush1.msra.mxu0 %v290
  %344 = vmatprep.subr.mxu0 0.0
  %345 = vmatpush1.msra.mxu0 %v291
  %346 = vmatprep.subr.mxu0 0.0
  %347 = vmatpush1.msra.mxu0 %v292
  %348 = vmatprep.subr.mxu0 0.0
  %349 = vmatpush1.msra.mxu0 %v293
  %350 = vmatprep.subr.mxu0 0.0
  %351 = vmatpush1.msra.mxu0 %v294
  %352 = vmatprep.subr.mxu0 0.0
  %353 = vmatpush1.msra.mxu0 %v295
  %354 = vmatprep.subr.mxu0 0.0
  %355 = vmatpush1.msra.mxu0 %v296
  %356 = vmatprep.subr.mxu0 0.0
  %357 = vmatpush1.msra.mxu0 %v297
  %358 = vmatprep.subr.mxu0 0.0
  %359 = vmatpush1.msra.mxu0 %v298
  %360 = vmatprep.subr.mxu0 0.0
  %361 = vmatpush1.msra.mxu0 %v299
  %362 = vmatprep.subr.mxu0 0.0
  %363 = vmatpush1.msra.mxu0 %v300
  %364 = vmatprep.subr.mxu0 0.0
  %365 = vmatpush1.msra.mxu0 %v301
  %366 = vmatprep.subr.mxu0 0.0
  %367 = vmatpush1.msra.mxu0 %v302
  %368 = vmatprep.subr.mxu0 0.0
  %369 = vmatpush1.msra.mxu0 %v303
  %370 = vmatprep.subr.mxu0 0.0
  %371 = vmatpush1.msra.mxu0 %v304
  %372 = vmatprep.subr.mxu0 0.0
  %373 = vmatpush1.msra.mxu0 %v305
  %374 = vmatprep.subr.mxu0 0.0
  %375 = vmatpush1.msra.mxu0 %v306
  %376 = vmatprep.subr.mxu0 0.0
  %377 = vmatpush1.msra.mxu0 %v307
  %378 = vmatprep.subr.mxu0 0.0
  %379 = vmatpush1.msra.mxu0 %v308
  %380 = vmatprep.mubr.f32.mxu0 %v46
  %381 = vmatmul.mubr.f32.gmra.mrb[0].mxu0 %v45
  %v382 = vpop.f32.mrb[0].mxu0
  %v383 = vadd.f32 %v314, %v382
  %v384 = vpop.f32.mrb[0].mxu0
  %385 = vmatprep.mubr.f32.mxu0 %v48
  %386 = vmatmul.mubr.f32.gmra.mrb[0].mxu0 %v47
  %v387 = vpop.f32.mrb[0].mxu0
  %v388 = vadd.f32 %v314, %v387
  %v389 = vpop.f32.mrb[0].mxu0
  %390 = vdwg.mxu0
  %vm391 = vcmask 523264
  %v393 = vsel %vm391, %v155, 0
  %v396 = vsel %vm391, %v269, 0
  %398 = vmatprep.subr.mxu0 0.0
  %399 = vmatpush1.xpose.msra.mxu0 %v396
  %400 = vmatprep.subr.mxu0 0.0
  %401 = vmatpush1.xpose.msra.mxu0 0.0
  %402 = vmatprep.subr.mxu0 0.0
  %403 = vmatpush1.xpose.msra.mxu0 0.0
  %404 = vmatprep.subr.mxu0 0.0
  %405 = vmatpush1.xpose.msra.mxu0 0.0
  %406 = vmatprep.subr.mxu0 0.0
  %407 = vmatpush1.xpose.msra.mxu0 0.0
  %408 = vmatprep.subr.mxu0 0.0
  %409 = vmatpush1.xpose.msra.mxu0 0.0
  %410 = vmatprep.subr.mxu0 0.0
  %411 = vmatpush1.xpose.msra.mxu0 0.0
  %412 = vmatprep.subr.mxu0 0.0
  %413 = vmatpush1.xpose.msra.mxu0 0.0
  %414 = vmatprep.subr.mxu0 0.0
  %415 = vmatpush1.xpose.msra.mxu0 0.0
  %416 = vmatprep.subr.mxu0 0.0
  %417 = vmatpush1.xpose.msra.mxu0 0.0
  %418 = vmatprep.subr.mxu0 0.0
  %419 = vmatpush1.xpose.msra.mxu0 0.0
  %420 = vmatprep.subr.mxu0 0.0
  %421 = vmatpush1.xpose.msra.mxu0 0.0
  %422 = vmatprep.subr.mxu0 0.0
  %423 = vmatpush1.xpose.msra.mxu0 0.0
  %424 = vmatprep.subr.mxu0 0.0
  %425 = vmatpush1.xpose.msra.mxu0 0.0
  %426 = vmatprep.subr.mxu0 0.0
  %427 = vmatpush1.xpose.msra.mxu0 0.0
  %428 = vmatprep.subr.mxu0 0.0
  %429 = vmatpush1.xpose.msra.mxu0 0.0
  %430 = vmatprep.subr.mxu0 0.0
  %431 = vmatpush1.xpose.msra.mxu0 0.0
  %432 = vmatprep.subr.mxu0 0.0
  %433 = vmatpush1.xpose.msra.mxu0 0.0
  %434 = vmatprep.subr.mxu0 0.0
  %435 = vmatpush1.xpose.msra.mxu0 0.0
  %436 = vmatprep.subr.mxu0 0.0
  %437 = vmatpush1.xpose.msra.mxu0 0.0
  %438 = vmatprep.subr.mxu0 0.0
  %439 = vmatpush1.xpose.msra.mxu0 0.0
  %440 = vmatprep.subr.mxu0 0.0
  %441 = vmatpush1.xpose.msra.mxu0 0.0
  %442 = vmatprep.subr.mxu0 0.0
  %443 = vmatpush1.xpose.msra.mxu0 0.0
  %444 = vmatprep.subr.mxu0 0.0
  %445 = vmatpush1.xpose.msra.mxu0 0.0
  %446 = vmatprep.subr.mxu0 0.0
  %447 = vmatpush1.xpose.msra.mxu0 0.0
  %448 = vmatprep.subr.mxu0 0.0
  %449 = vmatpush1.xpose.msra.mxu0 0.0
  %450 = vmatprep.subr.mxu0 0.0
  %451 = vmatpush1.xpose.msra.mxu0 0.0
  %452 = vmatprep.subr.mxu0 0.0
  %453 = vmatpush1.xpose.msra.mxu0 0.0
  %454 = vmatprep.subr.mxu0 0.0
  %455 = vmatpush1.xpose.msra.mxu0 0.0
  %456 = vmatprep.subr.mxu0 0.0
  %457 = vmatpush1.xpose.msra.mxu0 0.0
  %458 = vmatprep.subr.mxu0 0.0
  %459 = vmatpush1.xpose.msra.mxu0 0.0
  %460 = vmatprep.subr.mxu0 0.0
  %461 = vmatpush1.xpose.msra.mxu0 0.0
  %462 = vmatprep.mubr.f32.mxu0 0.0
  %463 = vmatmul.mubr.f32.gmra.mrb[0].mxu0 %v393
  %v464 = vpop.f32.mrb[0].mxu0
  %v465 = vadd.f32 0.0, %v464
  %v466 = vpop.f32.mrb[0].mxu0
  %467 = vdwg.mxu0
  %v469 = vsel %vm391, %v160, 0
  %v472 = vsel %vm391, %v274, 0
  %474 = vmatprep.subr.mxu0 0.0
  %475 = vmatpush1.xpose.msra.mxu0 %v472
  %476 = vmatprep.subr.mxu0 0.0
  %477 = vmatpush1.xpose.msra.mxu0 0.0
  %478 = vmatprep.subr.mxu0 0.0
  %479 = vmatpush1.xpose.msra.mxu0 0.0
  %480 = vmatprep.subr.mxu0 0.0
  %481 = vmatpush1.xpose.msra.mxu0 0.0
  %482 = vmatprep.subr.mxu0 0.0
  %483 = vmatpush1.xpose.msra.mxu0 0.0
  %484 = vmatprep.subr.mxu0 0.0
  %485 = vmatpush1.xpose.msra.mxu0 0.0
  %486 = vmatprep.subr.mxu0 0.0
  %487 = vmatpush1.xpose.msra.mxu0 0.0
  %488 = vmatprep.subr.mxu0 0.0
  %489 = vmatpush1.xpose.msra.mxu0 0.0
  %490 = vmatprep.subr.mxu0 0.0
  %491 = vmatpush1.xpose.msra.mxu0 0.0
  %492 = vmatprep.subr.mxu0 0.0
  %493 = vmatpush1.xpose.msra.mxu0 0.0
  %494 = vmatprep.subr.mxu0 0.0
  %495 = vmatpush1.xpose.msra.mxu0 0.0
  %496 = vmatprep.subr.mxu0 0.0
  %497 = vmatpush1.xpose.msra.mxu0 0.0
  %498 = vmatprep.subr.mxu0 0.0
  %499 = vmatpush1.xpose.msra.mxu0 0.0
  %500 = vmatprep.subr.mxu0 0.0
  %501 = vmatpush1.xpose.msra.mxu0 0.0
  %502 = vmatprep.subr.mxu0 0.0
  %503 = vmatpush1.xpose.msra.mxu0 0.0
  %504 = vmatprep.subr.mxu0 0.0
  %505 = vmatpush1.xpose.msra.mxu0 0.0
  %506 = vmatprep.subr.mxu0 0.0
  %507 = vmatpush1.xpose.msra.mxu0 0.0
  %508 = vmatprep.subr.mxu0 0.0
  %509 = vmatpush1.xpose.msra.mxu0 0.0
  %510 = vmatprep.subr.mxu0 0.0
  %511 = vmatpush1.xpose.msra.mxu0 0.0
  %512 = vmatprep.subr.mxu0 0.0
  %513 = vmatpush1.xpose.msra.mxu0 0.0
  %514 = vmatprep.subr.mxu0 0.0
  %515 = vmatpush1.xpose.msra.mxu0 0.0
  %516 = vmatprep.subr.mxu0 0.0
  %517 = vmatpush1.xpose.msra.mxu0 0.0
  %518 = vmatprep.subr.mxu0 0.0
  %519 = vmatpush1.xpose.msra.mxu0 0.0
  %520 = vmatprep.subr.mxu0 0.0
  %521 = vmatpush1.xpose.msra.mxu0 0.0
  %522 = vmatprep.subr.mxu0 0.0
  %523 = vmatpush1.xpose.msra.mxu0 0.0
  %524 = vmatprep.subr.mxu0 0.0
  %525 = vmatpush1.xpose.msra.mxu0 0.0
  %526 = vmatprep.subr.mxu0 0.0
  %527 = vmatpush1.xpose.msra.mxu0 0.0
  %528 = vmatprep.subr.mxu0 0.0
  %529 = vmatpush1.xpose.msra.mxu0 0.0
  %530 = vmatprep.subr.mxu0 0.0
  %531 = vmatpush1.xpose.msra.mxu0 0.0
  %532 = vmatprep.subr.mxu0 0.0
  %533 = vmatpush1.xpose.msra.mxu0 0.0
  %534 = vmatprep.subr.mxu0 0.0
  %535 = vmatpush1.xpose.msra.mxu0 0.0
  %536 = vmatprep.subr.mxu0 0.0
  %537 = vmatpush1.xpose.msra.mxu0 0.0
  %538 = vmatprep.mubr.f32.mxu0 0.0
  %539 = vmatmul.mubr.f32.gmra.mrb[0].mxu0 %v469
  %v540 = vpop.f32.mrb[0].mxu0
  %v541 = vadd.f32 0.0, %v540
  %v542 = vpop.f32.mrb[0].mxu0
  %543 = vdwg.mxu0
  %v544 = vmul.f32 %v465, 0.125
  %v545 = vmul.f32 %v541, 0.125
  %vm546 = vcmask 64512
  %v547 = vsel %vm546, %v544, -inf
  %548 = vmax.xlane.f32.xlu0 %v547
  %v549 = vpop.xlane.xlu0 %548
  %v550 = vsel %vm546, %v545, -inf
  %551 = vmax.xlane.f32.xlu0 %v550
  %v552 = vpop.xlane.xlu0 %551
  %v553 = vsub.f32 %v544, %v549
  %v554 = vsub.f32 %v545, %v552
  %v555 = vmul.f32 %v553, 1.442695
  %v556 = vpow.pop %v555
  %v557 = vmul.f32 %v554, 1.442695
  %v558 = vpow.pop %v557
  %v559 = vsel %vm546, %v556, 0.0
  %560 = vadd.xlane.f32.xlu0 %v559
  %v561 = vpop.xlane.xlu0 %560
  %v562 = vsel %vm546, %v558, 0.0
  %563 = vadd.xlane.f32.xlu0 %v562
  %v564 = vpop.xlane.xlu0 %563
  %v565 = vrcp.pop %v561
  %v566 = vrcp.pop %v564
  %v567 = vmul.f32 %v556, %v565
  %v568 = vmul.f32 %v558, %v566
  %v570 = vsel %vm546, %v567, 0
  %572 = vmatprep.subr.mxu0 0.0
  %573 = vmatpush1.msra.mxu0 %v383
  %574 = vmatprep.subr.mxu0 0.0
  %575 = vmatpush1.msra.mxu0 0.0
  %576 = vmatprep.subr.mxu0 0.0
  %577 = vmatpush1.msra.mxu0 0.0
  %578 = vmatprep.subr.mxu0 0.0
  %579 = vmatpush1.msra.mxu0 0.0
  %580 = vmatprep.subr.mxu0 0.0
  %581 = vmatpush1.msra.mxu0 0.0
  %582 = vmatprep.subr.mxu0 0.0
  %583 = vmatpush1.msra.mxu0 0.0
  %584 = vmatprep.subr.mxu0 0.0
  %585 = vmatpush1.msra.mxu0 0.0
  %586 = vmatprep.subr.mxu0 0.0
  %587 = vmatpush1.msra.mxu0 0.0
  %588 = vmatprep.subr.mxu0 0.0
  %589 = vmatpush1.msra.mxu0 0.0
  %590 = vmatprep.subr.mxu0 0.0
  %591 = vmatpush1.msra.mxu0 0.0
  %592 = vmatprep.subr.mxu0 0.0
  %593 = vmatpush1.msra.mxu0 0.0
  %594 = vmatprep.subr.mxu0 0.0
  %595 = vmatpush1.msra.mxu0 0.0
  %596 = vmatprep.subr.mxu0 0.0
  %597 = vmatpush1.msra.mxu0 0.0
  %598 = vmatprep.subr.mxu0 0.0
  %599 = vmatpush1.msra.mxu0 0.0
  %600 = vmatprep.subr.mxu0 0.0
  %601 = vmatpush1.msra.mxu0 0.0
  %602 = vmatprep.subr.mxu0 0.0
  %603 = vmatpush1.msra.mxu0 0.0
  %604 = vmatprep.subr.mxu0 0.0
  %605 = vmatpush1.msra.mxu0 0.0
  %606 = vmatprep.subr.mxu0 0.0
  %607 = vmatpush1.msra.mxu0 0.0
  %608 = vmatprep.subr.mxu0 0.0
  %609 = vmatpush1.msra.mxu0 0.0
  %610 = vmatprep.subr.mxu0 0.0
  %611 = vmatpush1.msra.mxu0 0.0
  %612 = vmatprep.subr.mxu0 0.0
  %613 = vmatpush1.msra.mxu0 0.0
  %614 = vmatprep.subr.mxu0 0.0
  %615 = vmatpush1.msra.mxu0 0.0
  %616 = vmatprep.subr.mxu0 0.0
  %617 = vmatpush1.msra.mxu0 0.0
  %618 = vmatprep.subr.mxu0 0.0
  %619 = vmatpush1.msra.mxu0 0.0
  %620 = vmatprep.subr.mxu0 0.0
  %621 = vmatpush1.msra.mxu0 0.0
  %622 = vmatprep.subr.mxu0 0.0
  %623 = vmatpush1.msra.mxu0 0.0
  %624 = vmatprep.subr.mxu0 0.0
  %625 = vmatpush1.msra.mxu0 0.0
  %626 = vmatprep.subr.mxu0 0.0
  %627 = vmatpush1.msra.mxu0 0.0
  %628 = vmatprep.subr.mxu0 0.0
  %629 = vmatpush1.msra.mxu0 0.0
  %630 = vmatprep.subr.mxu0 0.0
  %631 = vmatpush1.msra.mxu0 0.0
  %632 = vmatprep.subr.mxu0 0.0
  %633 = vmatpush1.msra.mxu0 0.0
  %634 = vmatprep.subr.mxu0 0.0
  %635 = vmatpush1.msra.mxu0 0.0
  %636 = vmatprep.mubr.f32.mxu0 0.0
  %637 = vmatmul.mubr.f32.gmra.mrb[0].mxu0 %v570
  %v638 = vpop.f32.mrb[0].mxu0
  %v639 = vadd.f32 0.0, %v638
  %v640 = vpop.f32.mrb[0].mxu0
  %641 = vdwg.mxu0
  %v643 = vsel %vm546, %v568, 0
  %645 = vmatprep.subr.mxu0 0.0
  %646 = vmatpush1.msra.mxu0 %v388
  %647 = vmatprep.subr.mxu0 0.0
  %648 = vmatpush1.msra.mxu0 0.0
  %649 = vmatprep.subr.mxu0 0.0
  %650 = vmatpush1.msra.mxu0 0.0
  %651 = vmatprep.subr.mxu0 0.0
  %652 = vmatpush1.msra.mxu0 0.0
  %653 = vmatprep.subr.mxu0 0.0
  %654 = vmatpush1.msra.mxu0 0.0
  %655 = vmatprep.subr.mxu0 0.0
  %656 = vmatpush1.msra.mxu0 0.0
  %657 = vmatprep.subr.mxu0 0.0
  %658 = vmatpush1.msra.mxu0 0.0
  %659 = vmatprep.subr.mxu0 0.0
  %660 = vmatpush1.msra.mxu0 0.0
  %661 = vmatprep.subr.mxu0 0.0
  %662 = vmatpush1.msra.mxu0 0.0
  %663 = vmatprep.subr.mxu0 0.0
  %664 = vmatpush1.msra.mxu0 0.0
  %665 = vmatprep.subr.mxu0 0.0
  %666 = vmatpush1.msra.mxu0 0.0
  %667 = vmatprep.subr.mxu0 0.0
  %668 = vmatpush1.msra.mxu0 0.0
  %669 = vmatprep.subr.mxu0 0.0
  %670 = vmatpush1.msra.mxu0 0.0
  %671 = vmatprep.subr.mxu0 0.0
  %672 = vmatpush1.msra.mxu0 0.0
  %673 = vmatprep.subr.mxu0 0.0
  %674 = vmatpush1.msra.mxu0 0.0
  %675 = vmatprep.subr.mxu0 0.0
  %676 = vmatpush1.msra.mxu0 0.0
  %677 = vmatprep.subr.mxu0 0.0
  %678 = vmatpush1.msra.mxu0 0.0
  %679 = vmatprep.subr.mxu0 0.0
  %680 = vmatpush1.msra.mxu0 0.0
  %681 = vmatprep.subr.mxu0 0.0
  %682 = vmatpush1.msra.mxu0 0.0
  %683 = vmatprep.subr.mxu0 0.0
  %684 = vmatpush1.msra.mxu0 0.0
  %685 = vmatprep.subr.mxu0 0.0
  %686 = vmatpush1.msra.mxu0 0.0
  %687 = vmatprep.subr.mxu0 0.0
  %688 = vmatpush1.msra.mxu0 0.0
  %689 = vmatprep.subr.mxu0 0.0
  %690 = vmatpush1.msra.mxu0 0.0
  %691 = vmatprep.subr.mxu0 0.0
  %692 = vmatpush1.msra.mxu0 0.0
  %693 = vmatprep.subr.mxu0 0.0
  %694 = vmatpush1.msra.mxu0 0.0
  %695 = vmatprep.subr.mxu0 0.0
  %696 = vmatpush1.msra.mxu0 0.0
  %697 = vmatprep.subr.mxu0 0.0
  %698 = vmatpush1.msra.mxu0 0.0
  %699 = vmatprep.subr.mxu0 0.0
  %700 = vmatpush1.msra.mxu0 0.0
  %701 = vmatprep.subr.mxu0 0.0
  %702 = vmatpush1.msra.mxu0 0.0
  %703 = vmatprep.subr.mxu0 0.0
  %704 = vmatpush1.msra.mxu0 0.0
  %705 = vmatprep.subr.mxu0 0.0
  %706 = vmatpush1.msra.mxu0 0.0
  %707 = vmatprep.subr.mxu0 0.0
  %708 = vmatpush1.msra.mxu0 0.0
  %709 = vmatprep.mubr.f32.mxu0 0.0
  %710 = vmatmul.mubr.f32.gmra.mrb[0].mxu0 %v643
  %v711 = vpop.f32.mrb[0].mxu0
  %v712 = vadd.f32 0.0, %v711
  %v713 = vpop.f32.mrb[0].mxu0
  %714 = vdwg.mxu0
  %v715 = vld [vmem:[%s8] sm:$0xff]
  %v716 = vld [vmem:[%s8 + $0x8] sm:$0xff]
  %v717 = vld [vmem:[%s8 + $0x10] sm:$0xff]
  %v718 = vld [vmem:[%s8 + $0x18] sm:$0xff]
  %v719 = vld [vmem:[%s8 + $0x20] sm:$0xff]
  %v720 = vld [vmem:[%s8 + $0x28] sm:$0xff]
  %v721 = vld [vmem:[%s8 + $0x30] sm:$0xff]
  %v722 = vld [vmem:[%s8 + $0x38] sm:$0xff]
  %v723 = vld [vmem:[%s8 + $0x40] sm:$0xff]
  %v724 = vld [vmem:[%s8 + $0x48] sm:$0xff]
  %v725 = vld [vmem:[%s8 + $0x50] sm:$0xff]
  %v726 = vld [vmem:[%s8 + $0x58] sm:$0xff]
  %v727 = vld [vmem:[%s8 + $0x60] sm:$0xff]
  %v728 = vld [vmem:[%s8 + $0x68] sm:$0xff]
  %v729 = vld [vmem:[%s8 + $0x70] sm:$0xff]
  %v730 = vld [vmem:[%s8 + $0x78] sm:$0xff]
  %s731 = scalar_lea.vmem %s2, 256
  %v732 = vld [vmem:[%s731] sm:$0xff]
  %v733 = vld [vmem:[%s731 + $0x8] sm:$0xff]
  %v734 = vld [vmem:[%s731 + $0x10] sm:$0xff]
  %v735 = vld [vmem:[%s731 + $0x18] sm:$0xff]
  %v736 = vld [vmem:[%s731 + $0x20] sm:$0xff]
  %v737 = vld [vmem:[%s731 + $0x28] sm:$0xff]
  %v738 = vld [vmem:[%s731 + $0x30] sm:$0xff]
  %v739 = vld [vmem:[%s731 + $0x38] sm:$0xff]
  %v740 = vld [vmem:[%s731 + $0x40] sm:$0xff]
  %v741 = vld [vmem:[%s731 + $0x48] sm:$0xff]
  %v742 = vld [vmem:[%s731 + $0x50] sm:$0xff]
  %v743 = vld [vmem:[%s731 + $0x58] sm:$0xff]
  %v744 = vld [vmem:[%s731 + $0x60] sm:$0xff]
  %v745 = vld [vmem:[%s731 + $0x68] sm:$0xff]
  %v746 = vld [vmem:[%s731 + $0x70] sm:$0xff]
  %v747 = vld [vmem:[%s731 + $0x78] sm:$0xff]
  %v748 = vld [vmem:[%s731 + $0x80] sm:$0xff]
  %v749 = vld [vmem:[%s731 + $0x88] sm:$0xff]
  %v750 = vld [vmem:[%s731 + $0x90] sm:$0xff]
  %v751 = vld [vmem:[%s731 + $0x98] sm:$0xff]
  %v752 = vld [vmem:[%s731 + $0xa0] sm:$0xff]
  %v753 = vld [vmem:[%s731 + $0xa8] sm:$0xff]
  %v754 = vld [vmem:[%s731 + $0xb0] sm:$0xff]
  %v755 = vld [vmem:[%s731 + $0xb8] sm:$0xff]
  %v756 = vld [vmem:[%s731 + $0xc0] sm:$0xff]
  %v757 = vld [vmem:[%s731 + $0xc8] sm:$0xff]
  %v758 = vld [vmem:[%s731 + $0xd0] sm:$0xff]
  %v759 = vld [vmem:[%s731 + $0xd8] sm:$0xff]
  %v760 = vld [vmem:[%s731 + $0xe0] sm:$0xff]
  %v761 = vld [vmem:[%s731 + $0xe8] sm:$0xff]
  %v762 = vld [vmem:[%s731 + $0xf0] sm:$0xff]
  %v763 = vld [vmem:[%s731 + $0xf8] sm:$0xff]
  %s764 = scalar_lea.vmem %s3, 1
  %v765 = vld [vmem:[%s764] sm:$0x1]
  %v767 = vlaneseq
  %v768 = vshrl.u32 %v767, 7
  %v769 = vsub.s32 0, %v768
  %v770 = vrot.slane %v765, %v769
  %772 = vmatprep.subr.mxu0 0.0
  %773 = vmatpush1.msra.mxu0 %v732
  %774 = vmatprep.subr.mxu0 0.0
  %775 = vmatpush1.msra.mxu0 %v733
  %776 = vmatprep.subr.mxu0 0.0
  %777 = vmatpush1.msra.mxu0 %v734
  %778 = vmatprep.subr.mxu0 0.0
  %779 = vmatpush1.msra.mxu0 %v735
  %780 = vmatprep.subr.mxu0 0.0
  %781 = vmatpush1.msra.mxu0 %v736
  %782 = vmatprep.subr.mxu0 0.0
  %783 = vmatpush1.msra.mxu0 %v737
  %784 = vmatprep.subr.mxu0 0.0
  %785 = vmatpush1.msra.mxu0 %v738
  %786 = vmatprep.subr.mxu0 0.0
  %787 = vmatpush1.msra.mxu0 %v739
  %788 = vmatprep.subr.mxu0 0.0
  %789 = vmatpush1.msra.mxu0 %v740
  %790 = vmatprep.subr.mxu0 0.0
  %791 = vmatpush1.msra.mxu0 %v741
  %792 = vmatprep.subr.mxu0 0.0
  %793 = vmatpush1.msra.mxu0 %v742
  %794 = vmatprep.subr.mxu0 0.0
  %795 = vmatpush1.msra.mxu0 %v743
  %796 = vmatprep.subr.mxu0 0.0
  %797 = vmatpush1.msra.mxu0 %v744
  %798 = vmatprep.subr.mxu0 0.0
  %799 = vmatpush1.msra.mxu0 %v745
  %800 = vmatprep.subr.mxu0 0.0
  %801 = vmatpush1.msra.mxu0 %v746
  %802 = vmatprep.subr.mxu0 0.0
  %803 = vmatpush1.msra.mxu0 %v747
  %804 = vmatprep.subr.mxu0 0.0
  %805 = vmatpush1.msra.mxu0 %v748
  %806 = vmatprep.subr.mxu0 0.0
  %807 = vmatpush1.msra.mxu0 %v749
  %808 = vmatprep.subr.mxu0 0.0
  %809 = vmatpush1.msra.mxu0 %v750
  %810 = vmatprep.subr.mxu0 0.0
  %811 = vmatpush1.msra.mxu0 %v751
  %812 = vmatprep.subr.mxu0 0.0
  %813 = vmatpush1.msra.mxu0 %v752
  %814 = vmatprep.subr.mxu0 0.0
  %815 = vmatpush1.msra.mxu0 %v753
  %816 = vmatprep.subr.mxu0 0.0
  %817 = vmatpush1.msra.mxu0 %v754
  %818 = vmatprep.subr.mxu0 0.0
  %819 = vmatpush1.msra.mxu0 %v755
  %820 = vmatprep.subr.mxu0 0.0
  %821 = vmatpush1.msra.mxu0 %v756
  %822 = vmatprep.subr.mxu0 0.0
  %823 = vmatpush1.msra.mxu0 %v757
  %824 = vmatprep.subr.mxu0 0.0
  %825 = vmatpush1.msra.mxu0 %v758
  %826 = vmatprep.subr.mxu0 0.0
  %827 = vmatpush1.msra.mxu0 %v759
  %828 = vmatprep.subr.mxu0 0.0
  %829 = vmatpush1.msra.mxu0 %v760
  %830 = vmatprep.subr.mxu0 0.0
  %831 = vmatpush1.msra.mxu0 %v761
  %832 = vmatprep.subr.mxu0 0.0
  %833 = vmatpush1.msra.mxu0 %v762
  %834 = vmatprep.subr.mxu0 0.0
  %835 = vmatpush1.msra.mxu0 %v763
  %836 = vmatprep.mubr.f32.mxu0 %v42
  %837 = vmatmul.mubr.f32.gmra.mrb[0].mxu0 %v41
  %v838 = vpop.f32.mrb[0].mxu0
  %v839 = vadd.f32 %v770, %v838
  %v840 = vpop.f32.mrb[0].mxu0
  %841 = vmatprep.mubr.f32.mxu0 %v44
  %842 = vmatmul.mubr.f32.gmra.mrb[0].mxu0 %v43
  %v843 = vpop.f32.mrb[0].mxu0
  %v844 = vadd.f32 %v770, %v843
  %v845 = vpop.f32.mrb[0].mxu0
  %846 = vdwg.mxu0
  %s847 = scalar_lea.vmem %s4, 256
  %v848 = vld [vmem:[%s847] sm:$0xff]
  %v849 = vld [vmem:[%s847 + $0x8] sm:$0xff]
  %v850 = vld [vmem:[%s847 + $0x10] sm:$0xff]
  %v851 = vld [vmem:[%s847 + $0x18] sm:$0xff]
  %v852 = vld [vmem:[%s847 + $0x20] sm:$0xff]
  %v853 = vld [vmem:[%s847 + $0x28] sm:$0xff]
  %v854 = vld [vmem:[%s847 + $0x30] sm:$0xff]
  %v855 = vld [vmem:[%s847 + $0x38] sm:$0xff]
  %v856 = vld [vmem:[%s847 + $0x40] sm:$0xff]
  %v857 = vld [vmem:[%s847 + $0x48] sm:$0xff]
  %v858 = vld [vmem:[%s847 + $0x50] sm:$0xff]
  %v859 = vld [vmem:[%s847 + $0x58] sm:$0xff]
  %v860 = vld [vmem:[%s847 + $0x60] sm:$0xff]
  %v861 = vld [vmem:[%s847 + $0x68] sm:$0xff]
  %v862 = vld [vmem:[%s847 + $0x70] sm:$0xff]
  %v863 = vld [vmem:[%s847 + $0x78] sm:$0xff]
  %v864 = vld [vmem:[%s847 + $0x80] sm:$0xff]
  %v865 = vld [vmem:[%s847 + $0x88] sm:$0xff]
  %v866 = vld [vmem:[%s847 + $0x90] sm:$0xff]
  %v867 = vld [vmem:[%s847 + $0x98] sm:$0xff]
  %v868 = vld [vmem:[%s847 + $0xa0] sm:$0xff]
  %v869 = vld [vmem:[%s847 + $0xa8] sm:$0xff]
  %v870 = vld [vmem:[%s847 + $0xb0] sm:$0xff]
  %v871 = vld [vmem:[%s847 + $0xb8] sm:$0xff]
  %v872 = vld [vmem:[%s847 + $0xc0] sm:$0xff]
  %v873 = vld [vmem:[%s847 + $0xc8] sm:$0xff]
  %v874 = vld [vmem:[%s847 + $0xd0] sm:$0xff]
  %v875 = vld [vmem:[%s847 + $0xd8] sm:$0xff]
  %v876 = vld [vmem:[%s847 + $0xe0] sm:$0xff]
  %v877 = vld [vmem:[%s847 + $0xe8] sm:$0xff]
  %v878 = vld [vmem:[%s847 + $0xf0] sm:$0xff]
  %v879 = vld [vmem:[%s847 + $0xf8] sm:$0xff]
  %s880 = scalar_lea.vmem %s5, 1
  %v881 = vld [vmem:[%s880] sm:$0x1]
  %v883 = vlaneseq
  %v884 = vshrl.u32 %v883, 7
  %v885 = vsub.s32 0, %v884
  %v886 = vrot.slane %v881, %v885
  %888 = vmatprep.subr.mxu0 0.0
  %889 = vmatpush1.msra.mxu0 %v848
  %890 = vmatprep.subr.mxu0 0.0
  %891 = vmatpush1.msra.mxu0 %v849
  %892 = vmatprep.subr.mxu0 0.0
  %893 = vmatpush1.msra.mxu0 %v850
  %894 = vmatprep.subr.mxu0 0.0
  %895 = vmatpush1.msra.mxu0 %v851
  %896 = vmatprep.subr.mxu0 0.0
  %897 = vmatpush1.msra.mxu0 %v852
  %898 = vmatprep.subr.mxu0 0.0
  %899 = vmatpush1.msra.mxu0 %v853
  %900 = vmatprep.subr.mxu0 0.0
  %901 = vmatpush1.msra.mxu0 %v854
  %902 = vmatprep.subr.mxu0 0.0
  %903 = vmatpush1.msra.mxu0 %v855
  %904 = vmatprep.subr.mxu0 0.0
  %905 = vmatpush1.msra.mxu0 %v856
  %906 = vmatprep.subr.mxu0 0.0
  %907 = vmatpush1.msra.mxu0 %v857
  %908 = vmatprep.subr.mxu0 0.0
  %909 = vmatpush1.msra.mxu0 %v858
  %910 = vmatprep.subr.mxu0 0.0
  %911 = vmatpush1.msra.mxu0 %v859
  %912 = vmatprep.subr.mxu0 0.0
  %913 = vmatpush1.msra.mxu0 %v860
  %914 = vmatprep.subr.mxu0 0.0
  %915 = vmatpush1.msra.mxu0 %v861
  %916 = vmatprep.subr.mxu0 0.0
  %917 = vmatpush1.msra.mxu0 %v862
  %918 = vmatprep.subr.mxu0 0.0
  %919 = vmatpush1.msra.mxu0 %v863
  %920 = vmatprep.subr.mxu0 0.0
  %921 = vmatpush1.msra.mxu0 %v864
  %922 = vmatprep.subr.mxu0 0.0
  %923 = vmatpush1.msra.mxu0 %v865
  %924 = vmatprep.subr.mxu0 0.0
  %925 = vmatpush1.msra.mxu0 %v866
  %926 = vmatprep.subr.mxu0 0.0
  %927 = vmatpush1.msra.mxu0 %v867
  %928 = vmatprep.subr.mxu0 0.0
  %929 = vmatpush1.msra.mxu0 %v868
  %930 = vmatprep.subr.mxu0 0.0
  %931 = vmatpush1.msra.mxu0 %v869
  %932 = vmatprep.subr.mxu0 0.0
  %933 = vmatpush1.msra.mxu0 %v870
  %934 = vmatprep.subr.mxu0 0.0
  %935 = vmatpush1.msra.mxu0 %v871
  %936 = vmatprep.subr.mxu0 0.0
  %937 = vmatpush1.msra.mxu0 %v872
  %938 = vmatprep.subr.mxu0 0.0
  %939 = vmatpush1.msra.mxu0 %v873
  %940 = vmatprep.subr.mxu0 0.0
  %941 = vmatpush1.msra.mxu0 %v874
  %942 = vmatprep.subr.mxu0 0.0
  %943 = vmatpush1.msra.mxu0 %v875
  %944 = vmatprep.subr.mxu0 0.0
  %945 = vmatpush1.msra.mxu0 %v876
  %946 = vmatprep.subr.mxu0 0.0
  %947 = vmatpush1.msra.mxu0 %v877
  %948 = vmatprep.subr.mxu0 0.0
  %949 = vmatpush1.msra.mxu0 %v878
  %950 = vmatprep.subr.mxu0 0.0
  %951 = vmatpush1.msra.mxu0 %v879
  %952 = vmatprep.mubr.f32.mxu0 %v46
  %953 = vmatmul.mubr.f32.gmra.mrb[0].mxu0 %v45
  %v954 = vpop.f32.mrb[0].mxu0
  %v955 = vadd.f32 %v886, %v954
  %v956 = vpop.f32.mrb[0].mxu0
  %957 = vmatprep.mubr.f32.mxu0 %v48
  %958 = vmatmul.mubr.f32.gmra.mrb[0].mxu0 %v47
  %v959 = vpop.f32.mrb[0].mxu0
  %v960 = vadd.f32 %v886, %v959
  %v961 = vpop.f32.mrb[0].mxu0
  %962 = vdwg.mxu0
  %s963 = scalar_lea.vmem %s6, 256
  %v964 = vld [vmem:[%s963] sm:$0xff]
  %v965 = vld [vmem:[%s963 + $0x8] sm:$0xff]
  %v966 = vld [vmem:[%s963 + $0x10] sm:$0xff]
  %v967 = vld [vmem:[%s963 + $0x18] sm:$0xff]
  %v968 = vld [vmem:[%s963 + $0x20] sm:$0xff]
  %v969 = vld [vmem:[%s963 + $0x28] sm:$0xff]
  %v970 = vld [vmem:[%s963 + $0x30] sm:$0xff]
  %v971 = vld [vmem:[%s963 + $0x38] sm:$0xff]
  %v972 = vld [vmem:[%s963 + $0x40] sm:$0xff]
  %v973 = vld [vmem:[%s963 + $0x48] sm:$0xff]
  %v974 = vld [vmem:[%s963 + $0x50] sm:$0xff]
  %v975 = vld [vmem:[%s963 + $0x58] sm:$0xff]
  %v976 = vld [vmem:[%s963 + $0x60] sm:$0xff]
  %v977 = vld [vmem:[%s963 + $0x68] sm:$0xff]
  %v978 = vld [vmem:[%s963 + $0x70] sm:$0xff]
  %v979 = vld [vmem:[%s963 + $0x78] sm:$0xff]
  %v980 = vld [vmem:[%s963 + $0x80] sm:$0xff]
  %v981 = vld [vmem:[%s963 + $0x88] sm:$0xff]
  %v982 = vld [vmem:[%s963 + $0x90] sm:$0xff]
  %v983 = vld [vmem:[%s963 + $0x98] sm:$0xff]
  %v984 = vld [vmem:[%s963 + $0xa0] sm:$0xff]
  %v985 = vld [vmem:[%s963 + $0xa8] sm:$0xff]
  %v986 = vld [vmem:[%s963 + $0xb0] sm:$0xff]
  %v987 = vld [vmem:[%s963 + $0xb8] sm:$0xff]
  %v988 = vld [vmem:[%s963 + $0xc0] sm:$0xff]
  %v989 = vld [vmem:[%s963 + $0xc8] sm:$0xff]
  %v990 = vld [vmem:[%s963 + $0xd0] sm:$0xff]
  %v991 = vld [vmem:[%s963 + $0xd8] sm:$0xff]
  %v992 = vld [vmem:[%s963 + $0xe0] sm:$0xff]
  %v993 = vld [vmem:[%s963 + $0xe8] sm:$0xff]
  %v994 = vld [vmem:[%s963 + $0xf0] sm:$0xff]
  %v995 = vld [vmem:[%s963 + $0xf8] sm:$0xff]
  %s996 = scalar_lea.vmem %s7, 1
  %v997 = vld [vmem:[%s996] sm:$0x1]
  %v999 = vlaneseq
  %v1000 = vshrl.u32 %v999, 7
  %v1001 = vsub.s32 0, %v1000
  %v1002 = vrot.slane %v997, %v1001
  %1004 = vmatprep.subr.mxu0 0.0
  %1005 = vmatpush1.msra.mxu0 %v964
  %1006 = vmatprep.subr.mxu0 0.0
  %1007 = vmatpush1.msra.mxu0 %v965
  %1008 = vmatprep.subr.mxu0 0.0
  %1009 = vmatpush1.msra.mxu0 %v966
  %1010 = vmatprep.subr.mxu0 0.0
  %1011 = vmatpush1.msra.mxu0 %v967
  %1012 = vmatprep.subr.mxu0 0.0
  %1013 = vmatpush1.msra.mxu0 %v968
  %1014 = vmatprep.subr.mxu0 0.0
  %1015 = vmatpush1.msra.mxu0 %v969
  %1016 = vmatprep.subr.mxu0 0.0
  %1017 = vmatpush1.msra.mxu0 %v970
  %1018 = vmatprep.subr.mxu0 0.0
  %1019 = vmatpush1.msra.mxu0 %v971
  %1020 = vmatprep.subr.mxu0 0.0
  %1021 = vmatpush1.msra.mxu0 %v972
  %1022 = vmatprep.subr.mxu0 0.0
  %1023 = vmatpush1.msra.mxu0 %v973
  %1024 = vmatprep.subr.mxu0 0.0
  %1025 = vmatpush1.msra.mxu0 %v974
  %1026 = vmatprep.subr.mxu0 0.0
  %1027 = vmatpush1.msra.mxu0 %v975
  %1028 = vmatprep.subr.mxu0 0.0
  %1029 = vmatpush1.msra.mxu0 %v976
  %1030 = vmatprep.subr.mxu0 0.0
  %1031 = vmatpush1.msra.mxu0 %v977
  %1032 = vmatprep.subr.mxu0 0.0
  %1033 = vmatpush1.msra.mxu0 %v978
  %1034 = vmatprep.subr.mxu0 0.0
  %1035 = vmatpush1.msra.mxu0 %v979
  %1036 = vmatprep.subr.mxu0 0.0
  %1037 = vmatpush1.msra.mxu0 %v980
  %1038 = vmatprep.subr.mxu0 0.0
  %1039 = vmatpush1.msra.mxu0 %v981
  %1040 = vmatprep.subr.mxu0 0.0
  %1041 = vmatpush1.msra.mxu0 %v982
  %1042 = vmatprep.subr.mxu0 0.0
  %1043 = vmatpush1.msra.mxu0 %v983
  %1044 = vmatprep.subr.mxu0 0.0
  %1045 = vmatpush1.msra.mxu0 %v984
  %1046 = vmatprep.subr.mxu0 0.0
  %1047 = vmatpush1.msra.mxu0 %v985
  %1048 = vmatprep.subr.mxu0 0.0
  %1049 = vmatpush1.msra.mxu0 %v986
  %1050 = vmatprep.subr.mxu0 0.0
  %1051 = vmatpush1.msra.mxu0 %v987
  %1052 = vmatprep.subr.mxu0 0.0
  %1053 = vmatpush1.msra.mxu0 %v988
  %1054 = vmatprep.subr.mxu0 0.0
  %1055 = vmatpush1.msra.mxu0 %v989
  %1056 = vmatprep.subr.mxu0 0.0
  %1057 = vmatpush1.msra.mxu0 %v990
  %1058 = vmatprep.subr.mxu0 0.0
  %1059 = vmatpush1.msra.mxu0 %v991
  %1060 = vmatprep.subr.mxu0 0.0
  %1061 = vmatpush1.msra.mxu0 %v992
  %1062 = vmatprep.subr.mxu0 0.0
  %1063 = vmatpush1.msra.mxu0 %v993
  %1064 = vmatprep.subr.mxu0 0.0
  %1065 = vmatpush1.msra.mxu0 %v994
  %1066 = vmatprep.subr.mxu0 0.0
  %1067 = vmatpush1.msra.mxu0 %v995
  %1068 = vmatprep.mubr.f32.mxu0 %v46
  %1069 = vmatmul.mubr.f32.gmra.mrb[0].mxu0 %v45
  %v1070 = vpop.f32.mrb[0].mxu0
  %v1071 = vadd.f32 %v1002, %v1070
  %v1072 = vpop.f32.mrb[0].mxu0
  %1073 = vmatprep.mubr.f32.mxu0 %v48
  %1074 = vmatmul.mubr.f32.gmra.mrb[0].mxu0 %v47
  %v1075 = vpop.f32.mrb[0].mxu0
  %v1076 = vadd.f32 %v1002, %v1075
  %v1077 = vpop.f32.mrb[0].mxu0
  %1078 = vdwg.mxu0
  %v1080 = vsel %vm391, %v839, 0
  %v1083 = vsel %vm391, %v955, 0
  %1085 = vmatprep.subr.mxu0 0.0
  %1086 = vmatpush1.xpose.msra.mxu0 %v1083
  %1087 = vmatprep.subr.mxu0 0.0
  %1088 = vmatpush1.xpose.msra.mxu0 0.0
  %1089 = vmatprep.subr.mxu0 0.0
  %1090 = vmatpush1.xpose.msra.mxu0 0.0
  %1091 = vmatprep.subr.mxu0 0.0
  %1092 = vmatpush1.xpose.msra.mxu0 0.0
  %1093 = vmatprep.subr.mxu0 0.0
  %1094 = vmatpush1.xpose.msra.mxu0 0.0
  %1095 = vmatprep.subr.mxu0 0.0
  %1096 = vmatpush1.xpose.msra.mxu0 0.0
  %1097 = vmatprep.subr.mxu0 0.0
  %1098 = vmatpush1.xpose.msra.mxu0 0.0
  %1099 = vmatprep.subr.mxu0 0.0
  %1100 = vmatpush1.xpose.msra.mxu0 0.0
  %1101 = vmatprep.subr.mxu0 0.0
  %1102 = vmatpush1.xpose.msra.mxu0 0.0
  %1103 = vmatprep.subr.mxu0 0.0
  %1104 = vmatpush1.xpose.msra.mxu0 0.0
  %1105 = vmatprep.subr.mxu0 0.0
  %1106 = vmatpush1.xpose.msra.mxu0 0.0
  %1107 = vmatprep.subr.mxu0 0.0
  %1108 = vmatpush1.xpose.msra.mxu0 0.0
  %1109 = vmatprep.subr.mxu0 0.0
  %1110 = vmatpush1.xpose.msra.mxu0 0.0
  %1111 = vmatprep.subr.mxu0 0.0
  %1112 = vmatpush1.xpose.msra.mxu0 0.0
  %1113 = vmatprep.subr.mxu0 0.0
  %1114 = vmatpush1.xpose.msra.mxu0 0.0
  %1115 = vmatprep.subr.mxu0 0.0
  %1116 = vmatpush1.xpose.msra.mxu0 0.0
  %1117 = vmatprep.subr.mxu0 0.0
  %1118 = vmatpush1.xpose.msra.mxu0 0.0
  %1119 = vmatprep.subr.mxu0 0.0
  %1120 = vmatpush1.xpose.msra.mxu0 0.0
  %1121 = vmatprep.subr.mxu0 0.0
  %1122 = vmatpush1.xpose.msra.mxu0 0.0
  %1123 = vmatprep.subr.mxu0 0.0
  %1124 = vmatpush1.xpose.msra.mxu0 0.0
  %1125 = vmatprep.subr.mxu0 0.0
  %1126 = vmatpush1.xpose.msra.mxu0 0.0
  %1127 = vmatprep.subr.mxu0 0.0
  %1128 = vmatpush1.xpose.msra.mxu0 0.0
  %1129 = vmatprep.subr.mxu0 0.0
  %1130 = vmatpush1.xpose.msra.mxu0 0.0
  %1131 = vmatprep.subr.mxu0 0.0
  %1132 = vmatpush1.xpose.msra.mxu0 0.0
  %1133 = vmatprep.subr.mxu0 0.0
  %1134 = vmatpush1.xpose.msra.mxu0 0.0
  %1135 = vmatprep.subr.mxu0 0.0
  %1136 = vmatpush1.xpose.msra.mxu0 0.0
  %1137 = vmatprep.subr.mxu0 0.0
  %1138 = vmatpush1.xpose.msra.mxu0 0.0
  %1139 = vmatprep.subr.mxu0 0.0
  %1140 = vmatpush1.xpose.msra.mxu0 0.0
  %1141 = vmatprep.subr.mxu0 0.0
  %1142 = vmatpush1.xpose.msra.mxu0 0.0
  %1143 = vmatprep.subr.mxu0 0.0
  %1144 = vmatpush1.xpose.msra.mxu0 0.0
  %1145 = vmatprep.subr.mxu0 0.0
  %1146 = vmatpush1.xpose.msra.mxu0 0.0
  %1147 = vmatprep.subr.mxu0 0.0
  %1148 = vmatpush1.xpose.msra.mxu0 0.0
  %1149 = vmatprep.mubr.f32.mxu0 0.0
  %1150 = vmatmul.mubr.f32.gmra.mrb[0].mxu0 %v1080
  %v1151 = vpop.f32.mrb[0].mxu0
  %v1152 = vadd.f32 0.0, %v1151
  %v1153 = vpop.f32.mrb[0].mxu0
  %1154 = vdwg.mxu0
  %v1156 = vsel %vm391, %v844, 0
  %v1159 = vsel %vm391, %v960, 0
  %1161 = vmatprep.subr.mxu0 0.0
  %1162 = vmatpush1.xpose.msra.mxu0 %v1159
  %1163 = vmatprep.subr.mxu0 0.0
  %1164 = vmatpush1.xpose.msra.mxu0 0.0
  %1165 = vmatprep.subr.mxu0 0.0
  %1166 = vmatpush1.xpose.msra.mxu0 0.0
  %1167 = vmatprep.subr.mxu0 0.0
  %1168 = vmatpush1.xpose.msra.mxu0 0.0
  %1169 = vmatprep.subr.mxu0 0.0
  %1170 = vmatpush1.xpose.msra.mxu0 0.0
  %1171 = vmatprep.subr.mxu0 0.0
  %1172 = vmatpush1.xpose.msra.mxu0 0.0
  %1173 = vmatprep.subr.mxu0 0.0
  %1174 = vmatpush1.xpose.msra.mxu0 0.0
  %1175 = vmatprep.subr.mxu0 0.0
  %1176 = vmatpush1.xpose.msra.mxu0 0.0
  %1177 = vmatprep.subr.mxu0 0.0
  %1178 = vmatpush1.xpose.msra.mxu0 0.0
  %1179 = vmatprep.subr.mxu0 0.0
  %1180 = vmatpush1.xpose.msra.mxu0 0.0
  %1181 = vmatprep.subr.mxu0 0.0
  %1182 = vmatpush1.xpose.msra.mxu0 0.0
  %1183 = vmatprep.subr.mxu0 0.0
  %1184 = vmatpush1.xpose.msra.mxu0 0.0
  %1185 = vmatprep.subr.mxu0 0.0
  %1186 = vmatpush1.xpose.msra.mxu0 0.0
  %1187 = vmatprep.subr.mxu0 0.0
  %1188 = vmatpush1.xpose.msra.mxu0 0.0
  %1189 = vmatprep.subr.mxu0 0.0
  %1190 = vmatpush1.xpose.msra.mxu0 0.0
  %1191 = vmatprep.subr.mxu0 0.0
  %1192 = vmatpush1.xpose.msra.mxu0 0.0
  %1193 = vmatprep.subr.mxu0 0.0
  %1194 = vmatpush1.xpose.msra.mxu0 0.0
  %1195 = vmatprep.subr.mxu0 0.0
  %1196 = vmatpush1.xpose.msra.mxu0 0.0
  %1197 = vmatprep.subr.mxu0 0.0
  %1198 = vmatpush1.xpose.msra.mxu0 0.0
  %1199 = vmatprep.subr.mxu0 0.0
  %1200 = vmatpush1.xpose.msra.mxu0 0.0
  %1201 = vmatprep.subr.mxu0 0.0
  %1202 = vmatpush1.xpose.msra.mxu0 0.0
  %1203 = vmatprep.subr.mxu0 0.0
  %1204 = vmatpush1.xpose.msra.mxu0 0.0
  %1205 = vmatprep.subr.mxu0 0.0
  %1206 = vmatpush1.xpose.msra.mxu0 0.0
  %1207 = vmatprep.subr.mxu0 0.0
  %1208 = vmatpush1.xpose.msra.mxu0 0.0
  %1209 = vmatprep.subr.mxu0 0.0
  %1210 = vmatpush1.xpose.msra.mxu0 0.0
  %1211 = vmatprep.subr.mxu0 0.0
  %1212 = vmatpush1.xpose.msra.mxu0 0.0
  %1213 = vmatprep.subr.mxu0 0.0
  %1214 = vmatpush1.xpose.msra.mxu0 0.0
  %1215 = vmatprep.subr.mxu0 0.0
  %1216 = vmatpush1.xpose.msra.mxu0 0.0
  %1217 = vmatprep.subr.mxu0 0.0
  %1218 = vmatpush1.xpose.msra.mxu0 0.0
  %1219 = vmatprep.subr.mxu0 0.0
  %1220 = vmatpush1.xpose.msra.mxu0 0.0
  %1221 = vmatprep.subr.mxu0 0.0
  %1222 = vmatpush1.xpose.msra.mxu0 0.0
  %1223 = vmatprep.subr.mxu0 0.0
  %1224 = vmatpush1.xpose.msra.mxu0 0.0
  %1225 = vmatprep.mubr.f32.mxu0 0.0
  %1226 = vmatmul.mubr.f32.gmra.mrb[0].mxu0 %v1156
  %v1227 = vpop.f32.mrb[0].mxu0
  %v1228 = vadd.f32 0.0, %v1227
  %v1229 = vpop.f32.mrb[0].mxu0
  %1230 = vdwg.mxu0
  %v1231 = vmul.f32 %v1152, 0.125
  %v1232 = vmul.f32 %v1228, 0.125
  %v1233 = vsel %vm546, %v1231, -inf
  %1234 = vmax.xlane.f32.xlu0 %v1233
  %v1235 = vpop.xlane.xlu0 %1234
  %v1236 = vsel %vm546, %v1232, -inf
  %1237 = vmax.xlane.f32.xlu0 %v1236
  %v1238 = vpop.xlane.xlu0 %1237
  %v1239 = vsub.f32 %v1231, %v1235
  %v1240 = vsub.f32 %v1232, %v1238
  %v1241 = vmul.f32 %v1239, 1.442695
  %v1242 = vpow.pop %v1241
  %v1243 = vmul.f32 %v1240, 1.442695
  %v1244 = vpow.pop %v1243
  %v1245 = vsel %vm546, %v1242, 0.0
  %1246 = vadd.xlane.f32.xlu0 %v1245
  %v1247 = vpop.xlane.xlu0 %1246
  %v1248 = vsel %vm546, %v1244, 0.0
  %1249 = vadd.xlane.f32.xlu0 %v1248
  %v1250 = vpop.xlane.xlu0 %1249
  %v1251 = vrcp.pop %v1247
  %v1252 = vrcp.pop %v1250
  %v1253 = vmul.f32 %v1242, %v1251
  %v1254 = vmul.f32 %v1244, %v1252
  %v1256 = vsel %vm546, %v1253, 0
  %1258 = vmatprep.subr.mxu0 0.0
  %1259 = vmatpush1.msra.mxu0 %v1071
  %1260 = vmatprep.subr.mxu0 0.0
  %1261 = vmatpush1.msra.mxu0 0.0
  %1262 = vmatprep.subr.mxu0 0.0
  %1263 = vmatpush1.msra.mxu0 0.0
  %1264 = vmatprep.subr.mxu0 0.0
  %1265 = vmatpush1.msra.mxu0 0.0
  %1266 = vmatprep.subr.mxu0 0.0
  %1267 = vmatpush1.msra.mxu0 0.0
  %1268 = vmatprep.subr.mxu0 0.0
  %1269 = vmatpush1.msra.mxu0 0.0
  %1270 = vmatprep.subr.mxu0 0.0
  %1271 = vmatpush1.msra.mxu0 0.0
  %1272 = vmatprep.subr.mxu0 0.0
  %1273 = vmatpush1.msra.mxu0 0.0
  %1274 = vmatprep.subr.mxu0 0.0
  %1275 = vmatpush1.msra.mxu0 0.0
  %1276 = vmatprep.subr.mxu0 0.0
  %1277 = vmatpush1.msra.mxu0 0.0
  %1278 = vmatprep.subr.mxu0 0.0
  %1279 = vmatpush1.msra.mxu0 0.0
  %1280 = vmatprep.subr.mxu0 0.0
  %1281 = vmatpush1.msra.mxu0 0.0
  %1282 = vmatprep.subr.mxu0 0.0
  %1283 = vmatpush1.msra.mxu0 0.0
  %1284 = vmatprep.subr.mxu0 0.0
  %1285 = vmatpush1.msra.mxu0 0.0
  %1286 = vmatprep.subr.mxu0 0.0
  %1287 = vmatpush1.msra.mxu0 0.0
  %1288 = vmatprep.subr.mxu0 0.0
  %1289 = vmatpush1.msra.mxu0 0.0
  %1290 = vmatprep.subr.mxu0 0.0
  %1291 = vmatpush1.msra.mxu0 0.0
  %1292 = vmatprep.subr.mxu0 0.0
  %1293 = vmatpush1.msra.mxu0 0.0
  %1294 = vmatprep.subr.mxu0 0.0
  %1295 = vmatpush1.msra.mxu0 0.0
  %1296 = vmatprep.subr.mxu0 0.0
  %1297 = vmatpush1.msra.mxu0 0.0
  %1298 = vmatprep.subr.mxu0 0.0
  %1299 = vmatpush1.msra.mxu0 0.0
  %1300 = vmatprep.subr.mxu0 0.0
  %1301 = vmatpush1.msra.mxu0 0.0
  %1302 = vmatprep.subr.mxu0 0.0
  %1303 = vmatpush1.msra.mxu0 0.0
  %1304 = vmatprep.subr.mxu0 0.0
  %1305 = vmatpush1.msra.mxu0 0.0
  %1306 = vmatprep.subr.mxu0 0.0
  %1307 = vmatpush1.msra.mxu0 0.0
  %1308 = vmatprep.subr.mxu0 0.0
  %1309 = vmatpush1.msra.mxu0 0.0
  %1310 = vmatprep.subr.mxu0 0.0
  %1311 = vmatpush1.msra.mxu0 0.0
  %1312 = vmatprep.subr.mxu0 0.0
  %1313 = vmatpush1.msra.mxu0 0.0
  %1314 = vmatprep.subr.mxu0 0.0
  %1315 = vmatpush1.msra.mxu0 0.0
  %1316 = vmatprep.subr.mxu0 0.0
  %1317 = vmatpush1.msra.mxu0 0.0
  %1318 = vmatprep.subr.mxu0 0.0
  %1319 = vmatpush1.msra.mxu0 0.0
  %1320 = vmatprep.subr.mxu0 0.0
  %1321 = vmatpush1.msra.mxu0 0.0
  %1322 = vmatprep.mubr.f32.mxu0 0.0
  %1323 = vmatmul.mubr.f32.gmra.mrb[0].mxu0 %v1256
  %v1324 = vpop.f32.mrb[0].mxu0
  %v1325 = vadd.f32 0.0, %v1324
  %v1326 = vpop.f32.mrb[0].mxu0
  %1327 = vdwg.mxu0
  %v1329 = vsel %vm546, %v1254, 0
  %1331 = vmatprep.subr.mxu0 0.0
  %1332 = vmatpush1.msra.mxu0 %v1076
  %1333 = vmatprep.subr.mxu0 0.0
  %1334 = vmatpush1.msra.mxu0 0.0
  %1335 = vmatprep.subr.mxu0 0.0
  %1336 = vmatpush1.msra.mxu0 0.0
  %1337 = vmatprep.subr.mxu0 0.0
  %1338 = vmatpush1.msra.mxu0 0.0
  %1339 = vmatprep.subr.mxu0 0.0
  %1340 = vmatpush1.msra.mxu0 0.0
  %1341 = vmatprep.subr.mxu0 0.0
  %1342 = vmatpush1.msra.mxu0 0.0
  %1343 = vmatprep.subr.mxu0 0.0
  %1344 = vmatpush1.msra.mxu0 0.0
  %1345 = vmatprep.subr.mxu0 0.0
  %1346 = vmatpush1.msra.mxu0 0.0
  %1347 = vmatprep.subr.mxu0 0.0
  %1348 = vmatpush1.msra.mxu0 0.0
  %1349 = vmatprep.subr.mxu0 0.0
  %1350 = vmatpush1.msra.mxu0 0.0
  %1351 = vmatprep.subr.mxu0 0.0
  %1352 = vmatpush1.msra.mxu0 0.0
  %1353 = vmatprep.subr.mxu0 0.0
  %1354 = vmatpush1.msra.mxu0 0.0
  %1355 = vmatprep.subr.mxu0 0.0
  %1356 = vmatpush1.msra.mxu0 0.0
  %1357 = vmatprep.subr.mxu0 0.0
  %1358 = vmatpush1.msra.mxu0 0.0
  %1359 = vmatprep.subr.mxu0 0.0
  %1360 = vmatpush1.msra.mxu0 0.0
  %1361 = vmatprep.subr.mxu0 0.0
  %1362 = vmatpush1.msra.mxu0 0.0
  %1363 = vmatprep.subr.mxu0 0.0
  %1364 = vmatpush1.msra.mxu0 0.0
  %1365 = vmatprep.subr.mxu0 0.0
  %1366 = vmatpush1.msra.mxu0 0.0
  %1367 = vmatprep.subr.mxu0 0.0
  %1368 = vmatpush1.msra.mxu0 0.0
  %1369 = vmatprep.subr.mxu0 0.0
  %1370 = vmatpush1.msra.mxu0 0.0
  %1371 = vmatprep.subr.mxu0 0.0
  %1372 = vmatpush1.msra.mxu0 0.0
  %1373 = vmatprep.subr.mxu0 0.0
  %1374 = vmatpush1.msra.mxu0 0.0
  %1375 = vmatprep.subr.mxu0 0.0
  %1376 = vmatpush1.msra.mxu0 0.0
  %1377 = vmatprep.subr.mxu0 0.0
  %1378 = vmatpush1.msra.mxu0 0.0
  %1379 = vmatprep.subr.mxu0 0.0
  %1380 = vmatpush1.msra.mxu0 0.0
  %1381 = vmatprep.subr.mxu0 0.0
  %1382 = vmatpush1.msra.mxu0 0.0
  %1383 = vmatprep.subr.mxu0 0.0
  %1384 = vmatpush1.msra.mxu0 0.0
  %1385 = vmatprep.subr.mxu0 0.0
  %1386 = vmatpush1.msra.mxu0 0.0
  %1387 = vmatprep.subr.mxu0 0.0
  %1388 = vmatpush1.msra.mxu0 0.0
  %1389 = vmatprep.subr.mxu0 0.0
  %1390 = vmatpush1.msra.mxu0 0.0
  %1391 = vmatprep.subr.mxu0 0.0
  %1392 = vmatpush1.msra.mxu0 0.0
  %1393 = vmatprep.subr.mxu0 0.0
  %1394 = vmatpush1.msra.mxu0 0.0
  %1395 = vmatprep.mubr.f32.mxu0 0.0
  %1396 = vmatmul.mubr.f32.gmra.mrb[0].mxu0 %v1329
  %v1397 = vpop.f32.mrb[0].mxu0
  %v1398 = vadd.f32 0.0, %v1397
  %v1399 = vpop.f32.mrb[0].mxu0
  %1400 = vdwg.mxu0
  %s1401 = scalar_lea.vmem %s8, 128
  %v1402 = vld [vmem:[%s1401] sm:$0xff]
  %v1403 = vld [vmem:[%s1401 + $0x8] sm:$0xff]
  %v1404 = vld [vmem:[%s1401 + $0x10] sm:$0xff]
  %v1405 = vld [vmem:[%s1401 + $0x18] sm:$0xff]
  %v1406 = vld [vmem:[%s1401 + $0x20] sm:$0xff]
  %v1407 = vld [vmem:[%s1401 + $0x28] sm:$0xff]
  %v1408 = vld [vmem:[%s1401 + $0x30] sm:$0xff]
  %v1409 = vld [vmem:[%s1401 + $0x38] sm:$0xff]
  %v1410 = vld [vmem:[%s1401 + $0x40] sm:$0xff]
  %v1411 = vld [vmem:[%s1401 + $0x48] sm:$0xff]
  %v1412 = vld [vmem:[%s1401 + $0x50] sm:$0xff]
  %v1413 = vld [vmem:[%s1401 + $0x58] sm:$0xff]
  %v1414 = vld [vmem:[%s1401 + $0x60] sm:$0xff]
  %v1415 = vld [vmem:[%s1401 + $0x68] sm:$0xff]
  %v1416 = vld [vmem:[%s1401 + $0x70] sm:$0xff]
  %v1417 = vld [vmem:[%s1401 + $0x78] sm:$0xff]
  %v1419 = vsel %vm391, %v1325, 0
  %v1422 = vsel %vm391, %v1398, 0
  %1424 = vmatprep.subr.mxu0 %v1403
  %1425 = vmatpush1.msra.mxu0 %v1402
  %1426 = vmatprep.subr.mxu0 %v1405
  %1427 = vmatpush1.msra.mxu0 %v1404
  %1428 = vmatprep.subr.mxu0 %v1407
  %1429 = vmatpush1.msra.mxu0 %v1406
  %1430 = vmatprep.subr.mxu0 %v1409
  %1431 = vmatpush1.msra.mxu0 %v1408
  %1432 = vmatprep.subr.mxu0 %v1411
  %1433 = vmatpush1.msra.mxu0 %v1410
  %1434 = vmatprep.subr.mxu0 %v1413
  %1435 = vmatpush1.msra.mxu0 %v1412
  %1436 = vmatprep.subr.mxu0 %v1415
  %1437 = vmatpush1.msra.mxu0 %v1414
  %1438 = vmatprep.subr.mxu0 %v1417
  %1439 = vmatpush1.msra.mxu0 %v1416
  %1440 = vmatprep.subr.mxu0 0.0
  %1441 = vmatpush1.msra.mxu0 0.0
  %1442 = vmatprep.subr.mxu0 0.0
  %1443 = vmatpush1.msra.mxu0 0.0
  %1444 = vmatprep.subr.mxu0 0.0
  %1445 = vmatpush1.msra.mxu0 0.0
  %1446 = vmatprep.subr.mxu0 0.0
  %1447 = vmatpush1.msra.mxu0 0.0
  %1448 = vmatprep.subr.mxu0 0.0
  %1449 = vmatpush1.msra.mxu0 0.0
  %1450 = vmatprep.subr.mxu0 0.0
  %1451 = vmatpush1.msra.mxu0 0.0
  %1452 = vmatprep.subr.mxu0 0.0
  %1453 = vmatpush1.msra.mxu0 0.0
  %1454 = vmatprep.subr.mxu0 0.0
  %1455 = vmatpush1.msra.mxu0 0.0
  %1456 = vmatprep.subr.mxu0 0.0
  %1457 = vmatpush1.msra.mxu0 0.0
  %1458 = vmatprep.subr.mxu0 0.0
  %1459 = vmatpush1.msra.mxu0 0.0
  %1460 = vmatprep.subr.mxu0 0.0
  %1461 = vmatpush1.msra.mxu0 0.0
  %1462 = vmatprep.subr.mxu0 0.0
  %1463 = vmatpush1.msra.mxu0 0.0
  %1464 = vmatprep.subr.mxu0 0.0
  %1465 = vmatpush1.msra.mxu0 0.0
  %1466 = vmatprep.subr.mxu0 0.0
  %1467 = vmatpush1.msra.mxu0 0.0
  %1468 = vmatprep.subr.mxu0 0.0
  %1469 = vmatpush1.msra.mxu0 0.0
  %1470 = vmatprep.subr.mxu0 0.0
  %1471 = vmatpush1.msra.mxu0 0.0
  %1472 = vmatprep.subr.mxu0 0.0
  %1473 = vmatpush1.msra.mxu0 0.0
  %1474 = vmatprep.subr.mxu0 0.0
  %1475 = vmatpush1.msra.mxu0 0.0
  %1476 = vmatprep.subr.mxu0 0.0
  %1477 = vmatpush1.msra.mxu0 0.0
  %1478 = vmatprep.subr.mxu0 0.0
  %1479 = vmatpush1.msra.mxu0 0.0
  %1480 = vmatprep.subr.mxu0 0.0
  %1481 = vmatpush1.msra.mxu0 0.0
  %1482 = vmatprep.subr.mxu0 0.0
  %1483 = vmatpush1.msra.mxu0 0.0
  %1484 = vmatprep.subr.mxu0 0.0
  %1485 = vmatpush1.msra.mxu0 0.0
  %1486 = vmatprep.subr.mxu0 0.0
  %1487 = vmatpush1.msra.mxu0 0.0
  %1488 = vmatprep.mubr.f32.mxu0 0.0
  %1489 = vmatmul.mubr.f32.gmra.mrb[0].mxu0 %v1419
  %v1490 = vpop.f32.mrb[0].mxu0
  %v1491 = vadd.f32 0.0, %v1490
  %v1492 = vpop.f32.mrb[0].mxu0
  %v1493 = vadd.f32 0.0, %v1492
  %1494 = vmatprep.mubr.f32.mxu0 0.0
  %1495 = vmatmul.mubr.f32.gmra.mrb[0].mxu0 %v1422
  %v1496 = vpop.f32.mrb[0].mxu0
  %v1497 = vadd.f32 0.0, %v1496
  %v1498 = vpop.f32.mrb[0].mxu0
  %v1499 = vadd.f32 0.0, %v1498
  %1500 = vdwg.mxu0
  %v1502 = vsel %vm391, %v639, 0
  %v1505 = vsel %vm391, %v712, 0
  %1507 = vmatprep.subr.mxu0 %v716
  %1508 = vmatpush1.msra.mxu0 %v715
  %1509 = vmatprep.subr.mxu0 %v718
  %1510 = vmatpush1.msra.mxu0 %v717
  %1511 = vmatprep.subr.mxu0 %v720
  %1512 = vmatpush1.msra.mxu0 %v719
  %1513 = vmatprep.subr.mxu0 %v722
  %1514 = vmatpush1.msra.mxu0 %v721
  %1515 = vmatprep.subr.mxu0 %v724
  %1516 = vmatpush1.msra.mxu0 %v723
  %1517 = vmatprep.subr.mxu0 %v726
  %1518 = vmatpush1.msra.mxu0 %v725
  %1519 = vmatprep.subr.mxu0 %v728
  %1520 = vmatpush1.msra.mxu0 %v727
  %1521 = vmatprep.subr.mxu0 %v730
  %1522 = vmatpush1.msra.mxu0 %v729
  %1523 = vmatprep.subr.mxu0 0.0
  %1524 = vmatpush1.msra.mxu0 0.0
  %1525 = vmatprep.subr.mxu0 0.0
  %1526 = vmatpush1.msra.mxu0 0.0
  %1527 = vmatprep.subr.mxu0 0.0
  %1528 = vmatpush1.msra.mxu0 0.0
  %1529 = vmatprep.subr.mxu0 0.0
  %1530 = vmatpush1.msra.mxu0 0.0
  %1531 = vmatprep.subr.mxu0 0.0
  %1532 = vmatpush1.msra.mxu0 0.0
  %1533 = vmatprep.subr.mxu0 0.0
  %1534 = vmatpush1.msra.mxu0 0.0
  %1535 = vmatprep.subr.mxu0 0.0
  %1536 = vmatpush1.msra.mxu0 0.0
  %1537 = vmatprep.subr.mxu0 0.0
  %1538 = vmatpush1.msra.mxu0 0.0
  %1539 = vmatprep.subr.mxu0 0.0
  %1540 = vmatpush1.msra.mxu0 0.0
  %1541 = vmatprep.subr.mxu0 0.0
  %1542 = vmatpush1.msra.mxu0 0.0
  %1543 = vmatprep.subr.mxu0 0.0
  %1544 = vmatpush1.msra.mxu0 0.0
  %1545 = vmatprep.subr.mxu0 0.0
  %1546 = vmatpush1.msra.mxu0 0.0
  %1547 = vmatprep.subr.mxu0 0.0
  %1548 = vmatpush1.msra.mxu0 0.0
  %1549 = vmatprep.subr.mxu0 0.0
  %1550 = vmatpush1.msra.mxu0 0.0
  %1551 = vmatprep.subr.mxu0 0.0
  %1552 = vmatpush1.msra.mxu0 0.0
  %1553 = vmatprep.subr.mxu0 0.0
  %1554 = vmatpush1.msra.mxu0 0.0
  %1555 = vmatprep.subr.mxu0 0.0
  %1556 = vmatpush1.msra.mxu0 0.0
  %1557 = vmatprep.subr.mxu0 0.0
  %1558 = vmatpush1.msra.mxu0 0.0
  %1559 = vmatprep.subr.mxu0 0.0
  %1560 = vmatpush1.msra.mxu0 0.0
  %1561 = vmatprep.subr.mxu0 0.0
  %1562 = vmatpush1.msra.mxu0 0.0
  %1563 = vmatprep.subr.mxu0 0.0
  %1564 = vmatpush1.msra.mxu0 0.0
  %1565 = vmatprep.subr.mxu0 0.0
  %1566 = vmatpush1.msra.mxu0 0.0
  %1567 = vmatprep.subr.mxu0 0.0
  %1568 = vmatpush1.msra.mxu0 0.0
  %1569 = vmatprep.subr.mxu0 0.0
  %1570 = vmatpush1.msra.mxu0 0.0
  %1571 = vmatprep.mubr.f32.mxu0 0.0
  %1572 = vmatmul.mubr.f32.gmra.mrb[0].mxu0 %v1502
  %v1573 = vpop.f32.mrb[0].mxu0
  %v1574 = vadd.f32 %v1491, %v1573
  %v1575 = vpop.f32.mrb[0].mxu0
  %v1576 = vadd.f32 %v1493, %v1575
  %1577 = vmatprep.mubr.f32.mxu0 0.0
  %1578 = vmatmul.mubr.f32.gmra.mrb[0].mxu0 %v1505
  %v1579 = vpop.f32.mrb[0].mxu0
  %v1580 = vadd.f32 %v1497, %v1579
  %v1581 = vpop.f32.mrb[0].mxu0
  %v1582 = vadd.f32 %v1499, %v1581
  %1583 = vdwg.mxu0
  %s1584 = scalar_lea.vmem %s2, 512
  %v1585 = vld [vmem:[%s1584] sm:$0xff]
  %v1586 = vld [vmem:[%s1584 + $0x8] sm:$0xff]
  %v1587 = vld [vmem:[%s1584 + $0x10] sm:$0xff]
  %v1588 = vld [vmem:[%s1584 + $0x18] sm:$0xff]
  %v1589 = vld [vmem:[%s1584 + $0x20] sm:$0xff]
  %v1590 = vld [vmem:[%s1584 + $0x28] sm:$0xff]
  %v1591 = vld [vmem:[%s1584 + $0x30] sm:$0xff]
  %v1592 = vld [vmem:[%s1584 + $0x38] sm:$0xff]
  %v1593 = vld [vmem:[%s1584 + $0x40] sm:$0xff]
  %v1594 = vld [vmem:[%s1584 + $0x48] sm:$0xff]
  %v1595 = vld [vmem:[%s1584 + $0x50] sm:$0xff]
  %v1596 = vld [vmem:[%s1584 + $0x58] sm:$0xff]
  %v1597 = vld [vmem:[%s1584 + $0x60] sm:$0xff]
  %v1598 = vld [vmem:[%s1584 + $0x68] sm:$0xff]
  %v1599 = vld [vmem:[%s1584 + $0x70] sm:$0xff]
  %v1600 = vld [vmem:[%s1584 + $0x78] sm:$0xff]
  %v1601 = vld [vmem:[%s1584 + $0x80] sm:$0xff]
  %v1602 = vld [vmem:[%s1584 + $0x88] sm:$0xff]
  %v1603 = vld [vmem:[%s1584 + $0x90] sm:$0xff]
  %v1604 = vld [vmem:[%s1584 + $0x98] sm:$0xff]
  %v1605 = vld [vmem:[%s1584 + $0xa0] sm:$0xff]
  %v1606 = vld [vmem:[%s1584 + $0xa8] sm:$0xff]
  %v1607 = vld [vmem:[%s1584 + $0xb0] sm:$0xff]
  %v1608 = vld [vmem:[%s1584 + $0xb8] sm:$0xff]
  %v1609 = vld [vmem:[%s1584 + $0xc0] sm:$0xff]
  %v1610 = vld [vmem:[%s1584 + $0xc8] sm:$0xff]
  %v1611 = vld [vmem:[%s1584 + $0xd0] sm:$0xff]
  %v1612 = vld [vmem:[%s1584 + $0xd8] sm:$0xff]
  %v1613 = vld [vmem:[%s1584 + $0xe0] sm:$0xff]
  %v1614 = vld [vmem:[%s1584 + $0xe8] sm:$0xff]
  %v1615 = vld [vmem:[%s1584 + $0xf0] sm:$0xff]
  %v1616 = vld [vmem:[%s1584 + $0xf8] sm:$0xff]
  %s1617 = scalar_lea.vmem %s3, 2
  %v1618 = vld [vmem:[%s1617] sm:$0x1]
  %v1620 = vlaneseq
  %v1621 = vshrl.u32 %v1620, 7
  %v1622 = vsub.s32 0, %v1621
  %v1623 = vrot.slane %v1618, %v1622
  %1625 = vmatprep.subr.mxu0 0.0
  %1626 = vmatpush1.msra.mxu0 %v1585
  %1627 = vmatprep.subr.mxu0 0.0
  %1628 = vmatpush1.msra.mxu0 %v1586
  %1629 = vmatprep.subr.mxu0 0.0
  %1630 = vmatpush1.msra.mxu0 %v1587
  %1631 = vmatprep.subr.mxu0 0.0
  %1632 = vmatpush1.msra.mxu0 %v1588
  %1633 = vmatprep.subr.mxu0 0.0
  %1634 = vmatpush1.msra.mxu0 %v1589
  %1635 = vmatprep.subr.mxu0 0.0
  %1636 = vmatpush1.msra.mxu0 %v1590
  %1637 = vmatprep.subr.mxu0 0.0
  %1638 = vmatpush1.msra.mxu0 %v1591
  %1639 = vmatprep.subr.mxu0 0.0
  %1640 = vmatpush1.msra.mxu0 %v1592
  %1641 = vmatprep.subr.mxu0 0.0
  %1642 = vmatpush1.msra.mxu0 %v1593
  %1643 = vmatprep.subr.mxu0 0.0
  %1644 = vmatpush1.msra.mxu0 %v1594
  %1645 = vmatprep.subr.mxu0 0.0
  %1646 = vmatpush1.msra.mxu0 %v1595
  %1647 = vmatprep.subr.mxu0 0.0
  %1648 = vmatpush1.msra.mxu0 %v1596
  %1649 = vmatprep.subr.mxu0 0.0
  %1650 = vmatpush1.msra.mxu0 %v1597
  %1651 = vmatprep.subr.mxu0 0.0
  %1652 = vmatpush1.msra.mxu0 %v1598
  %1653 = vmatprep.subr.mxu0 0.0
  %1654 = vmatpush1.msra.mxu0 %v1599
  %1655 = vmatprep.subr.mxu0 0.0
  %1656 = vmatpush1.msra.mxu0 %v1600
  %1657 = vmatprep.subr.mxu0 0.0
  %1658 = vmatpush1.msra.mxu0 %v1601
  %1659 = vmatprep.subr.mxu0 0.0
  %1660 = vmatpush1.msra.mxu0 %v1602
  %1661 = vmatprep.subr.mxu0 0.0
  %1662 = vmatpush1.msra.mxu0 %v1603
  %1663 = vmatprep.subr.mxu0 0.0
  %1664 = vmatpush1.msra.mxu0 %v1604
  %1665 = vmatprep.subr.mxu0 0.0
  %1666 = vmatpush1.msra.mxu0 %v1605
  %1667 = vmatprep.subr.mxu0 0.0
  %1668 = vmatpush1.msra.mxu0 %v1606
  %1669 = vmatprep.subr.mxu0 0.0
  %1670 = vmatpush1.msra.mxu0 %v1607
  %1671 = vmatprep.subr.mxu0 0.0
  %1672 = vmatpush1.msra.mxu0 %v1608
  %1673 = vmatprep.subr.mxu0 0.0
  %1674 = vmatpush1.msra.mxu0 %v1609
  %1675 = vmatprep.subr.mxu0 0.0
  %1676 = vmatpush1.msra.mxu0 %v1610
  %1677 = vmatprep.subr.mxu0 0.0
  %1678 = vmatpush1.msra.mxu0 %v1611
  %1679 = vmatprep.subr.mxu0 0.0
  %1680 = vmatpush1.msra.mxu0 %v1612
  %1681 = vmatprep.subr.mxu0 0.0
  %1682 = vmatpush1.msra.mxu0 %v1613
  %1683 = vmatprep.subr.mxu0 0.0
  %1684 = vmatpush1.msra.mxu0 %v1614
  %1685 = vmatprep.subr.mxu0 0.0
  %1686 = vmatpush1.msra.mxu0 %v1615
  %1687 = vmatprep.subr.mxu0 0.0
  %1688 = vmatpush1.msra.mxu0 %v1616
  %1689 = vmatprep.mubr.f32.mxu0 %v42
  %1690 = vmatmul.mubr.f32.gmra.mrb[0].mxu0 %v41
  %v1691 = vpop.f32.mrb[0].mxu0
  %v1692 = vadd.f32 %v1623, %v1691
  %v1693 = vpop.f32.mrb[0].mxu0
  %1694 = vmatprep.mubr.f32.mxu0 %v44
  %1695 = vmatmul.mubr.f32.gmra.mrb[0].mxu0 %v43
  %v1696 = vpop.f32.mrb[0].mxu0
  %v1697 = vadd.f32 %v1623, %v1696
  %v1698 = vpop.f32.mrb[0].mxu0
  %1699 = vdwg.mxu0
  %s1700 = scalar_lea.vmem %s4, 512
  %v1701 = vld [vmem:[%s1700] sm:$0xff]
  %v1702 = vld [vmem:[%s1700 + $0x8] sm:$0xff]
  %v1703 = vld [vmem:[%s1700 + $0x10] sm:$0xff]
  %v1704 = vld [vmem:[%s1700 + $0x18] sm:$0xff]
  %v1705 = vld [vmem:[%s1700 + $0x20] sm:$0xff]
  %v1706 = vld [vmem:[%s1700 + $0x28] sm:$0xff]
  %v1707 = vld [vmem:[%s1700 + $0x30] sm:$0xff]
  %v1708 = vld [vmem:[%s1700 + $0x38] sm:$0xff]
  %v1709 = vld [vmem:[%s1700 + $0x40] sm:$0xff]
  %v1710 = vld [vmem:[%s1700 + $0x48] sm:$0xff]
  %v1711 = vld [vmem:[%s1700 + $0x50] sm:$0xff]
  %v1712 = vld [vmem:[%s1700 + $0x58] sm:$0xff]
  %v1713 = vld [vmem:[%s1700 + $0x60] sm:$0xff]
  %v1714 = vld [vmem:[%s1700 + $0x68] sm:$0xff]
  %v1715 = vld [vmem:[%s1700 + $0x70] sm:$0xff]
  %v1716 = vld [vmem:[%s1700 + $0x78] sm:$0xff]
  %v1717 = vld [vmem:[%s1700 + $0x80] sm:$0xff]
  %v1718 = vld [vmem:[%s1700 + $0x88] sm:$0xff]
  %v1719 = vld [vmem:[%s1700 + $0x90] sm:$0xff]
  %v1720 = vld [vmem:[%s1700 + $0x98] sm:$0xff]
  %v1721 = vld [vmem:[%s1700 + $0xa0] sm:$0xff]
  %v1722 = vld [vmem:[%s1700 + $0xa8] sm:$0xff]
  %v1723 = vld [vmem:[%s1700 + $0xb0] sm:$0xff]
  %v1724 = vld [vmem:[%s1700 + $0xb8] sm:$0xff]
  %v1725 = vld [vmem:[%s1700 + $0xc0] sm:$0xff]
  %v1726 = vld [vmem:[%s1700 + $0xc8] sm:$0xff]
  %v1727 = vld [vmem:[%s1700 + $0xd0] sm:$0xff]
  %v1728 = vld [vmem:[%s1700 + $0xd8] sm:$0xff]
  %v1729 = vld [vmem:[%s1700 + $0xe0] sm:$0xff]
  %v1730 = vld [vmem:[%s1700 + $0xe8] sm:$0xff]
  %v1731 = vld [vmem:[%s1700 + $0xf0] sm:$0xff]
  %v1732 = vld [vmem:[%s1700 + $0xf8] sm:$0xff]
  %s1733 = scalar_lea.vmem %s5, 2
  %v1734 = vld [vmem:[%s1733] sm:$0x1]
  %v1736 = vlaneseq
  %v1737 = vshrl.u32 %v1736, 7
  %v1738 = vsub.s32 0, %v1737
  %v1739 = vrot.slane %v1734, %v1738
  %1741 = vmatprep.subr.mxu0 0.0
  %1742 = vmatpush1.msra.mxu0 %v1701
  %1743 = vmatprep.subr.mxu0 0.0
  %1744 = vmatpush1.msra.mxu0 %v1702
  %1745 = vmatprep.subr.mxu0 0.0
  %1746 = vmatpush1.msra.mxu0 %v1703
  %1747 = vmatprep.subr.mxu0 0.0
  %1748 = vmatpush1.msra.mxu0 %v1704
  %1749 = vmatprep.subr.mxu0 0.0
  %1750 = vmatpush1.msra.mxu0 %v1705
  %1751 = vmatprep.subr.mxu0 0.0
  %1752 = vmatpush1.msra.mxu0 %v1706
  %1753 = vmatprep.subr.mxu0 0.0
  %1754 = vmatpush1.msra.mxu0 %v1707
  %1755 = vmatprep.subr.mxu0 0.0
  %1756 = vmatpush1.msra.mxu0 %v1708
  %1757 = vmatprep.subr.mxu0 0.0
  %1758 = vmatpush1.msra.mxu0 %v1709
  %1759 = vmatprep.subr.mxu0 0.0
  %1760 = vmatpush1.msra.mxu0 %v1710
  %1761 = vmatprep.subr.mxu0 0.0
  %1762 = vmatpush1.msra.mxu0 %v1711
  %1763 = vmatprep.subr.mxu0 0.0
  %1764 = vmatpush1.msra.mxu0 %v1712
  %1765 = vmatprep.subr.mxu0 0.0
  %1766 = vmatpush1.msra.mxu0 %v1713
  %1767 = vmatprep.subr.mxu0 0.0
  %1768 = vmatpush1.msra.mxu0 %v1714
  %1769 = vmatprep.subr.mxu0 0.0
  %1770 = vmatpush1.msra.mxu0 %v1715
  %1771 = vmatprep.subr.mxu0 0.0
  %1772 = vmatpush1.msra.mxu0 %v1716
  %1773 = vmatprep.subr.mxu0 0.0
  %1774 = vmatpush1.msra.mxu0 %v1717
  %1775 = vmatprep.subr.mxu0 0.0
  %1776 = vmatpush1.msra.mxu0 %v1718
  %1777 = vmatprep.subr.mxu0 0.0
  %1778 = vmatpush1.msra.mxu0 %v1719
  %1779 = vmatprep.subr.mxu0 0.0
  %1780 = vmatpush1.msra.mxu0 %v1720
  %1781 = vmatprep.subr.mxu0 0.0
  %1782 = vmatpush1.msra.mxu0 %v1721
  %1783 = vmatprep.subr.mxu0 0.0
  %1784 = vmatpush1.msra.mxu0 %v1722
  %1785 = vmatprep.subr.mxu0 0.0
  %1786 = vmatpush1.msra.mxu0 %v1723
  %1787 = vmatprep.subr.mxu0 0.0
  %1788 = vmatpush1.msra.mxu0 %v1724
  %1789 = vmatprep.subr.mxu0 0.0
  %1790 = vmatpush1.msra.mxu0 %v1725
  %1791 = vmatprep.subr.mxu0 0.0
  %1792 = vmatpush1.msra.mxu0 %v1726
  %1793 = vmatprep.subr.mxu0 0.0
  %1794 = vmatpush1.msra.mxu0 %v1727
  %1795 = vmatprep.subr.mxu0 0.0
  %1796 = vmatpush1.msra.mxu0 %v1728
  %1797 = vmatprep.subr.mxu0 0.0
  %1798 = vmatpush1.msra.mxu0 %v1729
  %1799 = vmatprep.subr.mxu0 0.0
  %1800 = vmatpush1.msra.mxu0 %v1730
  %1801 = vmatprep.subr.mxu0 0.0
  %1802 = vmatpush1.msra.mxu0 %v1731
  %1803 = vmatprep.subr.mxu0 0.0
  %1804 = vmatpush1.msra.mxu0 %v1732
  %1805 = vmatprep.mubr.f32.mxu0 %v46
  %1806 = vmatmul.mubr.f32.gmra.mrb[0].mxu0 %v45
  %v1807 = vpop.f32.mrb[0].mxu0
  %v1808 = vadd.f32 %v1739, %v1807
  %v1809 = vpop.f32.mrb[0].mxu0
  %1810 = vmatprep.mubr.f32.mxu0 %v48
  %1811 = vmatmul.mubr.f32.gmra.mrb[0].mxu0 %v47
  %v1812 = vpop.f32.mrb[0].mxu0
  %v1813 = vadd.f32 %v1739, %v1812
  %v1814 = vpop.f32.mrb[0].mxu0
  %1815 = vdwg.mxu0
  %s1816 = scalar_lea.vmem %s6, 512
  %v1817 = vld [vmem:[%s1816] sm:$0xff]
  %v1818 = vld [vmem:[%s1816 + $0x8] sm:$0xff]
  %v1819 = vld [vmem:[%s1816 + $0x10] sm:$0xff]
  %v1820 = vld [vmem:[%s1816 + $0x18] sm:$0xff]
  %v1821 = vld [vmem:[%s1816 + $0x20] sm:$0xff]
  %v1822 = vld [vmem:[%s1816 + $0x28] sm:$0xff]
  %v1823 = vld [vmem:[%s1816 + $0x30] sm:$0xff]
  %v1824 = vld [vmem:[%s1816 + $0x38] sm:$0xff]
  %v1825 = vld [vmem:[%s1816 + $0x40] sm:$0xff]
  %v1826 = vld [vmem:[%s1816 + $0x48] sm:$0xff]
  %v1827 = vld [vmem:[%s1816 + $0x50] sm:$0xff]
  %v1828 = vld [vmem:[%s1816 + $0x58] sm:$0xff]
  %v1829 = vld [vmem:[%s1816 + $0x60] sm:$0xff]
  %v1830 = vld [vmem:[%s1816 + $0x68] sm:$0xff]
  %v1831 = vld [vmem:[%s1816 + $0x70] sm:$0xff]
  %v1832 = vld [vmem:[%s1816 + $0x78] sm:$0xff]
  %v1833 = vld [vmem:[%s1816 + $0x80] sm:$0xff]
  %v1834 = vld [vmem:[%s1816 + $0x88] sm:$0xff]
  %v1835 = vld [vmem:[%s1816 + $0x90] sm:$0xff]
  %v1836 = vld [vmem:[%s1816 + $0x98] sm:$0xff]
  %v1837 = vld [vmem:[%s1816 + $0xa0] sm:$0xff]
  %v1838 = vld [vmem:[%s1816 + $0xa8] sm:$0xff]
  %v1839 = vld [vmem:[%s1816 + $0xb0] sm:$0xff]
  %v1840 = vld [vmem:[%s1816 + $0xb8] sm:$0xff]
  %v1841 = vld [vmem:[%s1816 + $0xc0] sm:$0xff]
  %v1842 = vld [vmem:[%s1816 + $0xc8] sm:$0xff]
  %v1843 = vld [vmem:[%s1816 + $0xd0] sm:$0xff]
  %v1844 = vld [vmem:[%s1816 + $0xd8] sm:$0xff]
  %v1845 = vld [vmem:[%s1816 + $0xe0] sm:$0xff]
  %v1846 = vld [vmem:[%s1816 + $0xe8] sm:$0xff]
  %v1847 = vld [vmem:[%s1816 + $0xf0] sm:$0xff]
  %v1848 = vld [vmem:[%s1816 + $0xf8] sm:$0xff]
  %s1849 = scalar_lea.vmem %s7, 2
  %v1850 = vld [vmem:[%s1849] sm:$0x1]
  %v1852 = vlaneseq
  %v1853 = vshrl.u32 %v1852, 7
  %v1854 = vsub.s32 0, %v1853
  %v1855 = vrot.slane %v1850, %v1854
  %1857 = vmatprep.subr.mxu0 0.0
  %1858 = vmatpush1.msra.mxu0 %v1817
  %1859 = vmatprep.subr.mxu0 0.0
  %1860 = vmatpush1.msra.mxu0 %v1818
  %1861 = vmatprep.subr.mxu0 0.0
  %1862 = vmatpush1.msra.mxu0 %v1819
  %1863 = vmatprep.subr.mxu0 0.0
  %1864 = vmatpush1.msra.mxu0 %v1820
  %1865 = vmatprep.subr.mxu0 0.0
  %1866 = vmatpush1.msra.mxu0 %v1821
  %1867 = vmatprep.subr.mxu0 0.0
  %1868 = vmatpush1.msra.mxu0 %v1822
  %1869 = vmatprep.subr.mxu0 0.0
  %1870 = vmatpush1.msra.mxu0 %v1823
  %1871 = vmatprep.subr.mxu0 0.0
  %1872 = vmatpush1.msra.mxu0 %v1824
  %1873 = vmatprep.subr.mxu0 0.0
  %1874 = vmatpush1.msra.mxu0 %v1825
  %1875 = vmatprep.subr.mxu0 0.0
  %1876 = vmatpush1.msra.mxu0 %v1826
  %1877 = vmatprep.subr.mxu0 0.0
  %1878 = vmatpush1.msra.mxu0 %v1827
  %1879 = vmatprep.subr.mxu0 0.0
  %1880 = vmatpush1.msra.mxu0 %v1828
  %1881 = vmatprep.subr.mxu0 0.0
  %1882 = vmatpush1.msra.mxu0 %v1829
  %1883 = vmatprep.subr.mxu0 0.0
  %1884 = vmatpush1.msra.mxu0 %v1830
  %1885 = vmatprep.subr.mxu0 0.0
  %1886 = vmatpush1.msra.mxu0 %v1831
  %1887 = vmatprep.subr.mxu0 0.0
  %1888 = vmatpush1.msra.mxu0 %v1832
  %1889 = vmatprep.subr.mxu0 0.0
  %1890 = vmatpush1.msra.mxu0 %v1833
  %1891 = vmatprep.subr.mxu0 0.0
  %1892 = vmatpush1.msra.mxu0 %v1834
  %1893 = vmatprep.subr.mxu0 0.0
  %1894 = vmatpush1.msra.mxu0 %v1835
  %1895 = vmatprep.subr.mxu0 0.0
  %1896 = vmatpush1.msra.mxu0 %v1836
  %1897 = vmatprep.subr.mxu0 0.0
  %1898 = vmatpush1.msra.mxu0 %v1837
  %1899 = vmatprep.subr.mxu0 0.0
  %1900 = vmatpush1.msra.mxu0 %v1838
  %1901 = vmatprep.subr.mxu0 0.0
  %1902 = vmatpush1.msra.mxu0 %v1839
  %1903 = vmatprep.subr.mxu0 0.0
  %1904 = vmatpush1.msra.mxu0 %v1840
  %1905 = vmatprep.subr.mxu0 0.0
  %1906 = vmatpush1.msra.mxu0 %v1841
  %1907 = vmatprep.subr.mxu0 0.0
  %1908 = vmatpush1.msra.mxu0 %v1842
  %1909 = vmatprep.subr.mxu0 0.0
  %1910 = vmatpush1.msra.mxu0 %v1843
  %1911 = vmatprep.subr.mxu0 0.0
  %1912 = vmatpush1.msra.mxu0 %v1844
  %1913 = vmatprep.subr.mxu0 0.0
  %1914 = vmatpush1.msra.mxu0 %v1845
  %1915 = vmatprep.subr.mxu0 0.0
  %1916 = vmatpush1.msra.mxu0 %v1846
  %1917 = vmatprep.subr.mxu0 0.0
  %1918 = vmatpush1.msra.mxu0 %v1847
  %1919 = vmatprep.subr.mxu0 0.0
  %1920 = vmatpush1.msra.mxu0 %v1848
  %1921 = vmatprep.mubr.f32.mxu0 %v46
  %1922 = vmatmul.mubr.f32.gmra.mrb[0].mxu0 %v45
  %v1923 = vpop.f32.mrb[0].mxu0
  %v1924 = vadd.f32 %v1855, %v1923
  %v1925 = vpop.f32.mrb[0].mxu0
  %1926 = vmatprep.mubr.f32.mxu0 %v48
  %1927 = vmatmul.mubr.f32.gmra.mrb[0].mxu0 %v47
  %v1928 = vpop.f32.mrb[0].mxu0
  %v1929 = vadd.f32 %v1855, %v1928
  %v1930 = vpop.f32.mrb[0].mxu0
  %1931 = vdwg.mxu0
  %v1933 = vsel %vm391, %v1692, 0
  %v1936 = vsel %vm391, %v1808, 0
  %1938 = vmatprep.subr.mxu0 0.0
  %1939 = vmatpush1.xpose.msra.mxu0 %v1936
  %1940 = vmatprep.subr.mxu0 0.0
  %1941 = vmatpush1.xpose.msra.mxu0 0.0
  %1942 = vmatprep.subr.mxu0 0.0
  %1943 = vmatpush1.xpose.msra.mxu0 0.0
  %1944 = vmatprep.subr.mxu0 0.0
  %1945 = vmatpush1.xpose.msra.mxu0 0.0
  %1946 = vmatprep.subr.mxu0 0.0
  %1947 = vmatpush1.xpose.msra.mxu0 0.0
  %1948 = vmatprep.subr.mxu0 0.0
  %1949 = vmatpush1.xpose.msra.mxu0 0.0
  %1950 = vmatprep.subr.mxu0 0.0
  %1951 = vmatpush1.xpose.msra.mxu0 0.0
  %1952 = vmatprep.subr.mxu0 0.0
  %1953 = vmatpush1.xpose.msra.mxu0 0.0
  %1954 = vmatprep.subr.mxu0 0.0
  %1955 = vmatpush1.xpose.msra.mxu0 0.0
  %1956 = vmatprep.subr.mxu0 0.0
  %1957 = vmatpush1.xpose.msra.mxu0 0.0
  %1958 = vmatprep.subr.mxu0 0.0
  %1959 = vmatpush1.xpose.msra.mxu0 0.0
  %1960 = vmatprep.subr.mxu0 0.0
  %1961 = vmatpush1.xpose.msra.mxu0 0.0
  %1962 = vmatprep.subr.mxu0 0.0
  %1963 = vmatpush1.xpose.msra.mxu0 0.0
  %1964 = vmatprep.subr.mxu0 0.0
  %1965 = vmatpush1.xpose.msra.mxu0 0.0
  %1966 = vmatprep.subr.mxu0 0.0
  %1967 = vmatpush1.xpose.msra.mxu0 0.0
  %1968 = vmatprep.subr.mxu0 0.0
  %1969 = vmatpush1.xpose.msra.mxu0 0.0
  %1970 = vmatprep.subr.mxu0 0.0
  %1971 = vmatpush1.xpose.msra.mxu0 0.0
  %1972 = vmatprep.subr.mxu0 0.0
  %1973 = vmatpush1.xpose.msra.mxu0 0.0
  %1974 = vmatprep.subr.mxu0 0.0
  %1975 = vmatpush1.xpose.msra.mxu0 0.0
  %1976 = vmatprep.subr.mxu0 0.0
  %1977 = vmatpush1.xpose.msra.mxu0 0.0
  %1978 = vmatprep.subr.mxu0 0.0
  %1979 = vmatpush1.xpose.msra.mxu0 0.0
  %1980 = vmatprep.subr.mxu0 0.0
  %1981 = vmatpush1.xpose.msra.mxu0 0.0
  %1982 = vmatprep.subr.mxu0 0.0
  %1983 = vmatpush1.xpose.msra.mxu0 0.0
  %1984 = vmatprep.subr.mxu0 0.0
  %1985 = vmatpush1.xpose.msra.mxu0 0.0
  %1986 = vmatprep.subr.mxu0 0.0
  %1987 = vmatpush1.xpose.msra.mxu0 0.0
  %1988 = vmatprep.subr.mxu0 0.0
  %1989 = vmatpush1.xpose.msra.mxu0 0.0
  %1990 = vmatprep.subr.mxu0 0.0
  %1991 = vmatpush1.xpose.msra.mxu0 0.0
  %1992 = vmatprep.subr.mxu0 0.0
  %1993 = vmatpush1.xpose.msra.mxu0 0.0
  %1994 = vmatprep.subr.mxu0 0.0
  %1995 = vmatpush1.xpose.msra.mxu0 0.0
  %1996 = vmatprep.subr.mxu0 0.0
  %1997 = vmatpush1.xpose.msra.mxu0 0.0
  %1998 = vmatprep.subr.mxu0 0.0
  %1999 = vmatpush1.xpose.msra.mxu0 0.0
  %2000 = vmatprep.subr.mxu0 0.0
  %2001 = vmatpush1.xpose.msra.mxu0 0.0
  %2002 = vmatprep.mubr.f32.mxu0 0.0
  %2003 = vmatmul.mubr.f32.gmra.mrb[0].mxu0 %v1933
  %v2004 = vpop.f32.mrb[0].mxu0
  %v2005 = vadd.f32 0.0, %v2004
  %v2006 = vpop.f32.mrb[0].mxu0
  %2007 = vdwg.mxu0
  %v2009 = vsel %vm391, %v1697, 0
  %v2012 = vsel %vm391, %v1813, 0
  %2014 = vmatprep.subr.mxu0 0.0
  %2015 = vmatpush1.xpose.msra.mxu0 %v2012
  %2016 = vmatprep.subr.mxu0 0.0
  %2017 = vmatpush1.xpose.msra.mxu0 0.0
  %2018 = vmatprep.subr.mxu0 0.0
  %2019 = vmatpush1.xpose.msra.mxu0 0.0
  %2020 = vmatprep.subr.mxu0 0.0
  %2021 = vmatpush1.xpose.msra.mxu0 0.0
  %2022 = vmatprep.subr.mxu0 0.0
  %2023 = vmatpush1.xpose.msra.mxu0 0.0
  %2024 = vmatprep.subr.mxu0 0.0
  %2025 = vmatpush1.xpose.msra.mxu0 0.0
  %2026 = vmatprep.subr.mxu0 0.0
  %2027 = vmatpush1.xpose.msra.mxu0 0.0
  %2028 = vmatprep.subr.mxu0 0.0
  %2029 = vmatpush1.xpose.msra.mxu0 0.0
  %2030 = vmatprep.subr.mxu0 0.0
  %2031 = vmatpush1.xpose.msra.mxu0 0.0
  %2032 = vmatprep.subr.mxu0 0.0
  %2033 = vmatpush1.xpose.msra.mxu0 0.0
  %2034 = vmatprep.subr.mxu0 0.0
  %2035 = vmatpush1.xpose.msra.mxu0 0.0
  %2036 = vmatprep.subr.mxu0 0.0
  %2037 = vmatpush1.xpose.msra.mxu0 0.0
  %2038 = vmatprep.subr.mxu0 0.0
  %2039 = vmatpush1.xpose.msra.mxu0 0.0
  %2040 = vmatprep.subr.mxu0 0.0
  %2041 = vmatpush1.xpose.msra.mxu0 0.0
  %2042 = vmatprep.subr.mxu0 0.0
  %2043 = vmatpush1.xpose.msra.mxu0 0.0
  %2044 = vmatprep.subr.mxu0 0.0
  %2045 = vmatpush1.xpose.msra.mxu0 0.0
  %2046 = vmatprep.subr.mxu0 0.0
  %2047 = vmatpush1.xpose.msra.mxu0 0.0
  %2048 = vmatprep.subr.mxu0 0.0
  %2049 = vmatpush1.xpose.msra.mxu0 0.0
  %2050 = vmatprep.subr.mxu0 0.0
  %2051 = vmatpush1.xpose.msra.mxu0 0.0
  %2052 = vmatprep.subr.mxu0 0.0
  %2053 = vmatpush1.xpose.msra.mxu0 0.0
  %2054 = vmatprep.subr.mxu0 0.0
  %2055 = vmatpush1.xpose.msra.mxu0 0.0
  %2056 = vmatprep.subr.mxu0 0.0
  %2057 = vmatpush1.xpose.msra.mxu0 0.0
  %2058 = vmatprep.subr.mxu0 0.0
  %2059 = vmatpush1.xpose.msra.mxu0 0.0
  %2060 = vmatprep.subr.mxu0 0.0
  %2061 = vmatpush1.xpose.msra.mxu0 0.0
  %2062 = vmatprep.subr.mxu0 0.0
  %2063 = vmatpush1.xpose.msra.mxu0 0.0
  %2064 = vmatprep.subr.mxu0 0.0
  %2065 = vmatpush1.xpose.msra.mxu0 0.0
  %2066 = vmatprep.subr.mxu0 0.0
  %2067 = vmatpush1.xpose.msra.mxu0 0.0
  %2068 = vmatprep.subr.mxu0 0.0
  %2069 = vmatpush1.xpose.msra.mxu0 0.0
  %2070 = vmatprep.subr.mxu0 0.0
  %2071 = vmatpush1.xpose.msra.mxu0 0.0
  %2072 = vmatprep.subr.mxu0 0.0
  %2073 = vmatpush1.xpose.msra.mxu0 0.0
  %2074 = vmatprep.subr.mxu0 0.0
  %2075 = vmatpush1.xpose.msra.mxu0 0.0
  %2076 = vmatprep.subr.mxu0 0.0
  %2077 = vmatpush1.xpose.msra.mxu0 0.0
  %2078 = vmatprep.mubr.f32.mxu0 0.0
  %2079 = vmatmul.mubr.f32.gmra.mrb[0].mxu0 %v2009
  %v2080 = vpop.f32.mrb[0].mxu0
  %v2081 = vadd.f32 0.0, %v2080
  %v2082 = vpop.f32.mrb[0].mxu0
  %2083 = vdwg.mxu0
  %v2084 = vmul.f32 %v2005, 0.125
  %v2085 = vmul.f32 %v2081, 0.125
  %v2086 = vsel %vm546, %v2084, -inf
  %2087 = vmax.xlane.f32.xlu0 %v2086
  %v2088 = vpop.xlane.xlu0 %2087
  %v2089 = vsel %vm546, %v2085, -inf
  %2090 = vmax.xlane.f32.xlu0 %v2089
  %v2091 = vpop.xlane.xlu0 %2090
  %v2092 = vsub.f32 %v2084, %v2088
  %v2093 = vsub.f32 %v2085, %v2091
  %v2094 = vmul.f32 %v2092, 1.442695
  %v2095 = vpow.pop %v2094
  %v2096 = vmul.f32 %v2093, 1.442695
  %v2097 = vpow.pop %v2096
  %v2098 = vsel %vm546, %v2095, 0.0
  %2099 = vadd.xlane.f32.xlu0 %v2098
  %v2100 = vpop.xlane.xlu0 %2099
  %v2101 = vsel %vm546, %v2097, 0.0
  %2102 = vadd.xlane.f32.xlu0 %v2101
  %v2103 = vpop.xlane.xlu0 %2102
  %v2104 = vrcp.pop %v2100
  %v2105 = vrcp.pop %v2103
  %v2106 = vmul.f32 %v2095, %v2104
  %v2107 = vmul.f32 %v2097, %v2105
  %v2109 = vsel %vm546, %v2106, 0
  %2111 = vmatprep.subr.mxu0 0.0
  %2112 = vmatpush1.msra.mxu0 %v1924
  %2113 = vmatprep.subr.mxu0 0.0
  %2114 = vmatpush1.msra.mxu0 0.0
  %2115 = vmatprep.subr.mxu0 0.0
  %2116 = vmatpush1.msra.mxu0 0.0
  %2117 = vmatprep.subr.mxu0 0.0
  %2118 = vmatpush1.msra.mxu0 0.0
  %2119 = vmatprep.subr.mxu0 0.0
  %2120 = vmatpush1.msra.mxu0 0.0
  %2121 = vmatprep.subr.mxu0 0.0
  %2122 = vmatpush1.msra.mxu0 0.0
  %2123 = vmatprep.subr.mxu0 0.0
  %2124 = vmatpush1.msra.mxu0 0.0
  %2125 = vmatprep.subr.mxu0 0.0
  %2126 = vmatpush1.msra.mxu0 0.0
  %2127 = vmatprep.subr.mxu0 0.0
  %2128 = vmatpush1.msra.mxu0 0.0
  %2129 = vmatprep.subr.mxu0 0.0
  %2130 = vmatpush1.msra.mxu0 0.0
  %2131 = vmatprep.subr.mxu0 0.0
  %2132 = vmatpush1.msra.mxu0 0.0
  %2133 = vmatprep.subr.mxu0 0.0
  %2134 = vmatpush1.msra.mxu0 0.0
  %2135 = vmatprep.subr.mxu0 0.0
  %2136 = vmatpush1.msra.mxu0 0.0
  %2137 = vmatprep.subr.mxu0 0.0
  %2138 = vmatpush1.msra.mxu0 0.0
  %2139 = vmatprep.subr.mxu0 0.0
  %2140 = vmatpush1.msra.mxu0 0.0
  %2141 = vmatprep.subr.mxu0 0.0
  %2142 = vmatpush1.msra.mxu0 0.0
  %2143 = vmatprep.subr.mxu0 0.0
  %2144 = vmatpush1.msra.mxu0 0.0
  %2145 = vmatprep.subr.mxu0 0.0
  %2146 = vmatpush1.msra.mxu0 0.0
  %2147 = vmatprep.subr.mxu0 0.0
  %2148 = vmatpush1.msra.mxu0 0.0
  %2149 = vmatprep.subr.mxu0 0.0
  %2150 = vmatpush1.msra.mxu0 0.0
  %2151 = vmatprep.subr.mxu0 0.0
  %2152 = vmatpush1.msra.mxu0 0.0
  %2153 = vmatprep.subr.mxu0 0.0
  %2154 = vmatpush1.msra.mxu0 0.0
  %2155 = vmatprep.subr.mxu0 0.0
  %2156 = vmatpush1.msra.mxu0 0.0
  %2157 = vmatprep.subr.mxu0 0.0
  %2158 = vmatpush1.msra.mxu0 0.0
  %2159 = vmatprep.subr.mxu0 0.0
  %2160 = vmatpush1.msra.mxu0 0.0
  %2161 = vmatprep.subr.mxu0 0.0
  %2162 = vmatpush1.msra.mxu0 0.0
  %2163 = vmatprep.subr.mxu0 0.0
  %2164 = vmatpush1.msra.mxu0 0.0
  %2165 = vmatprep.subr.mxu0 0.0
  %2166 = vmatpush1.msra.mxu0 0.0
  %2167 = vmatprep.subr.mxu0 0.0
  %2168 = vmatpush1.msra.mxu0 0.0
  %2169 = vmatprep.subr.mxu0 0.0
  %2170 = vmatpush1.msra.mxu0 0.0
  %2171 = vmatprep.subr.mxu0 0.0
  %2172 = vmatpush1.msra.mxu0 0.0
  %2173 = vmatprep.subr.mxu0 0.0
  %2174 = vmatpush1.msra.mxu0 0.0
  %2175 = vmatprep.mubr.f32.mxu0 0.0
  %2176 = vmatmul.mubr.f32.gmra.mrb[0].mxu0 %v2109
  %v2177 = vpop.f32.mrb[0].mxu0
  %v2178 = vadd.f32 0.0, %v2177
  %v2179 = vpop.f32.mrb[0].mxu0
  %2180 = vdwg.mxu0
  %v2182 = vsel %vm546, %v2107, 0
  %2184 = vmatprep.subr.mxu0 0.0
  %2185 = vmatpush1.msra.mxu0 %v1929
  %2186 = vmatprep.subr.mxu0 0.0
  %2187 = vmatpush1.msra.mxu0 0.0
  %2188 = vmatprep.subr.mxu0 0.0
  %2189 = vmatpush1.msra.mxu0 0.0
  %2190 = vmatprep.subr.mxu0 0.0
  %2191 = vmatpush1.msra.mxu0 0.0
  %2192 = vmatprep.subr.mxu0 0.0
  %2193 = vmatpush1.msra.mxu0 0.0
  %2194 = vmatprep.subr.mxu0 0.0
  %2195 = vmatpush1.msra.mxu0 0.0
  %2196 = vmatprep.subr.mxu0 0.0
  %2197 = vmatpush1.msra.mxu0 0.0
  %2198 = vmatprep.subr.mxu0 0.0
  %2199 = vmatpush1.msra.mxu0 0.0
  %2200 = vmatprep.subr.mxu0 0.0
  %2201 = vmatpush1.msra.mxu0 0.0
  %2202 = vmatprep.subr.mxu0 0.0
  %2203 = vmatpush1.msra.mxu0 0.0
  %2204 = vmatprep.subr.mxu0 0.0
  %2205 = vmatpush1.msra.mxu0 0.0
  %2206 = vmatprep.subr.mxu0 0.0
  %2207 = vmatpush1.msra.mxu0 0.0
  %2208 = vmatprep.subr.mxu0 0.0
  %2209 = vmatpush1.msra.mxu0 0.0
  %2210 = vmatprep.subr.mxu0 0.0
  %2211 = vmatpush1.msra.mxu0 0.0
  %2212 = vmatprep.subr.mxu0 0.0
  %2213 = vmatpush1.msra.mxu0 0.0
  %2214 = vmatprep.subr.mxu0 0.0
  %2215 = vmatpush1.msra.mxu0 0.0
  %2216 = vmatprep.subr.mxu0 0.0
  %2217 = vmatpush1.msra.mxu0 0.0
  %2218 = vmatprep.subr.mxu0 0.0
  %2219 = vmatpush1.msra.mxu0 0.0
  %2220 = vmatprep.subr.mxu0 0.0
  %2221 = vmatpush1.msra.mxu0 0.0
  %2222 = vmatprep.subr.mxu0 0.0
  %2223 = vmatpush1.msra.mxu0 0.0
  %2224 = vmatprep.subr.mxu0 0.0
  %2225 = vmatpush1.msra.mxu0 0.0
  %2226 = vmatprep.subr.mxu0 0.0
  %2227 = vmatpush1.msra.mxu0 0.0
  %2228 = vmatprep.subr.mxu0 0.0
  %2229 = vmatpush1.msra.mxu0 0.0
  %2230 = vmatprep.subr.mxu0 0.0
  %2231 = vmatpush1.msra.mxu0 0.0
  %2232 = vmatprep.subr.mxu0 0.0
  %2233 = vmatpush1.msra.mxu0 0.0
  %2234 = vmatprep.subr.mxu0 0.0
  %2235 = vmatpush1.msra.mxu0 0.0
  %2236 = vmatprep.subr.mxu0 0.0
  %2237 = vmatpush1.msra.mxu0 0.0
  %2238 = vmatprep.subr.mxu0 0.0
  %2239 = vmatpush1.msra.mxu0 0.0
  %2240 = vmatprep.subr.mxu0 0.0
  %2241 = vmatpush1.msra.mxu0 0.0
  %2242 = vmatprep.subr.mxu0 0.0
  %2243 = vmatpush1.msra.mxu0 0.0
  %2244 = vmatprep.subr.mxu0 0.0
  %2245 = vmatpush1.msra.mxu0 0.0
  %2246 = vmatprep.subr.mxu0 0.0
  %2247 = vmatpush1.msra.mxu0 0.0
  %2248 = vmatprep.mubr.f32.mxu0 0.0
  %2249 = vmatmul.mubr.f32.gmra.mrb[0].mxu0 %v2182
  %v2250 = vpop.f32.mrb[0].mxu0
  %v2251 = vadd.f32 0.0, %v2250
  %v2252 = vpop.f32.mrb[0].mxu0
  %2253 = vdwg.mxu0
  %s2254 = scalar_lea.vmem %s8, 256
  %v2255 = vld [vmem:[%s2254] sm:$0xff]
  %v2256 = vld [vmem:[%s2254 + $0x8] sm:$0xff]
  %v2257 = vld [vmem:[%s2254 + $0x10] sm:$0xff]
  %v2258 = vld [vmem:[%s2254 + $0x18] sm:$0xff]
  %v2259 = vld [vmem:[%s2254 + $0x20] sm:$0xff]
  %v2260 = vld [vmem:[%s2254 + $0x28] sm:$0xff]
  %v2261 = vld [vmem:[%s2254 + $0x30] sm:$0xff]
  %v2262 = vld [vmem:[%s2254 + $0x38] sm:$0xff]
  %v2263 = vld [vmem:[%s2254 + $0x40] sm:$0xff]
  %v2264 = vld [vmem:[%s2254 + $0x48] sm:$0xff]
  %v2265 = vld [vmem:[%s2254 + $0x50] sm:$0xff]
  %v2266 = vld [vmem:[%s2254 + $0x58] sm:$0xff]
  %v2267 = vld [vmem:[%s2254 + $0x60] sm:$0xff]
  %v2268 = vld [vmem:[%s2254 + $0x68] sm:$0xff]
  %v2269 = vld [vmem:[%s2254 + $0x70] sm:$0xff]
  %v2270 = vld [vmem:[%s2254 + $0x78] sm:$0xff]
  %v2272 = vsel %vm391, %v2178, 0
  %v2275 = vsel %vm391, %v2251, 0
  %2277 = vmatprep.subr.mxu0 %v2256
  %2278 = vmatpush1.msra.mxu0 %v2255
  %2279 = vmatprep.subr.mxu0 %v2258
  %2280 = vmatpush1.msra.mxu0 %v2257
  %2281 = vmatprep.subr.mxu0 %v2260
  %2282 = vmatpush1.msra.mxu0 %v2259
  %2283 = vmatprep.subr.mxu0 %v2262
  %2284 = vmatpush1.msra.mxu0 %v2261
  %2285 = vmatprep.subr.mxu0 %v2264
  %2286 = vmatpush1.msra.mxu0 %v2263
  %2287 = vmatprep.subr.mxu0 %v2266
  %2288 = vmatpush1.msra.mxu0 %v2265
  %2289 = vmatprep.subr.mxu0 %v2268
  %2290 = vmatpush1.msra.mxu0 %v2267
  %2291 = vmatprep.subr.mxu0 %v2270
  %2292 = vmatpush1.msra.mxu0 %v2269
  %2293 = vmatprep.subr.mxu0 0.0
  %2294 = vmatpush1.msra.mxu0 0.0
  %2295 = vmatprep.subr.mxu0 0.0
  %2296 = vmatpush1.msra.mxu0 0.0
  %2297 = vmatprep.subr.mxu0 0.0
  %2298 = vmatpush1.msra.mxu0 0.0
  %2299 = vmatprep.subr.mxu0 0.0
  %2300 = vmatpush1.msra.mxu0 0.0
  %2301 = vmatprep.subr.mxu0 0.0
  %2302 = vmatpush1.msra.mxu0 0.0
  %2303 = vmatprep.subr.mxu0 0.0
  %2304 = vmatpush1.msra.mxu0 0.0
  %2305 = vmatprep.subr.mxu0 0.0
  %2306 = vmatpush1.msra.mxu0 0.0
  %2307 = vmatprep.subr.mxu0 0.0
  %2308 = vmatpush1.msra.mxu0 0.0
  %2309 = vmatprep.subr.mxu0 0.0
  %2310 = vmatpush1.msra.mxu0 0.0
  %2311 = vmatprep.subr.mxu0 0.0
  %2312 = vmatpush1.msra.mxu0 0.0
  %2313 = vmatprep.subr.mxu0 0.0
  %2314 = vmatpush1.msra.mxu0 0.0
  %2315 = vmatprep.subr.mxu0 0.0
  %2316 = vmatpush1.msra.mxu0 0.0
  %2317 = vmatprep.subr.mxu0 0.0
  %2318 = vmatpush1.msra.mxu0 0.0
  %2319 = vmatprep.subr.mxu0 0.0
  %2320 = vmatpush1.msra.mxu0 0.0
  %2321 = vmatprep.subr.mxu0 0.0
  %2322 = vmatpush1.msra.mxu0 0.0
  %2323 = vmatprep.subr.mxu0 0.0
  %2324 = vmatpush1.msra.mxu0 0.0
  %2325 = vmatprep.subr.mxu0 0.0
  %2326 = vmatpush1.msra.mxu0 0.0
  %2327 = vmatprep.subr.mxu0 0.0
  %2328 = vmatpush1.msra.mxu0 0.0
  %2329 = vmatprep.subr.mxu0 0.0
  %2330 = vmatpush1.msra.mxu0 0.0
  %2331 = vmatprep.subr.mxu0 0.0
  %2332 = vmatpush1.msra.mxu0 0.0
  %2333 = vmatprep.subr.mxu0 0.0
  %2334 = vmatpush1.msra.mxu0 0.0
  %2335 = vmatprep.subr.mxu0 0.0
  %2336 = vmatpush1.msra.mxu0 0.0
  %2337 = vmatprep.subr.mxu0 0.0
  %2338 = vmatpush1.msra.mxu0 0.0
  %2339 = vmatprep.subr.mxu0 0.0
  %2340 = vmatpush1.msra.mxu0 0.0
  %2341 = vmatprep.mubr.f32.mxu0 0.0
  %2342 = vmatmul.mubr.f32.gmra.mrb[0].mxu0 %v2272
  %v2343 = vpop.f32.mrb[0].mxu0
  %v2344 = vadd.f32 0.0, %v2343
  %v2345 = vpop.f32.mrb[0].mxu0
  %v2346 = vadd.f32 0.0, %v2345
  %2347 = vmatprep.mubr.f32.mxu0 0.0
  %2348 = vmatmul.mubr.f32.gmra.mrb[0].mxu0 %v2275
  %v2349 = vpop.f32.mrb[0].mxu0
  %v2350 = vadd.f32 0.0, %v2349
  %v2351 = vpop.f32.mrb[0].mxu0
  %v2352 = vadd.f32 0.0, %v2351
  %2353 = vdwg.mxu0
  %v2354 = vadd.f32 %v1574, %v2344
  %v2355 = vadd.f32 %v1576, %v2346
  %v2356 = vadd.f32 %v1580, %v2350
  %v2357 = vadd.f32 %v1582, %v2352
  %s2358 = scalar_lea.vmem %s2, 768
  %v2359 = vld [vmem:[%s2358] sm:$0xff]
  %v2360 = vld [vmem:[%s2358 + $0x8] sm:$0xff]
  %v2361 = vld [vmem:[%s2358 + $0x10] sm:$0xff]
  %v2362 = vld [vmem:[%s2358 + $0x18] sm:$0xff]
  %v2363 = vld [vmem:[%s2358 + $0x20] sm:$0xff]
  %v2364 = vld [vmem:[%s2358 + $0x28] sm:$0xff]
  %v2365 = vld [vmem:[%s2358 + $0x30] sm:$0xff]
  %v2366 = vld [vmem:[%s2358 + $0x38] sm:$0xff]
  %v2367 = vld [vmem:[%s2358 + $0x40] sm:$0xff]
  %v2368 = vld [vmem:[%s2358 + $0x48] sm:$0xff]
  %v2369 = vld [vmem:[%s2358 + $0x50] sm:$0xff]
  %v2370 = vld [vmem:[%s2358 + $0x58] sm:$0xff]
  %v2371 = vld [vmem:[%s2358 + $0x60] sm:$0xff]
  %v2372 = vld [vmem:[%s2358 + $0x68] sm:$0xff]
  %v2373 = vld [vmem:[%s2358 + $0x70] sm:$0xff]
  %v2374 = vld [vmem:[%s2358 + $0x78] sm:$0xff]
  %v2375 = vld [vmem:[%s2358 + $0x80] sm:$0xff]
  %v2376 = vld [vmem:[%s2358 + $0x88] sm:$0xff]
  %v2377 = vld [vmem:[%s2358 + $0x90] sm:$0xff]
  %v2378 = vld [vmem:[%s2358 + $0x98] sm:$0xff]
  %v2379 = vld [vmem:[%s2358 + $0xa0] sm:$0xff]
  %v2380 = vld [vmem:[%s2358 + $0xa8] sm:$0xff]
  %v2381 = vld [vmem:[%s2358 + $0xb0] sm:$0xff]
  %v2382 = vld [vmem:[%s2358 + $0xb8] sm:$0xff]
  %v2383 = vld [vmem:[%s2358 + $0xc0] sm:$0xff]
  %v2384 = vld [vmem:[%s2358 + $0xc8] sm:$0xff]
  %v2385 = vld [vmem:[%s2358 + $0xd0] sm:$0xff]
  %v2386 = vld [vmem:[%s2358 + $0xd8] sm:$0xff]
  %v2387 = vld [vmem:[%s2358 + $0xe0] sm:$0xff]
  %v2388 = vld [vmem:[%s2358 + $0xe8] sm:$0xff]
  %v2389 = vld [vmem:[%s2358 + $0xf0] sm:$0xff]
  %v2390 = vld [vmem:[%s2358 + $0xf8] sm:$0xff]
  %s2391 = scalar_lea.vmem %s3, 3
  %v2392 = vld [vmem:[%s2391] sm:$0x1]
  %v2394 = vlaneseq
  %v2395 = vshrl.u32 %v2394, 7
  %v2396 = vsub.s32 0, %v2395
  %v2397 = vrot.slane %v2392, %v2396
  %2399 = vmatprep.subr.mxu0 0.0
  %2400 = vmatpush1.msra.mxu0 %v2359
  %2401 = vmatprep.subr.mxu0 0.0
  %2402 = vmatpush1.msra.mxu0 %v2360
  %2403 = vmatprep.subr.mxu0 0.0
  %2404 = vmatpush1.msra.mxu0 %v2361
  %2405 = vmatprep.subr.mxu0 0.0
  %2406 = vmatpush1.msra.mxu0 %v2362
  %2407 = vmatprep.subr.mxu0 0.0
  %2408 = vmatpush1.msra.mxu0 %v2363
  %2409 = vmatprep.subr.mxu0 0.0
  %2410 = vmatpush1.msra.mxu0 %v2364
  %2411 = vmatprep.subr.mxu0 0.0
  %2412 = vmatpush1.msra.mxu0 %v2365
  %2413 = vmatprep.subr.mxu0 0.0
  %2414 = vmatpush1.msra.mxu0 %v2366
  %2415 = vmatprep.subr.mxu0 0.0
  %2416 = vmatpush1.msra.mxu0 %v2367
  %2417 = vmatprep.subr.mxu0 0.0
  %2418 = vmatpush1.msra.mxu0 %v2368
  %2419 = vmatprep.subr.mxu0 0.0
  %2420 = vmatpush1.msra.mxu0 %v2369
  %2421 = vmatprep.subr.mxu0 0.0
  %2422 = vmatpush1.msra.mxu0 %v2370
  %2423 = vmatprep.subr.mxu0 0.0
  %2424 = vmatpush1.msra.mxu0 %v2371
  %2425 = vmatprep.subr.mxu0 0.0
  %2426 = vmatpush1.msra.mxu0 %v2372
  %2427 = vmatprep.subr.mxu0 0.0
  %2428 = vmatpush1.msra.mxu0 %v2373
  %2429 = vmatprep.subr.mxu0 0.0
  %2430 = vmatpush1.msra.mxu0 %v2374
  %2431 = vmatprep.subr.mxu0 0.0
  %2432 = vmatpush1.msra.mxu0 %v2375
  %2433 = vmatprep.subr.mxu0 0.0
  %2434 = vmatpush1.msra.mxu0 %v2376
  %2435 = vmatprep.subr.mxu0 0.0
  %2436 = vmatpush1.msra.mxu0 %v2377
  %2437 = vmatprep.subr.mxu0 0.0
  %2438 = vmatpush1.msra.mxu0 %v2378
  %2439 = vmatprep.subr.mxu0 0.0
  %2440 = vmatpush1.msra.mxu0 %v2379
  %2441 = vmatprep.subr.mxu0 0.0
  %2442 = vmatpush1.msra.mxu0 %v2380
  %2443 = vmatprep.subr.mxu0 0.0
  %2444 = vmatpush1.msra.mxu0 %v2381
  %2445 = vmatprep.subr.mxu0 0.0
  %2446 = vmatpush1.msra.mxu0 %v2382
  %2447 = vmatprep.subr.mxu0 0.0
  %2448 = vmatpush1.msra.mxu0 %v2383
  %2449 = vmatprep.subr.mxu0 0.0
  %2450 = vmatpush1.msra.mxu0 %v2384
  %2451 = vmatprep.subr.mxu0 0.0
  %2452 = vmatpush1.msra.mxu0 %v2385
  %2453 = vmatprep.subr.mxu0 0.0
  %2454 = vmatpush1.msra.mxu0 %v2386
  %2455 = vmatprep.subr.mxu0 0.0
  %2456 = vmatpush1.msra.mxu0 %v2387
  %2457 = vmatprep.subr.mxu0 0.0
  %2458 = vmatpush1.msra.mxu0 %v2388
  %2459 = vmatprep.subr.mxu0 0.0
  %2460 = vmatpush1.msra.mxu0 %v2389
  %2461 = vmatprep.subr.mxu0 0.0
  %2462 = vmatpush1.msra.mxu0 %v2390
  %2463 = vmatprep.mubr.f32.mxu0 %v42
  %2464 = vmatmul.mubr.f32.gmra.mrb[0].mxu0 %v41
  %v2465 = vpop.f32.mrb[0].mxu0
  %v2466 = vadd.f32 %v2397, %v2465
  %v2467 = vpop.f32.mrb[0].mxu0
  %2468 = vmatprep.mubr.f32.mxu0 %v44
  %2469 = vmatmul.mubr.f32.gmra.mrb[0].mxu0 %v43
  %v2470 = vpop.f32.mrb[0].mxu0
  %v2471 = vadd.f32 %v2397, %v2470
  %v2472 = vpop.f32.mrb[0].mxu0
  %2473 = vdwg.mxu0
  %s2474 = scalar_lea.vmem %s4, 768
  %v2475 = vld [vmem:[%s2474] sm:$0xff]
  %v2476 = vld [vmem:[%s2474 + $0x8] sm:$0xff]
  %v2477 = vld [vmem:[%s2474 + $0x10] sm:$0xff]
  %v2478 = vld [vmem:[%s2474 + $0x18] sm:$0xff]
  %v2479 = vld [vmem:[%s2474 + $0x20] sm:$0xff]
  %v2480 = vld [vmem:[%s2474 + $0x28] sm:$0xff]
  %v2481 = vld [vmem:[%s2474 + $0x30] sm:$0xff]
  %v2482 = vld [vmem:[%s2474 + $0x38] sm:$0xff]
  %v2483 = vld [vmem:[%s2474 + $0x40] sm:$0xff]
  %v2484 = vld [vmem:[%s2474 + $0x48] sm:$0xff]
  %v2485 = vld [vmem:[%s2474 + $0x50] sm:$0xff]
  %v2486 = vld [vmem:[%s2474 + $0x58] sm:$0xff]
  %v2487 = vld [vmem:[%s2474 + $0x60] sm:$0xff]
  %v2488 = vld [vmem:[%s2474 + $0x68] sm:$0xff]
  %v2489 = vld [vmem:[%s2474 + $0x70] sm:$0xff]
  %v2490 = vld [vmem:[%s2474 + $0x78] sm:$0xff]
  %v2491 = vld [vmem:[%s2474 + $0x80] sm:$0xff]
  %v2492 = vld [vmem:[%s2474 + $0x88] sm:$0xff]
  %v2493 = vld [vmem:[%s2474 + $0x90] sm:$0xff]
  %v2494 = vld [vmem:[%s2474 + $0x98] sm:$0xff]
  %v2495 = vld [vmem:[%s2474 + $0xa0] sm:$0xff]
  %v2496 = vld [vmem:[%s2474 + $0xa8] sm:$0xff]
  %v2497 = vld [vmem:[%s2474 + $0xb0] sm:$0xff]
  %v2498 = vld [vmem:[%s2474 + $0xb8] sm:$0xff]
  %v2499 = vld [vmem:[%s2474 + $0xc0] sm:$0xff]
  %v2500 = vld [vmem:[%s2474 + $0xc8] sm:$0xff]
  %v2501 = vld [vmem:[%s2474 + $0xd0] sm:$0xff]
  %v2502 = vld [vmem:[%s2474 + $0xd8] sm:$0xff]
  %v2503 = vld [vmem:[%s2474 + $0xe0] sm:$0xff]
  %v2504 = vld [vmem:[%s2474 + $0xe8] sm:$0xff]
  %v2505 = vld [vmem:[%s2474 + $0xf0] sm:$0xff]
  %v2506 = vld [vmem:[%s2474 + $0xf8] sm:$0xff]
  %s2507 = scalar_lea.vmem %s5, 3
  %v2508 = vld [vmem:[%s2507] sm:$0x1]
  %v2510 = vlaneseq
  %v2511 = vshrl.u32 %v2510, 7
  %v2512 = vsub.s32 0, %v2511
  %v2513 = vrot.slane %v2508, %v2512
  %2515 = vmatprep.subr.mxu0 0.0
  %2516 = vmatpush1.msra.mxu0 %v2475
  %2517 = vmatprep.subr.mxu0 0.0
  %2518 = vmatpush1.msra.mxu0 %v2476
  %2519 = vmatprep.subr.mxu0 0.0
  %2520 = vmatpush1.msra.mxu0 %v2477
  %2521 = vmatprep.subr.mxu0 0.0
  %2522 = vmatpush1.msra.mxu0 %v2478
  %2523 = vmatprep.subr.mxu0 0.0
  %2524 = vmatpush1.msra.mxu0 %v2479
  %2525 = vmatprep.subr.mxu0 0.0
  %2526 = vmatpush1.msra.mxu0 %v2480
  %2527 = vmatprep.subr.mxu0 0.0
  %2528 = vmatpush1.msra.mxu0 %v2481
  %2529 = vmatprep.subr.mxu0 0.0
  %2530 = vmatpush1.msra.mxu0 %v2482
  %2531 = vmatprep.subr.mxu0 0.0
  %2532 = vmatpush1.msra.mxu0 %v2483
  %2533 = vmatprep.subr.mxu0 0.0
  %2534 = vmatpush1.msra.mxu0 %v2484
  %2535 = vmatprep.subr.mxu0 0.0
  %2536 = vmatpush1.msra.mxu0 %v2485
  %2537 = vmatprep.subr.mxu0 0.0
  %2538 = vmatpush1.msra.mxu0 %v2486
  %2539 = vmatprep.subr.mxu0 0.0
  %2540 = vmatpush1.msra.mxu0 %v2487
  %2541 = vmatprep.subr.mxu0 0.0
  %2542 = vmatpush1.msra.mxu0 %v2488
  %2543 = vmatprep.subr.mxu0 0.0
  %2544 = vmatpush1.msra.mxu0 %v2489
  %2545 = vmatprep.subr.mxu0 0.0
  %2546 = vmatpush1.msra.mxu0 %v2490
  %2547 = vmatprep.subr.mxu0 0.0
  %2548 = vmatpush1.msra.mxu0 %v2491
  %2549 = vmatprep.subr.mxu0 0.0
  %2550 = vmatpush1.msra.mxu0 %v2492
  %2551 = vmatprep.subr.mxu0 0.0
  %2552 = vmatpush1.msra.mxu0 %v2493
  %2553 = vmatprep.subr.mxu0 0.0
  %2554 = vmatpush1.msra.mxu0 %v2494
  %2555 = vmatprep.subr.mxu0 0.0
  %2556 = vmatpush1.msra.mxu0 %v2495
  %2557 = vmatprep.subr.mxu0 0.0
  %2558 = vmatpush1.msra.mxu0 %v2496
  %2559 = vmatprep.subr.mxu0 0.0
  %2560 = vmatpush1.msra.mxu0 %v2497
  %2561 = vmatprep.subr.mxu0 0.0
  %2562 = vmatpush1.msra.mxu0 %v2498
  %2563 = vmatprep.subr.mxu0 0.0
  %2564 = vmatpush1.msra.mxu0 %v2499
  %2565 = vmatprep.subr.mxu0 0.0
  %2566 = vmatpush1.msra.mxu0 %v2500
  %2567 = vmatprep.subr.mxu0 0.0
  %2568 = vmatpush1.msra.mxu0 %v2501
  %2569 = vmatprep.subr.mxu0 0.0
  %2570 = vmatpush1.msra.mxu0 %v2502
  %2571 = vmatprep.subr.mxu0 0.0
  %2572 = vmatpush1.msra.mxu0 %v2503
  %2573 = vmatprep.subr.mxu0 0.0
  %2574 = vmatpush1.msra.mxu0 %v2504
  %2575 = vmatprep.subr.mxu0 0.0
  %2576 = vmatpush1.msra.mxu0 %v2505
  %2577 = vmatprep.subr.mxu0 0.0
  %2578 = vmatpush1.msra.mxu0 %v2506
  %2579 = vmatprep.mubr.f32.mxu0 %v46
  %2580 = vmatmul.mubr.f32.gmra.mrb[0].mxu0 %v45
  %v2581 = vpop.f32.mrb[0].mxu0
  %v2582 = vadd.f32 %v2513, %v2581
  %v2583 = vpop.f32.mrb[0].mxu0
  %2584 = vmatprep.mubr.f32.mxu0 %v48
  %2585 = vmatmul.mubr.f32.gmra.mrb[0].mxu0 %v47
  %v2586 = vpop.f32.mrb[0].mxu0
  %v2587 = vadd.f32 %v2513, %v2586
  %v2588 = vpop.f32.mrb[0].mxu0
  %2589 = vdwg.mxu0
  %s2590 = scalar_lea.vmem %s6, 768
  %v2591 = vld [vmem:[%s2590] sm:$0xff]
  %v2592 = vld [vmem:[%s2590 + $0x8] sm:$0xff]
  %v2593 = vld [vmem:[%s2590 + $0x10] sm:$0xff]
  %v2594 = vld [vmem:[%s2590 + $0x18] sm:$0xff]
  %v2595 = vld [vmem:[%s2590 + $0x20] sm:$0xff]
  %v2596 = vld [vmem:[%s2590 + $0x28] sm:$0xff]
  %v2597 = vld [vmem:[%s2590 + $0x30] sm:$0xff]
  %v2598 = vld [vmem:[%s2590 + $0x38] sm:$0xff]
  %v2599 = vld [vmem:[%s2590 + $0x40] sm:$0xff]
  %v2600 = vld [vmem:[%s2590 + $0x48] sm:$0xff]
  %v2601 = vld [vmem:[%s2590 + $0x50] sm:$0xff]
  %v2602 = vld [vmem:[%s2590 + $0x58] sm:$0xff]
  %v2603 = vld [vmem:[%s2590 + $0x60] sm:$0xff]
  %v2604 = vld [vmem:[%s2590 + $0x68] sm:$0xff]
  %v2605 = vld [vmem:[%s2590 + $0x70] sm:$0xff]
  %v2606 = vld [vmem:[%s2590 + $0x78] sm:$0xff]
  %v2607 = vld [vmem:[%s2590 + $0x80] sm:$0xff]
  %v2608 = vld [vmem:[%s2590 + $0x88] sm:$0xff]
  %v2609 = vld [vmem:[%s2590 + $0x90] sm:$0xff]
  %v2610 = vld [vmem:[%s2590 + $0x98] sm:$0xff]
  %v2611 = vld [vmem:[%s2590 + $0xa0] sm:$0xff]
  %v2612 = vld [vmem:[%s2590 + $0xa8] sm:$0xff]
  %v2613 = vld [vmem:[%s2590 + $0xb0] sm:$0xff]
  %v2614 = vld [vmem:[%s2590 + $0xb8] sm:$0xff]
  %v2615 = vld [vmem:[%s2590 + $0xc0] sm:$0xff]
  %v2616 = vld [vmem:[%s2590 + $0xc8] sm:$0xff]
  %v2617 = vld [vmem:[%s2590 + $0xd0] sm:$0xff]
  %v2618 = vld [vmem:[%s2590 + $0xd8] sm:$0xff]
  %v2619 = vld [vmem:[%s2590 + $0xe0] sm:$0xff]
  %v2620 = vld [vmem:[%s2590 + $0xe8] sm:$0xff]
  %v2621 = vld [vmem:[%s2590 + $0xf0] sm:$0xff]
  %v2622 = vld [vmem:[%s2590 + $0xf8] sm:$0xff]
  %s2623 = scalar_lea.vmem %s7, 3
  %v2624 = vld [vmem:[%s2623] sm:$0x1]
  %v2626 = vlaneseq
  %v2627 = vshrl.u32 %v2626, 7
  %v2628 = vsub.s32 0, %v2627
  %v2629 = vrot.slane %v2624, %v2628
  %2631 = vmatprep.subr.mxu0 0.0
  %2632 = vmatpush1.msra.mxu0 %v2591
  %2633 = vmatprep.subr.mxu0 0.0
  %2634 = vmatpush1.msra.mxu0 %v2592
  %2635 = vmatprep.subr.mxu0 0.0
  %2636 = vmatpush1.msra.mxu0 %v2593
  %2637 = vmatprep.subr.mxu0 0.0
  %2638 = vmatpush1.msra.mxu0 %v2594
  %2639 = vmatprep.subr.mxu0 0.0
  %2640 = vmatpush1.msra.mxu0 %v2595
  %2641 = vmatprep.subr.mxu0 0.0
  %2642 = vmatpush1.msra.mxu0 %v2596
  %2643 = vmatprep.subr.mxu0 0.0
  %2644 = vmatpush1.msra.mxu0 %v2597
  %2645 = vmatprep.subr.mxu0 0.0
  %2646 = vmatpush1.msra.mxu0 %v2598
  %2647 = vmatprep.subr.mxu0 0.0
  %2648 = vmatpush1.msra.mxu0 %v2599
  %2649 = vmatprep.subr.mxu0 0.0
  %2650 = vmatpush1.msra.mxu0 %v2600
  %2651 = vmatprep.subr.mxu0 0.0
  %2652 = vmatpush1.msra.mxu0 %v2601
  %2653 = vmatprep.subr.mxu0 0.0
  %2654 = vmatpush1.msra.mxu0 %v2602
  %2655 = vmatprep.subr.mxu0 0.0
  %2656 = vmatpush1.msra.mxu0 %v2603
  %2657 = vmatprep.subr.mxu0 0.0
  %2658 = vmatpush1.msra.mxu0 %v2604
  %2659 = vmatprep.subr.mxu0 0.0
  %2660 = vmatpush1.msra.mxu0 %v2605
  %2661 = vmatprep.subr.mxu0 0.0
  %2662 = vmatpush1.msra.mxu0 %v2606
  %2663 = vmatprep.subr.mxu0 0.0
  %2664 = vmatpush1.msra.mxu0 %v2607
  %2665 = vmatprep.subr.mxu0 0.0
  %2666 = vmatpush1.msra.mxu0 %v2608
  %2667 = vmatprep.subr.mxu0 0.0
  %2668 = vmatpush1.msra.mxu0 %v2609
  %2669 = vmatprep.subr.mxu0 0.0
  %2670 = vmatpush1.msra.mxu0 %v2610
  %2671 = vmatprep.subr.mxu0 0.0
  %2672 = vmatpush1.msra.mxu0 %v2611
  %2673 = vmatprep.subr.mxu0 0.0
  %2674 = vmatpush1.msra.mxu0 %v2612
  %2675 = vmatprep.subr.mxu0 0.0
  %2676 = vmatpush1.msra.mxu0 %v2613
  %2677 = vmatprep.subr.mxu0 0.0
  %2678 = vmatpush1.msra.mxu0 %v2614
  %2679 = vmatprep.subr.mxu0 0.0
  %2680 = vmatpush1.msra.mxu0 %v2615
  %2681 = vmatprep.subr.mxu0 0.0
  %2682 = vmatpush1.msra.mxu0 %v2616
  %2683 = vmatprep.subr.mxu0 0.0
  %2684 = vmatpush1.msra.mxu0 %v2617
  %2685 = vmatprep.subr.mxu0 0.0
  %2686 = vmatpush1.msra.mxu0 %v2618
  %2687 = vmatprep.subr.mxu0 0.0
  %2688 = vmatpush1.msra.mxu0 %v2619
  %2689 = vmatprep.subr.mxu0 0.0
  %2690 = vmatpush1.msra.mxu0 %v2620
  %2691 = vmatprep.subr.mxu0 0.0
  %2692 = vmatpush1.msra.mxu0 %v2621
  %2693 = vmatprep.subr.mxu0 0.0
  %2694 = vmatpush1.msra.mxu0 %v2622
  %2695 = vmatprep.mubr.f32.mxu0 %v46
  %2696 = vmatmul.mubr.f32.gmra.mrb[0].mxu0 %v45
  %v2697 = vpop.f32.mrb[0].mxu0
  %v2698 = vadd.f32 %v2629, %v2697
  %v2699 = vpop.f32.mrb[0].mxu0
  %2700 = vmatprep.mubr.f32.mxu0 %v48
  %2701 = vmatmul.mubr.f32.gmra.mrb[0].mxu0 %v47
  %v2702 = vpop.f32.mrb[0].mxu0
  %v2703 = vadd.f32 %v2629, %v2702
  %v2704 = vpop.f32.mrb[0].mxu0
  %2705 = vdwg.mxu0
  %v2707 = vsel %vm391, %v2466, 0
  %v2710 = vsel %vm391, %v2582, 0
  %2712 = vmatprep.subr.mxu0 0.0
  %2713 = vmatpush1.xpose.msra.mxu0 %v2710
  %2714 = vmatprep.subr.mxu0 0.0
  %2715 = vmatpush1.xpose.msra.mxu0 0.0
  %2716 = vmatprep.subr.mxu0 0.0
  %2717 = vmatpush1.xpose.msra.mxu0 0.0
  %2718 = vmatprep.subr.mxu0 0.0
  %2719 = vmatpush1.xpose.msra.mxu0 0.0
  %2720 = vmatprep.subr.mxu0 0.0
  %2721 = vmatpush1.xpose.msra.mxu0 0.0
  %2722 = vmatprep.subr.mxu0 0.0
  %2723 = vmatpush1.xpose.msra.mxu0 0.0
  %2724 = vmatprep.subr.mxu0 0.0
  %2725 = vmatpush1.xpose.msra.mxu0 0.0
  %2726 = vmatprep.subr.mxu0 0.0
  %2727 = vmatpush1.xpose.msra.mxu0 0.0
  %2728 = vmatprep.subr.mxu0 0.0
  %2729 = vmatpush1.xpose.msra.mxu0 0.0
  %2730 = vmatprep.subr.mxu0 0.0
  %2731 = vmatpush1.xpose.msra.mxu0 0.0
  %2732 = vmatprep.subr.mxu0 0.0
  %2733 = vmatpush1.xpose.msra.mxu0 0.0
  %2734 = vmatprep.subr.mxu0 0.0
  %2735 = vmatpush1.xpose.msra.mxu0 0.0
  %2736 = vmatprep.subr.mxu0 0.0
  %2737 = vmatpush1.xpose.msra.mxu0 0.0
  %2738 = vmatprep.subr.mxu0 0.0
  %2739 = vmatpush1.xpose.msra.mxu0 0.0
  %2740 = vmatprep.subr.mxu0 0.0
  %2741 = vmatpush1.xpose.msra.mxu0 0.0
  %2742 = vmatprep.subr.mxu0 0.0
  %2743 = vmatpush1.xpose.msra.mxu0 0.0
  %2744 = vmatprep.subr.mxu0 0.0
  %2745 = vmatpush1.xpose.msra.mxu0 0.0
  %2746 = vmatprep.subr.mxu0 0.0
  %2747 = vmatpush1.xpose.msra.mxu0 0.0
  %2748 = vmatprep.subr.mxu0 0.0
  %2749 = vmatpush1.xpose.msra.mxu0 0.0
  %2750 = vmatprep.subr.mxu0 0.0
  %2751 = vmatpush1.xpose.msra.mxu0 0.0
  %2752 = vmatprep.subr.mxu0 0.0
  %2753 = vmatpush1.xpose.msra.mxu0 0.0
  %2754 = vmatprep.subr.mxu0 0.0
  %2755 = vmatpush1.xpose.msra.mxu0 0.0
  %2756 = vmatprep.subr.mxu0 0.0
  %2757 = vmatpush1.xpose.msra.mxu0 0.0
  %2758 = vmatprep.subr.mxu0 0.0
  %2759 = vmatpush1.xpose.msra.mxu0 0.0
  %2760 = vmatprep.subr.mxu0 0.0
  %2761 = vmatpush1.xpose.msra.mxu0 0.0
  %2762 = vmatprep.subr.mxu0 0.0
  %2763 = vmatpush1.xpose.msra.mxu0 0.0
  %2764 = vmatprep.subr.mxu0 0.0
  %2765 = vmatpush1.xpose.msra.mxu0 0.0
  %2766 = vmatprep.subr.mxu0 0.0
  %2767 = vmatpush1.xpose.msra.mxu0 0.0
  %2768 = vmatprep.subr.mxu0 0.0
  %2769 = vmatpush1.xpose.msra.mxu0 0.0
  %2770 = vmatprep.subr.mxu0 0.0
  %2771 = vmatpush1.xpose.msra.mxu0 0.0
  %2772 = vmatprep.subr.mxu0 0.0
  %2773 = vmatpush1.xpose.msra.mxu0 0.0
  %2774 = vmatprep.subr.mxu0 0.0
  %2775 = vmatpush1.xpose.msra.mxu0 0.0
  %2776 = vmatprep.mubr.f32.mxu0 0.0
  %2777 = vmatmul.mubr.f32.gmra.mrb[0].mxu0 %v2707
  %v2778 = vpop.f32.mrb[0].mxu0
  %v2779 = vadd.f32 0.0, %v2778
  %v2780 = vpop.f32.mrb[0].mxu0
  %2781 = vdwg.mxu0
  %v2783 = vsel %vm391, %v2471, 0
  %v2786 = vsel %vm391, %v2587, 0
  %2788 = vmatprep.subr.mxu0 0.0
  %2789 = vmatpush1.xpose.msra.mxu0 %v2786
  %2790 = vmatprep.subr.mxu0 0.0
  %2791 = vmatpush1.xpose.msra.mxu0 0.0
  %2792 = vmatprep.subr.mxu0 0.0
  %2793 = vmatpush1.xpose.msra.mxu0 0.0
  %2794 = vmatprep.subr.mxu0 0.0
  %2795 = vmatpush1.xpose.msra.mxu0 0.0
  %2796 = vmatprep.subr.mxu0 0.0
  %2797 = vmatpush1.xpose.msra.mxu0 0.0
  %2798 = vmatprep.subr.mxu0 0.0
  %2799 = vmatpush1.xpose.msra.mxu0 0.0
  %2800 = vmatprep.subr.mxu0 0.0
  %2801 = vmatpush1.xpose.msra.mxu0 0.0
  %2802 = vmatprep.subr.mxu0 0.0
  %2803 = vmatpush1.xpose.msra.mxu0 0.0
  %2804 = vmatprep.subr.mxu0 0.0
  %2805 = vmatpush1.xpose.msra.mxu0 0.0
  %2806 = vmatprep.subr.mxu0 0.0
  %2807 = vmatpush1.xpose.msra.mxu0 0.0
  %2808 = vmatprep.subr.mxu0 0.0
  %2809 = vmatpush1.xpose.msra.mxu0 0.0
  %2810 = vmatprep.subr.mxu0 0.0
  %2811 = vmatpush1.xpose.msra.mxu0 0.0
  %2812 = vmatprep.subr.mxu0 0.0
  %2813 = vmatpush1.xpose.msra.mxu0 0.0
  %2814 = vmatprep.subr.mxu0 0.0
  %2815 = vmatpush1.xpose.msra.mxu0 0.0
  %2816 = vmatprep.subr.mxu0 0.0
  %2817 = vmatpush1.xpose.msra.mxu0 0.0
  %2818 = vmatprep.subr.mxu0 0.0
  %2819 = vmatpush1.xpose.msra.mxu0 0.0
  %2820 = vmatprep.subr.mxu0 0.0
  %2821 = vmatpush1.xpose.msra.mxu0 0.0
  %2822 = vmatprep.subr.mxu0 0.0
  %2823 = vmatpush1.xpose.msra.mxu0 0.0
  %2824 = vmatprep.subr.mxu0 0.0
  %2825 = vmatpush1.xpose.msra.mxu0 0.0
  %2826 = vmatprep.subr.mxu0 0.0
  %2827 = vmatpush1.xpose.msra.mxu0 0.0
  %2828 = vmatprep.subr.mxu0 0.0
  %2829 = vmatpush1.xpose.msra.mxu0 0.0
  %2830 = vmatprep.subr.mxu0 0.0
  %2831 = vmatpush1.xpose.msra.mxu0 0.0
  %2832 = vmatprep.subr.mxu0 0.0
  %2833 = vmatpush1.xpose.msra.mxu0 0.0
  %2834 = vmatprep.subr.mxu0 0.0
  %2835 = vmatpush1.xpose.msra.mxu0 0.0
  %2836 = vmatprep.subr.mxu0 0.0
  %2837 = vmatpush1.xpose.msra.mxu0 0.0
  %2838 = vmatprep.subr.mxu0 0.0
  %2839 = vmatpush1.xpose.msra.mxu0 0.0
  %2840 = vmatprep.subr.mxu0 0.0
  %2841 = vmatpush1.xpose.msra.mxu0 0.0
  %2842 = vmatprep.subr.mxu0 0.0
  %2843 = vmatpush1.xpose.msra.mxu0 0.0
  %2844 = vmatprep.subr.mxu0 0.0
  %2845 = vmatpush1.xpose.msra.mxu0 0.0
  %2846 = vmatprep.subr.mxu0 0.0
  %2847 = vmatpush1.xpose.msra.mxu0 0.0
  %2848 = vmatprep.subr.mxu0 0.0
  %2849 = vmatpush1.xpose.msra.mxu0 0.0
  %2850 = vmatprep.subr.mxu0 0.0
  %2851 = vmatpush1.xpose.msra.mxu0 0.0
  %2852 = vmatprep.mubr.f32.mxu0 0.0
  %2853 = vmatmul.mubr.f32.gmra.mrb[0].mxu0 %v2783
  %v2854 = vpop.f32.mrb[0].mxu0
  %v2855 = vadd.f32 0.0, %v2854
  %v2856 = vpop.f32.mrb[0].mxu0
  %2857 = vdwg.mxu0
  %v2858 = vmul.f32 %v2779, 0.125
  %v2859 = vmul.f32 %v2855, 0.125
  %v2860 = vsel %vm546, %v2858, -inf
  %2861 = vmax.xlane.f32.xlu0 %v2860
  %v2862 = vpop.xlane.xlu0 %2861
  %v2863 = vsel %vm546, %v2859, -inf
  %2864 = vmax.xlane.f32.xlu0 %v2863
  %v2865 = vpop.xlane.xlu0 %2864
  %v2866 = vsub.f32 %v2858, %v2862
  %v2867 = vsub.f32 %v2859, %v2865
  %v2868 = vmul.f32 %v2866, 1.442695
  %v2869 = vpow.pop %v2868
  %v2870 = vmul.f32 %v2867, 1.442695
  %v2871 = vpow.pop %v2870
  %v2872 = vsel %vm546, %v2869, 0.0
  %2873 = vadd.xlane.f32.xlu0 %v2872
  %v2874 = vpop.xlane.xlu0 %2873
  %v2875 = vsel %vm546, %v2871, 0.0
  %2876 = vadd.xlane.f32.xlu0 %v2875
  %v2877 = vpop.xlane.xlu0 %2876
  %v2878 = vrcp.pop %v2874
  %v2879 = vrcp.pop %v2877
  %v2880 = vmul.f32 %v2869, %v2878
  %v2881 = vmul.f32 %v2871, %v2879
  %v2883 = vsel %vm546, %v2880, 0
  %2885 = vmatprep.subr.mxu0 0.0
  %2886 = vmatpush1.msra.mxu0 %v2698
  %2887 = vmatprep.subr.mxu0 0.0
  %2888 = vmatpush1.msra.mxu0 0.0
  %2889 = vmatprep.subr.mxu0 0.0
  %2890 = vmatpush1.msra.mxu0 0.0
  %2891 = vmatprep.subr.mxu0 0.0
  %2892 = vmatpush1.msra.mxu0 0.0
  %2893 = vmatprep.subr.mxu0 0.0
  %2894 = vmatpush1.msra.mxu0 0.0
  %2895 = vmatprep.subr.mxu0 0.0
  %2896 = vmatpush1.msra.mxu0 0.0
  %2897 = vmatprep.subr.mxu0 0.0
  %2898 = vmatpush1.msra.mxu0 0.0
  %2899 = vmatprep.subr.mxu0 0.0
  %2900 = vmatpush1.msra.mxu0 0.0
  %2901 = vmatprep.subr.mxu0 0.0
  %2902 = vmatpush1.msra.mxu0 0.0
  %2903 = vmatprep.subr.mxu0 0.0
  %2904 = vmatpush1.msra.mxu0 0.0
  %2905 = vmatprep.subr.mxu0 0.0
  %2906 = vmatpush1.msra.mxu0 0.0
  %2907 = vmatprep.subr.mxu0 0.0
  %2908 = vmatpush1.msra.mxu0 0.0
  %2909 = vmatprep.subr.mxu0 0.0
  %2910 = vmatpush1.msra.mxu0 0.0
  %2911 = vmatprep.subr.mxu0 0.0
  %2912 = vmatpush1.msra.mxu0 0.0
  %2913 = vmatprep.subr.mxu0 0.0
  %2914 = vmatpush1.msra.mxu0 0.0
  %2915 = vmatprep.subr.mxu0 0.0
  %2916 = vmatpush1.msra.mxu0 0.0
  %2917 = vmatprep.subr.mxu0 0.0
  %2918 = vmatpush1.msra.mxu0 0.0
  %2919 = vmatprep.subr.mxu0 0.0
  %2920 = vmatpush1.msra.mxu0 0.0
  %2921 = vmatprep.subr.mxu0 0.0
  %2922 = vmatpush1.msra.mxu0 0.0
  %2923 = vmatprep.subr.mxu0 0.0
  %2924 = vmatpush1.msra.mxu0 0.0
  %2925 = vmatprep.subr.mxu0 0.0
  %2926 = vmatpush1.msra.mxu0 0.0
  %2927 = vmatprep.subr.mxu0 0.0
  %2928 = vmatpush1.msra.mxu0 0.0
  %2929 = vmatprep.subr.mxu0 0.0
  %2930 = vmatpush1.msra.mxu0 0.0
  %2931 = vmatprep.subr.mxu0 0.0
  %2932 = vmatpush1.msra.mxu0 0.0
  %2933 = vmatprep.subr.mxu0 0.0
  %2934 = vmatpush1.msra.mxu0 0.0
  %2935 = vmatprep.subr.mxu0 0.0
  %2936 = vmatpush1.msra.mxu0 0.0
  %2937 = vmatprep.subr.mxu0 0.0
  %2938 = vmatpush1.msra.mxu0 0.0
  %2939 = vmatprep.subr.mxu0 0.0
  %2940 = vmatpush1.msra.mxu0 0.0
  %2941 = vmatprep.subr.mxu0 0.0
  %2942 = vmatpush1.msra.mxu0 0.0
  %2943 = vmatprep.subr.mxu0 0.0
  %2944 = vmatpush1.msra.mxu0 0.0
  %2945 = vmatprep.subr.mxu0 0.0
  %2946 = vmatpush1.msra.mxu0 0.0
  %2947 = vmatprep.subr.mxu0 0.0
  %2948 = vmatpush1.msra.mxu0 0.0
  %2949 = vmatprep.mubr.f32.mxu0 0.0
  %2950 = vmatmul.mubr.f32.gmra.mrb[0].mxu0 %v2883
  %v2951 = vpop.f32.mrb[0].mxu0
  %v2952 = vadd.f32 0.0, %v2951
  %v2953 = vpop.f32.mrb[0].mxu0
  %2954 = vdwg.mxu0
  %v2956 = vsel %vm546, %v2881, 0
  %2958 = vmatprep.subr.mxu0 0.0
  %2959 = vmatpush1.msra.mxu0 %v2703
  %2960 = vmatprep.subr.mxu0 0.0
  %2961 = vmatpush1.msra.mxu0 0.0
  %2962 = vmatprep.subr.mxu0 0.0
  %2963 = vmatpush1.msra.mxu0 0.0
  %2964 = vmatprep.subr.mxu0 0.0
  %2965 = vmatpush1.msra.mxu0 0.0
  %2966 = vmatprep.subr.mxu0 0.0
  %2967 = vmatpush1.msra.mxu0 0.0
  %2968 = vmatprep.subr.mxu0 0.0
  %2969 = vmatpush1.msra.mxu0 0.0
  %2970 = vmatprep.subr.mxu0 0.0
  %2971 = vmatpush1.msra.mxu0 0.0
  %2972 = vmatprep.subr.mxu0 0.0
  %2973 = vmatpush1.msra.mxu0 0.0
  %2974 = vmatprep.subr.mxu0 0.0
  %2975 = vmatpush1.msra.mxu0 0.0
  %2976 = vmatprep.subr.mxu0 0.0
  %2977 = vmatpush1.msra.mxu0 0.0
  %2978 = vmatprep.subr.mxu0 0.0
  %2979 = vmatpush1.msra.mxu0 0.0
  %2980 = vmatprep.subr.mxu0 0.0
  %2981 = vmatpush1.msra.mxu0 0.0
  %2982 = vmatprep.subr.mxu0 0.0
  %2983 = vmatpush1.msra.mxu0 0.0
  %2984 = vmatprep.subr.mxu0 0.0
  %2985 = vmatpush1.msra.mxu0 0.0
  %2986 = vmatprep.subr.mxu0 0.0
  %2987 = vmatpush1.msra.mxu0 0.0
  %2988 = vmatprep.subr.mxu0 0.0
  %2989 = vmatpush1.msra.mxu0 0.0
  %2990 = vmatprep.subr.mxu0 0.0
  %2991 = vmatpush1.msra.mxu0 0.0
  %2992 = vmatprep.subr.mxu0 0.0
  %2993 = vmatpush1.msra.mxu0 0.0
  %2994 = vmatprep.subr.mxu0 0.0
  %2995 = vmatpush1.msra.mxu0 0.0
  %2996 = vmatprep.subr.mxu0 0.0
  %2997 = vmatpush1.msra.mxu0 0.0
  %2998 = vmatprep.subr.mxu0 0.0
  %2999 = vmatpush1.msra.mxu0 0.0
  %3000 = vmatprep.subr.mxu0 0.0
  %3001 = vmatpush1.msra.mxu0 0.0
  %3002 = vmatprep.subr.mxu0 0.0
  %3003 = vmatpush1.msra.mxu0 0.0
  %3004 = vmatprep.subr.mxu0 0.0
  %3005 = vmatpush1.msra.mxu0 0.0
  %3006 = vmatprep.subr.mxu0 0.0
  %3007 = vmatpush1.msra.mxu0 0.0
  %3008 = vmatprep.subr.mxu0 0.0
  %3009 = vmatpush1.msra.mxu0 0.0
  %3010 = vmatprep.subr.mxu0 0.0
  %3011 = vmatpush1.msra.mxu0 0.0
  %3012 = vmatprep.subr.mxu0 0.0
  %3013 = vmatpush1.msra.mxu0 0.0
  %3014 = vmatprep.subr.mxu0 0.0
  %3015 = vmatpush1.msra.mxu0 0.0
  %3016 = vmatprep.subr.mxu0 0.0
  %3017 = vmatpush1.msra.mxu0 0.0
  %3018 = vmatprep.subr.mxu0 0.0
  %3019 = vmatpush1.msra.mxu0 0.0
  %3020 = vmatprep.subr.mxu0 0.0
  %3021 = vmatpush1.msra.mxu0 0.0
  %3022 = vmatprep.mubr.f32.mxu0 0.0
  %3023 = vmatmul.mubr.f32.gmra.mrb[0].mxu0 %v2956
  %v3024 = vpop.f32.mrb[0].mxu0
  %v3025 = vadd.f32 0.0, %v3024
  %v3026 = vpop.f32.mrb[0].mxu0
  %3027 = vdwg.mxu0
  %s3028 = scalar_lea.vmem %s8, 384
  %v3029 = vld [vmem:[%s3028] sm:$0xff]
  %v3030 = vld [vmem:[%s3028 + $0x8] sm:$0xff]
  %v3031 = vld [vmem:[%s3028 + $0x10] sm:$0xff]
  %v3032 = vld [vmem:[%s3028 + $0x18] sm:$0xff]
  %v3033 = vld [vmem:[%s3028 + $0x20] sm:$0xff]
  %v3034 = vld [vmem:[%s3028 + $0x28] sm:$0xff]
  %v3035 = vld [vmem:[%s3028 + $0x30] sm:$0xff]
  %v3036 = vld [vmem:[%s3028 + $0x38] sm:$0xff]
  %v3037 = vld [vmem:[%s3028 + $0x40] sm:$0xff]
  %v3038 = vld [vmem:[%s3028 + $0x48] sm:$0xff]
  %v3039 = vld [vmem:[%s3028 + $0x50] sm:$0xff]
  %v3040 = vld [vmem:[%s3028 + $0x58] sm:$0xff]
  %v3041 = vld [vmem:[%s3028 + $0x60] sm:$0xff]
  %v3042 = vld [vmem:[%s3028 + $0x68] sm:$0xff]
  %v3043 = vld [vmem:[%s3028 + $0x70] sm:$0xff]
  %v3044 = vld [vmem:[%s3028 + $0x78] sm:$0xff]
  %v3046 = vsel %vm391, %v2952, 0
  %v3049 = vsel %vm391, %v3025, 0
  %3051 = vmatprep.subr.mxu0 %v3030
  %3052 = vmatpush1.msra.mxu0 %v3029
  %3053 = vmatprep.subr.mxu0 %v3032
  %3054 = vmatpush1.msra.mxu0 %v3031
  %3055 = vmatprep.subr.mxu0 %v3034
  %3056 = vmatpush1.msra.mxu0 %v3033
  %3057 = vmatprep.subr.mxu0 %v3036
  %3058 = vmatpush1.msra.mxu0 %v3035
  %3059 = vmatprep.subr.mxu0 %v3038
  %3060 = vmatpush1.msra.mxu0 %v3037
  %3061 = vmatprep.subr.mxu0 %v3040
  %3062 = vmatpush1.msra.mxu0 %v3039
  %3063 = vmatprep.subr.mxu0 %v3042
  %3064 = vmatpush1.msra.mxu0 %v3041
  %3065 = vmatprep.subr.mxu0 %v3044
  %3066 = vmatpush1.msra.mxu0 %v3043
  %3067 = vmatprep.subr.mxu0 0.0
  %3068 = vmatpush1.msra.mxu0 0.0
  %3069 = vmatprep.subr.mxu0 0.0
  %3070 = vmatpush1.msra.mxu0 0.0
  %3071 = vmatprep.subr.mxu0 0.0
  %3072 = vmatpush1.msra.mxu0 0.0
  %3073 = vmatprep.subr.mxu0 0.0
  %3074 = vmatpush1.msra.mxu0 0.0
  %3075 = vmatprep.subr.mxu0 0.0
  %3076 = vmatpush1.msra.mxu0 0.0
  %3077 = vmatprep.subr.mxu0 0.0
  %3078 = vmatpush1.msra.mxu0 0.0
  %3079 = vmatprep.subr.mxu0 0.0
  %3080 = vmatpush1.msra.mxu0 0.0
  %3081 = vmatprep.subr.mxu0 0.0
  %3082 = vmatpush1.msra.mxu0 0.0
  %3083 = vmatprep.subr.mxu0 0.0
  %3084 = vmatpush1.msra.mxu0 0.0
  %3085 = vmatprep.subr.mxu0 0.0
  %3086 = vmatpush1.msra.mxu0 0.0
  %3087 = vmatprep.subr.mxu0 0.0
  %3088 = vmatpush1.msra.mxu0 0.0
  %3089 = vmatprep.subr.mxu0 0.0
  %3090 = vmatpush1.msra.mxu0 0.0
  %3091 = vmatprep.subr.mxu0 0.0
  %3092 = vmatpush1.msra.mxu0 0.0
  %3093 = vmatprep.subr.mxu0 0.0
  %3094 = vmatpush1.msra.mxu0 0.0
  %3095 = vmatprep.subr.mxu0 0.0
  %3096 = vmatpush1.msra.mxu0 0.0
  %3097 = vmatprep.subr.mxu0 0.0
  %3098 = vmatpush1.msra.mxu0 0.0
  %3099 = vmatprep.subr.mxu0 0.0
  %3100 = vmatpush1.msra.mxu0 0.0
  %3101 = vmatprep.subr.mxu0 0.0
  %3102 = vmatpush1.msra.mxu0 0.0
  %3103 = vmatprep.subr.mxu0 0.0
  %3104 = vmatpush1.msra.mxu0 0.0
  %3105 = vmatprep.subr.mxu0 0.0
  %3106 = vmatpush1.msra.mxu0 0.0
  %3107 = vmatprep.subr.mxu0 0.0
  %3108 = vmatpush1.msra.mxu0 0.0
  %3109 = vmatprep.subr.mxu0 0.0
  %3110 = vmatpush1.msra.mxu0 0.0
  %3111 = vmatprep.subr.mxu0 0.0
  %3112 = vmatpush1.msra.mxu0 0.0
  %3113 = vmatprep.subr.mxu0 0.0
  %3114 = vmatpush1.msra.mxu0 0.0
  %3115 = vmatprep.mubr.f32.mxu0 0.0
  %3116 = vmatmul.mubr.f32.gmra.mrb[0].mxu0 %v3046
  %v3117 = vpop.f32.mrb[0].mxu0
  %v3118 = vadd.f32 0.0, %v3117
  %v3119 = vpop.f32.mrb[0].mxu0
  %v3120 = vadd.f32 0.0, %v3119
  %3121 = vmatprep.mubr.f32.mxu0 0.0
  %3122 = vmatmul.mubr.f32.gmra.mrb[0].mxu0 %v3049
  %v3123 = vpop.f32.mrb[0].mxu0
  %v3124 = vadd.f32 0.0, %v3123
  %v3125 = vpop.f32.mrb[0].mxu0
  %v3126 = vadd.f32 0.0, %v3125
  %3127 = vdwg.mxu0
  %v3128 = vadd.f32 %v2354, %v3118
  %v3129 = vadd.f32 %v2355, %v3120
  %v3130 = vadd.f32 %v2356, %v3124
  %v3131 = vadd.f32 %v2357, %v3126
  %v3132 = vadd.f32 %v41, %v3128
  %v3133 = vadd.f32 %v42, %v3129
  %v3134 = vadd.f32 %v43, %v3130
  %v3135 = vadd.f32 %v44, %v3131
  %v3136 = vld [vmem:[%s9] sm:$0x3]
  %v3138 = vlaneseq
  %v3139 = vshrl.u32 %v3138, 7
  %v3140 = vsub.s32 0, %v3139
  %v3141 = vrot.slane %v3136, %v3140
  %v3142 = vlaneseq
  %v3143 = vshrl.u32 %v3142, 7
  %v3144 = vsub.s32 1, %v3143
  %v3145 = vrot.slane %v3136, %v3144
  %v3148 = vadd.f32 %v3132, %v3141
  %v3149 = vadd.f32 %v3133, %v3145
  %v3150 = vadd.f32 %v3134, %v3141
  %v3151 = vadd.f32 %v3135, %v3145
  %v3152 = vadd.f32 %v3148, %v3149
  %3153 = vadd.xlane.f32.xlu0 %v3152
  %v3154 = vpop.xlane.xlu0 %3153
  %v3155 = vadd.f32 %v3150, %v3151
  %3156 = vadd.xlane.f32.xlu0 %v3155
  %v3157 = vpop.xlane.xlu0 %3156
  %v3158 = vrcp.pop 256.0
  %v3159 = vmul.f32 %v3154, %v3158
  %v3160 = vmul.f32 %v3157, %v3158
  %v3161 = vsub.f32 %v3148, %v3159
  %v3162 = vsub.f32 %v3149, %v3159
  %v3163 = vsub.f32 %v3150, %v3160
  %v3164 = vsub.f32 %v3151, %v3160
  %v3165 = vmul.f32 %v3161, %v3161
  %v3166 = vmul.f32 %v3162, %v3162
  %v3167 = vmul.f32 %v3163, %v3163
  %v3168 = vmul.f32 %v3164, %v3164
  %v3169 = vadd.f32 %v3165, %v3166
  %3170 = vadd.xlane.f32.xlu0 %v3169
  %v3171 = vpop.xlane.xlu0 %3170
  %v3172 = vadd.f32 %v3167, %v3168
  %3173 = vadd.xlane.f32.xlu0 %v3172
  %v3174 = vpop.xlane.xlu0 %3173
  %v3175 = vmul.f32 %v3171, %v3158
  %v3176 = vmul.f32 %v3174, %v3158
  %v3177 = vadd.f32 %v3175, 1e-05
  %v3178 = vadd.f32 %v3176, 1e-05
  %v3179 = vrsqrt.pop %v3177
  %v3180 = vrsqrt.pop %v3178
  %v3181 = vmul.f32 %v3161, %v3179
  %v3182 = vmul.f32 %v3162, %v3179
  %v3183 = vmul.f32 %v3163, %v3180
  %v3184 = vmul.f32 %v3164, %v3180
  %v3185 = vld [vmem:[%s10] sm:$0x3]
  %v3187 = vlaneseq
  %v3188 = vshrl.u32 %v3187, 7
  %v3189 = vsub.s32 0, %v3188
  %v3190 = vrot.slane %v3185, %v3189
  %v3191 = vlaneseq
  %v3192 = vshrl.u32 %v3191, 7
  %v3193 = vsub.s32 1, %v3192
  %v3194 = vrot.slane %v3185, %v3193
  %v3197 = vmul.f32 %v3181, %v3190
  %v3198 = vmul.f32 %v3182, %v3194
  %v3199 = vmul.f32 %v3183, %v3190
  %v3200 = vmul.f32 %v3184, %v3194
  %v3201 = vld [vmem:[%s11] sm:$0x3]
  %v3203 = vlaneseq
  %v3204 = vshrl.u32 %v3203, 7
  %v3205 = vsub.s32 0, %v3204
  %v3206 = vrot.slane %v3201, %v3205
  %v3207 = vlaneseq
  %v3208 = vshrl.u32 %v3207, 7
  %v3209 = vsub.s32 1, %v3208
  %v3210 = vrot.slane %v3201, %v3209
  %v3213 = vadd.f32 %v3197, %v3206
  %v3214 = vadd.f32 %v3198, %v3210
  %v3215 = vadd.f32 %v3199, %v3206
  %v3216 = vadd.f32 %v3200, %v3210
  %3217 = vst [vmem:[%s12] sm:$0xff] %v3213
  %3218 = vst [vmem:[%s12 + $0x8] sm:$0xff] %v3214
  %3219 = vst [vmem:[%s12 + $0x10] sm:$0xff] %v3215
  %3220 = vst [vmem:[%s12 + $0x18] sm:$0xff] %v3216
  // Predicated region
  $region50: #{multistream_decoder_forward.9} parent=0 // pred_check
    _
  $region51: #{multistream_decoder_forward.9} parent=0 // pred_check_branch
    %3222 = sbr.rel (0) target = $region53
  $region52: #{multistream_decoder_forward.9} parent=0 // pred_region
    _
  $region53: #{multistream_decoder_forward.9} parent=0 // pred_fallthru
    _
  // Predicated region
  $region54: #{multistream_decoder_forward.9} parent=0 // pred_check
    _
  $region55: #{multistream_decoder_forward.9} parent=0 // pred_check_branch
    %3224 = sbr.rel (0) target = $region57
  $region56: #{multistream_decoder_forward.9} parent=0 // pred_region
    _
  $region57: #{multistream_decoder_forward.9} parent=0 // pred_fallthru
    _

// kernel: multistream_decoder_forward.10
$region0: #{multistream_decoder_forward.10}
  #allocation0 [shape = 'u32[]', space=smem, size = 0x4, offset = 0x4, fixed_abs, tag = 'smem constant byte address 0x4 - core index']
  #allocation1 [shape = 'u32[144,128]{1,0:T(1,128)}', space=vmem, size = 0x12000, scoped, tag = 'internal scratch']
  %s0 = inlined_call_operand.vmem [shape: f32[16,256], index: 0, kind: input, shape index: {}]
  %s1 = inlined_call_operand.vmem [shape: f32[32,256], index: 1, kind: input, shape index: {}]
  %s2 = inlined_call_operand.vmem [shape: f32[4,256,64], index: 2, kind: input, shape index: {}]
  %s3 = inlined_call_operand.vmem [shape: f32[4,1,64], index: 3, kind: input, shape index: {}]
  %s4 = inlined_call_operand.vmem [shape: f32[4,256,64], index: 4, kind: input, shape index: {}]
  %s5 = inlined_call_operand.vmem [shape: f32[4,1,64], index: 5, kind: input, shape index: {}]
  %s6 = inlined_call_operand.vmem [shape: f32[4,256,64], index: 6, kind: input, shape index: {}]
  %s7 = inlined_call_operand.vmem [shape: f32[4,1,64], index: 7, kind: input, shape index: {}]
  %s8 = inlined_call_operand.vmem [shape: f32[4,64,256], index: 8, kind: input, shape index: {}]
  %s9 = inlined_call_operand.vmem [shape: f32[1,256], index: 9, kind: input, shape index: {}]
  %s10 = inlined_call_operand.vmem [shape: f32[1,256], index: 10, kind: input, shape index: {}]
  %s11 = inlined_call_operand.vmem [shape: f32[1,256], index: 11, kind: input, shape index: {}]
  %s12 = inlined_call_operand.vmem [shape: f32[16,256], index: 12, kind: output, shape index: {}]
  %s13 = sld [smem:[#allocation0]]
  $region58: #{multistream_decoder_forward.10} parent=0
    _
  %s15 = ssub.s32 1, %s13
  %s16 = scalar_select 0, %s15, %s13
  // Predicated region
  $region2: #{multistream_decoder_forward.10} parent=0 // pred_check
    _
  $region3: #{multistream_decoder_forward.10} parent=0 // pred_check_branch
    %18 = sbr.rel (0) target = $region5
  $region4: #{multistream_decoder_forward.10} parent=0 // pred_region
    _
  $region5: #{multistream_decoder_forward.10} parent=0 // pred_fallthru
    _
  // Predicated region
  $region6: #{multistream_decoder_forward.10} parent=0 // pred_check
    _
  $region7: #{multistream_decoder_forward.10} parent=0 // pred_check_branch
    %20 = sbr.rel (0) target = $region9
  $region8: #{multistream_decoder_forward.10} parent=0 // pred_region
    _
  $region9: #{multistream_decoder_forward.10} parent=0 // pred_fallthru
    _
  // Predicated region
  $region10: #{multistream_decoder_forward.10} parent=0 // pred_check
    _
  $region11: #{multistream_decoder_forward.10} parent=0 // pred_check_branch
    %22 = sbr.rel (0) target = $region13
  $region12: #{multistream_decoder_forward.10} parent=0 // pred_region
    _
  $region13: #{multistream_decoder_forward.10} parent=0 // pred_fallthru
    _
  // Predicated region
  $region14: #{multistream_decoder_forward.10} parent=0 // pred_check
    _
  $region15: #{multistream_decoder_forward.10} parent=0 // pred_check_branch
    %24 = sbr.rel (0) target = $region17
  $region16: #{multistream_decoder_forward.10} parent=0 // pred_region
    _
  $region17: #{multistream_decoder_forward.10} parent=0 // pred_fallthru
    _
  // Predicated region
  $region18: #{multistream_decoder_forward.10} parent=0 // pred_check
    _
  $region19: #{multistream_decoder_forward.10} parent=0 // pred_check_branch
    %26 = sbr.rel (0) target = $region21
  $region20: #{multistream_decoder_forward.10} parent=0 // pred_region
    _
  $region21: #{multistream_decoder_forward.10} parent=0 // pred_fallthru
    _
  // Predicated region
  $region22: #{multistream_decoder_forward.10} parent=0 // pred_check
    _
  $region23: #{multistream_decoder_forward.10} parent=0 // pred_check_branch
    %28 = sbr.rel (0) target = $region25
  $region24: #{multistream_decoder_forward.10} parent=0 // pred_region
    _
  $region25: #{multistream_decoder_forward.10} parent=0 // pred_fallthru
    _
  // Predicated region
  $region26: #{multistream_decoder_forward.10} parent=0 // pred_check
    _
  $region27: #{multistream_decoder_forward.10} parent=0 // pred_check_branch
    %30 = sbr.rel (0) target = $region29
  $region28: #{multistream_decoder_forward.10} parent=0 // pred_region
    _
  $region29: #{multistream_decoder_forward.10} parent=0 // pred_fallthru
    _
  // Predicated region
  $region30: #{multistream_decoder_forward.10} parent=0 // pred_check
    _
  $region31: #{multistream_decoder_forward.10} parent=0 // pred_check_branch
    %32 = sbr.rel (0) target = $region33
  $region32: #{multistream_decoder_forward.10} parent=0 // pred_region
    _
  $region33: #{multistream_decoder_forward.10} parent=0 // pred_fallthru
    _
  // Predicated region
  $region34: #{multistream_decoder_forward.10} parent=0 // pred_check
    _
  $region35: #{multistream_decoder_forward.10} parent=0 // pred_check_branch
    %34 = sbr.rel (0) target = $region37
  $region36: #{multistream_decoder_forward.10} parent=0 // pred_region
    _
  $region37: #{multistream_decoder_forward.10} parent=0 // pred_fallthru
    _
  // Predicated region
  $region38: #{multistream_decoder_forward.10} parent=0 // pred_check
    _
  $region39: #{multistream_decoder_forward.10} parent=0 // pred_check_branch
    %36 = sbr.rel (0) target = $region41
  $region40: #{multistream_decoder_forward.10} parent=0 // pred_region
    _
  $region41: #{multistream_decoder_forward.10} parent=0 // pred_fallthru
    _
  // Predicated region
  $region42: #{multistream_decoder_forward.10} parent=0 // pred_check
    _
  $region43: #{multistream_decoder_forward.10} parent=0 // pred_check_branch
    %38 = sbr.rel (0) target = $region45
  $region44: #{multistream_decoder_forward.10} parent=0 // pred_region
    _
  $region45: #{multistream_decoder_forward.10} parent=0 // pred_fallthru
    _
  // Predicated region
  $region46: #{multistream_decoder_forward.10} parent=0 // pred_check
    _
  $region47: #{multistream_decoder_forward.10} parent=0 // pred_check_branch
    %40 = sbr.rel (0) target = $region49
  $region48: #{multistream_decoder_forward.10} parent=0 // pred_region
    _
  $region49: #{multistream_decoder_forward.10} parent=0 // pred_fallthru
    _
  %v41 = vld [vmem:[%s0] sm:$0xff]
  %v42 = vld [vmem:[%s0 + $0x8] sm:$0xff]
  %v43 = vld [vmem:[%s0 + $0x10] sm:$0xff]
  %v44 = vld [vmem:[%s0 + $0x18] sm:$0xff]
  %v45 = vld [vmem:[%s1] sm:$0xff]
  %v46 = vld [vmem:[%s1 + $0x8] sm:$0xff]
  %v47 = vld [vmem:[%s1 + $0x10] sm:$0xff]
  %v48 = vld [vmem:[%s1 + $0x18] sm:$0xff]
  %v49 = vld [vmem:[%s1 + $0x20] sm:$0xff]
  %v50 = vld [vmem:[%s1 + $0x28] sm:$0xff]
  %v51 = vld [vmem:[%s1 + $0x30] sm:$0xff]
  %v52 = vld [vmem:[%s1 + $0x38] sm:$0xff]
  %v53 = vld [vmem:[%s2] sm:$0xff]
  %v54 = vld [vmem:[%s2 + $0x8] sm:$0xff]
  %v55 = vld [vmem:[%s2 + $0x10] sm:$0xff]
  %v56 = vld [vmem:[%s2 + $0x18] sm:$0xff]
  %v57 = vld [vmem:[%s2 + $0x20] sm:$0xff]
  %v58 = vld [vmem:[%s2 + $0x28] sm:$0xff]
  %v59 = vld [vmem:[%s2 + $0x30] sm:$0xff]
  %v60 = vld [vmem:[%s2 + $0x38] sm:$0xff]
  %v61 = vld [vmem:[%s2 + $0x40] sm:$0xff]
  %v62 = vld [vmem:[%s2 + $0x48] sm:$0xff]
  %v63 = vld [vmem:[%s2 + $0x50] sm:$0xff]
  %v64 = vld [vmem:[%s2 + $0x58] sm:$0xff]
  %v65 = vld [vmem:[%s2 + $0x60] sm:$0xff]
  %v66 = vld [vmem:[%s2 + $0x68] sm:$0xff]
  %v67 = vld [vmem:[%s2 + $0x70] sm:$0xff]
  %v68 = vld [vmem:[%s2 + $0x78] sm:$0xff]
  %v69 = vld [vmem:[%s2 + $0x80] sm:$0xff]
  %v70 = vld [vmem:[%s2 + $0x88] sm:$0xff]
  %v71 = vld [vmem:[%s2 + $0x90] sm:$0xff]
  %v72 = vld [vmem:[%s2 + $0x98] sm:$0xff]
  %v73 = vld [vmem:[%s2 + $0xa0] sm:$0xff]
  %v74 = vld [vmem:[%s2 + $0xa8] sm:$0xff]
  %v75 = vld [vmem:[%s2 + $0xb0] sm:$0xff]
  %v76 = vld [vmem:[%s2 + $0xb8] sm:$0xff]
  %v77 = vld [vmem:[%s2 + $0xc0] sm:$0xff]
  %v78 = vld [vmem:[%s2 + $0xc8] sm:$0xff]
  %v79 = vld [vmem:[%s2 + $0xd0] sm:$0xff]
  %v80 = vld [vmem:[%s2 + $0xd8] sm:$0xff]
  %v81 = vld [vmem:[%s2 + $0xe0] sm:$0xff]
  %v82 = vld [vmem:[%s2 + $0xe8] sm:$0xff]
  %v83 = vld [vmem:[%s2 + $0xf0] sm:$0xff]
  %v84 = vld [vmem:[%s2 + $0xf8] sm:$0xff]
  %v85 = vld [vmem:[%s3] sm:$0x1]
  %v87 = vlaneseq
  %v88 = vshrl.u32 %v87, 7
  %v89 = vsub.s32 0, %v88
  %v90 = vrot.slane %v85, %v89
  %92 = vmatprep.subr.mxu0 0.0
  %93 = vmatpush1.msra.mxu0 %v53
  %94 = vmatprep.subr.mxu0 0.0
  %95 = vmatpush1.msra.mxu0 %v54
  %96 = vmatprep.subr.mxu0 0.0
  %97 = vmatpush1.msra.mxu0 %v55
  %98 = vmatprep.subr.mxu0 0.0
  %99 = vmatpush1.msra.mxu0 %v56
  %100 = vmatprep.subr.mxu0 0.0
  %101 = vmatpush1.msra.mxu0 %v57
  %102 = vmatprep.subr.mxu0 0.0
  %103 = vmatpush1.msra.mxu0 %v58
  %104 = vmatprep.subr.mxu0 0.0
  %105 = vmatpush1.msra.mxu0 %v59
  %106 = vmatprep.subr.mxu0 0.0
  %107 = vmatpush1.msra.mxu0 %v60
  %108 = vmatprep.subr.mxu0 0.0
  %109 = vmatpush1.msra.mxu0 %v61
  %110 = vmatprep.subr.mxu0 0.0
  %111 = vmatpush1.msra.mxu0 %v62
  %112 = vmatprep.subr.mxu0 0.0
  %113 = vmatpush1.msra.mxu0 %v63
  %114 = vmatprep.subr.mxu0 0.0
  %115 = vmatpush1.msra.mxu0 %v64
  %116 = vmatprep.subr.mxu0 0.0
  %117 = vmatpush1.msra.mxu0 %v65
  %118 = vmatprep.subr.mxu0 0.0
  %119 = vmatpush1.msra.mxu0 %v66
  %120 = vmatprep.subr.mxu0 0.0
  %121 = vmatpush1.msra.mxu0 %v67
  %122 = vmatprep.subr.mxu0 0.0
  %123 = vmatpush1.msra.mxu0 %v68
  %124 = vmatprep.subr.mxu0 0.0
  %125 = vmatpush1.msra.mxu0 %v69
  %126 = vmatprep.subr.mxu0 0.0
  %127 = vmatpush1.msra.mxu0 %v70
  %128 = vmatprep.subr.mxu0 0.0
  %129 = vmatpush1.msra.mxu0 %v71
  %130 = vmatprep.subr.mxu0 0.0
  %131 = vmatpush1.msra.mxu0 %v72
  %132 = vmatprep.subr.mxu0 0.0
  %133 = vmatpush1.msra.mxu0 %v73
  %134 = vmatprep.subr.mxu0 0.0
  %135 = vmatpush1.msra.mxu0 %v74
  %136 = vmatprep.subr.mxu0 0.0
  %137 = vmatpush1.msra.mxu0 %v75
  %138 = vmatprep.subr.mxu0 0.0
  %139 = vmatpush1.msra.mxu0 %v76
  %140 = vmatprep.subr.mxu0 0.0
  %141 = vmatpush1.msra.mxu0 %v77
  %142 = vmatprep.subr.mxu0 0.0
  %143 = vmatpush1.msra.mxu0 %v78
  %144 = vmatprep.subr.mxu0 0.0
  %145 = vmatpush1.msra.mxu0 %v79
  %146 = vmatprep.subr.mxu0 0.0
  %147 = vmatpush1.msra.mxu0 %v80
  %148 = vmatprep.subr.mxu0 0.0
  %149 = vmatpush1.msra.mxu0 %v81
  %150 = vmatprep.subr.mxu0 0.0
  %151 = vmatpush1.msra.mxu0 %v82
  %152 = vmatprep.subr.mxu0 0.0
  %153 = vmatpush1.msra.mxu0 %v83
  %154 = vmatprep.subr.mxu0 0.0
  %155 = vmatpush1.msra.mxu0 %v84
  %156 = vmatprep.mubr.f32.mxu0 %v42
  %157 = vmatmul.mubr.f32.gmra.mrb[0].mxu0 %v41
  %v158 = vpop.f32.mrb[0].mxu0
  %v159 = vadd.f32 %v90, %v158
  %v160 = vpop.f32.mrb[0].mxu0
  %161 = vmatprep.mubr.f32.mxu0 %v44
  %162 = vmatmul.mubr.f32.gmra.mrb[0].mxu0 %v43
  %v163 = vpop.f32.mrb[0].mxu0
  %v164 = vadd.f32 %v90, %v163
  %v165 = vpop.f32.mrb[0].mxu0
  %166 = vdwg.mxu0
  %v167 = vld [vmem:[%s4] sm:$0xff]
  %v168 = vld [vmem:[%s4 + $0x8] sm:$0xff]
  %v169 = vld [vmem:[%s4 + $0x10] sm:$0xff]
  %v170 = vld [vmem:[%s4 + $0x18] sm:$0xff]
  %v171 = vld [vmem:[%s4 + $0x20] sm:$0xff]
  %v172 = vld [vmem:[%s4 + $0x28] sm:$0xff]
  %v173 = vld [vmem:[%s4 + $0x30] sm:$0xff]
  %v174 = vld [vmem:[%s4 + $0x38] sm:$0xff]
  %v175 = vld [vmem:[%s4 + $0x40] sm:$0xff]
  %v176 = vld [vmem:[%s4 + $0x48] sm:$0xff]
  %v177 = vld [vmem:[%s4 + $0x50] sm:$0xff]
  %v178 = vld [vmem:[%s4 + $0x58] sm:$0xff]
  %v179 = vld [vmem:[%s4 + $0x60] sm:$0xff]
  %v180 = vld [vmem:[%s4 + $0x68] sm:$0xff]
  %v181 = vld [vmem:[%s4 + $0x70] sm:$0xff]
  %v182 = vld [vmem:[%s4 + $0x78] sm:$0xff]
  %v183 = vld [vmem:[%s4 + $0x80] sm:$0xff]
  %v184 = vld [vmem:[%s4 + $0x88] sm:$0xff]
  %v185 = vld [vmem:[%s4 + $0x90] sm:$0xff]
  %v186 = vld [vmem:[%s4 + $0x98] sm:$0xff]
  %v187 = vld [vmem:[%s4 + $0xa0] sm:$0xff]
  %v188 = vld [vmem:[%s4 + $0xa8] sm:$0xff]
  %v189 = vld [vmem:[%s4 + $0xb0] sm:$0xff]
  %v190 = vld [vmem:[%s4 + $0xb8] sm:$0xff]
  %v191 = vld [vmem:[%s4 + $0xc0] sm:$0xff]
  %v192 = vld [vmem:[%s4 + $0xc8] sm:$0xff]
  %v193 = vld [vmem:[%s4 + $0xd0] sm:$0xff]
  %v194 = vld [vmem:[%s4 + $0xd8] sm:$0xff]
  %v195 = vld [vmem:[%s4 + $0xe0] sm:$0xff]
  %v196 = vld [vmem:[%s4 + $0xe8] sm:$0xff]
  %v197 = vld [vmem:[%s4 + $0xf0] sm:$0xff]
  %v198 = vld [vmem:[%s4 + $0xf8] sm:$0xff]
  %v199 = vld [vmem:[%s5] sm:$0x1]
  %v201 = vlaneseq
  %v202 = vshrl.u32 %v201, 7
  %v203 = vsub.s32 0, %v202
  %v204 = vrot.slane %v199, %v203
  %206 = vmatprep.subr.mxu0 0.0
  %207 = vmatpush1.msra.mxu0 %v167
  %208 = vmatprep.subr.mxu0 0.0
  %209 = vmatpush1.msra.mxu0 %v168
  %210 = vmatprep.subr.mxu0 0.0
  %211 = vmatpush1.msra.mxu0 %v169
  %212 = vmatprep.subr.mxu0 0.0
  %213 = vmatpush1.msra.mxu0 %v170
  %214 = vmatprep.subr.mxu0 0.0
  %215 = vmatpush1.msra.mxu0 %v171
  %216 = vmatprep.subr.mxu0 0.0
  %217 = vmatpush1.msra.mxu0 %v172
  %218 = vmatprep.subr.mxu0 0.0
  %219 = vmatpush1.msra.mxu0 %v173
  %220 = vmatprep.subr.mxu0 0.0
  %221 = vmatpush1.msra.mxu0 %v174
  %222 = vmatprep.subr.mxu0 0.0
  %223 = vmatpush1.msra.mxu0 %v175
  %224 = vmatprep.subr.mxu0 0.0
  %225 = vmatpush1.msra.mxu0 %v176
  %226 = vmatprep.subr.mxu0 0.0
  %227 = vmatpush1.msra.mxu0 %v177
  %228 = vmatprep.subr.mxu0 0.0
  %229 = vmatpush1.msra.mxu0 %v178
  %230 = vmatprep.subr.mxu0 0.0
  %231 = vmatpush1.msra.mxu0 %v179
  %232 = vmatprep.subr.mxu0 0.0
  %233 = vmatpush1.msra.mxu0 %v180
  %234 = vmatprep.subr.mxu0 0.0
  %235 = vmatpush1.msra.mxu0 %v181
  %236 = vmatprep.subr.mxu0 0.0
  %237 = vmatpush1.msra.mxu0 %v182
  %238 = vmatprep.subr.mxu0 0.0
  %239 = vmatpush1.msra.mxu0 %v183
  %240 = vmatprep.subr.mxu0 0.0
  %241 = vmatpush1.msra.mxu0 %v184
  %242 = vmatprep.subr.mxu0 0.0
  %243 = vmatpush1.msra.mxu0 %v185
  %244 = vmatprep.subr.mxu0 0.0
  %245 = vmatpush1.msra.mxu0 %v186
  %246 = vmatprep.subr.mxu0 0.0
  %247 = vmatpush1.msra.mxu0 %v187
  %248 = vmatprep.subr.mxu0 0.0
  %249 = vmatpush1.msra.mxu0 %v188
  %250 = vmatprep.subr.mxu0 0.0
  %251 = vmatpush1.msra.mxu0 %v189
  %252 = vmatprep.subr.mxu0 0.0
  %253 = vmatpush1.msra.mxu0 %v190
  %254 = vmatprep.subr.mxu0 0.0
  %255 = vmatpush1.msra.mxu0 %v191
  %256 = vmatprep.subr.mxu0 0.0
  %257 = vmatpush1.msra.mxu0 %v192
  %258 = vmatprep.subr.mxu0 0.0
  %259 = vmatpush1.msra.mxu0 %v193
  %260 = vmatprep.subr.mxu0 0.0
  %261 = vmatpush1.msra.mxu0 %v194
  %262 = vmatprep.subr.mxu0 0.0
  %263 = vmatpush1.msra.mxu0 %v195
  %264 = vmatprep.subr.mxu0 0.0
  %265 = vmatpush1.msra.mxu0 %v196
  %266 = vmatprep.subr.mxu0 0.0
  %267 = vmatpush1.msra.mxu0 %v197
  %268 = vmatprep.subr.mxu0 0.0
  %269 = vmatpush1.msra.mxu0 %v198
  %270 = vmatprep.mubr.f32.mxu0 %v46
  %271 = vmatmul.mubr.f32.gmra.mrb[0].mxu0 %v45
  %v272 = vpop.f32.mrb[0].mxu0
  %v273 = vadd.f32 %v204, %v272
  %v274 = vpop.f32.mrb[0].mxu0
  %275 = vmatprep.mubr.f32.mxu0 %v48
  %276 = vmatmul.mubr.f32.gmra.mrb[0].mxu0 %v47
  %v277 = vpop.f32.mrb[0].mxu0
  %v278 = vadd.f32 %v204, %v277
  %v279 = vpop.f32.mrb[0].mxu0
  %280 = vmatprep.mubr.f32.mxu0 %v50
  %281 = vmatmul.mubr.f32.gmra.mrb[0].mxu0 %v49
  %v282 = vpop.f32.mrb[0].mxu0
  %v283 = vadd.f32 %v204, %v282
  %v284 = vpop.f32.mrb[0].mxu0
  %285 = vmatprep.mubr.f32.mxu0 %v52
  %286 = vmatmul.mubr.f32.gmra.mrb[0].mxu0 %v51
  %v287 = vpop.f32.mrb[0].mxu0
  %v288 = vadd.f32 %v204, %v287
  %v289 = vpop.f32.mrb[0].mxu0
  %290 = vdwg.mxu0
  %v291 = vld [vmem:[%s6] sm:$0xff]
  %v292 = vld [vmem:[%s6 + $0x8] sm:$0xff]
  %v293 = vld [vmem:[%s6 + $0x10] sm:$0xff]
  %v294 = vld [vmem:[%s6 + $0x18] sm:$0xff]
  %v295 = vld [vmem:[%s6 + $0x20] sm:$0xff]
  %v296 = vld [vmem:[%s6 + $0x28] sm:$0xff]
  %v297 = vld [vmem:[%s6 + $0x30] sm:$0xff]
  %v298 = vld [vmem:[%s6 + $0x38] sm:$0xff]
  %v299 = vld [vmem:[%s6 + $0x40] sm:$0xff]
  %v300 = vld [vmem:[%s6 + $0x48] sm:$0xff]
  %v301 = vld [vmem:[%s6 + $0x50] sm:$0xff]
  %v302 = vld [vmem:[%s6 + $0x58] sm:$0xff]
  %v303 = vld [vmem:[%s6 + $0x60] sm:$0xff]
  %v304 = vld [vmem:[%s6 + $0x68] sm:$0xff]
  %v305 = vld [vmem:[%s6 + $0x70] sm:$0xff]
  %v306 = vld [vmem:[%s6 + $0x78] sm:$0xff]
  %v307 = vld [vmem:[%s6 + $0x80] sm:$0xff]
  %v308 = vld [vmem:[%s6 + $0x88] sm:$0xff]
  %v309 = vld [vmem:[%s6 + $0x90] sm:$0xff]
  %v310 = vld [vmem:[%s6 + $0x98] sm:$0xff]
  %v311 = vld [vmem:[%s6 + $0xa0] sm:$0xff]
  %v312 = vld [vmem:[%s6 + $0xa8] sm:$0xff]
  %v313 = vld [vmem:[%s6 + $0xb0] sm:$0xff]
  %v314 = vld [vmem:[%s6 + $0xb8] sm:$0xff]
  %v315 = vld [vmem:[%s6 + $0xc0] sm:$0xff]
  %v316 = vld [vmem:[%s6 + $0xc8] sm:$0xff]
  %v317 = vld [vmem:[%s6 + $0xd0] sm:$0xff]
  %v318 = vld [vmem:[%s6 + $0xd8] sm:$0xff]
  %v319 = vld [vmem:[%s6 + $0xe0] sm:$0xff]
  %v320 = vld [vmem:[%s6 + $0xe8] sm:$0xff]
  %v321 = vld [vmem:[%s6 + $0xf0] sm:$0xff]
  %v322 = vld [vmem:[%s6 + $0xf8] sm:$0xff]
  %v323 = vld [vmem:[%s7] sm:$0x1]
  %v325 = vlaneseq
  %v326 = vshrl.u32 %v325, 7
  %v327 = vsub.s32 0, %v326
  %v328 = vrot.slane %v323, %v327
  %330 = vmatprep.subr.mxu0 0.0
  %331 = vmatpush1.msra.mxu0 %v291
  %332 = vmatprep.subr.mxu0 0.0
  %333 = vmatpush1.msra.mxu0 %v292
  %334 = vmatprep.subr.mxu0 0.0
  %335 = vmatpush1.msra.mxu0 %v293
  %336 = vmatprep.subr.mxu0 0.0
  %337 = vmatpush1.msra.mxu0 %v294
  %338 = vmatprep.subr.mxu0 0.0
  %339 = vmatpush1.msra.mxu0 %v295
  %340 = vmatprep.subr.mxu0 0.0
  %341 = vmatpush1.msra.mxu0 %v296
  %342 = vmatprep.subr.mxu0 0.0
  %343 = vmatpush1.msra.mxu0 %v297
  %344 = vmatprep.subr.mxu0 0.0
  %345 = vmatpush1.msra.mxu0 %v298
  %346 = vmatprep.subr.mxu0 0.0
  %347 = vmatpush1.msra.mxu0 %v299
  %348 = vmatprep.subr.mxu0 0.0
  %349 = vmatpush1.msra.mxu0 %v300
  %350 = vmatprep.subr.mxu0 0.0
  %351 = vmatpush1.msra.mxu0 %v301
  %352 = vmatprep.subr.mxu0 0.0
  %353 = vmatpush1.msra.mxu0 %v302
  %354 = vmatprep.subr.mxu0 0.0
  %355 = vmatpush1.msra.mxu0 %v303
  %356 = vmatprep.subr.mxu0 0.0
  %357 = vmatpush1.msra.mxu0 %v304
  %358 = vmatprep.subr.mxu0 0.0
  %359 = vmatpush1.msra.mxu0 %v305
  %360 = vmatprep.subr.mxu0 0.0
  %361 = vmatpush1.msra.mxu0 %v306
  %362 = vmatprep.subr.mxu0 0.0
  %363 = vmatpush1.msra.mxu0 %v307
  %364 = vmatprep.subr.mxu0 0.0
  %365 = vmatpush1.msra.mxu0 %v308
  %366 = vmatprep.subr.mxu0 0.0
  %367 = vmatpush1.msra.mxu0 %v309
  %368 = vmatprep.subr.mxu0 0.0
  %369 = vmatpush1.msra.mxu0 %v310
  %370 = vmatprep.subr.mxu0 0.0
  %371 = vmatpush1.msra.mxu0 %v311
  %372 = vmatprep.subr.mxu0 0.0
  %373 = vmatpush1.msra.mxu0 %v312
  %374 = vmatprep.subr.mxu0 0.0
  %375 = vmatpush1.msra.mxu0 %v313
  %376 = vmatprep.subr.mxu0 0.0
  %377 = vmatpush1.msra.mxu0 %v314
  %378 = vmatprep.subr.mxu0 0.0
  %379 = vmatpush1.msra.mxu0 %v315
  %380 = vmatprep.subr.mxu0 0.0
  %381 = vmatpush1.msra.mxu0 %v316
  %382 = vmatprep.subr.mxu0 0.0
  %383 = vmatpush1.msra.mxu0 %v317
  %384 = vmatprep.subr.mxu0 0.0
  %385 = vmatpush1.msra.mxu0 %v318
  %386 = vmatprep.subr.mxu0 0.0
  %387 = vmatpush1.msra.mxu0 %v319
  %388 = vmatprep.subr.mxu0 0.0
  %389 = vmatpush1.msra.mxu0 %v320
  %390 = vmatprep.subr.mxu0 0.0
  %391 = vmatpush1.msra.mxu0 %v321
  %392 = vmatprep.subr.mxu0 0.0
  %393 = vmatpush1.msra.mxu0 %v322
  %394 = vmatprep.mubr.f32.mxu0 %v46
  %395 = vmatmul.mubr.f32.gmra.mrb[0].mxu0 %v45
  %v396 = vpop.f32.mrb[0].mxu0
  %v397 = vadd.f32 %v328, %v396
  %v398 = vpop.f32.mrb[0].mxu0
  %399 = vmatprep.mubr.f32.mxu0 %v48
  %400 = vmatmul.mubr.f32.gmra.mrb[0].mxu0 %v47
  %v401 = vpop.f32.mrb[0].mxu0
  %v402 = vadd.f32 %v328, %v401
  %v403 = vpop.f32.mrb[0].mxu0
  %404 = vmatprep.mubr.f32.mxu0 %v50
  %405 = vmatmul.mubr.f32.gmra.mrb[0].mxu0 %v49
  %v406 = vpop.f32.mrb[0].mxu0
  %v407 = vadd.f32 %v328, %v406
  %v408 = vpop.f32.mrb[0].mxu0
  %409 = vmatprep.mubr.f32.mxu0 %v52
  %410 = vmatmul.mubr.f32.gmra.mrb[0].mxu0 %v51
  %v411 = vpop.f32.mrb[0].mxu0
  %v412 = vadd.f32 %v328, %v411
  %v413 = vpop.f32.mrb[0].mxu0
  %414 = vdwg.mxu0
  %vm415 = vcmask 523264
  %v417 = vsel %vm415, %v159, 0
  %v420 = vsel %vm415, %v273, 0
  %v423 = vsel %vm415, %v278, 0
  %425 = vmatprep.subr.mxu0 0.0
  %426 = vmatpush1.xpose.msra.mxu0 %v420
  %427 = vmatprep.subr.mxu0 0.0
  %428 = vmatpush1.xpose.msra.mxu0 %v423
  %429 = vmatprep.subr.mxu0 0.0
  %430 = vmatpush1.xpose.msra.mxu0 0.0
  %431 = vmatprep.subr.mxu0 0.0
  %432 = vmatpush1.xpose.msra.mxu0 0.0
  %433 = vmatprep.subr.mxu0 0.0
  %434 = vmatpush1.xpose.msra.mxu0 0.0
  %435 = vmatprep.subr.mxu0 0.0
  %436 = vmatpush1.xpose.msra.mxu0 0.0
  %437 = vmatprep.subr.mxu0 0.0
  %438 = vmatpush1.xpose.msra.mxu0 0.0
  %439 = vmatprep.subr.mxu0 0.0
  %440 = vmatpush1.xpose.msra.mxu0 0.0
  %441 = vmatprep.subr.mxu0 0.0
  %442 = vmatpush1.xpose.msra.mxu0 0.0
  %443 = vmatprep.subr.mxu0 0.0
  %444 = vmatpush1.xpose.msra.mxu0 0.0
  %445 = vmatprep.subr.mxu0 0.0
  %446 = vmatpush1.xpose.msra.mxu0 0.0
  %447 = vmatprep.subr.mxu0 0.0
  %448 = vmatpush1.xpose.msra.mxu0 0.0
  %449 = vmatprep.subr.mxu0 0.0
  %450 = vmatpush1.xpose.msra.mxu0 0.0
  %451 = vmatprep.subr.mxu0 0.0
  %452 = vmatpush1.xpose.msra.mxu0 0.0
  %453 = vmatprep.subr.mxu0 0.0
  %454 = vmatpush1.xpose.msra.mxu0 0.0
  %455 = vmatprep.subr.mxu0 0.0
  %456 = vmatpush1.xpose.msra.mxu0 0.0
  %457 = vmatprep.subr.mxu0 0.0
  %458 = vmatpush1.xpose.msra.mxu0 0.0
  %459 = vmatprep.subr.mxu0 0.0
  %460 = vmatpush1.xpose.msra.mxu0 0.0
  %461 = vmatprep.subr.mxu0 0.0
  %462 = vmatpush1.xpose.msra.mxu0 0.0
  %463 = vmatprep.subr.mxu0 0.0
  %464 = vmatpush1.xpose.msra.mxu0 0.0
  %465 = vmatprep.subr.mxu0 0.0
  %466 = vmatpush1.xpose.msra.mxu0 0.0
  %467 = vmatprep.subr.mxu0 0.0
  %468 = vmatpush1.xpose.msra.mxu0 0.0
  %469 = vmatprep.subr.mxu0 0.0
  %470 = vmatpush1.xpose.msra.mxu0 0.0
  %471 = vmatprep.subr.mxu0 0.0
  %472 = vmatpush1.xpose.msra.mxu0 0.0
  %473 = vmatprep.subr.mxu0 0.0
  %474 = vmatpush1.xpose.msra.mxu0 0.0
  %475 = vmatprep.subr.mxu0 0.0
  %476 = vmatpush1.xpose.msra.mxu0 0.0
  %477 = vmatprep.subr.mxu0 0.0
  %478 = vmatpush1.xpose.msra.mxu0 0.0
  %479 = vmatprep.subr.mxu0 0.0
  %480 = vmatpush1.xpose.msra.mxu0 0.0
  %481 = vmatprep.subr.mxu0 0.0
  %482 = vmatpush1.xpose.msra.mxu0 0.0
  %483 = vmatprep.subr.mxu0 0.0
  %484 = vmatpush1.xpose.msra.mxu0 0.0
  %485 = vmatprep.subr.mxu0 0.0
  %486 = vmatpush1.xpose.msra.mxu0 0.0
  %487 = vmatprep.subr.mxu0 0.0
  %488 = vmatpush1.xpose.msra.mxu0 0.0
  %489 = vmatprep.mubr.f32.mxu0 0.0
  %490 = vmatmul.mubr.f32.gmra.mrb[0].mxu0 %v417
  %v491 = vpop.f32.mrb[0].mxu0
  %v492 = vadd.f32 0.0, %v491
  %v493 = vpop.f32.mrb[0].mxu0
  %494 = vdwg.mxu0
  %v496 = vsel %vm415, %v164, 0
  %v499 = vsel %vm415, %v283, 0
  %v502 = vsel %vm415, %v288, 0
  %504 = vmatprep.subr.mxu0 0.0
  %505 = vmatpush1.xpose.msra.mxu0 %v499
  %506 = vmatprep.subr.mxu0 0.0
  %507 = vmatpush1.xpose.msra.mxu0 %v502
  %508 = vmatprep.subr.mxu0 0.0
  %509 = vmatpush1.xpose.msra.mxu0 0.0
  %510 = vmatprep.subr.mxu0 0.0
  %511 = vmatpush1.xpose.msra.mxu0 0.0
  %512 = vmatprep.subr.mxu0 0.0
  %513 = vmatpush1.xpose.msra.mxu0 0.0
  %514 = vmatprep.subr.mxu0 0.0
  %515 = vmatpush1.xpose.msra.mxu0 0.0
  %516 = vmatprep.subr.mxu0 0.0
  %517 = vmatpush1.xpose.msra.mxu0 0.0
  %518 = vmatprep.subr.mxu0 0.0
  %519 = vmatpush1.xpose.msra.mxu0 0.0
  %520 = vmatprep.subr.mxu0 0.0
  %521 = vmatpush1.xpose.msra.mxu0 0.0
  %522 = vmatprep.subr.mxu0 0.0
  %523 = vmatpush1.xpose.msra.mxu0 0.0
  %524 = vmatprep.subr.mxu0 0.0
  %525 = vmatpush1.xpose.msra.mxu0 0.0
  %526 = vmatprep.subr.mxu0 0.0
  %527 = vmatpush1.xpose.msra.mxu0 0.0
  %528 = vmatprep.subr.mxu0 0.0
  %529 = vmatpush1.xpose.msra.mxu0 0.0
  %530 = vmatprep.subr.mxu0 0.0
  %531 = vmatpush1.xpose.msra.mxu0 0.0
  %532 = vmatprep.subr.mxu0 0.0
  %533 = vmatpush1.xpose.msra.mxu0 0.0
  %534 = vmatprep.subr.mxu0 0.0
  %535 = vmatpush1.xpose.msra.mxu0 0.0
  %536 = vmatprep.subr.mxu0 0.0
  %537 = vmatpush1.xpose.msra.mxu0 0.0
  %538 = vmatprep.subr.mxu0 0.0
  %539 = vmatpush1.xpose.msra.mxu0 0.0
  %540 = vmatprep.subr.mxu0 0.0
  %541 = vmatpush1.xpose.msra.mxu0 0.0
  %542 = vmatprep.subr.mxu0 0.0
  %543 = vmatpush1.xpose.msra.mxu0 0.0
  %544 = vmatprep.subr.mxu0 0.0
  %545 = vmatpush1.xpose.msra.mxu0 0.0
  %546 = vmatprep.subr.mxu0 0.0
  %547 = vmatpush1.xpose.msra.mxu0 0.0
  %548 = vmatprep.subr.mxu0 0.0
  %549 = vmatpush1.xpose.msra.mxu0 0.0
  %550 = vmatprep.subr.mxu0 0.0
  %551 = vmatpush1.xpose.msra.mxu0 0.0
  %552 = vmatprep.subr.mxu0 0.0
  %553 = vmatpush1.xpose.msra.mxu0 0.0
  %554 = vmatprep.subr.mxu0 0.0
  %555 = vmatpush1.xpose.msra.mxu0 0.0
  %556 = vmatprep.subr.mxu0 0.0
  %557 = vmatpush1.xpose.msra.mxu0 0.0
  %558 = vmatprep.subr.mxu0 0.0
  %559 = vmatpush1.xpose.msra.mxu0 0.0
  %560 = vmatprep.subr.mxu0 0.0
  %561 = vmatpush1.xpose.msra.mxu0 0.0
  %562 = vmatprep.subr.mxu0 0.0
  %563 = vmatpush1.xpose.msra.mxu0 0.0
  %564 = vmatprep.subr.mxu0 0.0
  %565 = vmatpush1.xpose.msra.mxu0 0.0
  %566 = vmatprep.subr.mxu0 0.0
  %567 = vmatpush1.xpose.msra.mxu0 0.0
  %568 = vmatprep.mubr.f32.mxu0 0.0
  %569 = vmatmul.mubr.f32.gmra.mrb[0].mxu0 %v496
  %v570 = vpop.f32.mrb[0].mxu0
  %v571 = vadd.f32 0.0, %v570
  %v572 = vpop.f32.mrb[0].mxu0
  %573 = vdwg.mxu0
  %v574 = vmul.f32 %v492, 0.125
  %v575 = vmul.f32 %v571, 0.125
  %vm576 = vcmask 130048
  %v577 = vsel %vm576, %v574, -inf
  %578 = vmax.xlane.f32.xlu0 %v577
  %v579 = vpop.xlane.xlu0 %578
  %v580 = vsel %vm576, %v575, -inf
  %581 = vmax.xlane.f32.xlu0 %v580
  %v582 = vpop.xlane.xlu0 %581
  %v583 = vsub.f32 %v574, %v579
  %v584 = vsub.f32 %v575, %v582
  %v585 = vmul.f32 %v583, 1.442695
  %v586 = vpow.pop %v585
  %v587 = vmul.f32 %v584, 1.442695
  %v588 = vpow.pop %v587
  %v589 = vsel %vm576, %v586, 0.0
  %590 = vadd.xlane.f32.xlu0 %v589
  %v591 = vpop.xlane.xlu0 %590
  %v592 = vsel %vm576, %v588, 0.0
  %593 = vadd.xlane.f32.xlu0 %v592
  %v594 = vpop.xlane.xlu0 %593
  %v595 = vrcp.pop %v591
  %v596 = vrcp.pop %v594
  %v597 = vmul.f32 %v586, %v595
  %v598 = vmul.f32 %v588, %v596
  %v600 = vsel %vm576, %v597, 0
  %602 = vmatprep.subr.mxu0 0.0
  %603 = vmatpush1.msra.mxu0 %v397
  %604 = vmatprep.subr.mxu0 0.0
  %605 = vmatpush1.msra.mxu0 %v402
  %606 = vmatprep.subr.mxu0 0.0
  %607 = vmatpush1.msra.mxu0 0.0
  %608 = vmatprep.subr.mxu0 0.0
  %609 = vmatpush1.msra.mxu0 0.0
  %610 = vmatprep.subr.mxu0 0.0
  %611 = vmatpush1.msra.mxu0 0.0
  %612 = vmatprep.subr.mxu0 0.0
  %613 = vmatpush1.msra.mxu0 0.0
  %614 = vmatprep.subr.mxu0 0.0
  %615 = vmatpush1.msra.mxu0 0.0
  %616 = vmatprep.subr.mxu0 0.0
  %617 = vmatpush1.msra.mxu0 0.0
  %618 = vmatprep.subr.mxu0 0.0
  %619 = vmatpush1.msra.mxu0 0.0
  %620 = vmatprep.subr.mxu0 0.0
  %621 = vmatpush1.msra.mxu0 0.0
  %622 = vmatprep.subr.mxu0 0.0
  %623 = vmatpush1.msra.mxu0 0.0
  %624 = vmatprep.subr.mxu0 0.0
  %625 = vmatpush1.msra.mxu0 0.0
  %626 = vmatprep.subr.mxu0 0.0
  %627 = vmatpush1.msra.mxu0 0.0
  %628 = vmatprep.subr.mxu0 0.0
  %629 = vmatpush1.msra.mxu0 0.0
  %630 = vmatprep.subr.mxu0 0.0
  %631 = vmatpush1.msra.mxu0 0.0
  %632 = vmatprep.subr.mxu0 0.0
  %633 = vmatpush1.msra.mxu0 0.0
  %634 = vmatprep.subr.mxu0 0.0
  %635 = vmatpush1.msra.mxu0 0.0
  %636 = vmatprep.subr.mxu0 0.0
  %637 = vmatpush1.msra.mxu0 0.0
  %638 = vmatprep.subr.mxu0 0.0
  %639 = vmatpush1.msra.mxu0 0.0
  %640 = vmatprep.subr.mxu0 0.0
  %641 = vmatpush1.msra.mxu0 0.0
  %642 = vmatprep.subr.mxu0 0.0
  %643 = vmatpush1.msra.mxu0 0.0
  %644 = vmatprep.subr.mxu0 0.0
  %645 = vmatpush1.msra.mxu0 0.0
  %646 = vmatprep.subr.mxu0 0.0
  %647 = vmatpush1.msra.mxu0 0.0
  %648 = vmatprep.subr.mxu0 0.0
  %649 = vmatpush1.msra.mxu0 0.0
  %650 = vmatprep.subr.mxu0 0.0
  %651 = vmatpush1.msra.mxu0 0.0
  %652 = vmatprep.subr.mxu0 0.0
  %653 = vmatpush1.msra.mxu0 0.0
  %654 = vmatprep.subr.mxu0 0.0
  %655 = vmatpush1.msra.mxu0 0.0
  %656 = vmatprep.subr.mxu0 0.0
  %657 = vmatpush1.msra.mxu0 0.0
  %658 = vmatprep.subr.mxu0 0.0
  %659 = vmatpush1.msra.mxu0 0.0
  %660 = vmatprep.subr.mxu0 0.0
  %661 = vmatpush1.msra.mxu0 0.0
  %662 = vmatprep.subr.mxu0 0.0
  %663 = vmatpush1.msra.mxu0 0.0
  %664 = vmatprep.subr.mxu0 0.0
  %665 = vmatpush1.msra.mxu0 0.0
  %666 = vmatprep.mubr.f32.mxu0 0.0
  %667 = vmatmul.mubr.f32.gmra.mrb[0].mxu0 %v600
  %v668 = vpop.f32.mrb[0].mxu0
  %v669 = vadd.f32 0.0, %v668
  %v670 = vpop.f32.mrb[0].mxu0
  %671 = vdwg.mxu0
  %v673 = vsel %vm576, %v598, 0
  %675 = vmatprep.subr.mxu0 0.0
  %676 = vmatpush1.msra.mxu0 %v407
  %677 = vmatprep.subr.mxu0 0.0
  %678 = vmatpush1.msra.mxu0 %v412
  %679 = vmatprep.subr.mxu0 0.0
  %680 = vmatpush1.msra.mxu0 0.0
  %681 = vmatprep.subr.mxu0 0.0
  %682 = vmatpush1.msra.mxu0 0.0
  %683 = vmatprep.subr.mxu0 0.0
  %684 = vmatpush1.msra.mxu0 0.0
  %685 = vmatprep.subr.mxu0 0.0
  %686 = vmatpush1.msra.mxu0 0.0
  %687 = vmatprep.subr.mxu0 0.0
  %688 = vmatpush1.msra.mxu0 0.0
  %689 = vmatprep.subr.mxu0 0.0
  %690 = vmatpush1.msra.mxu0 0.0
  %691 = vmatprep.subr.mxu0 0.0
  %692 = vmatpush1.msra.mxu0 0.0
  %693 = vmatprep.subr.mxu0 0.0
  %694 = vmatpush1.msra.mxu0 0.0
  %695 = vmatprep.subr.mxu0 0.0
  %696 = vmatpush1.msra.mxu0 0.0
  %697 = vmatprep.subr.mxu0 0.0
  %698 = vmatpush1.msra.mxu0 0.0
  %699 = vmatprep.subr.mxu0 0.0
  %700 = vmatpush1.msra.mxu0 0.0
  %701 = vmatprep.subr.mxu0 0.0
  %702 = vmatpush1.msra.mxu0 0.0
  %703 = vmatprep.subr.mxu0 0.0
  %704 = vmatpush1.msra.mxu0 0.0
  %705 = vmatprep.subr.mxu0 0.0
  %706 = vmatpush1.msra.mxu0 0.0
  %707 = vmatprep.subr.mxu0 0.0
  %708 = vmatpush1.msra.mxu0 0.0
  %709 = vmatprep.subr.mxu0 0.0
  %710 = vmatpush1.msra.mxu0 0.0
  %711 = vmatprep.subr.mxu0 0.0
  %712 = vmatpush1.msra.mxu0 0.0
  %713 = vmatprep.subr.mxu0 0.0
  %714 = vmatpush1.msra.mxu0 0.0
  %715 = vmatprep.subr.mxu0 0.0
  %716 = vmatpush1.msra.mxu0 0.0
  %717 = vmatprep.subr.mxu0 0.0
  %718 = vmatpush1.msra.mxu0 0.0
  %719 = vmatprep.subr.mxu0 0.0
  %720 = vmatpush1.msra.mxu0 0.0
  %721 = vmatprep.subr.mxu0 0.0
  %722 = vmatpush1.msra.mxu0 0.0
  %723 = vmatprep.subr.mxu0 0.0
  %724 = vmatpush1.msra.mxu0 0.0
  %725 = vmatprep.subr.mxu0 0.0
  %726 = vmatpush1.msra.mxu0 0.0
  %727 = vmatprep.subr.mxu0 0.0
  %728 = vmatpush1.msra.mxu0 0.0
  %729 = vmatprep.subr.mxu0 0.0
  %730 = vmatpush1.msra.mxu0 0.0
  %731 = vmatprep.subr.mxu0 0.0
  %732 = vmatpush1.msra.mxu0 0.0
  %733 = vmatprep.subr.mxu0 0.0
  %734 = vmatpush1.msra.mxu0 0.0
  %735 = vmatprep.subr.mxu0 0.0
  %736 = vmatpush1.msra.mxu0 0.0
  %737 = vmatprep.subr.mxu0 0.0
  %738 = vmatpush1.msra.mxu0 0.0
  %739 = vmatprep.mubr.f32.mxu0 0.0
  %740 = vmatmul.mubr.f32.gmra.mrb[0].mxu0 %v673
  %v741 = vpop.f32.mrb[0].mxu0
  %v742 = vadd.f32 0.0, %v741
  %v743 = vpop.f32.mrb[0].mxu0
  %744 = vdwg.mxu0
  %v745 = vld [vmem:[%s8] sm:$0xff]
  %v746 = vld [vmem:[%s8 + $0x8] sm:$0xff]
  %v747 = vld [vmem:[%s8 + $0x10] sm:$0xff]
  %v748 = vld [vmem:[%s8 + $0x18] sm:$0xff]
  %v749 = vld [vmem:[%s8 + $0x20] sm:$0xff]
  %v750 = vld [vmem:[%s8 + $0x28] sm:$0xff]
  %v751 = vld [vmem:[%s8 + $0x30] sm:$0xff]
  %v752 = vld [vmem:[%s8 + $0x38] sm:$0xff]
  %v753 = vld [vmem:[%s8 + $0x40] sm:$0xff]
  %v754 = vld [vmem:[%s8 + $0x48] sm:$0xff]
  %v755 = vld [vmem:[%s8 + $0x50] sm:$0xff]
  %v756 = vld [vmem:[%s8 + $0x58] sm:$0xff]
  %v757 = vld [vmem:[%s8 + $0x60] sm:$0xff]
  %v758 = vld [vmem:[%s8 + $0x68] sm:$0xff]
  %v759 = vld [vmem:[%s8 + $0x70] sm:$0xff]
  %v760 = vld [vmem:[%s8 + $0x78] sm:$0xff]
  %s761 = scalar_lea.vmem %s2, 256
  %v762 = vld [vmem:[%s761] sm:$0xff]
  %v763 = vld [vmem:[%s761 + $0x8] sm:$0xff]
  %v764 = vld [vmem:[%s761 + $0x10] sm:$0xff]
  %v765 = vld [vmem:[%s761 + $0x18] sm:$0xff]
  %v766 = vld [vmem:[%s761 + $0x20] sm:$0xff]
  %v767 = vld [vmem:[%s761 + $0x28] sm:$0xff]
  %v768 = vld [vmem:[%s761 + $0x30] sm:$0xff]
  %v769 = vld [vmem:[%s761 + $0x38] sm:$0xff]
  %v770 = vld [vmem:[%s761 + $0x40] sm:$0xff]
  %v771 = vld [vmem:[%s761 + $0x48] sm:$0xff]
  %v772 = vld [vmem:[%s761 + $0x50] sm:$0xff]
  %v773 = vld [vmem:[%s761 + $0x58] sm:$0xff]
  %v774 = vld [vmem:[%s761 + $0x60] sm:$0xff]
  %v775 = vld [vmem:[%s761 + $0x68] sm:$0xff]
  %v776 = vld [vmem:[%s761 + $0x70] sm:$0xff]
  %v777 = vld [vmem:[%s761 + $0x78] sm:$0xff]
  %v778 = vld [vmem:[%s761 + $0x80] sm:$0xff]
  %v779 = vld [vmem:[%s761 + $0x88] sm:$0xff]
  %v780 = vld [vmem:[%s761 + $0x90] sm:$0xff]
  %v781 = vld [vmem:[%s761 + $0x98] sm:$0xff]
  %v782 = vld [vmem:[%s761 + $0xa0] sm:$0xff]
  %v783 = vld [vmem:[%s761 + $0xa8] sm:$0xff]
  %v784 = vld [vmem:[%s761 + $0xb0] sm:$0xff]
  %v785 = vld [vmem:[%s761 + $0xb8] sm:$0xff]
  %v786 = vld [vmem:[%s761 + $0xc0] sm:$0xff]
  %v787 = vld [vmem:[%s761 + $0xc8] sm:$0xff]
  %v788 = vld [vmem:[%s761 + $0xd0] sm:$0xff]
  %v789 = vld [vmem:[%s761 + $0xd8] sm:$0xff]
  %v790 = vld [vmem:[%s761 + $0xe0] sm:$0xff]
  %v791 = vld [vmem:[%s761 + $0xe8] sm:$0xff]
  %v792 = vld [vmem:[%s761 + $0xf0] sm:$0xff]
  %v793 = vld [vmem:[%s761 + $0xf8] sm:$0xff]
  %s794 = scalar_lea.vmem %s3, 1
  %v795 = vld [vmem:[%s794] sm:$0x1]
  %v797 = vlaneseq
  %v798 = vshrl.u32 %v797, 7
  %v799 = vsub.s32 0, %v798
  %v800 = vrot.slane %v795, %v799
  %802 = vmatprep.subr.mxu0 0.0
  %803 = vmatpush1.msra.mxu0 %v762
  %804 = vmatprep.subr.mxu0 0.0
  %805 = vmatpush1.msra.mxu0 %v763
  %806 = vmatprep.subr.mxu0 0.0
  %807 = vmatpush1.msra.mxu0 %v764
  %808 = vmatprep.subr.mxu0 0.0
  %809 = vmatpush1.msra.mxu0 %v765
  %810 = vmatprep.subr.mxu0 0.0
  %811 = vmatpush1.msra.mxu0 %v766
  %812 = vmatprep.subr.mxu0 0.0
  %813 = vmatpush1.msra.mxu0 %v767
  %814 = vmatprep.subr.mxu0 0.0
  %815 = vmatpush1.msra.mxu0 %v768
  %816 = vmatprep.subr.mxu0 0.0
  %817 = vmatpush1.msra.mxu0 %v769
  %818 = vmatprep.subr.mxu0 0.0
  %819 = vmatpush1.msra.mxu0 %v770
  %820 = vmatprep.subr.mxu0 0.0
  %821 = vmatpush1.msra.mxu0 %v771
  %822 = vmatprep.subr.mxu0 0.0
  %823 = vmatpush1.msra.mxu0 %v772
  %824 = vmatprep.subr.mxu0 0.0
  %825 = vmatpush1.msra.mxu0 %v773
  %826 = vmatprep.subr.mxu0 0.0
  %827 = vmatpush1.msra.mxu0 %v774
  %828 = vmatprep.subr.mxu0 0.0
  %829 = vmatpush1.msra.mxu0 %v775
  %830 = vmatprep.subr.mxu0 0.0
  %831 = vmatpush1.msra.mxu0 %v776
  %832 = vmatprep.subr.mxu0 0.0
  %833 = vmatpush1.msra.mxu0 %v777
  %834 = vmatprep.subr.mxu0 0.0
  %835 = vmatpush1.msra.mxu0 %v778
  %836 = vmatprep.subr.mxu0 0.0
  %837 = vmatpush1.msra.mxu0 %v779
  %838 = vmatprep.subr.mxu0 0.0
  %839 = vmatpush1.msra.mxu0 %v780
  %840 = vmatprep.subr.mxu0 0.0
  %841 = vmatpush1.msra.mxu0 %v781
  %842 = vmatprep.subr.mxu0 0.0
  %843 = vmatpush1.msra.mxu0 %v782
  %844 = vmatprep.subr.mxu0 0.0
  %845 = vmatpush1.msra.mxu0 %v783
  %846 = vmatprep.subr.mxu0 0.0
  %847 = vmatpush1.msra.mxu0 %v784
  %848 = vmatprep.subr.mxu0 0.0
  %849 = vmatpush1.msra.mxu0 %v785
  %850 = vmatprep.subr.mxu0 0.0
  %851 = vmatpush1.msra.mxu0 %v786
  %852 = vmatprep.subr.mxu0 0.0
  %853 = vmatpush1.msra.mxu0 %v787
  %854 = vmatprep.subr.mxu0 0.0
  %855 = vmatpush1.msra.mxu0 %v788
  %856 = vmatprep.subr.mxu0 0.0
  %857 = vmatpush1.msra.mxu0 %v789
  %858 = vmatprep.subr.mxu0 0.0
  %859 = vmatpush1.msra.mxu0 %v790
  %860 = vmatprep.subr.mxu0 0.0
  %861 = vmatpush1.msra.mxu0 %v791
  %862 = vmatprep.subr.mxu0 0.0
  %863 = vmatpush1.msra.mxu0 %v792
  %864 = vmatprep.subr.mxu0 0.0
  %865 = vmatpush1.msra.mxu0 %v793
  %866 = vmatprep.mubr.f32.mxu0 %v42
  %867 = vmatmul.mubr.f32.gmra.mrb[0].mxu0 %v41
  %v868 = vpop.f32.mrb[0].mxu0
  %v869 = vadd.f32 %v800, %v868
  %v870 = vpop.f32.mrb[0].mxu0
  %871 = vmatprep.mubr.f32.mxu0 %v44
  %872 = vmatmul.mubr.f32.gmra.mrb[0].mxu0 %v43
  %v873 = vpop.f32.mrb[0].mxu0
  %v874 = vadd.f32 %v800, %v873
  %v875 = vpop.f32.mrb[0].mxu0
  %876 = vdwg.mxu0
  %s877 = scalar_lea.vmem %s4, 256
  %v878 = vld [vmem:[%s877] sm:$0xff]
  %v879 = vld [vmem:[%s877 + $0x8] sm:$0xff]
  %v880 = vld [vmem:[%s877 + $0x10] sm:$0xff]
  %v881 = vld [vmem:[%s877 + $0x18] sm:$0xff]
  %v882 = vld [vmem:[%s877 + $0x20] sm:$0xff]
  %v883 = vld [vmem:[%s877 + $0x28] sm:$0xff]
  %v884 = vld [vmem:[%s877 + $0x30] sm:$0xff]
  %v885 = vld [vmem:[%s877 + $0x38] sm:$0xff]
  %v886 = vld [vmem:[%s877 + $0x40] sm:$0xff]
  %v887 = vld [vmem:[%s877 + $0x48] sm:$0xff]
  %v888 = vld [vmem:[%s877 + $0x50] sm:$0xff]
  %v889 = vld [vmem:[%s877 + $0x58] sm:$0xff]
  %v890 = vld [vmem:[%s877 + $0x60] sm:$0xff]
  %v891 = vld [vmem:[%s877 + $0x68] sm:$0xff]
  %v892 = vld [vmem:[%s877 + $0x70] sm:$0xff]
  %v893 = vld [vmem:[%s877 + $0x78] sm:$0xff]
  %v894 = vld [vmem:[%s877 + $0x80] sm:$0xff]
  %v895 = vld [vmem:[%s877 + $0x88] sm:$0xff]
  %v896 = vld [vmem:[%s877 + $0x90] sm:$0xff]
  %v897 = vld [vmem:[%s877 + $0x98] sm:$0xff]
  %v898 = vld [vmem:[%s877 + $0xa0] sm:$0xff]
  %v899 = vld [vmem:[%s877 + $0xa8] sm:$0xff]
  %v900 = vld [vmem:[%s877 + $0xb0] sm:$0xff]
  %v901 = vld [vmem:[%s877 + $0xb8] sm:$0xff]
  %v902 = vld [vmem:[%s877 + $0xc0] sm:$0xff]
  %v903 = vld [vmem:[%s877 + $0xc8] sm:$0xff]
  %v904 = vld [vmem:[%s877 + $0xd0] sm:$0xff]
  %v905 = vld [vmem:[%s877 + $0xd8] sm:$0xff]
  %v906 = vld [vmem:[%s877 + $0xe0] sm:$0xff]
  %v907 = vld [vmem:[%s877 + $0xe8] sm:$0xff]
  %v908 = vld [vmem:[%s877 + $0xf0] sm:$0xff]
  %v909 = vld [vmem:[%s877 + $0xf8] sm:$0xff]
  %s910 = scalar_lea.vmem %s5, 1
  %v911 = vld [vmem:[%s910] sm:$0x1]
  %v913 = vlaneseq
  %v914 = vshrl.u32 %v913, 7
  %v915 = vsub.s32 0, %v914
  %v916 = vrot.slane %v911, %v915
  %918 = vmatprep.subr.mxu0 0.0
  %919 = vmatpush1.msra.mxu0 %v878
  %920 = vmatprep.subr.mxu0 0.0
  %921 = vmatpush1.msra.mxu0 %v879
  %922 = vmatprep.subr.mxu0 0.0
  %923 = vmatpush1.msra.mxu0 %v880
  %924 = vmatprep.subr.mxu0 0.0
  %925 = vmatpush1.msra.mxu0 %v881
  %926 = vmatprep.subr.mxu0 0.0
  %927 = vmatpush1.msra.mxu0 %v882
  %928 = vmatprep.subr.mxu0 0.0
  %929 = vmatpush1.msra.mxu0 %v883
  %930 = vmatprep.subr.mxu0 0.0
  %931 = vmatpush1.msra.mxu0 %v884
  %932 = vmatprep.subr.mxu0 0.0
  %933 = vmatpush1.msra.mxu0 %v885
  %934 = vmatprep.subr.mxu0 0.0
  %935 = vmatpush1.msra.mxu0 %v886
  %936 = vmatprep.subr.mxu0 0.0
  %937 = vmatpush1.msra.mxu0 %v887
  %938 = vmatprep.subr.mxu0 0.0
  %939 = vmatpush1.msra.mxu0 %v888
  %940 = vmatprep.subr.mxu0 0.0
  %941 = vmatpush1.msra.mxu0 %v889
  %942 = vmatprep.subr.mxu0 0.0
  %943 = vmatpush1.msra.mxu0 %v890
  %944 = vmatprep.subr.mxu0 0.0
  %945 = vmatpush1.msra.mxu0 %v891
  %946 = vmatprep.subr.mxu0 0.0
  %947 = vmatpush1.msra.mxu0 %v892
  %948 = vmatprep.subr.mxu0 0.0
  %949 = vmatpush1.msra.mxu0 %v893
  %950 = vmatprep.subr.mxu0 0.0
  %951 = vmatpush1.msra.mxu0 %v894
  %952 = vmatprep.subr.mxu0 0.0
  %953 = vmatpush1.msra.mxu0 %v895
  %954 = vmatprep.subr.mxu0 0.0
  %955 = vmatpush1.msra.mxu0 %v896
  %956 = vmatprep.subr.mxu0 0.0
  %957 = vmatpush1.msra.mxu0 %v897
  %958 = vmatprep.subr.mxu0 0.0
  %959 = vmatpush1.msra.mxu0 %v898
  %960 = vmatprep.subr.mxu0 0.0
  %961 = vmatpush1.msra.mxu0 %v899
  %962 = vmatprep.subr.mxu0 0.0
  %963 = vmatpush1.msra.mxu0 %v900
  %964 = vmatprep.subr.mxu0 0.0
  %965 = vmatpush1.msra.mxu0 %v901
  %966 = vmatprep.subr.mxu0 0.0
  %967 = vmatpush1.msra.mxu0 %v902
  %968 = vmatprep.subr.mxu0 0.0
  %969 = vmatpush1.msra.mxu0 %v903
  %970 = vmatprep.subr.mxu0 0.0
  %971 = vmatpush1.msra.mxu0 %v904
  %972 = vmatprep.subr.mxu0 0.0
  %973 = vmatpush1.msra.mxu0 %v905
  %974 = vmatprep.subr.mxu0 0.0
  %975 = vmatpush1.msra.mxu0 %v906
  %976 = vmatprep.subr.mxu0 0.0
  %977 = vmatpush1.msra.mxu0 %v907
  %978 = vmatprep.subr.mxu0 0.0
  %979 = vmatpush1.msra.mxu0 %v908
  %980 = vmatprep.subr.mxu0 0.0
  %981 = vmatpush1.msra.mxu0 %v909
  %982 = vmatprep.mubr.f32.mxu0 %v46
  %983 = vmatmul.mubr.f32.gmra.mrb[0].mxu0 %v45
  %v984 = vpop.f32.mrb[0].mxu0
  %v985 = vadd.f32 %v916, %v984
  %v986 = vpop.f32.mrb[0].mxu0
  %987 = vmatprep.mubr.f32.mxu0 %v48
  %988 = vmatmul.mubr.f32.gmra.mrb[0].mxu0 %v47
  %v989 = vpop.f32.mrb[0].mxu0
  %v990 = vadd.f32 %v916, %v989
  %v991 = vpop.f32.mrb[0].mxu0
  %992 = vmatprep.mubr.f32.mxu0 %v50
  %993 = vmatmul.mubr.f32.gmra.mrb[0].mxu0 %v49
  %v994 = vpop.f32.mrb[0].mxu0
  %v995 = vadd.f32 %v916, %v994
  %v996 = vpop.f32.mrb[0].mxu0
  %997 = vmatprep.mubr.f32.mxu0 %v52
  %998 = vmatmul.mubr.f32.gmra.mrb[0].mxu0 %v51
  %v999 = vpop.f32.mrb[0].mxu0
  %v1000 = vadd.f32 %v916, %v999
  %v1001 = vpop.f32.mrb[0].mxu0
  %1002 = vdwg.mxu0
  %s1003 = scalar_lea.vmem %s6, 256
  %v1004 = vld [vmem:[%s1003] sm:$0xff]
  %v1005 = vld [vmem:[%s1003 + $0x8] sm:$0xff]
  %v1006 = vld [vmem:[%s1003 + $0x10] sm:$0xff]
  %v1007 = vld [vmem:[%s1003 + $0x18] sm:$0xff]
  %v1008 = vld [vmem:[%s1003 + $0x20] sm:$0xff]
  %v1009 = vld [vmem:[%s1003 + $0x28] sm:$0xff]
  %v1010 = vld [vmem:[%s1003 + $0x30] sm:$0xff]
  %v1011 = vld [vmem:[%s1003 + $0x38] sm:$0xff]
  %v1012 = vld [vmem:[%s1003 + $0x40] sm:$0xff]
  %v1013 = vld [vmem:[%s1003 + $0x48] sm:$0xff]
  %v1014 = vld [vmem:[%s1003 + $0x50] sm:$0xff]
  %v1015 = vld [vmem:[%s1003 + $0x58] sm:$0xff]
  %v1016 = vld [vmem:[%s1003 + $0x60] sm:$0xff]
  %v1017 = vld [vmem:[%s1003 + $0x68] sm:$0xff]
  %v1018 = vld [vmem:[%s1003 + $0x70] sm:$0xff]
  %v1019 = vld [vmem:[%s1003 + $0x78] sm:$0xff]
  %v1020 = vld [vmem:[%s1003 + $0x80] sm:$0xff]
  %v1021 = vld [vmem:[%s1003 + $0x88] sm:$0xff]
  %v1022 = vld [vmem:[%s1003 + $0x90] sm:$0xff]
  %v1023 = vld [vmem:[%s1003 + $0x98] sm:$0xff]
  %v1024 = vld [vmem:[%s1003 + $0xa0] sm:$0xff]
  %v1025 = vld [vmem:[%s1003 + $0xa8] sm:$0xff]
  %v1026 = vld [vmem:[%s1003 + $0xb0] sm:$0xff]
  %v1027 = vld [vmem:[%s1003 + $0xb8] sm:$0xff]
  %v1028 = vld [vmem:[%s1003 + $0xc0] sm:$0xff]
  %v1029 = vld [vmem:[%s1003 + $0xc8] sm:$0xff]
  %v1030 = vld [vmem:[%s1003 + $0xd0] sm:$0xff]
  %v1031 = vld [vmem:[%s1003 + $0xd8] sm:$0xff]
  %v1032 = vld [vmem:[%s1003 + $0xe0] sm:$0xff]
  %v1033 = vld [vmem:[%s1003 + $0xe8] sm:$0xff]
  %v1034 = vld [vmem:[%s1003 + $0xf0] sm:$0xff]
  %v1035 = vld [vmem:[%s1003 + $0xf8] sm:$0xff]
  %s1036 = scalar_lea.vmem %s7, 1
  %v1037 = vld [vmem:[%s1036] sm:$0x1]
  %v1039 = vlaneseq
  %v1040 = vshrl.u32 %v1039, 7
  %v1041 = vsub.s32 0, %v1040
  %v1042 = vrot.slane %v1037, %v1041
  %1044 = vmatprep.subr.mxu0 0.0
  %1045 = vmatpush1.msra.mxu0 %v1004
  %1046 = vmatprep.subr.mxu0 0.0
  %1047 = vmatpush1.msra.mxu0 %v1005
  %1048 = vmatprep.subr.mxu0 0.0
  %1049 = vmatpush1.msra.mxu0 %v1006
  %1050 = vmatprep.subr.mxu0 0.0
  %1051 = vmatpush1.msra.mxu0 %v1007
  %1052 = vmatprep.subr.mxu0 0.0
  %1053 = vmatpush1.msra.mxu0 %v1008
  %1054 = vmatprep.subr.mxu0 0.0
  %1055 = vmatpush1.msra.mxu0 %v1009
  %1056 = vmatprep.subr.mxu0 0.0
  %1057 = vmatpush1.msra.mxu0 %v1010
  %1058 = vmatprep.subr.mxu0 0.0
  %1059 = vmatpush1.msra.mxu0 %v1011
  %1060 = vmatprep.subr.mxu0 0.0
  %1061 = vmatpush1.msra.mxu0 %v1012
  %1062 = vmatprep.subr.mxu0 0.0
  %1063 = vmatpush1.msra.mxu0 %v1013
  %1064 = vmatprep.subr.mxu0 0.0
  %1065 = vmatpush1.msra.mxu0 %v1014
  %1066 = vmatprep.subr.mxu0 0.0
  %1067 = vmatpush1.msra.mxu0 %v1015
  %1068 = vmatprep.subr.mxu0 0.0
  %1069 = vmatpush1.msra.mxu0 %v1016
  %1070 = vmatprep.subr.mxu0 0.0
  %1071 = vmatpush1.msra.mxu0 %v1017
  %1072 = vmatprep.subr.mxu0 0.0
  %1073 = vmatpush1.msra.mxu0 %v1018
  %1074 = vmatprep.subr.mxu0 0.0
  %1075 = vmatpush1.msra.mxu0 %v1019
  %1076 = vmatprep.subr.mxu0 0.0
  %1077 = vmatpush1.msra.mxu0 %v1020
  %1078 = vmatprep.subr.mxu0 0.0
  %1079 = vmatpush1.msra.mxu0 %v1021
  %1080 = vmatprep.subr.mxu0 0.0
  %1081 = vmatpush1.msra.mxu0 %v1022
  %1082 = vmatprep.subr.mxu0 0.0
  %1083 = vmatpush1.msra.mxu0 %v1023
  %1084 = vmatprep.subr.mxu0 0.0
  %1085 = vmatpush1.msra.mxu0 %v1024
  %1086 = vmatprep.subr.mxu0 0.0
  %1087 = vmatpush1.msra.mxu0 %v1025
  %1088 = vmatprep.subr.mxu0 0.0
  %1089 = vmatpush1.msra.mxu0 %v1026
  %1090 = vmatprep.subr.mxu0 0.0
  %1091 = vmatpush1.msra.mxu0 %v1027
  %1092 = vmatprep.subr.mxu0 0.0
  %1093 = vmatpush1.msra.mxu0 %v1028
  %1094 = vmatprep.subr.mxu0 0.0
  %1095 = vmatpush1.msra.mxu0 %v1029
  %1096 = vmatprep.subr.mxu0 0.0
  %1097 = vmatpush1.msra.mxu0 %v1030
  %1098 = vmatprep.subr.mxu0 0.0
  %1099 = vmatpush1.msra.mxu0 %v1031
  %1100 = vmatprep.subr.mxu0 0.0
  %1101 = vmatpush1.msra.mxu0 %v1032
  %1102 = vmatprep.subr.mxu0 0.0
  %1103 = vmatpush1.msra.mxu0 %v1033
  %1104 = vmatprep.subr.mxu0 0.0
  %1105 = vmatpush1.msra.mxu0 %v1034
  %1106 = vmatprep.subr.mxu0 0.0
  %1107 = vmatpush1.msra.mxu0 %v1035
  %1108 = vmatprep.mubr.f32.mxu0 %v46
  %1109 = vmatmul.mubr.f32.gmra.mrb[0].mxu0 %v45
  %v1110 = vpop.f32.mrb[0].mxu0
  %v1111 = vadd.f32 %v1042, %v1110
  %v1112 = vpop.f32.mrb[0].mxu0
  %1113 = vmatprep.mubr.f32.mxu0 %v48
  %1114 = vmatmul.mubr.f32.gmra.mrb[0].mxu0 %v47
  %v1115 = vpop.f32.mrb[0].mxu0
  %v1116 = vadd.f32 %v1042, %v1115
  %v1117 = vpop.f32.mrb[0].mxu0
  %1118 = vmatprep.mubr.f32.mxu0 %v50
  %1119 = vmatmul.mubr.f32.gmra.mrb[0].mxu0 %v49
  %v1120 = vpop.f32.mrb[0].mxu0
  %v1121 = vadd.f32 %v1042, %v1120
  %v1122 = vpop.f32.mrb[0].mxu0
  %1123 = vmatprep.mubr.f32.mxu0 %v52
  %1124 = vmatmul.mubr.f32.gmra.mrb[0].mxu0 %v51
  %v1125 = vpop.f32.mrb[0].mxu0
  %v1126 = vadd.f32 %v1042, %v1125
  %v1127 = vpop.f32.mrb[0].mxu0
  %1128 = vdwg.mxu0
  %v1130 = vsel %vm415, %v869, 0
  %v1133 = vsel %vm415, %v985, 0
  %v1136 = vsel %vm415, %v990, 0
  %1138 = vmatprep.subr.mxu0 0.0
  %1139 = vmatpush1.xpose.msra.mxu0 %v1133
  %1140 = vmatprep.subr.mxu0 0.0
  %1141 = vmatpush1.xpose.msra.mxu0 %v1136
  %1142 = vmatprep.subr.mxu0 0.0
  %1143 = vmatpush1.xpose.msra.mxu0 0.0
  %1144 = vmatprep.subr.mxu0 0.0
  %1145 = vmatpush1.xpose.msra.mxu0 0.0
  %1146 = vmatprep.subr.mxu0 0.0
  %1147 = vmatpush1.xpose.msra.mxu0 0.0
  %1148 = vmatprep.subr.mxu0 0.0
  %1149 = vmatpush1.xpose.msra.mxu0 0.0
  %1150 = vmatprep.subr.mxu0 0.0
  %1151 = vmatpush1.xpose.msra.mxu0 0.0
  %1152 = vmatprep.subr.mxu0 0.0
  %1153 = vmatpush1.xpose.msra.mxu0 0.0
  %1154 = vmatprep.subr.mxu0 0.0
  %1155 = vmatpush1.xpose.msra.mxu0 0.0
  %1156 = vmatprep.subr.mxu0 0.0
  %1157 = vmatpush1.xpose.msra.mxu0 0.0
  %1158 = vmatprep.subr.mxu0 0.0
  %1159 = vmatpush1.xpose.msra.mxu0 0.0
  %1160 = vmatprep.subr.mxu0 0.0
  %1161 = vmatpush1.xpose.msra.mxu0 0.0
  %1162 = vmatprep.subr.mxu0 0.0
  %1163 = vmatpush1.xpose.msra.mxu0 0.0
  %1164 = vmatprep.subr.mxu0 0.0
  %1165 = vmatpush1.xpose.msra.mxu0 0.0
  %1166 = vmatprep.subr.mxu0 0.0
  %1167 = vmatpush1.xpose.msra.mxu0 0.0
  %1168 = vmatprep.subr.mxu0 0.0
  %1169 = vmatpush1.xpose.msra.mxu0 0.0
  %1170 = vmatprep.subr.mxu0 0.0
  %1171 = vmatpush1.xpose.msra.mxu0 0.0
  %1172 = vmatprep.subr.mxu0 0.0
  %1173 = vmatpush1.xpose.msra.mxu0 0.0
  %1174 = vmatprep.subr.mxu0 0.0
  %1175 = vmatpush1.xpose.msra.mxu0 0.0
  %1176 = vmatprep.subr.mxu0 0.0
  %1177 = vmatpush1.xpose.msra.mxu0 0.0
  %1178 = vmatprep.subr.mxu0 0.0
  %1179 = vmatpush1.xpose.msra.mxu0 0.0
  %1180 = vmatprep.subr.mxu0 0.0
  %1181 = vmatpush1.xpose.msra.mxu0 0.0
  %1182 = vmatprep.subr.mxu0 0.0
  %1183 = vmatpush1.xpose.msra.mxu0 0.0
  %1184 = vmatprep.subr.mxu0 0.0
  %1185 = vmatpush1.xpose.msra.mxu0 0.0
  %1186 = vmatprep.subr.mxu0 0.0
  %1187 = vmatpush1.xpose.msra.mxu0 0.0
  %1188 = vmatprep.subr.mxu0 0.0
  %1189 = vmatpush1.xpose.msra.mxu0 0.0
  %1190 = vmatprep.subr.mxu0 0.0
  %1191 = vmatpush1.xpose.msra.mxu0 0.0
  %1192 = vmatprep.subr.mxu0 0.0
  %1193 = vmatpush1.xpose.msra.mxu0 0.0
  %1194 = vmatprep.subr.mxu0 0.0
  %1195 = vmatpush1.xpose.msra.mxu0 0.0
  %1196 = vmatprep.subr.mxu0 0.0
  %1197 = vmatpush1.xpose.msra.mxu0 0.0
  %1198 = vmatprep.subr.mxu0 0.0
  %1199 = vmatpush1.xpose.msra.mxu0 0.0
  %1200 = vmatprep.subr.mxu0 0.0
  %1201 = vmatpush1.xpose.msra.mxu0 0.0
  %1202 = vmatprep.mubr.f32.mxu0 0.0
  %1203 = vmatmul.mubr.f32.gmra.mrb[0].mxu0 %v1130
  %v1204 = vpop.f32.mrb[0].mxu0
  %v1205 = vadd.f32 0.0, %v1204
  %v1206 = vpop.f32.mrb[0].mxu0
  %1207 = vdwg.mxu0
  %v1209 = vsel %vm415, %v874, 0
  %v1212 = vsel %vm415, %v995, 0
  %v1215 = vsel %vm415, %v1000, 0
  %1217 = vmatprep.subr.mxu0 0.0
  %1218 = vmatpush1.xpose.msra.mxu0 %v1212
  %1219 = vmatprep.subr.mxu0 0.0
  %1220 = vmatpush1.xpose.msra.mxu0 %v1215
  %1221 = vmatprep.subr.mxu0 0.0
  %1222 = vmatpush1.xpose.msra.mxu0 0.0
  %1223 = vmatprep.subr.mxu0 0.0
  %1224 = vmatpush1.xpose.msra.mxu0 0.0
  %1225 = vmatprep.subr.mxu0 0.0
  %1226 = vmatpush1.xpose.msra.mxu0 0.0
  %1227 = vmatprep.subr.mxu0 0.0
  %1228 = vmatpush1.xpose.msra.mxu0 0.0
  %1229 = vmatprep.subr.mxu0 0.0
  %1230 = vmatpush1.xpose.msra.mxu0 0.0
  %1231 = vmatprep.subr.mxu0 0.0
  %1232 = vmatpush1.xpose.msra.mxu0 0.0
  %1233 = vmatprep.subr.mxu0 0.0
  %1234 = vmatpush1.xpose.msra.mxu0 0.0
  %1235 = vmatprep.subr.mxu0 0.0
  %1236 = vmatpush1.xpose.msra.mxu0 0.0
  %1237 = vmatprep.subr.mxu0 0.0
  %1238 = vmatpush1.xpose.msra.mxu0 0.0
  %1239 = vmatprep.subr.mxu0 0.0
  %1240 = vmatpush1.xpose.msra.mxu0 0.0
  %1241 = vmatprep.subr.mxu0 0.0
  %1242 = vmatpush1.xpose.msra.mxu0 0.0
  %1243 = vmatprep.subr.mxu0 0.0
  %1244 = vmatpush1.xpose.msra.mxu0 0.0
  %1245 = vmatprep.subr.mxu0 0.0
  %1246 = vmatpush1.xpose.msra.mxu0 0.0
  %1247 = vmatprep.subr.mxu0 0.0
  %1248 = vmatpush1.xpose.msra.mxu0 0.0
  %1249 = vmatprep.subr.mxu0 0.0
  %1250 = vmatpush1.xpose.msra.mxu0 0.0
  %1251 = vmatprep.subr.mxu0 0.0
  %1252 = vmatpush1.xpose.msra.mxu0 0.0
  %1253 = vmatprep.subr.mxu0 0.0
  %1254 = vmatpush1.xpose.msra.mxu0 0.0
  %1255 = vmatprep.subr.mxu0 0.0
  %1256 = vmatpush1.xpose.msra.mxu0 0.0
  %1257 = vmatprep.subr.mxu0 0.0
  %1258 = vmatpush1.xpose.msra.mxu0 0.0
  %1259 = vmatprep.subr.mxu0 0.0
  %1260 = vmatpush1.xpose.msra.mxu0 0.0
  %1261 = vmatprep.subr.mxu0 0.0
  %1262 = vmatpush1.xpose.msra.mxu0 0.0
  %1263 = vmatprep.subr.mxu0 0.0
  %1264 = vmatpush1.xpose.msra.mxu0 0.0
  %1265 = vmatprep.subr.mxu0 0.0
  %1266 = vmatpush1.xpose.msra.mxu0 0.0
  %1267 = vmatprep.subr.mxu0 0.0
  %1268 = vmatpush1.xpose.msra.mxu0 0.0
  %1269 = vmatprep.subr.mxu0 0.0
  %1270 = vmatpush1.xpose.msra.mxu0 0.0
  %1271 = vmatprep.subr.mxu0 0.0
  %1272 = vmatpush1.xpose.msra.mxu0 0.0
  %1273 = vmatprep.subr.mxu0 0.0
  %1274 = vmatpush1.xpose.msra.mxu0 0.0
  %1275 = vmatprep.subr.mxu0 0.0
  %1276 = vmatpush1.xpose.msra.mxu0 0.0
  %1277 = vmatprep.subr.mxu0 0.0
  %1278 = vmatpush1.xpose.msra.mxu0 0.0
  %1279 = vmatprep.subr.mxu0 0.0
  %1280 = vmatpush1.xpose.msra.mxu0 0.0
  %1281 = vmatprep.mubr.f32.mxu0 0.0
  %1282 = vmatmul.mubr.f32.gmra.mrb[0].mxu0 %v1209
  %v1283 = vpop.f32.mrb[0].mxu0
  %v1284 = vadd.f32 0.0, %v1283
  %v1285 = vpop.f32.mrb[0].mxu0
  %1286 = vdwg.mxu0
  %v1287 = vmul.f32 %v1205, 0.125
  %v1288 = vmul.f32 %v1284, 0.125
  %v1289 = vsel %vm576, %v1287, -inf
  %1290 = vmax.xlane.f32.xlu0 %v1289
  %v1291 = vpop.xlane.xlu0 %1290
  %v1292 = vsel %vm576, %v1288, -inf
  %1293 = vmax.xlane.f32.xlu0 %v1292
  %v1294 = vpop.xlane.xlu0 %1293
  %v1295 = vsub.f32 %v1287, %v1291
  %v1296 = vsub.f32 %v1288, %v1294
  %v1297 = vmul.f32 %v1295, 1.442695
  %v1298 = vpow.pop %v1297
  %v1299 = vmul.f32 %v1296, 1.442695
  %v1300 = vpow.pop %v1299
  %v1301 = vsel %vm576, %v1298, 0.0
  %1302 = vadd.xlane.f32.xlu0 %v1301
  %v1303 = vpop.xlane.xlu0 %1302
  %v1304 = vsel %vm576, %v1300, 0.0
  %1305 = vadd.xlane.f32.xlu0 %v1304
  %v1306 = vpop.xlane.xlu0 %1305
  %v1307 = vrcp.pop %v1303
  %v1308 = vrcp.pop %v1306
  %v1309 = vmul.f32 %v1298, %v1307
  %v1310 = vmul.f32 %v1300, %v1308
  %v1312 = vsel %vm576, %v1309, 0
  %1314 = vmatprep.subr.mxu0 0.0
  %1315 = vmatpush1.msra.mxu0 %v1111
  %1316 = vmatprep.subr.mxu0 0.0
  %1317 = vmatpush1.msra.mxu0 %v1116
  %1318 = vmatprep.subr.mxu0 0.0
  %1319 = vmatpush1.msra.mxu0 0.0
  %1320 = vmatprep.subr.mxu0 0.0
  %1321 = vmatpush1.msra.mxu0 0.0
  %1322 = vmatprep.subr.mxu0 0.0
  %1323 = vmatpush1.msra.mxu0 0.0
  %1324 = vmatprep.subr.mxu0 0.0
  %1325 = vmatpush1.msra.mxu0 0.0
  %1326 = vmatprep.subr.mxu0 0.0
  %1327 = vmatpush1.msra.mxu0 0.0
  %1328 = vmatprep.subr.mxu0 0.0
  %1329 = vmatpush1.msra.mxu0 0.0
  %1330 = vmatprep.subr.mxu0 0.0
  %1331 = vmatpush1.msra.mxu0 0.0
  %1332 = vmatprep.subr.mxu0 0.0
  %1333 = vmatpush1.msra.mxu0 0.0
  %1334 = vmatprep.subr.mxu0 0.0
  %1335 = vmatpush1.msra.mxu0 0.0
  %1336 = vmatprep.subr.mxu0 0.0
  %1337 = vmatpush1.msra.mxu0 0.0
  %1338 = vmatprep.subr.mxu0 0.0
  %1339 = vmatpush1.msra.mxu0 0.0
  %1340 = vmatprep.subr.mxu0 0.0
  %1341 = vmatpush1.msra.mxu0 0.0
  %1342 = vmatprep.subr.mxu0 0.0
  %1343 = vmatpush1.msra.mxu0 0.0
  %1344 = vmatprep.subr.mxu0 0.0
  %1345 = vmatpush1.msra.mxu0 0.0
  %1346 = vmatprep.subr.mxu0 0.0
  %1347 = vmatpush1.msra.mxu0 0.0
  %1348 = vmatprep.subr.mxu0 0.0
  %1349 = vmatpush1.msra.mxu0 0.0
  %1350 = vmatprep.subr.mxu0 0.0
  %1351 = vmatpush1.msra.mxu0 0.0
  %1352 = vmatprep.subr.mxu0 0.0
  %1353 = vmatpush1.msra.mxu0 0.0
  %1354 = vmatprep.subr.mxu0 0.0
  %1355 = vmatpush1.msra.mxu0 0.0
  %1356 = vmatprep.subr.mxu0 0.0
  %1357 = vmatpush1.msra.mxu0 0.0
  %1358 = vmatprep.subr.mxu0 0.0
  %1359 = vmatpush1.msra.mxu0 0.0
  %1360 = vmatprep.subr.mxu0 0.0
  %1361 = vmatpush1.msra.mxu0 0.0
  %1362 = vmatprep.subr.mxu0 0.0
  %1363 = vmatpush1.msra.mxu0 0.0
  %1364 = vmatprep.subr.mxu0 0.0
  %1365 = vmatpush1.msra.mxu0 0.0
  %1366 = vmatprep.subr.mxu0 0.0
  %1367 = vmatpush1.msra.mxu0 0.0
  %1368 = vmatprep.subr.mxu0 0.0
  %1369 = vmatpush1.msra.mxu0 0.0
  %1370 = vmatprep.subr.mxu0 0.0
  %1371 = vmatpush1.msra.mxu0 0.0
  %1372 = vmatprep.subr.mxu0 0.0
  %1373 = vmatpush1.msra.mxu0 0.0
  %1374 = vmatprep.subr.mxu0 0.0
  %1375 = vmatpush1.msra.mxu0 0.0
  %1376 = vmatprep.subr.mxu0 0.0
  %1377 = vmatpush1.msra.mxu0 0.0
  %1378 = vmatprep.mubr.f32.mxu0 0.0
  %1379 = vmatmul.mubr.f32.gmra.mrb[0].mxu0 %v1312
  %v1380 = vpop.f32.mrb[0].mxu0
  %v1381 = vadd.f32 0.0, %v1380
  %v1382 = vpop.f32.mrb[0].mxu0
  %1383 = vdwg.mxu0
  %v1385 = vsel %vm576, %v1310, 0
  %1387 = vmatprep.subr.mxu0 0.0
  %1388 = vmatpush1.msra.mxu0 %v1121
  %1389 = vmatprep.subr.mxu0 0.0
  %1390 = vmatpush1.msra.mxu0 %v1126
  %1391 = vmatprep.subr.mxu0 0.0
  %1392 = vmatpush1.msra.mxu0 0.0
  %1393 = vmatprep.subr.mxu0 0.0
  %1394 = vmatpush1.msra.mxu0 0.0
  %1395 = vmatprep.subr.mxu0 0.0
  %1396 = vmatpush1.msra.mxu0 0.0
  %1397 = vmatprep.subr.mxu0 0.0
  %1398 = vmatpush1.msra.mxu0 0.0
  %1399 = vmatprep.subr.mxu0 0.0
  %1400 = vmatpush1.msra.mxu0 0.0
  %1401 = vmatprep.subr.mxu0 0.0
  %1402 = vmatpush1.msra.mxu0 0.0
  %1403 = vmatprep.subr.mxu0 0.0
  %1404 = vmatpush1.msra.mxu0 0.0
  %1405 = vmatprep.subr.mxu0 0.0
  %1406 = vmatpush1.msra.mxu0 0.0
  %1407 = vmatprep.subr.mxu0 0.0
  %1408 = vmatpush1.msra.mxu0 0.0
  %1409 = vmatprep.subr.mxu0 0.0
  %1410 = vmatpush1.msra.mxu0 0.0
  %1411 = vmatprep.subr.mxu0 0.0
  %1412 = vmatpush1.msra.mxu0 0.0
  %1413 = vmatprep.subr.mxu0 0.0
  %1414 = vmatpush1.msra.mxu0 0.0
  %1415 = vmatprep.subr.mxu0 0.0
  %1416 = vmatpush1.msra.mxu0 0.0
  %1417 = vmatprep.subr.mxu0 0.0
  %1418 = vmatpush1.msra.mxu0 0.0
  %1419 = vmatprep.subr.mxu0 0.0
  %1420 = vmatpush1.msra.mxu0 0.0
  %1421 = vmatprep.subr.mxu0 0.0
  %1422 = vmatpush1.msra.mxu0 0.0
  %1423 = vmatprep.subr.mxu0 0.0
  %1424 = vmatpush1.msra.mxu0 0.0
  %1425 = vmatprep.subr.mxu0 0.0
  %1426 = vmatpush1.msra.mxu0 0.0
  %1427 = vmatprep.subr.mxu0 0.0
  %1428 = vmatpush1.msra.mxu0 0.0
  %1429 = vmatprep.subr.mxu0 0.0
  %1430 = vmatpush1.msra.mxu0 0.0
  %1431 = vmatprep.subr.mxu0 0.0
  %1432 = vmatpush1.msra.mxu0 0.0
  %1433 = vmatprep.subr.mxu0 0.0
  %1434 = vmatpush1.msra.mxu0 0.0
  %1435 = vmatprep.subr.mxu0 0.0
  %1436 = vmatpush1.msra.mxu0 0.0
  %1437 = vmatprep.subr.mxu0 0.0
  %1438 = vmatpush1.msra.mxu0 0.0
  %1439 = vmatprep.subr.mxu0 0.0
  %1440 = vmatpush1.msra.mxu0 0.0
  %1441 = vmatprep.subr.mxu0 0.0
  %1442 = vmatpush1.msra.mxu0 0.0
  %1443 = vmatprep.subr.mxu0 0.0
  %1444 = vmatpush1.msra.mxu0 0.0
  %1445 = vmatprep.subr.mxu0 0.0
  %1446 = vmatpush1.msra.mxu0 0.0
  %1447 = vmatprep.subr.mxu0 0.0
  %1448 = vmatpush1.msra.mxu0 0.0
  %1449 = vmatprep.subr.mxu0 0.0
  %1450 = vmatpush1.msra.mxu0 0.0
  %1451 = vmatprep.mubr.f32.mxu0 0.0
  %1452 = vmatmul.mubr.f32.gmra.mrb[0].mxu0 %v1385
  %v1453 = vpop.f32.mrb[0].mxu0
  %v1454 = vadd.f32 0.0, %v1453
  %v1455 = vpop.f32.mrb[0].mxu0
  %1456 = vdwg.mxu0
  %s1457 = scalar_lea.vmem %s8, 128
  %v1458 = vld [vmem:[%s1457] sm:$0xff]
  %v1459 = vld [vmem:[%s1457 + $0x8] sm:$0xff]
  %v1460 = vld [vmem:[%s1457 + $0x10] sm:$0xff]
  %v1461 = vld [vmem:[%s1457 + $0x18] sm:$0xff]
  %v1462 = vld [vmem:[%s1457 + $0x20] sm:$0xff]
  %v1463 = vld [vmem:[%s1457 + $0x28] sm:$0xff]
  %v1464 = vld [vmem:[%s1457 + $0x30] sm:$0xff]
  %v1465 = vld [vmem:[%s1457 + $0x38] sm:$0xff]
  %v1466 = vld [vmem:[%s1457 + $0x40] sm:$0xff]
  %v1467 = vld [vmem:[%s1457 + $0x48] sm:$0xff]
  %v1468 = vld [vmem:[%s1457 + $0x50] sm:$0xff]
  %v1469 = vld [vmem:[%s1457 + $0x58] sm:$0xff]
  %v1470 = vld [vmem:[%s1457 + $0x60] sm:$0xff]
  %v1471 = vld [vmem:[%s1457 + $0x68] sm:$0xff]
  %v1472 = vld [vmem:[%s1457 + $0x70] sm:$0xff]
  %v1473 = vld [vmem:[%s1457 + $0x78] sm:$0xff]
  %v1475 = vsel %vm415, %v1381, 0
  %v1478 = vsel %vm415, %v1454, 0
  %1480 = vmatprep.subr.mxu0 %v1459
  %1481 = vmatpush1.msra.mxu0 %v1458
  %1482 = vmatprep.subr.mxu0 %v1461
  %1483 = vmatpush1.msra.mxu0 %v1460
  %1484 = vmatprep.subr.mxu0 %v1463
  %1485 = vmatpush1.msra.mxu0 %v1462
  %1486 = vmatprep.subr.mxu0 %v1465
  %1487 = vmatpush1.msra.mxu0 %v1464
  %1488 = vmatprep.subr.mxu0 %v1467
  %1489 = vmatpush1.msra.mxu0 %v1466
  %1490 = vmatprep.subr.mxu0 %v1469
  %1491 = vmatpush1.msra.mxu0 %v1468
  %1492 = vmatprep.subr.mxu0 %v1471
  %1493 = vmatpush1.msra.mxu0 %v1470
  %1494 = vmatprep.subr.mxu0 %v1473
  %1495 = vmatpush1.msra.mxu0 %v1472
  %1496 = vmatprep.subr.mxu0 0.0
  %1497 = vmatpush1.msra.mxu0 0.0
  %1498 = vmatprep.subr.mxu0 0.0
  %1499 = vmatpush1.msra.mxu0 0.0
  %1500 = vmatprep.subr.mxu0 0.0
  %1501 = vmatpush1.msra.mxu0 0.0
  %1502 = vmatprep.subr.mxu0 0.0
  %1503 = vmatpush1.msra.mxu0 0.0
  %1504 = vmatprep.subr.mxu0 0.0
  %1505 = vmatpush1.msra.mxu0 0.0
  %1506 = vmatprep.subr.mxu0 0.0
  %1507 = vmatpush1.msra.mxu0 0.0
  %1508 = vmatprep.subr.mxu0 0.0
  %1509 = vmatpush1.msra.mxu0 0.0
  %1510 = vmatprep.subr.mxu0 0.0
  %1511 = vmatpush1.msra.mxu0 0.0
  %1512 = vmatprep.subr.mxu0 0.0
  %1513 = vmatpush1.msra.mxu0 0.0
  %1514 = vmatprep.subr.mxu0 0.0
  %1515 = vmatpush1.msra.mxu0 0.0
  %1516 = vmatprep.subr.mxu0 0.0
  %1517 = vmatpush1.msra.mxu0 0.0
  %1518 = vmatprep.subr.mxu0 0.0
  %1519 = vmatpush1.msra.mxu0 0.0
  %1520 = vmatprep.subr.mxu0 0.0
  %1521 = vmatpush1.msra.mxu0 0.0
  %1522 = vmatprep.subr.mxu0 0.0
  %1523 = vmatpush1.msra.mxu0 0.0
  %1524 = vmatprep.subr.mxu0 0.0
  %1525 = vmatpush1.msra.mxu0 0.0
  %1526 = vmatprep.subr.mxu0 0.0
  %1527 = vmatpush1.msra.mxu0 0.0
  %1528 = vmatprep.subr.mxu0 0.0
  %1529 = vmatpush1.msra.mxu0 0.0
  %1530 = vmatprep.subr.mxu0 0.0
  %1531 = vmatpush1.msra.mxu0 0.0
  %1532 = vmatprep.subr.mxu0 0.0
  %1533 = vmatpush1.msra.mxu0 0.0
  %1534 = vmatprep.subr.mxu0 0.0
  %1535 = vmatpush1.msra.mxu0 0.0
  %1536 = vmatprep.subr.mxu0 0.0
  %1537 = vmatpush1.msra.mxu0 0.0
  %1538 = vmatprep.subr.mxu0 0.0
  %1539 = vmatpush1.msra.mxu0 0.0
  %1540 = vmatprep.subr.mxu0 0.0
  %1541 = vmatpush1.msra.mxu0 0.0
  %1542 = vmatprep.subr.mxu0 0.0
  %1543 = vmatpush1.msra.mxu0 0.0
  %1544 = vmatprep.mubr.f32.mxu0 0.0
  %1545 = vmatmul.mubr.f32.gmra.mrb[0].mxu0 %v1475
  %v1546 = vpop.f32.mrb[0].mxu0
  %v1547 = vadd.f32 0.0, %v1546
  %v1548 = vpop.f32.mrb[0].mxu0
  %v1549 = vadd.f32 0.0, %v1548
  %1550 = vmatprep.mubr.f32.mxu0 0.0
  %1551 = vmatmul.mubr.f32.gmra.mrb[0].mxu0 %v1478
  %v1552 = vpop.f32.mrb[0].mxu0
  %v1553 = vadd.f32 0.0, %v1552
  %v1554 = vpop.f32.mrb[0].mxu0
  %v1555 = vadd.f32 0.0, %v1554
  %1556 = vdwg.mxu0
  %v1558 = vsel %vm415, %v669, 0
  %v1561 = vsel %vm415, %v742, 0
  %1563 = vmatprep.subr.mxu0 %v746
  %1564 = vmatpush1.msra.mxu0 %v745
  %1565 = vmatprep.subr.mxu0 %v748
  %1566 = vmatpush1.msra.mxu0 %v747
  %1567 = vmatprep.subr.mxu0 %v750
  %1568 = vmatpush1.msra.mxu0 %v749
  %1569 = vmatprep.subr.mxu0 %v752
  %1570 = vmatpush1.msra.mxu0 %v751
  %1571 = vmatprep.subr.mxu0 %v754
  %1572 = vmatpush1.msra.mxu0 %v753
  %1573 = vmatprep.subr.mxu0 %v756
  %1574 = vmatpush1.msra.mxu0 %v755
  %1575 = vmatprep.subr.mxu0 %v758
  %1576 = vmatpush1.msra.mxu0 %v757
  %1577 = vmatprep.subr.mxu0 %v760
  %1578 = vmatpush1.msra.mxu0 %v759
  %1579 = vmatprep.subr.mxu0 0.0
  %1580 = vmatpush1.msra.mxu0 0.0
  %1581 = vmatprep.subr.mxu0 0.0
  %1582 = vmatpush1.msra.mxu0 0.0
  %1583 = vmatprep.subr.mxu0 0.0
  %1584 = vmatpush1.msra.mxu0 0.0
  %1585 = vmatprep.subr.mxu0 0.0
  %1586 = vmatpush1.msra.mxu0 0.0
  %1587 = vmatprep.subr.mxu0 0.0
  %1588 = vmatpush1.msra.mxu0 0.0
  %1589 = vmatprep.subr.mxu0 0.0
  %1590 = vmatpush1.msra.mxu0 0.0
  %1591 = vmatprep.subr.mxu0 0.0
  %1592 = vmatpush1.msra.mxu0 0.0
  %1593 = vmatprep.subr.mxu0 0.0
  %1594 = vmatpush1.msra.mxu0 0.0
  %1595 = vmatprep.subr.mxu0 0.0
  %1596 = vmatpush1.msra.mxu0 0.0
  %1597 = vmatprep.subr.mxu0 0.0
  %1598 = vmatpush1.msra.mxu0 0.0
  %1599 = vmatprep.subr.mxu0 0.0
  %1600 = vmatpush1.msra.mxu0 0.0
  %1601 = vmatprep.subr.mxu0 0.0
  %1602 = vmatpush1.msra.mxu0 0.0
  %1603 = vmatprep.subr.mxu0 0.0
  %1604 = vmatpush1.msra.mxu0 0.0
  %1605 = vmatprep.subr.mxu0 0.0
  %1606 = vmatpush1.msra.mxu0 0.0
  %1607 = vmatprep.subr.mxu0 0.0
  %1608 = vmatpush1.msra.mxu0 0.0
  %1609 = vmatprep.subr.mxu0 0.0
  %1610 = vmatpush1.msra.mxu0 0.0
  %1611 = vmatprep.subr.mxu0 0.0
  %1612 = vmatpush1.msra.mxu0 0.0
  %1613 = vmatprep.subr.mxu0 0.0
  %1614 = vmatpush1.msra.mxu0 0.0
  %1615 = vmatprep.subr.mxu0 0.0
  %1616 = vmatpush1.msra.mxu0 0.0
  %1617 = vmatprep.subr.mxu0 0.0
  %1618 = vmatpush1.msra.mxu0 0.0
  %1619 = vmatprep.subr.mxu0 0.0
  %1620 = vmatpush1.msra.mxu0 0.0
  %1621 = vmatprep.subr.mxu0 0.0
  %1622 = vmatpush1.msra.mxu0 0.0
  %1623 = vmatprep.subr.mxu0 0.0
  %1624 = vmatpush1.msra.mxu0 0.0
  %1625 = vmatprep.subr.mxu0 0.0
  %1626 = vmatpush1.msra.mxu0 0.0
  %1627 = vmatprep.mubr.f32.mxu0 0.0
  %1628 = vmatmul.mubr.f32.gmra.mrb[0].mxu0 %v1558
  %v1629 = vpop.f32.mrb[0].mxu0
  %v1630 = vadd.f32 %v1547, %v1629
  %v1631 = vpop.f32.mrb[0].mxu0
  %v1632 = vadd.f32 %v1549, %v1631
  %1633 = vmatprep.mubr.f32.mxu0 0.0
  %1634 = vmatmul.mubr.f32.gmra.mrb[0].mxu0 %v1561
  %v1635 = vpop.f32.mrb[0].mxu0
  %v1636 = vadd.f32 %v1553, %v1635
  %v1637 = vpop.f32.mrb[0].mxu0
  %v1638 = vadd.f32 %v1555, %v1637
  %1639 = vdwg.mxu0
  %s1640 = scalar_lea.vmem %s2, 512
  %v1641 = vld [vmem:[%s1640] sm:$0xff]
  %v1642 = vld [vmem:[%s1640 + $0x8] sm:$0xff]
  %v1643 = vld [vmem:[%s1640 + $0x10] sm:$0xff]
  %v1644 = vld [vmem:[%s1640 + $0x18] sm:$0xff]
  %v1645 = vld [vmem:[%s1640 + $0x20] sm:$0xff]
  %v1646 = vld [vmem:[%s1640 + $0x28] sm:$0xff]
  %v1647 = vld [vmem:[%s1640 + $0x30] sm:$0xff]
  %v1648 = vld [vmem:[%s1640 + $0x38] sm:$0xff]
  %v1649 = vld [vmem:[%s1640 + $0x40] sm:$0xff]
  %v1650 = vld [vmem:[%s1640 + $0x48] sm:$0xff]
  %v1651 = vld [vmem:[%s1640 + $0x50] sm:$0xff]
  %v1652 = vld [vmem:[%s1640 + $0x58] sm:$0xff]
  %v1653 = vld [vmem:[%s1640 + $0x60] sm:$0xff]
  %v1654 = vld [vmem:[%s1640 + $0x68] sm:$0xff]
  %v1655 = vld [vmem:[%s1640 + $0x70] sm:$0xff]
  %v1656 = vld [vmem:[%s1640 + $0x78] sm:$0xff]
  %v1657 = vld [vmem:[%s1640 + $0x80] sm:$0xff]
  %v1658 = vld [vmem:[%s1640 + $0x88] sm:$0xff]
  %v1659 = vld [vmem:[%s1640 + $0x90] sm:$0xff]
  %v1660 = vld [vmem:[%s1640 + $0x98] sm:$0xff]
  %v1661 = vld [vmem:[%s1640 + $0xa0] sm:$0xff]
  %v1662 = vld [vmem:[%s1640 + $0xa8] sm:$0xff]
  %v1663 = vld [vmem:[%s1640 + $0xb0] sm:$0xff]
  %v1664 = vld [vmem:[%s1640 + $0xb8] sm:$0xff]
  %v1665 = vld [vmem:[%s1640 + $0xc0] sm:$0xff]
  %v1666 = vld [vmem:[%s1640 + $0xc8] sm:$0xff]
  %v1667 = vld [vmem:[%s1640 + $0xd0] sm:$0xff]
  %v1668 = vld [vmem:[%s1640 + $0xd8] sm:$0xff]
  %v1669 = vld [vmem:[%s1640 + $0xe0] sm:$0xff]
  %v1670 = vld [vmem:[%s1640 + $0xe8] sm:$0xff]
  %v1671 = vld [vmem:[%s1640 + $0xf0] sm:$0xff]
  %v1672 = vld [vmem:[%s1640 + $0xf8] sm:$0xff]
  %s1673 = scalar_lea.vmem %s3, 2
  %v1674 = vld [vmem:[%s1673] sm:$0x1]
  %v1676 = vlaneseq
  %v1677 = vshrl.u32 %v1676, 7
  %v1678 = vsub.s32 0, %v1677
  %v1679 = vrot.slane %v1674, %v1678
  %1681 = vmatprep.subr.mxu0 0.0
  %1682 = vmatpush1.msra.mxu0 %v1641
  %1683 = vmatprep.subr.mxu0 0.0
  %1684 = vmatpush1.msra.mxu0 %v1642
  %1685 = vmatprep.subr.mxu0 0.0
  %1686 = vmatpush1.msra.mxu0 %v1643
  %1687 = vmatprep.subr.mxu0 0.0
  %1688 = vmatpush1.msra.mxu0 %v1644
  %1689 = vmatprep.subr.mxu0 0.0
  %1690 = vmatpush1.msra.mxu0 %v1645
  %1691 = vmatprep.subr.mxu0 0.0
  %1692 = vmatpush1.msra.mxu0 %v1646
  %1693 = vmatprep.subr.mxu0 0.0
  %1694 = vmatpush1.msra.mxu0 %v1647
  %1695 = vmatprep.subr.mxu0 0.0
  %1696 = vmatpush1.msra.mxu0 %v1648
  %1697 = vmatprep.subr.mxu0 0.0
  %1698 = vmatpush1.msra.mxu0 %v1649
  %1699 = vmatprep.subr.mxu0 0.0
  %1700 = vmatpush1.msra.mxu0 %v1650
  %1701 = vmatprep.subr.mxu0 0.0
  %1702 = vmatpush1.msra.mxu0 %v1651
  %1703 = vmatprep.subr.mxu0 0.0
  %1704 = vmatpush1.msra.mxu0 %v1652
  %1705 = vmatprep.subr.mxu0 0.0
  %1706 = vmatpush1.msra.mxu0 %v1653
  %1707 = vmatprep.subr.mxu0 0.0
  %1708 = vmatpush1.msra.mxu0 %v1654
  %1709 = vmatprep.subr.mxu0 0.0
  %1710 = vmatpush1.msra.mxu0 %v1655
  %1711 = vmatprep.subr.mxu0 0.0
  %1712 = vmatpush1.msra.mxu0 %v1656
  %1713 = vmatprep.subr.mxu0 0.0
  %1714 = vmatpush1.msra.mxu0 %v1657
  %1715 = vmatprep.subr.mxu0 0.0
  %1716 = vmatpush1.msra.mxu0 %v1658
  %1717 = vmatprep.subr.mxu0 0.0
  %1718 = vmatpush1.msra.mxu0 %v1659
  %1719 = vmatprep.subr.mxu0 0.0
  %1720 = vmatpush1.msra.mxu0 %v1660
  %1721 = vmatprep.subr.mxu0 0.0
  %1722 = vmatpush1.msra.mxu0 %v1661
  %1723 = vmatprep.subr.mxu0 0.0
  %1724 = vmatpush1.msra.mxu0 %v1662
  %1725 = vmatprep.subr.mxu0 0.0
  %1726 = vmatpush1.msra.mxu0 %v1663
  %1727 = vmatprep.subr.mxu0 0.0
  %1728 = vmatpush1.msra.mxu0 %v1664
  %1729 = vmatprep.subr.mxu0 0.0
  %1730 = vmatpush1.msra.mxu0 %v1665
  %1731 = vmatprep.subr.mxu0 0.0
  %1732 = vmatpush1.msra.mxu0 %v1666
  %1733 = vmatprep.subr.mxu0 0.0
  %1734 = vmatpush1.msra.mxu0 %v1667
  %1735 = vmatprep.subr.mxu0 0.0
  %1736 = vmatpush1.msra.mxu0 %v1668
  %1737 = vmatprep.subr.mxu0 0.0
  %1738 = vmatpush1.msra.mxu0 %v1669
  %1739 = vmatprep.subr.mxu0 0.0
  %1740 = vmatpush1.msra.mxu0 %v1670
  %1741 = vmatprep.subr.mxu0 0.0
  %1742 = vmatpush1.msra.mxu0 %v1671
  %1743 = vmatprep.subr.mxu0 0.0
  %1744 = vmatpush1.msra.mxu0 %v1672
  %1745 = vmatprep.mubr.f32.mxu0 %v42
  %1746 = vmatmul.mubr.f32.gmra.mrb[0].mxu0 %v41
  %v1747 = vpop.f32.mrb[0].mxu0
  %v1748 = vadd.f32 %v1679, %v1747
  %v1749 = vpop.f32.mrb[0].mxu0
  %1750 = vmatprep.mubr.f32.mxu0 %v44
  %1751 = vmatmul.mubr.f32.gmra.mrb[0].mxu0 %v43
  %v1752 = vpop.f32.mrb[0].mxu0
  %v1753 = vadd.f32 %v1679, %v1752
  %v1754 = vpop.f32.mrb[0].mxu0
  %1755 = vdwg.mxu0
  %s1756 = scalar_lea.vmem %s4, 512
  %v1757 = vld [vmem:[%s1756] sm:$0xff]
  %v1758 = vld [vmem:[%s1756 + $0x8] sm:$0xff]
  %v1759 = vld [vmem:[%s1756 + $0x10] sm:$0xff]
  %v1760 = vld [vmem:[%s1756 + $0x18] sm:$0xff]
  %v1761 = vld [vmem:[%s1756 + $0x20] sm:$0xff]
  %v1762 = vld [vmem:[%s1756 + $0x28] sm:$0xff]
  %v1763 = vld [vmem:[%s1756 + $0x30] sm:$0xff]
  %v1764 = vld [vmem:[%s1756 + $0x38] sm:$0xff]
  %v1765 = vld [vmem:[%s1756 + $0x40] sm:$0xff]
  %v1766 = vld [vmem:[%s1756 + $0x48] sm:$0xff]
  %v1767 = vld [vmem:[%s1756 + $0x50] sm:$0xff]
  %v1768 = vld [vmem:[%s1756 + $0x58] sm:$0xff]
  %v1769 = vld [vmem:[%s1756 + $0x60] sm:$0xff]
  %v1770 = vld [vmem:[%s1756 + $0x68] sm:$0xff]
  %v1771 = vld [vmem:[%s1756 + $0x70] sm:$0xff]
  %v1772 = vld [vmem:[%s1756 + $0x78] sm:$0xff]
  %v1773 = vld [vmem:[%s1756 + $0x80] sm:$0xff]
  %v1774 = vld [vmem:[%s1756 + $0x88] sm:$0xff]
  %v1775 = vld [vmem:[%s1756 + $0x90] sm:$0xff]
  %v1776 = vld [vmem:[%s1756 + $0x98] sm:$0xff]
  %v1777 = vld [vmem:[%s1756 + $0xa0] sm:$0xff]
  %v1778 = vld [vmem:[%s1756 + $0xa8] sm:$0xff]
  %v1779 = vld [vmem:[%s1756 + $0xb0] sm:$0xff]
  %v1780 = vld [vmem:[%s1756 + $0xb8] sm:$0xff]
  %v1781 = vld [vmem:[%s1756 + $0xc0] sm:$0xff]
  %v1782 = vld [vmem:[%s1756 + $0xc8] sm:$0xff]
  %v1783 = vld [vmem:[%s1756 + $0xd0] sm:$0xff]
  %v1784 = vld [vmem:[%s1756 + $0xd8] sm:$0xff]
  %v1785 = vld [vmem:[%s1756 + $0xe0] sm:$0xff]
  %v1786 = vld [vmem:[%s1756 + $0xe8] sm:$0xff]
  %v1787 = vld [vmem:[%s1756 + $0xf0] sm:$0xff]
  %v1788 = vld [vmem:[%s1756 + $0xf8] sm:$0xff]
  %s1789 = scalar_lea.vmem %s5, 2
  %v1790 = vld [vmem:[%s1789] sm:$0x1]
  %v1792 = vlaneseq
  %v1793 = vshrl.u32 %v1792, 7
  %v1794 = vsub.s32 0, %v1793
  %v1795 = vrot.slane %v1790, %v1794
  %1797 = vmatprep.subr.mxu0 0.0
  %1798 = vmatpush1.msra.mxu0 %v1757
  %1799 = vmatprep.subr.mxu0 0.0
  %1800 = vmatpush1.msra.mxu0 %v1758
  %1801 = vmatprep.subr.mxu0 0.0
  %1802 = vmatpush1.msra.mxu0 %v1759
  %1803 = vmatprep.subr.mxu0 0.0
  %1804 = vmatpush1.msra.mxu0 %v1760
  %1805 = vmatprep.subr.mxu0 0.0
  %1806 = vmatpush1.msra.mxu0 %v1761
  %1807 = vmatprep.subr.mxu0 0.0
  %1808 = vmatpush1.msra.mxu0 %v1762
  %1809 = vmatprep.subr.mxu0 0.0
  %1810 = vmatpush1.msra.mxu0 %v1763
  %1811 = vmatprep.subr.mxu0 0.0
  %1812 = vmatpush1.msra.mxu0 %v1764
  %1813 = vmatprep.subr.mxu0 0.0
  %1814 = vmatpush1.msra.mxu0 %v1765
  %1815 = vmatprep.subr.mxu0 0.0
  %1816 = vmatpush1.msra.mxu0 %v1766
  %1817 = vmatprep.subr.mxu0 0.0
  %1818 = vmatpush1.msra.mxu0 %v1767
  %1819 = vmatprep.subr.mxu0 0.0
  %1820 = vmatpush1.msra.mxu0 %v1768
  %1821 = vmatprep.subr.mxu0 0.0
  %1822 = vmatpush1.msra.mxu0 %v1769
  %1823 = vmatprep.subr.mxu0 0.0
  %1824 = vmatpush1.msra.mxu0 %v1770
  %1825 = vmatprep.subr.mxu0 0.0
  %1826 = vmatpush1.msra.mxu0 %v1771
  %1827 = vmatprep.subr.mxu0 0.0
  %1828 = vmatpush1.msra.mxu0 %v1772
  %1829 = vmatprep.subr.mxu0 0.0
  %1830 = vmatpush1.msra.mxu0 %v1773
  %1831 = vmatprep.subr.mxu0 0.0
  %1832 = vmatpush1.msra.mxu0 %v1774
  %1833 = vmatprep.subr.mxu0 0.0
  %1834 = vmatpush1.msra.mxu0 %v1775
  %1835 = vmatprep.subr.mxu0 0.0
  %1836 = vmatpush1.msra.mxu0 %v1776
  %1837 = vmatprep.subr.mxu0 0.0
  %1838 = vmatpush1.msra.mxu0 %v1777
  %1839 = vmatprep.subr.mxu0 0.0
  %1840 = vmatpush1.msra.mxu0 %v1778
  %1841 = vmatprep.subr.mxu0 0.0
  %1842 = vmatpush1.msra.mxu0 %v1779
  %1843 = vmatprep.subr.mxu0 0.0
  %1844 = vmatpush1.msra.mxu0 %v1780
  %1845 = vmatprep.subr.mxu0 0.0
  %1846 = vmatpush1.msra.mxu0 %v1781
  %1847 = vmatprep.subr.mxu0 0.0
  %1848 = vmatpush1.msra.mxu0 %v1782
  %1849 = vmatprep.subr.mxu0 0.0
  %1850 = vmatpush1.msra.mxu0 %v1783
  %1851 = vmatprep.subr.mxu0 0.0
  %1852 = vmatpush1.msra.mxu0 %v1784
  %1853 = vmatprep.subr.mxu0 0.0
  %1854 = vmatpush1.msra.mxu0 %v1785
  %1855 = vmatprep.subr.mxu0 0.0
  %1856 = vmatpush1.msra.mxu0 %v1786
  %1857 = vmatprep.subr.mxu0 0.0
  %1858 = vmatpush1.msra.mxu0 %v1787
  %1859 = vmatprep.subr.mxu0 0.0
  %1860 = vmatpush1.msra.mxu0 %v1788
  %1861 = vmatprep.mubr.f32.mxu0 %v46
  %1862 = vmatmul.mubr.f32.gmra.mrb[0].mxu0 %v45
  %v1863 = vpop.f32.mrb[0].mxu0
  %v1864 = vadd.f32 %v1795, %v1863
  %v1865 = vpop.f32.mrb[0].mxu0
  %1866 = vmatprep.mubr.f32.mxu0 %v48
  %1867 = vmatmul.mubr.f32.gmra.mrb[0].mxu0 %v47
  %v1868 = vpop.f32.mrb[0].mxu0
  %v1869 = vadd.f32 %v1795, %v1868
  %v1870 = vpop.f32.mrb[0].mxu0
  %1871 = vmatprep.mubr.f32.mxu0 %v50
  %1872 = vmatmul.mubr.f32.gmra.mrb[0].mxu0 %v49
  %v1873 = vpop.f32.mrb[0].mxu0
  %v1874 = vadd.f32 %v1795, %v1873
  %v1875 = vpop.f32.mrb[0].mxu0
  %1876 = vmatprep.mubr.f32.mxu0 %v52
  %1877 = vmatmul.mubr.f32.gmra.mrb[0].mxu0 %v51
  %v1878 = vpop.f32.mrb[0].mxu0
  %v1879 = vadd.f32 %v1795, %v1878
  %v1880 = vpop.f32.mrb[0].mxu0
  %1881 = vdwg.mxu0
  %s1882 = scalar_lea.vmem %s6, 512
  %v1883 = vld [vmem:[%s1882] sm:$0xff]
  %v1884 = vld [vmem:[%s1882 + $0x8] sm:$0xff]
  %v1885 = vld [vmem:[%s1882 + $0x10] sm:$0xff]
  %v1886 = vld [vmem:[%s1882 + $0x18] sm:$0xff]
  %v1887 = vld [vmem:[%s1882 + $0x20] sm:$0xff]
  %v1888 = vld [vmem:[%s1882 + $0x28] sm:$0xff]
  %v1889 = vld [vmem:[%s1882 + $0x30] sm:$0xff]
  %v1890 = vld [vmem:[%s1882 + $0x38] sm:$0xff]
  %v1891 = vld [vmem:[%s1882 + $0x40] sm:$0xff]
  %v1892 = vld [vmem:[%s1882 + $0x48] sm:$0xff]
  %v1893 = vld [vmem:[%s1882 + $0x50] sm:$0xff]
  %v1894 = vld [vmem:[%s1882 + $0x58] sm:$0xff]
  %v1895 = vld [vmem:[%s1882 + $0x60] sm:$0xff]
  %v1896 = vld [vmem:[%s1882 + $0x68] sm:$0xff]
  %v1897 = vld [vmem:[%s1882 + $0x70] sm:$0xff]
  %v1898 = vld [vmem:[%s1882 + $0x78] sm:$0xff]
  %v1899 = vld [vmem:[%s1882 + $0x80] sm:$0xff]
  %v1900 = vld [vmem:[%s1882 + $0x88] sm:$0xff]
  %v1901 = vld [vmem:[%s1882 + $0x90] sm:$0xff]
  %v1902 = vld [vmem:[%s1882 + $0x98] sm:$0xff]
  %v1903 = vld [vmem:[%s1882 + $0xa0] sm:$0xff]
  %v1904 = vld [vmem:[%s1882 + $0xa8] sm:$0xff]
  %v1905 = vld [vmem:[%s1882 + $0xb0] sm:$0xff]
  %v1906 = vld [vmem:[%s1882 + $0xb8] sm:$0xff]
  %v1907 = vld [vmem:[%s1882 + $0xc0] sm:$0xff]
  %v1908 = vld [vmem:[%s1882 + $0xc8] sm:$0xff]
  %v1909 = vld [vmem:[%s1882 + $0xd0] sm:$0xff]
  %v1910 = vld [vmem:[%s1882 + $0xd8] sm:$0xff]
  %v1911 = vld [vmem:[%s1882 + $0xe0] sm:$0xff]
  %v1912 = vld [vmem:[%s1882 + $0xe8] sm:$0xff]
  %v1913 = vld [vmem:[%s1882 + $0xf0] sm:$0xff]
  %v1914 = vld [vmem:[%s1882 + $0xf8] sm:$0xff]
  %s1915 = scalar_lea.vmem %s7, 2
  %v1916 = vld [vmem:[%s1915] sm:$0x1]
  %v1918 = vlaneseq
  %v1919 = vshrl.u32 %v1918, 7
  %v1920 = vsub.s32 0, %v1919
  %v1921 = vrot.slane %v1916, %v1920
  %1923 = vmatprep.subr.mxu0 0.0
  %1924 = vmatpush1.msra.mxu0 %v1883
  %1925 = vmatprep.subr.mxu0 0.0
  %1926 = vmatpush1.msra.mxu0 %v1884
  %1927 = vmatprep.subr.mxu0 0.0
  %1928 = vmatpush1.msra.mxu0 %v1885
  %1929 = vmatprep.subr.mxu0 0.0
  %1930 = vmatpush1.msra.mxu0 %v1886
  %1931 = vmatprep.subr.mxu0 0.0
  %1932 = vmatpush1.msra.mxu0 %v1887
  %1933 = vmatprep.subr.mxu0 0.0
  %1934 = vmatpush1.msra.mxu0 %v1888
  %1935 = vmatprep.subr.mxu0 0.0
  %1936 = vmatpush1.msra.mxu0 %v1889
  %1937 = vmatprep.subr.mxu0 0.0
  %1938 = vmatpush1.msra.mxu0 %v1890
  %1939 = vmatprep.subr.mxu0 0.0
  %1940 = vmatpush1.msra.mxu0 %v1891
  %1941 = vmatprep.subr.mxu0 0.0
  %1942 = vmatpush1.msra.mxu0 %v1892
  %1943 = vmatprep.subr.mxu0 0.0
  %1944 = vmatpush1.msra.mxu0 %v1893
  %1945 = vmatprep.subr.mxu0 0.0
  %1946 = vmatpush1.msra.mxu0 %v1894
  %1947 = vmatprep.subr.mxu0 0.0
  %1948 = vmatpush1.msra.mxu0 %v1895
  %1949 = vmatprep.subr.mxu0 0.0
  %1950 = vmatpush1.msra.mxu0 %v1896
  %1951 = vmatprep.subr.mxu0 0.0
  %1952 = vmatpush1.msra.mxu0 %v1897
  %1953 = vmatprep.subr.mxu0 0.0
  %1954 = vmatpush1.msra.mxu0 %v1898
  %1955 = vmatprep.subr.mxu0 0.0
  %1956 = vmatpush1.msra.mxu0 %v1899
  %1957 = vmatprep.subr.mxu0 0.0
  %1958 = vmatpush1.msra.mxu0 %v1900
  %1959 = vmatprep.subr.mxu0 0.0
  %1960 = vmatpush1.msra.mxu0 %v1901
  %1961 = vmatprep.subr.mxu0 0.0
  %1962 = vmatpush1.msra.mxu0 %v1902
  %1963 = vmatprep.subr.mxu0 0.0
  %1964 = vmatpush1.msra.mxu0 %v1903
  %1965 = vmatprep.subr.mxu0 0.0
  %1966 = vmatpush1.msra.mxu0 %v1904
  %1967 = vmatprep.subr.mxu0 0.0
  %1968 = vmatpush1.msra.mxu0 %v1905
  %1969 = vmatprep.subr.mxu0 0.0
  %1970 = vmatpush1.msra.mxu0 %v1906
  %1971 = vmatprep.subr.mxu0 0.0
  %1972 = vmatpush1.msra.mxu0 %v1907
  %1973 = vmatprep.subr.mxu0 0.0
  %1974 = vmatpush1.msra.mxu0 %v1908
  %1975 = vmatprep.subr.mxu0 0.0
  %1976 = vmatpush1.msra.mxu0 %v1909
  %1977 = vmatprep.subr.mxu0 0.0
  %1978 = vmatpush1.msra.mxu0 %v1910
  %1979 = vmatprep.subr.mxu0 0.0
  %1980 = vmatpush1.msra.mxu0 %v1911
  %1981 = vmatprep.subr.mxu0 0.0
  %1982 = vmatpush1.msra.mxu0 %v1912
  %1983 = vmatprep.subr.mxu0 0.0
  %1984 = vmatpush1.msra.mxu0 %v1913
  %1985 = vmatprep.subr.mxu0 0.0
  %1986 = vmatpush1.msra.mxu0 %v1914
  %1987 = vmatprep.mubr.f32.mxu0 %v46
  %1988 = vmatmul.mubr.f32.gmra.mrb[0].mxu0 %v45
  %v1989 = vpop.f32.mrb[0].mxu0
  %v1990 = vadd.f32 %v1921, %v1989
  %v1991 = vpop.f32.mrb[0].mxu0
  %1992 = vmatprep.mubr.f32.mxu0 %v48
  %1993 = vmatmul.mubr.f32.gmra.mrb[0].mxu0 %v47
  %v1994 = vpop.f32.mrb[0].mxu0
  %v1995 = vadd.f32 %v1921, %v1994
  %v1996 = vpop.f32.mrb[0].mxu0
  %1997 = vmatprep.mubr.f32.mxu0 %v50
  %1998 = vmatmul.mubr.f32.gmra.mrb[0].mxu0 %v49
  %v1999 = vpop.f32.mrb[0].mxu0
  %v2000 = vadd.f32 %v1921, %v1999
  %v2001 = vpop.f32.mrb[0].mxu0
  %2002 = vmatprep.mubr.f32.mxu0 %v52
  %2003 = vmatmul.mubr.f32.gmra.mrb[0].mxu0 %v51
  %v2004 = vpop.f32.mrb[0].mxu0
  %v2005 = vadd.f32 %v1921, %v2004
  %v2006 = vpop.f32.mrb[0].mxu0
  %2007 = vdwg.mxu0
  %v2009 = vsel %vm415, %v1748, 0
  %v2012 = vsel %vm415, %v1864, 0
  %v2015 = vsel %vm415, %v1869, 0
  %2017 = vmatprep.subr.mxu0 0.0
  %2018 = vmatpush1.xpose.msra.mxu0 %v2012
  %2019 = vmatprep.subr.mxu0 0.0
  %2020 = vmatpush1.xpose.msra.mxu0 %v2015
  %2021 = vmatprep.subr.mxu0 0.0
  %2022 = vmatpush1.xpose.msra.mxu0 0.0
  %2023 = vmatprep.subr.mxu0 0.0
  %2024 = vmatpush1.xpose.msra.mxu0 0.0
  %2025 = vmatprep.subr.mxu0 0.0
  %2026 = vmatpush1.xpose.msra.mxu0 0.0
  %2027 = vmatprep.subr.mxu0 0.0
  %2028 = vmatpush1.xpose.msra.mxu0 0.0
  %2029 = vmatprep.subr.mxu0 0.0
  %2030 = vmatpush1.xpose.msra.mxu0 0.0
  %2031 = vmatprep.subr.mxu0 0.0
  %2032 = vmatpush1.xpose.msra.mxu0 0.0
  %2033 = vmatprep.subr.mxu0 0.0
  %2034 = vmatpush1.xpose.msra.mxu0 0.0
  %2035 = vmatprep.subr.mxu0 0.0
  %2036 = vmatpush1.xpose.msra.mxu0 0.0
  %2037 = vmatprep.subr.mxu0 0.0
  %2038 = vmatpush1.xpose.msra.mxu0 0.0
  %2039 = vmatprep.subr.mxu0 0.0
  %2040 = vmatpush1.xpose.msra.mxu0 0.0
  %2041 = vmatprep.subr.mxu0 0.0
  %2042 = vmatpush1.xpose.msra.mxu0 0.0
  %2043 = vmatprep.subr.mxu0 0.0
  %2044 = vmatpush1.xpose.msra.mxu0 0.0
  %2045 = vmatprep.subr.mxu0 0.0
  %2046 = vmatpush1.xpose.msra.mxu0 0.0
  %2047 = vmatprep.subr.mxu0 0.0
  %2048 = vmatpush1.xpose.msra.mxu0 0.0
  %2049 = vmatprep.subr.mxu0 0.0
  %2050 = vmatpush1.xpose.msra.mxu0 0.0
  %2051 = vmatprep.subr.mxu0 0.0
  %2052 = vmatpush1.xpose.msra.mxu0 0.0
  %2053 = vmatprep.subr.mxu0 0.0
  %2054 = vmatpush1.xpose.msra.mxu0 0.0
  %2055 = vmatprep.subr.mxu0 0.0
  %2056 = vmatpush1.xpose.msra.mxu0 0.0
  %2057 = vmatprep.subr.mxu0 0.0
  %2058 = vmatpush1.xpose.msra.mxu0 0.0
  %2059 = vmatprep.subr.mxu0 0.0
  %2060 = vmatpush1.xpose.msra.mxu0 0.0
  %2061 = vmatprep.subr.mxu0 0.0
  %2062 = vmatpush1.xpose.msra.mxu0 0.0
  %2063 = vmatprep.subr.mxu0 0.0
  %2064 = vmatpush1.xpose.msra.mxu0 0.0
  %2065 = vmatprep.subr.mxu0 0.0
  %2066 = vmatpush1.xpose.msra.mxu0 0.0
  %2067 = vmatprep.subr.mxu0 0.0
  %2068 = vmatpush1.xpose.msra.mxu0 0.0
  %2069 = vmatprep.subr.mxu0 0.0
  %2070 = vmatpush1.xpose.msra.mxu0 0.0
  %2071 = vmatprep.subr.mxu0 0.0
  %2072 = vmatpush1.xpose.msra.mxu0 0.0
  %2073 = vmatprep.subr.mxu0 0.0
  %2074 = vmatpush1.xpose.msra.mxu0 0.0
  %2075 = vmatprep.subr.mxu0 0.0
  %2076 = vmatpush1.xpose.msra.mxu0 0.0
  %2077 = vmatprep.subr.mxu0 0.0
  %2078 = vmatpush1.xpose.msra.mxu0 0.0
  %2079 = vmatprep.subr.mxu0 0.0
  %2080 = vmatpush1.xpose.msra.mxu0 0.0
  %2081 = vmatprep.mubr.f32.mxu0 0.0
  %2082 = vmatmul.mubr.f32.gmra.mrb[0].mxu0 %v2009
  %v2083 = vpop.f32.mrb[0].mxu0
  %v2084 = vadd.f32 0.0, %v2083
  %v2085 = vpop.f32.mrb[0].mxu0
  %2086 = vdwg.mxu0
  %v2088 = vsel %vm415, %v1753, 0
  %v2091 = vsel %vm415, %v1874, 0
  %v2094 = vsel %vm415, %v1879, 0
  %2096 = vmatprep.subr.mxu0 0.0
  %2097 = vmatpush1.xpose.msra.mxu0 %v2091
  %2098 = vmatprep.subr.mxu0 0.0
  %2099 = vmatpush1.xpose.msra.mxu0 %v2094
  %2100 = vmatprep.subr.mxu0 0.0
  %2101 = vmatpush1.xpose.msra.mxu0 0.0
  %2102 = vmatprep.subr.mxu0 0.0
  %2103 = vmatpush1.xpose.msra.mxu0 0.0
  %2104 = vmatprep.subr.mxu0 0.0
  %2105 = vmatpush1.xpose.msra.mxu0 0.0
  %2106 = vmatprep.subr.mxu0 0.0
  %2107 = vmatpush1.xpose.msra.mxu0 0.0
  %2108 = vmatprep.subr.mxu0 0.0
  %2109 = vmatpush1.xpose.msra.mxu0 0.0
  %2110 = vmatprep.subr.mxu0 0.0
  %2111 = vmatpush1.xpose.msra.mxu0 0.0
  %2112 = vmatprep.subr.mxu0 0.0
  %2113 = vmatpush1.xpose.msra.mxu0 0.0
  %2114 = vmatprep.subr.mxu0 0.0
  %2115 = vmatpush1.xpose.msra.mxu0 0.0
  %2116 = vmatprep.subr.mxu0 0.0
  %2117 = vmatpush1.xpose.msra.mxu0 0.0
  %2118 = vmatprep.subr.mxu0 0.0
  %2119 = vmatpush1.xpose.msra.mxu0 0.0
  %2120 = vmatprep.subr.mxu0 0.0
  %2121 = vmatpush1.xpose.msra.mxu0 0.0
  %2122 = vmatprep.subr.mxu0 0.0
  %2123 = vmatpush1.xpose.msra.mxu0 0.0
  %2124 = vmatprep.subr.mxu0 0.0
  %2125 = vmatpush1.xpose.msra.mxu0 0.0
  %2126 = vmatprep.subr.mxu0 0.0
  %2127 = vmatpush1.xpose.msra.mxu0 0.0
  %2128 = vmatprep.subr.mxu0 0.0
  %2129 = vmatpush1.xpose.msra.mxu0 0.0
  %2130 = vmatprep.subr.mxu0 0.0
  %2131 = vmatpush1.xpose.msra.mxu0 0.0
  %2132 = vmatprep.subr.mxu0 0.0
  %2133 = vmatpush1.xpose.msra.mxu0 0.0
  %2134 = vmatprep.subr.mxu0 0.0
  %2135 = vmatpush1.xpose.msra.mxu0 0.0
  %2136 = vmatprep.subr.mxu0 0.0
  %2137 = vmatpush1.xpose.msra.mxu0 0.0
  %2138 = vmatprep.subr.mxu0 0.0
  %2139 = vmatpush1.xpose.msra.mxu0 0.0
  %2140 = vmatprep.subr.mxu0 0.0
  %2141 = vmatpush1.xpose.msra.mxu0 0.0
  %2142 = vmatprep.subr.mxu0 0.0
  %2143 = vmatpush1.xpose.msra.mxu0 0.0
  %2144 = vmatprep.subr.mxu0 0.0
  %2145 = vmatpush1.xpose.msra.mxu0 0.0
  %2146 = vmatprep.subr.mxu0 0.0
  %2147 = vmatpush1.xpose.msra.mxu0 0.0
  %2148 = vmatprep.subr.mxu0 0.0
  %2149 = vmatpush1.xpose.msra.mxu0 0.0
  %2150 = vmatprep.subr.mxu0 0.0
  %2151 = vmatpush1.xpose.msra.mxu0 0.0
  %2152 = vmatprep.subr.mxu0 0.0
  %2153 = vmatpush1.xpose.msra.mxu0 0.0
  %2154 = vmatprep.subr.mxu0 0.0
  %2155 = vmatpush1.xpose.msra.mxu0 0.0
  %2156 = vmatprep.subr.mxu0 0.0
  %2157 = vmatpush1.xpose.msra.mxu0 0.0
  %2158 = vmatprep.subr.mxu0 0.0
  %2159 = vmatpush1.xpose.msra.mxu0 0.0
  %2160 = vmatprep.mubr.f32.mxu0 0.0
  %2161 = vmatmul.mubr.f32.gmra.mrb[0].mxu0 %v2088
  %v2162 = vpop.f32.mrb[0].mxu0
  %v2163 = vadd.f32 0.0, %v2162
  %v2164 = vpop.f32.mrb[0].mxu0
  %2165 = vdwg.mxu0
  %v2166 = vmul.f32 %v2084, 0.125
  %v2167 = vmul.f32 %v2163, 0.125
  %v2168 = vsel %vm576, %v2166, -inf
  %2169 = vmax.xlane.f32.xlu0 %v2168
  %v2170 = vpop.xlane.xlu0 %2169
  %v2171 = vsel %vm576, %v2167, -inf
  %2172 = vmax.xlane.f32.xlu0 %v2171
  %v2173 = vpop.xlane.xlu0 %2172
  %v2174 = vsub.f32 %v2166, %v2170
  %v2175 = vsub.f32 %v2167, %v2173
  %v2176 = vmul.f32 %v2174, 1.442695
  %v2177 = vpow.pop %v2176
  %v2178 = vmul.f32 %v2175, 1.442695
  %v2179 = vpow.pop %v2178
  %v2180 = vsel %vm576, %v2177, 0.0
  %2181 = vadd.xlane.f32.xlu0 %v2180
  %v2182 = vpop.xlane.xlu0 %2181
  %v2183 = vsel %vm576, %v2179, 0.0
  %2184 = vadd.xlane.f32.xlu0 %v2183
  %v2185 = vpop.xlane.xlu0 %2184
  %v2186 = vrcp.pop %v2182
  %v2187 = vrcp.pop %v2185
  %v2188 = vmul.f32 %v2177, %v2186
  %v2189 = vmul.f32 %v2179, %v2187
  %v2191 = vsel %vm576, %v2188, 0
  %2193 = vmatprep.subr.mxu0 0.0
  %2194 = vmatpush1.msra.mxu0 %v1990
  %2195 = vmatprep.subr.mxu0 0.0
  %2196 = vmatpush1.msra.mxu0 %v1995
  %2197 = vmatprep.subr.mxu0 0.0
  %2198 = vmatpush1.msra.mxu0 0.0
  %2199 = vmatprep.subr.mxu0 0.0
  %2200 = vmatpush1.msra.mxu0 0.0
  %2201 = vmatprep.subr.mxu0 0.0
  %2202 = vmatpush1.msra.mxu0 0.0
  %2203 = vmatprep.subr.mxu0 0.0
  %2204 = vmatpush1.msra.mxu0 0.0
  %2205 = vmatprep.subr.mxu0 0.0
  %2206 = vmatpush1.msra.mxu0 0.0
  %2207 = vmatprep.subr.mxu0 0.0
  %2208 = vmatpush1.msra.mxu0 0.0
  %2209 = vmatprep.subr.mxu0 0.0
  %2210 = vmatpush1.msra.mxu0 0.0
  %2211 = vmatprep.subr.mxu0 0.0
  %2212 = vmatpush1.msra.mxu0 0.0
  %2213 = vmatprep.subr.mxu0 0.0
  %2214 = vmatpush1.msra.mxu0 0.0
  %2215 = vmatprep.subr.mxu0 0.0
  %2216 = vmatpush1.msra.mxu0 0.0
  %2217 = vmatprep.subr.mxu0 0.0
  %2218 = vmatpush1.msra.mxu0 0.0
  %2219 = vmatprep.subr.mxu0 0.0
  %2220 = vmatpush1.msra.mxu0 0.0
  %2221 = vmatprep.subr.mxu0 0.0
  %2222 = vmatpush1.msra.mxu0 0.0
  %2223 = vmatprep.subr.mxu0 0.0
  %2224 = vmatpush1.msra.mxu0 0.0
  %2225 = vmatprep.subr.mxu0 0.0
  %2226 = vmatpush1.msra.mxu0 0.0
  %2227 = vmatprep.subr.mxu0 0.0
  %2228 = vmatpush1.msra.mxu0 0.0
  %2229 = vmatprep.subr.mxu0 0.0
  %2230 = vmatpush1.msra.mxu0 0.0
  %2231 = vmatprep.subr.mxu0 0.0
  %2232 = vmatpush1.msra.mxu0 0.0
  %2233 = vmatprep.subr.mxu0 0.0
  %2234 = vmatpush1.msra.mxu0 0.0
  %2235 = vmatprep.subr.mxu0 0.0
  %2236 = vmatpush1.msra.mxu0 0.0
  %2237 = vmatprep.subr.mxu0 0.0
  %2238 = vmatpush1.msra.mxu0 0.0
  %2239 = vmatprep.subr.mxu0 0.0
  %2240 = vmatpush1.msra.mxu0 0.0
  %2241 = vmatprep.subr.mxu0 0.0
  %2242 = vmatpush1.msra.mxu0 0.0
  %2243 = vmatprep.subr.mxu0 0.0
  %2244 = vmatpush1.msra.mxu0 0.0
  %2245 = vmatprep.subr.mxu0 0.0
  %2246 = vmatpush1.msra.mxu0 0.0
  %2247 = vmatprep.subr.mxu0 0.0
  %2248 = vmatpush1.msra.mxu0 0.0
  %2249 = vmatprep.subr.mxu0 0.0
  %2250 = vmatpush1.msra.mxu0 0.0
  %2251 = vmatprep.subr.mxu0 0.0
  %2252 = vmatpush1.msra.mxu0 0.0
  %2253 = vmatprep.subr.mxu0 0.0
  %2254 = vmatpush1.msra.mxu0 0.0
  %2255 = vmatprep.subr.mxu0 0.0
  %2256 = vmatpush1.msra.mxu0 0.0
  %2257 = vmatprep.mubr.f32.mxu0 0.0
  %2258 = vmatmul.mubr.f32.gmra.mrb[0].mxu0 %v2191
  %v2259 = vpop.f32.mrb[0].mxu0
  %v2260 = vadd.f32 0.0, %v2259
  %v2261 = vpop.f32.mrb[0].mxu0
  %2262 = vdwg.mxu0
  %v2264 = vsel %vm576, %v2189, 0
  %2266 = vmatprep.subr.mxu0 0.0
  %2267 = vmatpush1.msra.mxu0 %v2000
  %2268 = vmatprep.subr.mxu0 0.0
  %2269 = vmatpush1.msra.mxu0 %v2005
  %2270 = vmatprep.subr.mxu0 0.0
  %2271 = vmatpush1.msra.mxu0 0.0
  %2272 = vmatprep.subr.mxu0 0.0
  %2273 = vmatpush1.msra.mxu0 0.0
  %2274 = vmatprep.subr.mxu0 0.0
  %2275 = vmatpush1.msra.mxu0 0.0
  %2276 = vmatprep.subr.mxu0 0.0
  %2277 = vmatpush1.msra.mxu0 0.0
  %2278 = vmatprep.subr.mxu0 0.0
  %2279 = vmatpush1.msra.mxu0 0.0
  %2280 = vmatprep.subr.mxu0 0.0
  %2281 = vmatpush1.msra.mxu0 0.0
  %2282 = vmatprep.subr.mxu0 0.0
  %2283 = vmatpush1.msra.mxu0 0.0
  %2284 = vmatprep.subr.mxu0 0.0
  %2285 = vmatpush1.msra.mxu0 0.0
  %2286 = vmatprep.subr.mxu0 0.0
  %2287 = vmatpush1.msra.mxu0 0.0
  %2288 = vmatprep.subr.mxu0 0.0
  %2289 = vmatpush1.msra.mxu0 0.0
  %2290 = vmatprep.subr.mxu0 0.0
  %2291 = vmatpush1.msra.mxu0 0.0
  %2292 = vmatprep.subr.mxu0 0.0
  %2293 = vmatpush1.msra.mxu0 0.0
  %2294 = vmatprep.subr.mxu0 0.0
  %2295 = vmatpush1.msra.mxu0 0.0
  %2296 = vmatprep.subr.mxu0 0.0
  %2297 = vmatpush1.msra.mxu0 0.0
  %2298 = vmatprep.subr.mxu0 0.0
  %2299 = vmatpush1.msra.mxu0 0.0
  %2300 = vmatprep.subr.mxu0 0.0
  %2301 = vmatpush1.msra.mxu0 0.0
  %2302 = vmatprep.subr.mxu0 0.0
  %2303 = vmatpush1.msra.mxu0 0.0
  %2304 = vmatprep.subr.mxu0 0.0
  %2305 = vmatpush1.msra.mxu0 0.0
  %2306 = vmatprep.subr.mxu0 0.0
  %2307 = vmatpush1.msra.mxu0 0.0
  %2308 = vmatprep.subr.mxu0 0.0
  %2309 = vmatpush1.msra.mxu0 0.0
  %2310 = vmatprep.subr.mxu0 0.0
  %2311 = vmatpush1.msra.mxu0 0.0
  %2312 = vmatprep.subr.mxu0 0.0
  %2313 = vmatpush1.msra.mxu0 0.0
  %2314 = vmatprep.subr.mxu0 0.0
  %2315 = vmatpush1.msra.mxu0 0.0
  %2316 = vmatprep.subr.mxu0 0.0
  %2317 = vmatpush1.msra.mxu0 0.0
  %2318 = vmatprep.subr.mxu0 0.0
  %2319 = vmatpush1.msra.mxu0 0.0
  %2320 = vmatprep.subr.mxu0 0.0
  %2321 = vmatpush1.msra.mxu0 0.0
  %2322 = vmatprep.subr.mxu0 0.0
  %2323 = vmatpush1.msra.mxu0 0.0
  %2324 = vmatprep.subr.mxu0 0.0
  %2325 = vmatpush1.msra.mxu0 0.0
  %2326 = vmatprep.subr.mxu0 0.0
  %2327 = vmatpush1.msra.mxu0 0.0
  %2328 = vmatprep.subr.mxu0 0.0
  %2329 = vmatpush1.msra.mxu0 0.0
  %2330 = vmatprep.mubr.f32.mxu0 0.0
  %2331 = vmatmul.mubr.f32.gmra.mrb[0].mxu0 %v2264
  %v2332 = vpop.f32.mrb[0].mxu0
  %v2333 = vadd.f32 0.0, %v2332
  %v2334 = vpop.f32.mrb[0].mxu0
  %2335 = vdwg.mxu0
  %s2336 = scalar_lea.vmem %s8, 256
  %v2337 = vld [vmem:[%s2336] sm:$0xff]
  %v2338 = vld [vmem:[%s2336 + $0x8] sm:$0xff]
  %v2339 = vld [vmem:[%s2336 + $0x10] sm:$0xff]
  %v2340 = vld [vmem:[%s2336 + $0x18] sm:$0xff]
  %v2341 = vld [vmem:[%s2336 + $0x20] sm:$0xff]
  %v2342 = vld [vmem:[%s2336 + $0x28] sm:$0xff]
  %v2343 = vld [vmem:[%s2336 + $0x30] sm:$0xff]
  %v2344 = vld [vmem:[%s2336 + $0x38] sm:$0xff]
  %v2345 = vld [vmem:[%s2336 + $0x40] sm:$0xff]
  %v2346 = vld [vmem:[%s2336 + $0x48] sm:$0xff]
  %v2347 = vld [vmem:[%s2336 + $0x50] sm:$0xff]
  %v2348 = vld [vmem:[%s2336 + $0x58] sm:$0xff]
  %v2349 = vld [vmem:[%s2336 + $0x60] sm:$0xff]
  %v2350 = vld [vmem:[%s2336 + $0x68] sm:$0xff]
  %v2351 = vld [vmem:[%s2336 + $0x70] sm:$0xff]
  %v2352 = vld [vmem:[%s2336 + $0x78] sm:$0xff]
  %v2354 = vsel %vm415, %v2260, 0
  %v2357 = vsel %vm415, %v2333, 0
  %2359 = vmatprep.subr.mxu0 %v2338
  %2360 = vmatpush1.msra.mxu0 %v2337
  %2361 = vmatprep.subr.mxu0 %v2340
  %2362 = vmatpush1.msra.mxu0 %v2339
  %2363 = vmatprep.subr.mxu0 %v2342
  %2364 = vmatpush1.msra.mxu0 %v2341
  %2365 = vmatprep.subr.mxu0 %v2344
  %2366 = vmatpush1.msra.mxu0 %v2343
  %2367 = vmatprep.subr.mxu0 %v2346
  %2368 = vmatpush1.msra.mxu0 %v2345
  %2369 = vmatprep.subr.mxu0 %v2348
  %2370 = vmatpush1.msra.mxu0 %v2347
  %2371 = vmatprep.subr.mxu0 %v2350
  %2372 = vmatpush1.msra.mxu0 %v2349
  %2373 = vmatprep.subr.mxu0 %v2352
  %2374 = vmatpush1.msra.mxu0 %v2351
  %2375 = vmatprep.subr.mxu0 0.0
  %2376 = vmatpush1.msra.mxu0 0.0
  %2377 = vmatprep.subr.mxu0 0.0
  %2378 = vmatpush1.msra.mxu0 0.0
  %2379 = vmatprep.subr.mxu0 0.0
  %2380 = vmatpush1.msra.mxu0 0.0
  %2381 = vmatprep.subr.mxu0 0.0
  %2382 = vmatpush1.msra.mxu0 0.0
  %2383 = vmatprep.subr.mxu0 0.0
  %2384 = vmatpush1.msra.mxu0 0.0
  %2385 = vmatprep.subr.mxu0 0.0
  %2386 = vmatpush1.msra.mxu0 0.0
  %2387 = vmatprep.subr.mxu0 0.0
  %2388 = vmatpush1.msra.mxu0 0.0
  %2389 = vmatprep.subr.mxu0 0.0
  %2390 = vmatpush1.msra.mxu0 0.0
  %2391 = vmatprep.subr.mxu0 0.0
  %2392 = vmatpush1.msra.mxu0 0.0
  %2393 = vmatprep.subr.mxu0 0.0
  %2394 = vmatpush1.msra.mxu0 0.0
  %2395 = vmatprep.subr.mxu0 0.0
  %2396 = vmatpush1.msra.mxu0 0.0
  %2397 = vmatprep.subr.mxu0 0.0
  %2398 = vmatpush1.msra.mxu0 0.0
  %2399 = vmatprep.subr.mxu0 0.0
  %2400 = vmatpush1.msra.mxu0 0.0
  %2401 = vmatprep.subr.mxu0 0.0
  %2402 = vmatpush1.msra.mxu0 0.0
  %2403 = vmatprep.subr.mxu0 0.0
  %2404 = vmatpush1.msra.mxu0 0.0
  %2405 = vmatprep.subr.mxu0 0.0
  %2406 = vmatpush1.msra.mxu0 0.0
  %2407 = vmatprep.subr.mxu0 0.0
  %2408 = vmatpush1.msra.mxu0 0.0
  %2409 = vmatprep.subr.mxu0 0.0
  %2410 = vmatpush1.msra.mxu0 0.0
  %2411 = vmatprep.subr.mxu0 0.0
  %2412 = vmatpush1.msra.mxu0 0.0
  %2413 = vmatprep.subr.mxu0 0.0
  %2414 = vmatpush1.msra.mxu0 0.0
  %2415 = vmatprep.subr.mxu0 0.0
  %2416 = vmatpush1.msra.mxu0 0.0
  %2417 = vmatprep.subr.mxu0 0.0
  %2418 = vmatpush1.msra.mxu0 0.0
  %2419 = vmatprep.subr.mxu0 0.0
  %2420 = vmatpush1.msra.mxu0 0.0
  %2421 = vmatprep.subr.mxu0 0.0
  %2422 = vmatpush1.msra.mxu0 0.0
  %2423 = vmatprep.mubr.f32.mxu0 0.0
  %2424 = vmatmul.mubr.f32.gmra.mrb[0].mxu0 %v2354
  %v2425 = vpop.f32.mrb[0].mxu0
  %v2426 = vadd.f32 0.0, %v2425
  %v2427 = vpop.f32.mrb[0].mxu0
  %v2428 = vadd.f32 0.0, %v2427
  %2429 = vmatprep.mubr.f32.mxu0 0.0
  %2430 = vmatmul.mubr.f32.gmra.mrb[0].mxu0 %v2357
  %v2431 = vpop.f32.mrb[0].mxu0
  %v2432 = vadd.f32 0.0, %v2431
  %v2433 = vpop.f32.mrb[0].mxu0
  %v2434 = vadd.f32 0.0, %v2433
  %2435 = vdwg.mxu0
  %v2436 = vadd.f32 %v1630, %v2426
  %v2437 = vadd.f32 %v1632, %v2428
  %v2438 = vadd.f32 %v1636, %v2432
  %v2439 = vadd.f32 %v1638, %v2434
  %s2440 = scalar_lea.vmem %s2, 768
  %v2441 = vld [vmem:[%s2440] sm:$0xff]
  %v2442 = vld [vmem:[%s2440 + $0x8] sm:$0xff]
  %v2443 = vld [vmem:[%s2440 + $0x10] sm:$0xff]
  %v2444 = vld [vmem:[%s2440 + $0x18] sm:$0xff]
  %v2445 = vld [vmem:[%s2440 + $0x20] sm:$0xff]
  %v2446 = vld [vmem:[%s2440 + $0x28] sm:$0xff]
  %v2447 = vld [vmem:[%s2440 + $0x30] sm:$0xff]
  %v2448 = vld [vmem:[%s2440 + $0x38] sm:$0xff]
  %v2449 = vld [vmem:[%s2440 + $0x40] sm:$0xff]
  %v2450 = vld [vmem:[%s2440 + $0x48] sm:$0xff]
  %v2451 = vld [vmem:[%s2440 + $0x50] sm:$0xff]
  %v2452 = vld [vmem:[%s2440 + $0x58] sm:$0xff]
  %v2453 = vld [vmem:[%s2440 + $0x60] sm:$0xff]
  %v2454 = vld [vmem:[%s2440 + $0x68] sm:$0xff]
  %v2455 = vld [vmem:[%s2440 + $0x70] sm:$0xff]
  %v2456 = vld [vmem:[%s2440 + $0x78] sm:$0xff]
  %v2457 = vld [vmem:[%s2440 + $0x80] sm:$0xff]
  %v2458 = vld [vmem:[%s2440 + $0x88] sm:$0xff]
  %v2459 = vld [vmem:[%s2440 + $0x90] sm:$0xff]
  %v2460 = vld [vmem:[%s2440 + $0x98] sm:$0xff]
  %v2461 = vld [vmem:[%s2440 + $0xa0] sm:$0xff]
  %v2462 = vld [vmem:[%s2440 + $0xa8] sm:$0xff]
  %v2463 = vld [vmem:[%s2440 + $0xb0] sm:$0xff]
  %v2464 = vld [vmem:[%s2440 + $0xb8] sm:$0xff]
  %v2465 = vld [vmem:[%s2440 + $0xc0] sm:$0xff]
  %v2466 = vld [vmem:[%s2440 + $0xc8] sm:$0xff]
  %v2467 = vld [vmem:[%s2440 + $0xd0] sm:$0xff]
  %v2468 = vld [vmem:[%s2440 + $0xd8] sm:$0xff]
  %v2469 = vld [vmem:[%s2440 + $0xe0] sm:$0xff]
  %v2470 = vld [vmem:[%s2440 + $0xe8] sm:$0xff]
  %v2471 = vld [vmem:[%s2440 + $0xf0] sm:$0xff]
  %v2472 = vld [vmem:[%s2440 + $0xf8] sm:$0xff]
  %s2473 = scalar_lea.vmem %s3, 3
  %v2474 = vld [vmem:[%s2473] sm:$0x1]
  %v2476 = vlaneseq
  %v2477 = vshrl.u32 %v2476, 7
  %v2478 = vsub.s32 0, %v2477
  %v2479 = vrot.slane %v2474, %v2478
  %2481 = vmatprep.subr.mxu0 0.0
  %2482 = vmatpush1.msra.mxu0 %v2441
  %2483 = vmatprep.subr.mxu0 0.0
  %2484 = vmatpush1.msra.mxu0 %v2442
  %2485 = vmatprep.subr.mxu0 0.0
  %2486 = vmatpush1.msra.mxu0 %v2443
  %2487 = vmatprep.subr.mxu0 0.0
  %2488 = vmatpush1.msra.mxu0 %v2444
  %2489 = vmatprep.subr.mxu0 0.0
  %2490 = vmatpush1.msra.mxu0 %v2445
  %2491 = vmatprep.subr.mxu0 0.0
  %2492 = vmatpush1.msra.mxu0 %v2446
  %2493 = vmatprep.subr.mxu0 0.0
  %2494 = vmatpush1.msra.mxu0 %v2447
  %2495 = vmatprep.subr.mxu0 0.0
  %2496 = vmatpush1.msra.mxu0 %v2448
  %2497 = vmatprep.subr.mxu0 0.0
  %2498 = vmatpush1.msra.mxu0 %v2449
  %2499 = vmatprep.subr.mxu0 0.0
  %2500 = vmatpush1.msra.mxu0 %v2450
  %2501 = vmatprep.subr.mxu0 0.0
  %2502 = vmatpush1.msra.mxu0 %v2451
  %2503 = vmatprep.subr.mxu0 0.0
  %2504 = vmatpush1.msra.mxu0 %v2452
  %2505 = vmatprep.subr.mxu0 0.0
  %2506 = vmatpush1.msra.mxu0 %v2453
  %2507 = vmatprep.subr.mxu0 0.0
  %2508 = vmatpush1.msra.mxu0 %v2454
  %2509 = vmatprep.subr.mxu0 0.0
  %2510 = vmatpush1.msra.mxu0 %v2455
  %2511 = vmatprep.subr.mxu0 0.0
  %2512 = vmatpush1.msra.mxu0 %v2456
  %2513 = vmatprep.subr.mxu0 0.0
  %2514 = vmatpush1.msra.mxu0 %v2457
  %2515 = vmatprep.subr.mxu0 0.0
  %2516 = vmatpush1.msra.mxu0 %v2458
  %2517 = vmatprep.subr.mxu0 0.0
  %2518 = vmatpush1.msra.mxu0 %v2459
  %2519 = vmatprep.subr.mxu0 0.0
  %2520 = vmatpush1.msra.mxu0 %v2460
  %2521 = vmatprep.subr.mxu0 0.0
  %2522 = vmatpush1.msra.mxu0 %v2461
  %2523 = vmatprep.subr.mxu0 0.0
  %2524 = vmatpush1.msra.mxu0 %v2462
  %2525 = vmatprep.subr.mxu0 0.0
  %2526 = vmatpush1.msra.mxu0 %v2463
  %2527 = vmatprep.subr.mxu0 0.0
  %2528 = vmatpush1.msra.mxu0 %v2464
  %2529 = vmatprep.subr.mxu0 0.0
  %2530 = vmatpush1.msra.mxu0 %v2465
  %2531 = vmatprep.subr.mxu0 0.0
  %2532 = vmatpush1.msra.mxu0 %v2466
  %2533 = vmatprep.subr.mxu0 0.0
  %2534 = vmatpush1.msra.mxu0 %v2467
  %2535 = vmatprep.subr.mxu0 0.0
  %2536 = vmatpush1.msra.mxu0 %v2468
  %2537 = vmatprep.subr.mxu0 0.0
  %2538 = vmatpush1.msra.mxu0 %v2469
  %2539 = vmatprep.subr.mxu0 0.0
  %2540 = vmatpush1.msra.mxu0 %v2470
  %2541 = vmatprep.subr.mxu0 0.0
  %2542 = vmatpush1.msra.mxu0 %v2471
  %2543 = vmatprep.subr.mxu0 0.0
  %2544 = vmatpush1.msra.mxu0 %v2472
  %2545 = vmatprep.mubr.f32.mxu0 %v42
  %2546 = vmatmul.mubr.f32.gmra.mrb[0].mxu0 %v41
  %v2547 = vpop.f32.mrb[0].mxu0
  %v2548 = vadd.f32 %v2479, %v2547
  %v2549 = vpop.f32.mrb[0].mxu0
  %2550 = vmatprep.mubr.f32.mxu0 %v44
  %2551 = vmatmul.mubr.f32.gmra.mrb[0].mxu0 %v43
  %v2552 = vpop.f32.mrb[0].mxu0
  %v2553 = vadd.f32 %v2479, %v2552
  %v2554 = vpop.f32.mrb[0].mxu0
  %2555 = vdwg.mxu0
  %s2556 = scalar_lea.vmem %s4, 768
  %v2557 = vld [vmem:[%s2556] sm:$0xff]
  %v2558 = vld [vmem:[%s2556 + $0x8] sm:$0xff]
  %v2559 = vld [vmem:[%s2556 + $0x10] sm:$0xff]
  %v2560 = vld [vmem:[%s2556 + $0x18] sm:$0xff]
  %v2561 = vld [vmem:[%s2556 + $0x20] sm:$0xff]
  %v2562 = vld [vmem:[%s2556 + $0x28] sm:$0xff]
  %v2563 = vld [vmem:[%s2556 + $0x30] sm:$0xff]
  %v2564 = vld [vmem:[%s2556 + $0x38] sm:$0xff]
  %v2565 = vld [vmem:[%s2556 + $0x40] sm:$0xff]
  %v2566 = vld [vmem:[%s2556 + $0x48] sm:$0xff]
  %v2567 = vld [vmem:[%s2556 + $0x50] sm:$0xff]
  %v2568 = vld [vmem:[%s2556 + $0x58] sm:$0xff]
  %v2569 = vld [vmem:[%s2556 + $0x60] sm:$0xff]
  %v2570 = vld [vmem:[%s2556 + $0x68] sm:$0xff]
  %v2571 = vld [vmem:[%s2556 + $0x70] sm:$0xff]
  %v2572 = vld [vmem:[%s2556 + $0x78] sm:$0xff]
  %v2573 = vld [vmem:[%s2556 + $0x80] sm:$0xff]
  %v2574 = vld [vmem:[%s2556 + $0x88] sm:$0xff]
  %v2575 = vld [vmem:[%s2556 + $0x90] sm:$0xff]
  %v2576 = vld [vmem:[%s2556 + $0x98] sm:$0xff]
  %v2577 = vld [vmem:[%s2556 + $0xa0] sm:$0xff]
  %v2578 = vld [vmem:[%s2556 + $0xa8] sm:$0xff]
  %v2579 = vld [vmem:[%s2556 + $0xb0] sm:$0xff]
  %v2580 = vld [vmem:[%s2556 + $0xb8] sm:$0xff]
  %v2581 = vld [vmem:[%s2556 + $0xc0] sm:$0xff]
  %v2582 = vld [vmem:[%s2556 + $0xc8] sm:$0xff]
  %v2583 = vld [vmem:[%s2556 + $0xd0] sm:$0xff]
  %v2584 = vld [vmem:[%s2556 + $0xd8] sm:$0xff]
  %v2585 = vld [vmem:[%s2556 + $0xe0] sm:$0xff]
  %v2586 = vld [vmem:[%s2556 + $0xe8] sm:$0xff]
  %v2587 = vld [vmem:[%s2556 + $0xf0] sm:$0xff]
  %v2588 = vld [vmem:[%s2556 + $0xf8] sm:$0xff]
  %s2589 = scalar_lea.vmem %s5, 3
  %v2590 = vld [vmem:[%s2589] sm:$0x1]
  %v2592 = vlaneseq
  %v2593 = vshrl.u32 %v2592, 7
  %v2594 = vsub.s32 0, %v2593
  %v2595 = vrot.slane %v2590, %v2594
  %2597 = vmatprep.subr.mxu0 0.0
  %2598 = vmatpush1.msra.mxu0 %v2557
  %2599 = vmatprep.subr.mxu0 0.0
  %2600 = vmatpush1.msra.mxu0 %v2558
  %2601 = vmatprep.subr.mxu0 0.0
  %2602 = vmatpush1.msra.mxu0 %v2559
  %2603 = vmatprep.subr.mxu0 0.0
  %2604 = vmatpush1.msra.mxu0 %v2560
  %2605 = vmatprep.subr.mxu0 0.0
  %2606 = vmatpush1.msra.mxu0 %v2561
  %2607 = vmatprep.subr.mxu0 0.0
  %2608 = vmatpush1.msra.mxu0 %v2562
  %2609 = vmatprep.subr.mxu0 0.0
  %2610 = vmatpush1.msra.mxu0 %v2563
  %2611 = vmatprep.subr.mxu0 0.0
  %2612 = vmatpush1.msra.mxu0 %v2564
  %2613 = vmatprep.subr.mxu0 0.0
  %2614 = vmatpush1.msra.mxu0 %v2565
  %2615 = vmatprep.subr.mxu0 0.0
  %2616 = vmatpush1.msra.mxu0 %v2566
  %2617 = vmatprep.subr.mxu0 0.0
  %2618 = vmatpush1.msra.mxu0 %v2567
  %2619 = vmatprep.subr.mxu0 0.0
  %2620 = vmatpush1.msra.mxu0 %v2568
  %2621 = vmatprep.subr.mxu0 0.0
  %2622 = vmatpush1.msra.mxu0 %v2569
  %2623 = vmatprep.subr.mxu0 0.0
  %2624 = vmatpush1.msra.mxu0 %v2570
  %2625 = vmatprep.subr.mxu0 0.0
  %2626 = vmatpush1.msra.mxu0 %v2571
  %2627 = vmatprep.subr.mxu0 0.0
  %2628 = vmatpush1.msra.mxu0 %v2572
  %2629 = vmatprep.subr.mxu0 0.0
  %2630 = vmatpush1.msra.mxu0 %v2573
  %2631 = vmatprep.subr.mxu0 0.0
  %2632 = vmatpush1.msra.mxu0 %v2574
  %2633 = vmatprep.subr.mxu0 0.0
  %2634 = vmatpush1.msra.mxu0 %v2575
  %2635 = vmatprep.subr.mxu0 0.0
  %2636 = vmatpush1.msra.mxu0 %v2576
  %2637 = vmatprep.subr.mxu0 0.0
  %2638 = vmatpush1.msra.mxu0 %v2577
  %2639 = vmatprep.subr.mxu0 0.0
  %2640 = vmatpush1.msra.mxu0 %v2578
  %2641 = vmatprep.subr.mxu0 0.0
  %2642 = vmatpush1.msra.mxu0 %v2579
  %2643 = vmatprep.subr.mxu0 0.0
  %2644 = vmatpush1.msra.mxu0 %v2580
  %2645 = vmatprep.subr.mxu0 0.0
  %2646 = vmatpush1.msra.mxu0 %v2581
  %2647 = vmatprep.subr.mxu0 0.0
  %2648 = vmatpush1.msra.mxu0 %v2582
  %2649 = vmatprep.subr.mxu0 0.0
  %2650 = vmatpush1.msra.mxu0 %v2583
  %2651 = vmatprep.subr.mxu0 0.0
  %2652 = vmatpush1.msra.mxu0 %v2584
  %2653 = vmatprep.subr.mxu0 0.0
  %2654 = vmatpush1.msra.mxu0 %v2585
  %2655 = vmatprep.subr.mxu0 0.0
  %2656 = vmatpush1.msra.mxu0 %v2586
  %2657 = vmatprep.subr.mxu0 0.0
  %2658 = vmatpush1.msra.mxu0 %v2587
  %2659 = vmatprep.subr.mxu0 0.0
  %2660 = vmatpush1.msra.mxu0 %v2588
  %2661 = vmatprep.mubr.f32.mxu0 %v46
  %2662 = vmatmul.mubr.f32.gmra.mrb[0].mxu0 %v45
  %v2663 = vpop.f32.mrb[0].mxu0
  %v2664 = vadd.f32 %v2595, %v2663
  %v2665 = vpop.f32.mrb[0].mxu0
  %2666 = vmatprep.mubr.f32.mxu0 %v48
  %2667 = vmatmul.mubr.f32.gmra.mrb[0].mxu0 %v47
  %v2668 = vpop.f32.mrb[0].mxu0
  %v2669 = vadd.f32 %v2595, %v2668
  %v2670 = vpop.f32.mrb[0].mxu0
  %2671 = vmatprep.mubr.f32.mxu0 %v50
  %2672 = vmatmul.mubr.f32.gmra.mrb[0].mxu0 %v49
  %v2673 = vpop.f32.mrb[0].mxu0
  %v2674 = vadd.f32 %v2595, %v2673
  %v2675 = vpop.f32.mrb[0].mxu0
  %2676 = vmatprep.mubr.f32.mxu0 %v52
  %2677 = vmatmul.mubr.f32.gmra.mrb[0].mxu0 %v51
  %v2678 = vpop.f32.mrb[0].mxu0
  %v2679 = vadd.f32 %v2595, %v2678
  %v2680 = vpop.f32.mrb[0].mxu0
  %2681 = vdwg.mxu0
  %s2682 = scalar_lea.vmem %s6, 768
  %v2683 = vld [vmem:[%s2682] sm:$0xff]
  %v2684 = vld [vmem:[%s2682 + $0x8] sm:$0xff]
  %v2685 = vld [vmem:[%s2682 + $0x10] sm:$0xff]
  %v2686 = vld [vmem:[%s2682 + $0x18] sm:$0xff]
  %v2687 = vld [vmem:[%s2682 + $0x20] sm:$0xff]
  %v2688 = vld [vmem:[%s2682 + $0x28] sm:$0xff]
  %v2689 = vld [vmem:[%s2682 + $0x30] sm:$0xff]
  %v2690 = vld [vmem:[%s2682 + $0x38] sm:$0xff]
  %v2691 = vld [vmem:[%s2682 + $0x40] sm:$0xff]
  %v2692 = vld [vmem:[%s2682 + $0x48] sm:$0xff]
  %v2693 = vld [vmem:[%s2682 + $0x50] sm:$0xff]
  %v2694 = vld [vmem:[%s2682 + $0x58] sm:$0xff]
  %v2695 = vld [vmem:[%s2682 + $0x60] sm:$0xff]
  %v2696 = vld [vmem:[%s2682 + $0x68] sm:$0xff]
  %v2697 = vld [vmem:[%s2682 + $0x70] sm:$0xff]
  %v2698 = vld [vmem:[%s2682 + $0x78] sm:$0xff]
  %v2699 = vld [vmem:[%s2682 + $0x80] sm:$0xff]
  %v2700 = vld [vmem:[%s2682 + $0x88] sm:$0xff]
  %v2701 = vld [vmem:[%s2682 + $0x90] sm:$0xff]
  %v2702 = vld [vmem:[%s2682 + $0x98] sm:$0xff]
  %v2703 = vld [vmem:[%s2682 + $0xa0] sm:$0xff]
  %v2704 = vld [vmem:[%s2682 + $0xa8] sm:$0xff]
  %v2705 = vld [vmem:[%s2682 + $0xb0] sm:$0xff]
  %v2706 = vld [vmem:[%s2682 + $0xb8] sm:$0xff]
  %v2707 = vld [vmem:[%s2682 + $0xc0] sm:$0xff]
  %v2708 = vld [vmem:[%s2682 + $0xc8] sm:$0xff]
  %v2709 = vld [vmem:[%s2682 + $0xd0] sm:$0xff]
  %v2710 = vld [vmem:[%s2682 + $0xd8] sm:$0xff]
  %v2711 = vld [vmem:[%s2682 + $0xe0] sm:$0xff]
  %v2712 = vld [vmem:[%s2682 + $0xe8] sm:$0xff]
  %v2713 = vld [vmem:[%s2682 + $0xf0] sm:$0xff]
  %v2714 = vld [vmem:[%s2682 + $0xf8] sm:$0xff]
  %s2715 = scalar_lea.vmem %s7, 3
  %v2716 = vld [vmem:[%s2715] sm:$0x1]
  %v2718 = vlaneseq
  %v2719 = vshrl.u32 %v2718, 7
  %v2720 = vsub.s32 0, %v2719
  %v2721 = vrot.slane %v2716, %v2720
  %2723 = vmatprep.subr.mxu0 0.0
  %2724 = vmatpush1.msra.mxu0 %v2683
  %2725 = vmatprep.subr.mxu0 0.0
  %2726 = vmatpush1.msra.mxu0 %v2684
  %2727 = vmatprep.subr.mxu0 0.0
  %2728 = vmatpush1.msra.mxu0 %v2685
  %2729 = vmatprep.subr.mxu0 0.0
  %2730 = vmatpush1.msra.mxu0 %v2686
  %2731 = vmatprep.subr.mxu0 0.0
  %2732 = vmatpush1.msra.mxu0 %v2687
  %2733 = vmatprep.subr.mxu0 0.0
  %2734 = vmatpush1.msra.mxu0 %v2688
  %2735 = vmatprep.subr.mxu0 0.0
  %2736 = vmatpush1.msra.mxu0 %v2689
  %2737 = vmatprep.subr.mxu0 0.0
  %2738 = vmatpush1.msra.mxu0 %v2690
  %2739 = vmatprep.subr.mxu0 0.0
  %2740 = vmatpush1.msra.mxu0 %v2691
  %2741 = vmatprep.subr.mxu0 0.0
  %2742 = vmatpush1.msra.mxu0 %v2692
  %2743 = vmatprep.subr.mxu0 0.0
  %2744 = vmatpush1.msra.mxu0 %v2693
  %2745 = vmatprep.subr.mxu0 0.0
  %2746 = vmatpush1.msra.mxu0 %v2694
  %2747 = vmatprep.subr.mxu0 0.0
  %2748 = vmatpush1.msra.mxu0 %v2695
  %2749 = vmatprep.subr.mxu0 0.0
  %2750 = vmatpush1.msra.mxu0 %v2696
  %2751 = vmatprep.subr.mxu0 0.0
  %2752 = vmatpush1.msra.mxu0 %v2697
  %2753 = vmatprep.subr.mxu0 0.0
  %2754 = vmatpush1.msra.mxu0 %v2698
  %2755 = vmatprep.subr.mxu0 0.0
  %2756 = vmatpush1.msra.mxu0 %v2699
  %2757 = vmatprep.subr.mxu0 0.0
  %2758 = vmatpush1.msra.mxu0 %v2700
  %2759 = vmatprep.subr.mxu0 0.0
  %2760 = vmatpush1.msra.mxu0 %v2701
  %2761 = vmatprep.subr.mxu0 0.0
  %2762 = vmatpush1.msra.mxu0 %v2702
  %2763 = vmatprep.subr.mxu0 0.0
  %2764 = vmatpush1.msra.mxu0 %v2703
  %2765 = vmatprep.subr.mxu0 0.0
  %2766 = vmatpush1.msra.mxu0 %v2704
  %2767 = vmatprep.subr.mxu0 0.0
  %2768 = vmatpush1.msra.mxu0 %v2705
  %2769 = vmatprep.subr.mxu0 0.0
  %2770 = vmatpush1.msra.mxu0 %v2706
  %2771 = vmatprep.subr.mxu0 0.0
  %2772 = vmatpush1.msra.mxu0 %v2707
  %2773 = vmatprep.subr.mxu0 0.0
  %2774 = vmatpush1.msra.mxu0 %v2708
  %2775 = vmatprep.subr.mxu0 0.0
  %2776 = vmatpush1.msra.mxu0 %v2709
  %2777 = vmatprep.subr.mxu0 0.0
  %2778 = vmatpush1.msra.mxu0 %v2710
  %2779 = vmatprep.subr.mxu0 0.0
  %2780 = vmatpush1.msra.mxu0 %v2711
  %2781 = vmatprep.subr.mxu0 0.0
  %2782 = vmatpush1.msra.mxu0 %v2712
  %2783 = vmatprep.subr.mxu0 0.0
  %2784 = vmatpush1.msra.mxu0 %v2713
  %2785 = vmatprep.subr.mxu0 0.0
  %2786 = vmatpush1.msra.mxu0 %v2714
  %2787 = vmatprep.mubr.f32.mxu0 %v46
  %2788 = vmatmul.mubr.f32.gmra.mrb[0].mxu0 %v45
  %v2789 = vpop.f32.mrb[0].mxu0
  %v2790 = vadd.f32 %v2721, %v2789
  %v2791 = vpop.f32.mrb[0].mxu0
  %2792 = vmatprep.mubr.f32.mxu0 %v48
  %2793 = vmatmul.mubr.f32.gmra.mrb[0].mxu0 %v47
  %v2794 = vpop.f32.mrb[0].mxu0
  %v2795 = vadd.f32 %v2721, %v2794
  %v2796 = vpop.f32.mrb[0].mxu0
  %2797 = vmatprep.mubr.f32.mxu0 %v50
  %2798 = vmatmul.mubr.f32.gmra.mrb[0].mxu0 %v49
  %v2799 = vpop.f32.mrb[0].mxu0
  %v2800 = vadd.f32 %v2721, %v2799
  %v2801 = vpop.f32.mrb[0].mxu0
  %2802 = vmatprep.mubr.f32.mxu0 %v52
  %2803 = vmatmul.mubr.f32.gmra.mrb[0].mxu0 %v51
  %v2804 = vpop.f32.mrb[0].mxu0
  %v2805 = vadd.f32 %v2721, %v2804
  %v2806 = vpop.f32.mrb[0].mxu0
  %2807 = vdwg.mxu0
  %v2809 = vsel %vm415, %v2548, 0
  %v2812 = vsel %vm415, %v2664, 0
  %v2815 = vsel %vm415, %v2669, 0
  %2817 = vmatprep.subr.mxu0 0.0
  %2818 = vmatpush1.xpose.msra.mxu0 %v2812
  %2819 = vmatprep.subr.mxu0 0.0
  %2820 = vmatpush1.xpose.msra.mxu0 %v2815
  %2821 = vmatprep.subr.mxu0 0.0
  %2822 = vmatpush1.xpose.msra.mxu0 0.0
  %2823 = vmatprep.subr.mxu0 0.0
  %2824 = vmatpush1.xpose.msra.mxu0 0.0
  %2825 = vmatprep.subr.mxu0 0.0
  %2826 = vmatpush1.xpose.msra.mxu0 0.0
  %2827 = vmatprep.subr.mxu0 0.0
  %2828 = vmatpush1.xpose.msra.mxu0 0.0
  %2829 = vmatprep.subr.mxu0 0.0
  %2830 = vmatpush1.xpose.msra.mxu0 0.0
  %2831 = vmatprep.subr.mxu0 0.0
  %2832 = vmatpush1.xpose.msra.mxu0 0.0
  %2833 = vmatprep.subr.mxu0 0.0
  %2834 = vmatpush1.xpose.msra.mxu0 0.0
  %2835 = vmatprep.subr.mxu0 0.0
  %2836 = vmatpush1.xpose.msra.mxu0 0.0
  %2837 = vmatprep.subr.mxu0 0.0
  %2838 = vmatpush1.xpose.msra.mxu0 0.0
  %2839 = vmatprep.subr.mxu0 0.0
  %2840 = vmatpush1.xpose.msra.mxu0 0.0
  %2841 = vmatprep.subr.mxu0 0.0
  %2842 = vmatpush1.xpose.msra.mxu0 0.0
  %2843 = vmatprep.subr.mxu0 0.0
  %2844 = vmatpush1.xpose.msra.mxu0 0.0
  %2845 = vmatprep.subr.mxu0 0.0
  %2846 = vmatpush1.xpose.msra.mxu0 0.0
  %2847 = vmatprep.subr.mxu0 0.0
  %2848 = vmatpush1.xpose.msra.mxu0 0.0
  %2849 = vmatprep.subr.mxu0 0.0
  %2850 = vmatpush1.xpose.msra.mxu0 0.0
  %2851 = vmatprep.subr.mxu0 0.0
  %2852 = vmatpush1.xpose.msra.mxu0 0.0
  %2853 = vmatprep.subr.mxu0 0.0
  %2854 = vmatpush1.xpose.msra.mxu0 0.0
  %2855 = vmatprep.subr.mxu0 0.0
  %2856 = vmatpush1.xpose.msra.mxu0 0.0
  %2857 = vmatprep.subr.mxu0 0.0
  %2858 = vmatpush1.xpose.msra.mxu0 0.0
  %2859 = vmatprep.subr.mxu0 0.0
  %2860 = vmatpush1.xpose.msra.mxu0 0.0
  %2861 = vmatprep.subr.mxu0 0.0
  %2862 = vmatpush1.xpose.msra.mxu0 0.0
  %2863 = vmatprep.subr.mxu0 0.0
  %2864 = vmatpush1.xpose.msra.mxu0 0.0
  %2865 = vmatprep.subr.mxu0 0.0
  %2866 = vmatpush1.xpose.msra.mxu0 0.0
  %2867 = vmatprep.subr.mxu0 0.0
  %2868 = vmatpush1.xpose.msra.mxu0 0.0
  %2869 = vmatprep.subr.mxu0 0.0
  %2870 = vmatpush1.xpose.msra.mxu0 0.0
  %2871 = vmatprep.subr.mxu0 0.0
  %2872 = vmatpush1.xpose.msra.mxu0 0.0
  %2873 = vmatprep.subr.mxu0 0.0
  %2874 = vmatpush1.xpose.msra.mxu0 0.0
  %2875 = vmatprep.subr.mxu0 0.0
  %2876 = vmatpush1.xpose.msra.mxu0 0.0
  %2877 = vmatprep.subr.mxu0 0.0
  %2878 = vmatpush1.xpose.msra.mxu0 0.0
  %2879 = vmatprep.subr.mxu0 0.0
  %2880 = vmatpush1.xpose.msra.mxu0 0.0
  %2881 = vmatprep.mubr.f32.mxu0 0.0
  %2882 = vmatmul.mubr.f32.gmra.mrb[0].mxu0 %v2809
  %v2883 = vpop.f32.mrb[0].mxu0
  %v2884 = vadd.f32 0.0, %v2883
  %v2885 = vpop.f32.mrb[0].mxu0
  %2886 = vdwg.mxu0
  %v2888 = vsel %vm415, %v2553, 0
  %v2891 = vsel %vm415, %v2674, 0
  %v2894 = vsel %vm415, %v2679, 0
  %2896 = vmatprep.subr.mxu0 0.0
  %2897 = vmatpush1.xpose.msra.mxu0 %v2891
  %2898 = vmatprep.subr.mxu0 0.0
  %2899 = vmatpush1.xpose.msra.mxu0 %v2894
  %2900 = vmatprep.subr.mxu0 0.0
  %2901 = vmatpush1.xpose.msra.mxu0 0.0
  %2902 = vmatprep.subr.mxu0 0.0
  %2903 = vmatpush1.xpose.msra.mxu0 0.0
  %2904 = vmatprep.subr.mxu0 0.0
  %2905 = vmatpush1.xpose.msra.mxu0 0.0
  %2906 = vmatprep.subr.mxu0 0.0
  %2907 = vmatpush1.xpose.msra.mxu0 0.0
  %2908 = vmatprep.subr.mxu0 0.0
  %2909 = vmatpush1.xpose.msra.mxu0 0.0
  %2910 = vmatprep.subr.mxu0 0.0
  %2911 = vmatpush1.xpose.msra.mxu0 0.0
  %2912 = vmatprep.subr.mxu0 0.0
  %2913 = vmatpush1.xpose.msra.mxu0 0.0
  %2914 = vmatprep.subr.mxu0 0.0
  %2915 = vmatpush1.xpose.msra.mxu0 0.0
  %2916 = vmatprep.subr.mxu0 0.0
  %2917 = vmatpush1.xpose.msra.mxu0 0.0
  %2918 = vmatprep.subr.mxu0 0.0
  %2919 = vmatpush1.xpose.msra.mxu0 0.0
  %2920 = vmatprep.subr.mxu0 0.0
  %2921 = vmatpush1.xpose.msra.mxu0 0.0
  %2922 = vmatprep.subr.mxu0 0.0
  %2923 = vmatpush1.xpose.msra.mxu0 0.0
  %2924 = vmatprep.subr.mxu0 0.0
  %2925 = vmatpush1.xpose.msra.mxu0 0.0
  %2926 = vmatprep.subr.mxu0 0.0
  %2927 = vmatpush1.xpose.msra.mxu0 0.0
  %2928 = vmatprep.subr.mxu0 0.0
  %2929 = vmatpush1.xpose.msra.mxu0 0.0
  %2930 = vmatprep.subr.mxu0 0.0
  %2931 = vmatpush1.xpose.msra.mxu0 0.0
  %2932 = vmatprep.subr.mxu0 0.0
  %2933 = vmatpush1.xpose.msra.mxu0 0.0
  %2934 = vmatprep.subr.mxu0 0.0
  %2935 = vmatpush1.xpose.msra.mxu0 0.0
  %2936 = vmatprep.subr.mxu0 0.0
  %2937 = vmatpush1.xpose.msra.mxu0 0.0
  %2938 = vmatprep.subr.mxu0 0.0
  %2939 = vmatpush1.xpose.msra.mxu0 0.0
  %2940 = vmatprep.subr.mxu0 0.0
  %2941 = vmatpush1.xpose.msra.mxu0 0.0
  %2942 = vmatprep.subr.mxu0 0.0
  %2943 = vmatpush1.xpose.msra.mxu0 0.0
  %2944 = vmatprep.subr.mxu0 0.0
  %2945 = vmatpush1.xpose.msra.mxu0 0.0
  %2946 = vmatprep.subr.mxu0 0.0
  %2947 = vmatpush1.xpose.msra.mxu0 0.0
  %2948 = vmatprep.subr.mxu0 0.0
  %2949 = vmatpush1.xpose.msra.mxu0 0.0
  %2950 = vmatprep.subr.mxu0 0.0
  %2951 = vmatpush1.xpose.msra.mxu0 0.0
  %2952 = vmatprep.subr.mxu0 0.0
  %2953 = vmatpush1.xpose.msra.mxu0 0.0
  %2954 = vmatprep.subr.mxu0 0.0
  %2955 = vmatpush1.xpose.msra.mxu0 0.0
  %2956 = vmatprep.subr.mxu0 0.0
  %2957 = vmatpush1.xpose.msra.mxu0 0.0
  %2958 = vmatprep.subr.mxu0 0.0
  %2959 = vmatpush1.xpose.msra.mxu0 0.0
  %2960 = vmatprep.mubr.f32.mxu0 0.0
  %2961 = vmatmul.mubr.f32.gmra.mrb[0].mxu0 %v2888
  %v2962 = vpop.f32.mrb[0].mxu0
  %v2963 = vadd.f32 0.0, %v2962
  %v2964 = vpop.f32.mrb[0].mxu0
  %2965 = vdwg.mxu0
  %v2966 = vmul.f32 %v2884, 0.125
  %v2967 = vmul.f32 %v2963, 0.125
  %v2968 = vsel %vm576, %v2966, -inf
  %2969 = vmax.xlane.f32.xlu0 %v2968
  %v2970 = vpop.xlane.xlu0 %2969
  %v2971 = vsel %vm576, %v2967, -inf
  %2972 = vmax.xlane.f32.xlu0 %v2971
  %v2973 = vpop.xlane.xlu0 %2972
  %v2974 = vsub.f32 %v2966, %v2970
  %v2975 = vsub.f32 %v2967, %v2973
  %v2976 = vmul.f32 %v2974, 1.442695
  %v2977 = vpow.pop %v2976
  %v2978 = vmul.f32 %v2975, 1.442695
  %v2979 = vpow.pop %v2978
  %v2980 = vsel %vm576, %v2977, 0.0
  %2981 = vadd.xlane.f32.xlu0 %v2980
  %v2982 = vpop.xlane.xlu0 %2981
  %v2983 = vsel %vm576, %v2979, 0.0
  %2984 = vadd.xlane.f32.xlu0 %v2983
  %v2985 = vpop.xlane.xlu0 %2984
  %v2986 = vrcp.pop %v2982
  %v2987 = vrcp.pop %v2985
  %v2988 = vmul.f32 %v2977, %v2986
  %v2989 = vmul.f32 %v2979, %v2987
  %v2991 = vsel %vm576, %v2988, 0
  %2993 = vmatprep.subr.mxu0 0.0
  %2994 = vmatpush1.msra.mxu0 %v2790
  %2995 = vmatprep.subr.mxu0 0.0
  %2996 = vmatpush1.msra.mxu0 %v2795
  %2997 = vmatprep.subr.mxu0 0.0
  %2998 = vmatpush1.msra.mxu0 0.0
  %2999 = vmatprep.subr.mxu0 0.0
  %3000 = vmatpush1.msra.mxu0 0.0
  %3001 = vmatprep.subr.mxu0 0.0
  %3002 = vmatpush1.msra.mxu0 0.0
  %3003 = vmatprep.subr.mxu0 0.0
  %3004 = vmatpush1.msra.mxu0 0.0
  %3005 = vmatprep.subr.mxu0 0.0
  %3006 = vmatpush1.msra.mxu0 0.0
  %3007 = vmatprep.subr.mxu0 0.0
  %3008 = vmatpush1.msra.mxu0 0.0
  %3009 = vmatprep.subr.mxu0 0.0
  %3010 = vmatpush1.msra.mxu0 0.0
  %3011 = vmatprep.subr.mxu0 0.0
  %3012 = vmatpush1.msra.mxu0 0.0
  %3013 = vmatprep.subr.mxu0 0.0
  %3014 = vmatpush1.msra.mxu0 0.0
  %3015 = vmatprep.subr.mxu0 0.0
  %3016 = vmatpush1.msra.mxu0 0.0
  %3017 = vmatprep.subr.mxu0 0.0
  %3018 = vmatpush1.msra.mxu0 0.0
  %3019 = vmatprep.subr.mxu0 0.0
  %3020 = vmatpush1.msra.mxu0 0.0
  %3021 = vmatprep.subr.mxu0 0.0
  %3022 = vmatpush1.msra.mxu0 0.0
  %3023 = vmatprep.subr.mxu0 0.0
  %3024 = vmatpush1.msra.mxu0 0.0
  %3025 = vmatprep.subr.mxu0 0.0
  %3026 = vmatpush1.msra.mxu0 0.0
  %3027 = vmatprep.subr.mxu0 0.0
  %3028 = vmatpush1.msra.mxu0 0.0
  %3029 = vmatprep.subr.mxu0 0.0
  %3030 = vmatpush1.msra.mxu0 0.0
  %3031 = vmatprep.subr.mxu0 0.0
  %3032 = vmatpush1.msra.mxu0 0.0
  %3033 = vmatprep.subr.mxu0 0.0
  %3034 = vmatpush1.msra.mxu0 0.0
  %3035 = vmatprep.subr.mxu0 0.0
  %3036 = vmatpush1.msra.mxu0 0.0
  %3037 = vmatprep.subr.mxu0 0.0
  %3038 = vmatpush1.msra.mxu0 0.0
  %3039 = vmatprep.subr.mxu0 0.0
  %3040 = vmatpush1.msra.mxu0 0.0
  %3041 = vmatprep.subr.mxu0 0.0
  %3042 = vmatpush1.msra.mxu0 0.0
  %3043 = vmatprep.subr.mxu0 0.0
  %3044 = vmatpush1.msra.mxu0 0.0
  %3045 = vmatprep.subr.mxu0 0.0
  %3046 = vmatpush1.msra.mxu0 0.0
  %3047 = vmatprep.subr.mxu0 0.0
  %3048 = vmatpush1.msra.mxu0 0.0
  %3049 = vmatprep.subr.mxu0 0.0
  %3050 = vmatpush1.msra.mxu0 0.0
  %3051 = vmatprep.subr.mxu0 0.0
  %3052 = vmatpush1.msra.mxu0 0.0
  %3053 = vmatprep.subr.mxu0 0.0
  %3054 = vmatpush1.msra.mxu0 0.0
  %3055 = vmatprep.subr.mxu0 0.0
  %3056 = vmatpush1.msra.mxu0 0.0
  %3057 = vmatprep.mubr.f32.mxu0 0.0
  %3058 = vmatmul.mubr.f32.gmra.mrb[0].mxu0 %v2991
  %v3059 = vpop.f32.mrb[0].mxu0
  %v3060 = vadd.f32 0.0, %v3059
  %v3061 = vpop.f32.mrb[0].mxu0
  %3062 = vdwg.mxu0
  %v3064 = vsel %vm576, %v2989, 0
  %3066 = vmatprep.subr.mxu0 0.0
  %3067 = vmatpush1.msra.mxu0 %v2800
  %3068 = vmatprep.subr.mxu0 0.0
  %3069 = vmatpush1.msra.mxu0 %v2805
  %3070 = vmatprep.subr.mxu0 0.0
  %3071 = vmatpush1.msra.mxu0 0.0
  %3072 = vmatprep.subr.mxu0 0.0
  %3073 = vmatpush1.msra.mxu0 0.0
  %3074 = vmatprep.subr.mxu0 0.0
  %3075 = vmatpush1.msra.mxu0 0.0
  %3076 = vmatprep.subr.mxu0 0.0
  %3077 = vmatpush1.msra.mxu0 0.0
  %3078 = vmatprep.subr.mxu0 0.0
  %3079 = vmatpush1.msra.mxu0 0.0
  %3080 = vmatprep.subr.mxu0 0.0
  %3081 = vmatpush1.msra.mxu0 0.0
  %3082 = vmatprep.subr.mxu0 0.0
  %3083 = vmatpush1.msra.mxu0 0.0
  %3084 = vmatprep.subr.mxu0 0.0
  %3085 = vmatpush1.msra.mxu0 0.0
  %3086 = vmatprep.subr.mxu0 0.0
  %3087 = vmatpush1.msra.mxu0 0.0
  %3088 = vmatprep.subr.mxu0 0.0
  %3089 = vmatpush1.msra.mxu0 0.0
  %3090 = vmatprep.subr.mxu0 0.0
  %3091 = vmatpush1.msra.mxu0 0.0
  %3092 = vmatprep.subr.mxu0 0.0
  %3093 = vmatpush1.msra.mxu0 0.0
  %3094 = vmatprep.subr.mxu0 0.0
  %3095 = vmatpush1.msra.mxu0 0.0
  %3096 = vmatprep.subr.mxu0 0.0
  %3097 = vmatpush1.msra.mxu0 0.0
  %3098 = vmatprep.subr.mxu0 0.0
  %3099 = vmatpush1.msra.mxu0 0.0
  %3100 = vmatprep.subr.mxu0 0.0
  %3101 = vmatpush1.msra.mxu0 0.0
  %3102 = vmatprep.subr.mxu0 0.0
  %3103 = vmatpush1.msra.mxu0 0.0
  %3104 = vmatprep.subr.mxu0 0.0
  %3105 = vmatpush1.msra.mxu0 0.0
  %3106 = vmatprep.subr.mxu0 0.0
  %3107 = vmatpush1.msra.mxu0 0.0
  %3108 = vmatprep.subr.mxu0 0.0
  %3109 = vmatpush1.msra.mxu0 0.0
  %3110 = vmatprep.subr.mxu0 0.0
  %3111 = vmatpush1.msra.mxu0 0.0
  %3112 = vmatprep.subr.mxu0 0.0
  %3113 = vmatpush1.msra.mxu0 0.0
  %3114 = vmatprep.subr.mxu0 0.0
  %3115 = vmatpush1.msra.mxu0 0.0
  %3116 = vmatprep.subr.mxu0 0.0
  %3117 = vmatpush1.msra.mxu0 0.0
  %3118 = vmatprep.subr.mxu0 0.0
  %3119 = vmatpush1.msra.mxu0 0.0
  %3120 = vmatprep.subr.mxu0 0.0
  %3121 = vmatpush1.msra.mxu0 0.0
  %3122 = vmatprep.subr.mxu0 0.0
  %3123 = vmatpush1.msra.mxu0 0.0
  %3124 = vmatprep.subr.mxu0 0.0
  %3125 = vmatpush1.msra.mxu0 0.0
  %3126 = vmatprep.subr.mxu0 0.0
  %3127 = vmatpush1.msra.mxu0 0.0
  %3128 = vmatprep.subr.mxu0 0.0
  %3129 = vmatpush1.msra.mxu0 0.0
  %3130 = vmatprep.mubr.f32.mxu0 0.0
  %3131 = vmatmul.mubr.f32.gmra.mrb[0].mxu0 %v3064
  %v3132 = vpop.f32.mrb[0].mxu0
  %v3133 = vadd.f32 0.0, %v3132
  %v3134 = vpop.f32.mrb[0].mxu0
  %3135 = vdwg.mxu0
  %s3136 = scalar_lea.vmem %s8, 384
  %v3137 = vld [vmem:[%s3136] sm:$0xff]
  %v3138 = vld [vmem:[%s3136 + $0x8] sm:$0xff]
  %v3139 = vld [vmem:[%s3136 + $0x10] sm:$0xff]
  %v3140 = vld [vmem:[%s3136 + $0x18] sm:$0xff]
  %v3141 = vld [vmem:[%s3136 + $0x20] sm:$0xff]
  %v3142 = vld [vmem:[%s3136 + $0x28] sm:$0xff]
  %v3143 = vld [vmem:[%s3136 + $0x30] sm:$0xff]
  %v3144 = vld [vmem:[%s3136 + $0x38] sm:$0xff]
  %v3145 = vld [vmem:[%s3136 + $0x40] sm:$0xff]
  %v3146 = vld [vmem:[%s3136 + $0x48] sm:$0xff]
  %v3147 = vld [vmem:[%s3136 + $0x50] sm:$0xff]
  %v3148 = vld [vmem:[%s3136 + $0x58] sm:$0xff]
  %v3149 = vld [vmem:[%s3136 + $0x60] sm:$0xff]
  %v3150 = vld [vmem:[%s3136 + $0x68] sm:$0xff]
  %v3151 = vld [vmem:[%s3136 + $0x70] sm:$0xff]
  %v3152 = vld [vmem:[%s3136 + $0x78] sm:$0xff]
  %v3154 = vsel %vm415, %v3060, 0
  %v3157 = vsel %vm415, %v3133, 0
  %3159 = vmatprep.subr.mxu0 %v3138
  %3160 = vmatpush1.msra.mxu0 %v3137
  %3161 = vmatprep.subr.mxu0 %v3140
  %3162 = vmatpush1.msra.mxu0 %v3139
  %3163 = vmatprep.subr.mxu0 %v3142
  %3164 = vmatpush1.msra.mxu0 %v3141
  %3165 = vmatprep.subr.mxu0 %v3144
  %3166 = vmatpush1.msra.mxu0 %v3143
  %3167 = vmatprep.subr.mxu0 %v3146
  %3168 = vmatpush1.msra.mxu0 %v3145
  %3169 = vmatprep.subr.mxu0 %v3148
  %3170 = vmatpush1.msra.mxu0 %v3147
  %3171 = vmatprep.subr.mxu0 %v3150
  %3172 = vmatpush1.msra.mxu0 %v3149
  %3173 = vmatprep.subr.mxu0 %v3152
  %3174 = vmatpush1.msra.mxu0 %v3151
  %3175 = vmatprep.subr.mxu0 0.0
  %3176 = vmatpush1.msra.mxu0 0.0
  %3177 = vmatprep.subr.mxu0 0.0
  %3178 = vmatpush1.msra.mxu0 0.0
  %3179 = vmatprep.subr.mxu0 0.0
  %3180 = vmatpush1.msra.mxu0 0.0
  %3181 = vmatprep.subr.mxu0 0.0
  %3182 = vmatpush1.msra.mxu0 0.0
  %3183 = vmatprep.subr.mxu0 0.0
  %3184 = vmatpush1.msra.mxu0 0.0
  %3185 = vmatprep.subr.mxu0 0.0
  %3186 = vmatpush1.msra.mxu0 0.0
  %3187 = vmatprep.subr.mxu0 0.0
  %3188 = vmatpush1.msra.mxu0 0.0
  %3189 = vmatprep.subr.mxu0 0.0
  %3190 = vmatpush1.msra.mxu0 0.0
  %3191 = vmatprep.subr.mxu0 0.0
  %3192 = vmatpush1.msra.mxu0 0.0
  %3193 = vmatprep.subr.mxu0 0.0
  %3194 = vmatpush1.msra.mxu0 0.0
  %3195 = vmatprep.subr.mxu0 0.0
  %3196 = vmatpush1.msra.mxu0 0.0
  %3197 = vmatprep.subr.mxu0 0.0
  %3198 = vmatpush1.msra.mxu0 0.0
  %3199 = vmatprep.subr.mxu0 0.0
  %3200 = vmatpush1.msra.mxu0 0.0
  %3201 = vmatprep.subr.mxu0 0.0
  %3202 = vmatpush1.msra.mxu0 0.0
  %3203 = vmatprep.subr.mxu0 0.0
  %3204 = vmatpush1.msra.mxu0 0.0
  %3205 = vmatprep.subr.mxu0 0.0
  %3206 = vmatpush1.msra.mxu0 0.0
  %3207 = vmatprep.subr.mxu0 0.0
  %3208 = vmatpush1.msra.mxu0 0.0
  %3209 = vmatprep.subr.mxu0 0.0
  %3210 = vmatpush1.msra.mxu0 0.0
  %3211 = vmatprep.subr.mxu0 0.0
  %3212 = vmatpush1.msra.mxu0 0.0
  %3213 = vmatprep.subr.mxu0 0.0
  %3214 = vmatpush1.msra.mxu0 0.0
  %3215 = vmatprep.subr.mxu0 0.0
  %3216 = vmatpush1.msra.mxu0 0.0
  %3217 = vmatprep.subr.mxu0 0.0
  %3218 = vmatpush1.msra.mxu0 0.0
  %3219 = vmatprep.subr.mxu0 0.0
  %3220 = vmatpush1.msra.mxu0 0.0
  %3221 = vmatprep.subr.mxu0 0.0
  %3222 = vmatpush1.msra.mxu0 0.0
  %3223 = vmatprep.mubr.f32.mxu0 0.0
  %3224 = vmatmul.mubr.f32.gmra.mrb[0].mxu0 %v3154
  %v3225 = vpop.f32.mrb[0].mxu0
  %v3226 = vadd.f32 0.0, %v3225
  %v3227 = vpop.f32.mrb[0].mxu0
  %v3228 = vadd.f32 0.0, %v3227
  %3229 = vmatprep.mubr.f32.mxu0 0.0
  %3230 = vmatmul.mubr.f32.gmra.mrb[0].mxu0 %v3157
  %v3231 = vpop.f32.mrb[0].mxu0
  %v3232 = vadd.f32 0.0, %v3231
  %v3233 = vpop.f32.mrb[0].mxu0
  %v3234 = vadd.f32 0.0, %v3233
  %3235 = vdwg.mxu0
  %v3236 = vadd.f32 %v2436, %v3226
  %v3237 = vadd.f32 %v2437, %v3228
  %v3238 = vadd.f32 %v2438, %v3232
  %v3239 = vadd.f32 %v2439, %v3234
  %v3240 = vadd.f32 %v41, %v3236
  %v3241 = vadd.f32 %v42, %v3237
  %v3242 = vadd.f32 %v43, %v3238
  %v3243 = vadd.f32 %v44, %v3239
  %v3244 = vld [vmem:[%s9] sm:$0x3]
  %v3246 = vlaneseq
  %v3247 = vshrl.u32 %v3246, 7
  %v3248 = vsub.s32 0, %v3247
  %v3249 = vrot.slane %v3244, %v3248
  %v3250 = vlaneseq
  %v3251 = vshrl.u32 %v3250, 7
  %v3252 = vsub.s32 1, %v3251
  %v3253 = vrot.slane %v3244, %v3252
  %v3256 = vadd.f32 %v3240, %v3249
  %v3257 = vadd.f32 %v3241, %v3253
  %v3258 = vadd.f32 %v3242, %v3249
  %v3259 = vadd.f32 %v3243, %v3253
  %v3260 = vadd.f32 %v3256, %v3257
  %3261 = vadd.xlane.f32.xlu0 %v3260
  %v3262 = vpop.xlane.xlu0 %3261
  %v3263 = vadd.f32 %v3258, %v3259
  %3264 = vadd.xlane.f32.xlu0 %v3263
  %v3265 = vpop.xlane.xlu0 %3264
  %v3266 = vrcp.pop 256.0
  %v3267 = vmul.f32 %v3262, %v3266
  %v3268 = vmul.f32 %v3265, %v3266
  %v3269 = vsub.f32 %v3256, %v3267
  %v3270 = vsub.f32 %v3257, %v3267
  %v3271 = vsub.f32 %v3258, %v3268
  %v3272 = vsub.f32 %v3259, %v3268
  %v3273 = vmul.f32 %v3269, %v3269
  %v3274 = vmul.f32 %v3270, %v3270
  %v3275 = vmul.f32 %v3271, %v3271
  %v3276 = vmul.f32 %v3272, %v3272
  %v3277 = vadd.f32 %v3273, %v3274
  %3278 = vadd.xlane.f32.xlu0 %v3277
  %v3279 = vpop.xlane.xlu0 %3278
  %v3280 = vadd.f32 %v3275, %v3276
  %3281 = vadd.xlane.f32.xlu0 %v3280
  %v3282 = vpop.xlane.xlu0 %3281
  %v3283 = vmul.f32 %v3279, %v3266
  %v3284 = vmul.f32 %v3282, %v3266
  %v3285 = vadd.f32 %v3283, 1e-05
  %v3286 = vadd.f32 %v3284, 1e-05
  %v3287 = vrsqrt.pop %v3285
  %v3288 = vrsqrt.pop %v3286
  %v3289 = vmul.f32 %v3269, %v3287
  %v3290 = vmul.f32 %v3270, %v3287
  %v3291 = vmul.f32 %v3271, %v3288
  %v3292 = vmul.f32 %v3272, %v3288
  %v3293 = vld [vmem:[%s10] sm:$0x3]
  %v3295 = vlaneseq
  %v3296 = vshrl.u32 %v3295, 7
  %v3297 = vsub.s32 0, %v3296
  %v3298 = vrot.slane %v3293, %v3297
  %v3299 = vlaneseq
  %v3300 = vshrl.u32 %v3299, 7
  %v3301 = vsub.s32 1, %v3300
  %v3302 = vrot.slane %v3293, %v3301
  %v3305 = vmul.f32 %v3289, %v3298
  %v3306 = vmul.f32 %v3290, %v3302
  %v3307 = vmul.f32 %v3291, %v3298
  %v3308 = vmul.f32 %v3292, %v3302
  %v3309 = vld [vmem:[%s11] sm:$0x3]
  %v3311 = vlaneseq
  %v3312 = vshrl.u32 %v3311, 7
  %v3313 = vsub.s32 0, %v3312
  %v3314 = vrot.slane %v3309, %v3313
  %v3315 = vlaneseq
  %v3316 = vshrl.u32 %v3315, 7
  %v3317 = vsub.s32 1, %v3316
  %v3318 = vrot.slane %v3309, %v3317
  %v3321 = vadd.f32 %v3305, %v3314
  %v3322 = vadd.f32 %v3306, %v3318
  %v3323 = vadd.f32 %v3307, %v3314
  %v3324 = vadd.f32 %v3308, %v3318
  %3325 = vst [vmem:[%s12] sm:$0xff] %v3321
  %3326 = vst [vmem:[%s12 + $0x8] sm:$0xff] %v3322
  %3327 = vst [vmem:[%s12 + $0x10] sm:$0xff] %v3323
  %3328 = vst [vmem:[%s12 + $0x18] sm:$0xff] %v3324
  // Predicated region
  $region50: #{multistream_decoder_forward.10} parent=0 // pred_check
    _
  $region51: #{multistream_decoder_forward.10} parent=0 // pred_check_branch
    %3330 = sbr.rel (0) target = $region53
  $region52: #{multistream_decoder_forward.10} parent=0 // pred_region
    _
  $region53: #{multistream_decoder_forward.10} parent=0 // pred_fallthru
    _
  // Predicated region
  $region54: #{multistream_decoder_forward.10} parent=0 // pred_check
    _
  $region55: #{multistream_decoder_forward.10} parent=0 // pred_check_branch
    %3332 = sbr.rel (0) target = $region57
  $region56: #{multistream_decoder_forward.10} parent=0 // pred_region
    _
  $region57: #{multistream_decoder_forward.10} parent=0 // pred_fallthru
    _

</llo_original>
